<compile_context>
chip_gen: v7x
topology: tpu7x:2x2x1
jax: 0.10.0
libtpu: 0.0.40
codegen_flags: <defaults>
</compile_context>

<pallas_src>
import functools

import jax
import jax.numpy as jnp
from jax.experimental import pallas as pl
from jax.experimental.pallas import tpu as pltpu

LANE = 128  # channel dims are zero-padded to the TPU lane width


# ----------------------------------------------------------------------------
# Fused AttentionBranch kernel (one grid step = one batch element)
# ----------------------------------------------------------------------------
def _attention_branch_kernel(x_ref, w1_ref, b1_ref, bn1s_ref, bn1t_ref,
                             w2_ref, b2_ref, bn2s_ref, bn2t_ref,
                             c11w_ref, c11b_ref, c12w_ref, c12b_ref,
                             sel1_ref, sel1t_ref, sel2_ref, sel2t_ref,
                             o_ref, pad_ref):
    C = x_ref.shape[2]
    f32 = jnp.float32
    bf16 = jnp.bfloat16

    def conv_same3(a, w_flat, bias):
        # 'same' Conv1d, k=3, dilation=1, stride=1.  Zero padding of the conv
        # input is realized by writing the tile into a zero-bracketed VMEM
        # scratch; the three taps are lane-concatenated into one (L, 3C) slab
        # -> a single bf16 MXU contraction with f32 accumulation.
        L = a.shape[0]
        zrow = jnp.zeros((1, C), f32)
        pad_ref[0:1, :] = zrow
        pad_ref[1:L + 1, :] = a
        pad_ref[L + 1:L + 2, :] = zrow
        slab = jnp.concatenate(
            [pad_ref[0:L, :], pad_ref[1:L + 1, :], pad_ref[2:L + 2, :]], axis=1)
        return jnp.dot(slab.astype(bf16), w_flat,
                       preferred_element_type=f32) + bias

    def conv1x1(a, w, bias):
        return jnp.dot(a.astype(bf16), w, preferred_element_type=f32) + bias

    def res_unit(a, i):
        # BN(eval) -> ReLU -> conv3 -> BN(eval) -> ReLU -> conv3, plus identity.
        h = jnp.maximum(a * bn1s_ref[i] + bn1t_ref[i], 0.0)
        h = conv_same3(h, w1_ref[i], b1_ref[i])
        h = jnp.maximum(h * bn2s_ref[i] + bn2t_ref[i], 0.0)
        h = conv_same3(h, w2_ref[i], b2_ref[i])
        return a + h

    def max_pool3(a, sel):
        # MaxPool1d(k=3, s=3) with indices: rows 3p+j are gathered with 0/1
        # selection matrices (one tiny MXU matmul per tap), then a 3-way
        # elementwise max.  'off' is the within-window offset of the first max.
        a16 = a.astype(bf16)
        r0 = jnp.dot(sel[0], a16, preferred_element_type=f32)
        r1 = jnp.dot(sel[1], a16, preferred_element_type=f32)
        r2 = jnp.dot(sel[2], a16, preferred_element_type=f32)
        m01 = jnp.maximum(r0, r1)
        off01 = jnp.where(r1 > r0, 1.0, 0.0)
        v = jnp.maximum(m01, r2)
        off = jnp.where(r2 > m01, 2.0, off01)
        return v, off

    def max_unpool3(v, off, selt):
        # MaxUnpool1d(k=3): scatter each pooled value back to row 3p+off;
        # all other rows (incl. any leftover tail) receive zeros.
        out = None
        for j in range(3):
            mj = jnp.where(off == float(j), v, 0.0).astype(bf16)
            part = jnp.dot(selt[j], mj, preferred_element_type=f32)
            out = part if out is None else out + part
        return out

    x_in = x_ref[0]                           # (L1, C) float32
    x = res_unit(x_in, 0)                     # ResUnit1
    new_x, off1 = max_pool3(x, sel1_ref)      # max_pool1 -> (L1//3, C)
    x = res_unit(new_x, 1)                    # ResUnit2
    x = res_unit(x, 2)                        # ResUnit3
    x, off2 = max_pool3(x, sel2_ref)          # max_pool2 -> (L1//9, C)
    x = res_unit(x, 3)                        # ResUnit4
    x = res_unit(x, 4)                        # ResUnit5
    x = max_unpool3(x, off2, sel2t_ref)       # max_unpool1(indices2, size S2)
    x = res_unit(x + new_x, 5)                # ResUnit6
    x = max_unpool3(x, off1, sel1t_ref)       # max_unpool2(indices1, size S1)
    # TODO(synk): match_residual 1x1 conv on x_input (only needed when c_in != c_inner).
    x = x_in + x
    x = conv1x1(x, c11w_ref[...], c11b_ref[...])   # conv1_1 (1x1)
    x = conv1x1(x, c12w_ref[...], c12b_ref[...])   # conv1_2 (1x1)
    o_ref[0] = jax.nn.sigmoid(x)


# ----------------------------------------------------------------------------
# Wrapper: BlockSpecs / grid and NCL <-> lane-dense channels-last conversion
# ----------------------------------------------------------------------------
def _pool_selectors(L):
    """0/1 selection matrices for the MaxPool1d(k=3,s=3) gather and their
    transposes for the MaxUnpool1d scatter (handles L % 3 != 0: leftover rows
    are never selected and receive zeros on unpool, matching PyTorch)."""
    Lp = (L - 3) // 3 + 1
    p = jnp.arange(Lp)[:, None]
    l = jnp.arange(L)[None, :]
    sel = jnp.stack([(l == 3 * p + j) for j in range(3)]).astype(jnp.bfloat16)
    return Lp, sel, jnp.transpose(sel, (0, 2, 1))


def attention_branch_forward(x_ncl, packed, *, c_out):
    """x_ncl: (B, c_in, L) float32, PyTorch NCL layout -> (B, c_out, L)."""
    B, _, L1 = x_ncl.shape
    C = LANE
    x = jnp.transpose(x_ncl, (0, 2, 1)).astype(jnp.float32)   # channels-last
    x = jnp.pad(x, ((0, 0), (0, 0), (0, C - x.shape[2])))     # lane-dense channels (once)
    Lp1, sel1, sel1t = _pool_selectors(L1)
    Lp2, sel2, sel2t = _pool_selectors(Lp1)

    def rep(shape):  # whole (weight) array resident in VMEM, same block for all steps
        return pl.BlockSpec(shape, lambda b: (0,) * len(shape))

    out = pl.pallas_call(
        _attention_branch_kernel,
        out_shape=jax.ShapeDtypeStruct((B, L1, C), jnp.float32),
        grid=(B,),
        in_specs=[
            pl.BlockSpec((1, L1, C), lambda b: (b, 0, 0)),        # x (per batch element)
            rep((6, 3 * C, C)), rep((6, 1, C)), rep((6, 1, C)), rep((6, 1, C)),
            rep((6, 3 * C, C)), rep((6, 1, C)), rep((6, 1, C)), rep((6, 1, C)),
            rep((C, C)), rep((1, C)), rep((C, C)), rep((1, C)),
            rep((3, Lp1, L1)), rep((3, L1, Lp1)),
            rep((3, Lp2, Lp1)), rep((3, Lp1, Lp2)),
        ],
        out_specs=pl.BlockSpec((1, L1, C), lambda b: (b, 0, 0)),
        scratch_shapes=[pltpu.VMEM((L1 + 2, C), jnp.float32)],    # zero-bracketed conv pad
        compiler_params=pltpu.CompilerParams(
            dimension_semantics=("parallel",)),  # v7x: split the batch over both TCs
    )(x, packed['w1'], packed['b1'], packed['bn1s'], packed['bn1t'],
      packed['w2'], packed['b2'], packed['bn2s'], packed['bn2t'],
      packed['c11w'], packed['c11b'], packed['c12w'], packed['c12b'],
      sel1, sel1t, sel2, sel2t)

    return jnp.transpose(out[:, :, :c_out], (0, 2, 1))            # back to NCL


# ----------------------------------------------------------------------------
# Parameter init (PyTorch-style fan-in uniform) and lane-dense packing
# ----------------------------------------------------------------------------
def init_conv(key, cin, cout, k):
    k1, k2 = jax.random.split(key)
    bound = float(1.0 / (cin * k) ** 0.5)
    w = jax.random.uniform(k1, (k, cin, cout), jnp.float32, -bound, bound)
    b = jax.random.uniform(k2, (cout,), jnp.float32, -bound, bound)
    return w, b


def init_bn(key, c, eps=1e-5):
    k1, k2 = jax.random.split(key)
    gamma = 1.0 + 0.1 * jax.random.normal(k1, (c,), jnp.float32)
    beta = 0.1 * jax.random.normal(k2, (c,), jnp.float32)
    running_mean = jnp.zeros((c,), jnp.float32)
    running_var = jnp.ones((c,), jnp.float32)
    scale = gamma * jax.lax.rsqrt(running_var + eps)
    shift = beta - running_mean * scale
    return scale, shift


def init_res_unit(key, cin, cout, k):
    ks = jax.random.split(key, 4)
    return {'bn1': init_bn(ks[0], cin), 'conv1': init_conv(ks[1], cin, cout, k),
            'bn2': init_bn(ks[2], cout), 'conv2': init_conv(ks[3], cout, cout, k)}


def init_attention_branch(key, c_in=50, c_inner=50, c_out=50, kernel_size=3):
    # TODO(synk): match_residual / per-ResUnit 1x1 match-conv path (c_in != c_inner)
    # is not implemented; the default AttentionBranch(50, 50, 50) never takes it.
    assert c_in == c_inner, "only the default c_in == c_inner configuration is supported"
    ks = jax.random.split(key, 8)
    p = {f'ru{i + 1}': init_res_unit(ks[i], c_inner, c_inner, kernel_size)
         for i in range(6)}
    p['c11'] = init_conv(ks[6], c_inner, c_inner, 1)
    p['c12'] = init_conv(ks[7], c_inner, c_out, 1)
    return p


def _pad_axis(a, axis, n):
    pads = [(0, 0)] * a.ndim
    pads[axis] = (0, n - a.shape[axis])
    return jnp.pad(a, pads)


def pack_params(p):
    """Zero-pad channels to LANE, flatten conv taps, stack the 6 ResUnits."""
    C = LANE

    def conv_w(w):                        # (k, cin, cout) -> (k*C, C) bfloat16
        k = w.shape[0]
        w = _pad_axis(_pad_axis(w, 1, C), 2, C)
        return w.reshape(k * C, C).astype(jnp.bfloat16)

    def vec(v):                           # (c,) -> (1, C) float32
        return _pad_axis(v.reshape(1, -1), 1, C)

    rus = [p[f'ru{i}'] for i in range(1, 7)]
    return {
        'w1': jnp.stack([conv_w(r['conv1'][0]) for r in rus]),
        'b1': jnp.stack([vec(r['conv1'][1]) for r in rus]),
        'w2': jnp.stack([conv_w(r['conv2'][0]) for r in rus]),
        'b2': jnp.stack([vec(r['conv2'][1]) for r in rus]),
        'bn1s': jnp.stack([vec(r['bn1'][0]) for r in rus]),
        'bn1t': jnp.stack([vec(r['bn1'][1]) for r in rus]),
        'bn2s': jnp.stack([vec(r['bn2'][0]) for r in rus]),
        'bn2t': jnp.stack([vec(r['bn2'][1]) for r in rus]),
        'c11w': conv_w(p['c11'][0]), 'c11b': vec(p['c11'][1]),
        'c12w': conv_w(p['c12'][0]), 'c12b': vec(p['c12'][1]),
    }


# ----------------------------------------------------------------------------
# Plain-jnp (XLA) reference of the same channels-last, eval-mode math
# ----------------------------------------------------------------------------
def attention_branch_reference(x_ncl, packed, *, c_out):
    B, _, L1 = x_ncl.shape
    C = LANE
    f32, bf16 = jnp.float32, jnp.bfloat16
    x = jnp.transpose(x_ncl, (0, 2, 1)).astype(f32)
    x = jnp.pad(x, ((0, 0), (0, 0), (0, C - x.shape[2])))
    Lp1, sel1, sel1t = _pool_selectors(L1)
    Lp2, sel2, sel2t = _pool_selectors(Lp1)

    def conv_same3(a, w_flat, bias):
        L = a.shape[1]
        z = jnp.zeros_like(a[:, :1, :])
        ap = jnp.concatenate([z, a, z], axis=1)
        slab = jnp.concatenate([ap[:, 0:L], ap[:, 1:L + 1], ap[:, 2:L + 2]], axis=2)
        return jnp.einsum('blk,kc->blc', slab.astype(bf16), w_flat,
                          preferred_element_type=f32) + bias

    def conv1x1(a, w, bias):
        return jnp.einsum('blk,kc->blc', a.astype(bf16), w,
                          preferred_element_type=f32) + bias

    def res_unit(a, i):
        h = jnp.maximum(a * packed['bn1s'][i] + packed['bn1t'][i], 0.0)
        h = conv_same3(h, packed['w1'][i], packed['b1'][i])
        h = jnp.maximum(h * packed['bn2s'][i] + packed['bn2t'][i], 0.0)
        h = conv_same3(h, packed['w2'][i], packed['b2'][i])
        return a + h

    def max_pool3(a, sel):
        a16 = a.astype(bf16)
        r = [jnp.einsum('pl,blc->bpc', sel[j], a16, preferred_element_type=f32)
             for j in range(3)]
        m01 = jnp.maximum(r[0], r[1])
        off01 = jnp.where(r[1] > r[0], 1.0, 0.0)
        v = jnp.maximum(m01, r[2])
        return v, jnp.where(r[2] > m01, 2.0, off01)

    def max_unpool3(v, off, selt):
        out = 0.0
        for j in range(3):
            mj = jnp.where(off == float(j), v, 0.0).astype(bf16)
            out = out + jnp.einsum('lp,bpc->blc', selt[j], mj,
                                   preferred_element_type=f32)
        return out

    x_in = x
    h = res_unit(x_in, 0)
    new_x, off1 = max_pool3(h, sel1)
    h = res_unit(new_x, 1)
    h = res_unit(h, 2)
    h, off2 = max_pool3(h, sel2)
    h = res_unit(h, 3)
    h = res_unit(h, 4)
    h = max_unpool3(h, off2, sel2t)
    h = res_unit(h + new_x, 5)
    h = max_unpool3(h, off1, sel1t)
    h = x_in + h
    h = conv1x1(h, packed['c11w'], packed['c11b'])
    h = conv1x1(h, packed['c12w'], packed['c12b'])
    return jnp.transpose(jax.nn.sigmoid(h)[:, :, :c_out], (0, 2, 1))


if __name__ == "__main__":
    B, c_in, c_inner, c_out, L = 2, 50, 50, 50, 36   # L divisible by 9 for the two pools

    key = jax.random.PRNGKey(0)
    pkey, xkey = jax.random.split(key)
    params = init_attention_branch(pkey, c_in, c_inner, c_out, kernel_size=3)
    packed = pack_params(params)
    x = jax.random.normal(xkey, (B, c_in, L), jnp.float32)

    fwd = jax.jit(functools.partial(attention_branch_forward, c_out=c_out))
    y = fwd(x, packed)
    jax.block_until_ready(y)
    assert y.shape == (B, c_out, L), y.shape
    assert bool(jnp.all(jnp.isfinite(y)))

    y_ref = jax.jit(functools.partial(attention_branch_reference, c_out=c_out))(x, packed)
    # Fraction-based check: tolerant to a (measure-zero) pooling-argmax tie flip,
    # strict enough to catch any structural error in the fused kernel.
    frac_bad = float(jnp.mean((jnp.abs(y - y_ref) > 2e-3).astype(jnp.float32)))
    assert frac_bad < 0.03, frac_bad

    print("KERNEL_OK")
</pallas_src>

<mosaic_0001>
module attributes {stable_mosaic.version = 11 : i64} {
  func.func @_attention_branch_kernel(%arg0: i32, %arg1: memref<1x36x128xf32, #tpu.memory_space<vmem>>, %arg2: memref<6x384x128xbf16, #tpu.memory_space<vmem>>, %arg3: memref<6x1x128xf32, #tpu.memory_space<vmem>>, %arg4: memref<6x1x128xf32, #tpu.memory_space<vmem>>, %arg5: memref<6x1x128xf32, #tpu.memory_space<vmem>>, %arg6: memref<6x384x128xbf16, #tpu.memory_space<vmem>>, %arg7: memref<6x1x128xf32, #tpu.memory_space<vmem>>, %arg8: memref<6x1x128xf32, #tpu.memory_space<vmem>>, %arg9: memref<6x1x128xf32, #tpu.memory_space<vmem>>, %arg10: memref<128x128xbf16, #tpu.memory_space<vmem>>, %arg11: memref<1x128xf32, #tpu.memory_space<vmem>>, %arg12: memref<128x128xbf16, #tpu.memory_space<vmem>>, %arg13: memref<1x128xf32, #tpu.memory_space<vmem>>, %arg14: memref<3x12x36xbf16, #tpu.memory_space<vmem>>, %arg15: memref<3x36x12xbf16, #tpu.memory_space<vmem>>, %arg16: memref<3x4x12xbf16, #tpu.memory_space<vmem>>, %arg17: memref<3x12x4xbf16, #tpu.memory_space<vmem>>, %arg18: memref<1x36x128xf32, #tpu.memory_space<vmem>>, %arg19: memref<38x128xf32, #tpu.memory_space<vmem>>) attributes {dimension_semantics = [#tpu.dimension_semantics<parallel>], iteration_bounds = array<i64: 2>, scalar_prefetch = 0 : i64, scratch_operands = 1 : i64, tpu.core_type = #tpu.core_type<tc>, window_params = [{transform_indices = @transform_0, window_bounds = array<i64: 1, 36, 128>}, {pipeline_mode = #tpu.pipeline_mode<synchronous>, transform_indices = @transform_1, window_bounds = array<i64: 6, 384, 128>}, {pipeline_mode = #tpu.pipeline_mode<synchronous>, transform_indices = @transform_2, window_bounds = array<i64: 6, 1, 128>}, {pipeline_mode = #tpu.pipeline_mode<synchronous>, transform_indices = @transform_3, window_bounds = array<i64: 6, 1, 128>}, {pipeline_mode = #tpu.pipeline_mode<synchronous>, transform_indices = @transform_4, window_bounds = array<i64: 6, 1, 128>}, {pipeline_mode = #tpu.pipeline_mode<synchronous>, transform_indices = @transform_5, window_bounds = array<i64: 6, 384, 128>}, {pipeline_mode = #tpu.pipeline_mode<synchronous>, transform_indices = @transform_6, window_bounds = array<i64: 6, 1, 128>}, {pipeline_mode = #tpu.pipeline_mode<synchronous>, transform_indices = @transform_7, window_bounds = array<i64: 6, 1, 128>}, {pipeline_mode = #tpu.pipeline_mode<synchronous>, transform_indices = @transform_8, window_bounds = array<i64: 6, 1, 128>}, {pipeline_mode = #tpu.pipeline_mode<synchronous>, transform_indices = @transform_9, window_bounds = array<i64: 128, 128>}, {pipeline_mode = #tpu.pipeline_mode<synchronous>, transform_indices = @transform_10, window_bounds = array<i64: 1, 128>}, {pipeline_mode = #tpu.pipeline_mode<synchronous>, transform_indices = @transform_11, window_bounds = array<i64: 128, 128>}, {pipeline_mode = #tpu.pipeline_mode<synchronous>, transform_indices = @transform_12, window_bounds = array<i64: 1, 128>}, {pipeline_mode = #tpu.pipeline_mode<synchronous>, transform_indices = @transform_13, window_bounds = array<i64: 3, 12, 36>}, {pipeline_mode = #tpu.pipeline_mode<synchronous>, transform_indices = @transform_14, window_bounds = array<i64: 3, 36, 12>}, {pipeline_mode = #tpu.pipeline_mode<synchronous>, transform_indices = @transform_15, window_bounds = array<i64: 3, 4, 12>}, {pipeline_mode = #tpu.pipeline_mode<synchronous>, transform_indices = @transform_16, window_bounds = array<i64: 3, 12, 4>}, {transform_indices = @transform_17, window_bounds = array<i64: 1, 36, 128>}]} {
    %c0 = arith.constant 0 : index
    %c0_0 = arith.constant 0 : index
    %c0_1 = arith.constant 0 : index
    %0 = vector.load %arg1[%c0, %c0_0, %c0_1] : memref<1x36x128xf32, #tpu.memory_space<vmem>>, vector<1x36x128xf32>
    %1 = vector.shape_cast %0 : vector<1x36x128xf32> to vector<36x128xf32>
    %c0_2 = arith.constant 0 : index
    %c0_3 = arith.constant 0 : index
    %c0_4 = arith.constant 0 : index
    %2 = vector.load %arg4[%c0_2, %c0_3, %c0_4] : memref<6x1x128xf32, #tpu.memory_space<vmem>>, vector<1x1x128xf32>
    %3 = vector.shape_cast %2 : vector<1x1x128xf32> to vector<1x128xf32>
    %4 = vector.broadcast %3 : vector<1x128xf32> to vector<36x128xf32>
    %5 = arith.mulf %1, %4 : vector<36x128xf32>
    %c0_5 = arith.constant 0 : index
    %c0_6 = arith.constant 0 : index
    %c0_7 = arith.constant 0 : index
    %6 = vector.load %arg5[%c0_5, %c0_6, %c0_7] : memref<6x1x128xf32, #tpu.memory_space<vmem>>, vector<1x1x128xf32>
    %7 = vector.shape_cast %6 : vector<1x1x128xf32> to vector<1x128xf32>
    %8 = vector.broadcast %7 : vector<1x128xf32> to vector<36x128xf32>
    %9 = arith.addf %5, %8 : vector<36x128xf32>
    %cst = arith.constant 0.000000e+00 : f32
    %10 = vector.broadcast %cst : f32 to vector<36x128xf32>
    %11 = arith.maximumf %9, %10 : vector<36x128xf32>
    %c0_8 = arith.constant 0 : index
    %c0_9 = arith.constant 0 : index
    %c0_10 = arith.constant 0 : index
    %12 = vector.load %arg2[%c0_8, %c0_9, %c0_10] : memref<6x384x128xbf16, #tpu.memory_space<vmem>>, vector<1x384x128xbf16>
    %13 = vector.shape_cast %12 : vector<1x384x128xbf16> to vector<384x128xbf16>
    %c0_11 = arith.constant 0 : index
    %c0_12 = arith.constant 0 : index
    %c0_13 = arith.constant 0 : index
    %14 = vector.load %arg3[%c0_11, %c0_12, %c0_13] : memref<6x1x128xf32, #tpu.memory_space<vmem>>, vector<1x1x128xf32>
    %15 = vector.shape_cast %14 : vector<1x1x128xf32> to vector<1x128xf32>
    %cst_14 = arith.constant 0.000000e+00 : f32
    %16 = vector.broadcast %cst_14 : f32 to vector<1x128xf32>
    %c0_15 = arith.constant 0 : index
    %c0_16 = arith.constant 0 : index
    %17 = vector.load %arg19[%c0_15, %c0_16] : memref<38x128xf32, #tpu.memory_space<vmem>>, vector<1x128xf32>
    tpu.vector_store %arg19[%c0_15, %c0_16], %16 {strides = array<i32>} : memref<38x128xf32, #tpu.memory_space<vmem>>, vector<1x128xf32>,
    %c1 = arith.constant 1 : index
    %c0_17 = arith.constant 0 : index
    %18 = vector.load %arg19[%c1, %c0_17] : memref<38x128xf32, #tpu.memory_space<vmem>>, vector<36x128xf32>
    tpu.vector_store %arg19[%c1, %c0_17], %11 {strides = array<i32>} : memref<38x128xf32, #tpu.memory_space<vmem>>, vector<36x128xf32>,
    %c37 = arith.constant 37 : index
    %c0_18 = arith.constant 0 : index
    %19 = vector.load %arg19[%c37, %c0_18] : memref<38x128xf32, #tpu.memory_space<vmem>>, vector<1x128xf32>
    tpu.vector_store %arg19[%c37, %c0_18], %16 {strides = array<i32>} : memref<38x128xf32, #tpu.memory_space<vmem>>, vector<1x128xf32>,
    %c0_19 = arith.constant 0 : index
    %c0_20 = arith.constant 0 : index
    %20 = vector.load %arg19[%c0_19, %c0_20] : memref<38x128xf32, #tpu.memory_space<vmem>>, vector<36x128xf32>
    %c1_21 = arith.constant 1 : index
    %c0_22 = arith.constant 0 : index
    %21 = vector.load %arg19[%c1_21, %c0_22] : memref<38x128xf32, #tpu.memory_space<vmem>>, vector<36x128xf32>
    %c2 = arith.constant 2 : index
    %c0_23 = arith.constant 0 : index
    %22 = vector.load %arg19[%c2, %c0_23] : memref<38x128xf32, #tpu.memory_space<vmem>>, vector<36x128xf32>
    %23 = tpu.concatenate %20, %21, %22 in 1 : vector<36x128xf32>, vector<36x128xf32>, vector<36x128xf32> -> vector<36x384xf32>
    %24 = arith.truncf %23 : vector<36x384xf32> to vector<36x384xbf16>
    %cst_24 = arith.constant dense<0.000000e+00> : vector<36x128xf32>
    %25 = tpu.matmul %24, %13, %cst_24 {dimension_numbers = #tpu.dot_dimension_numbers<[1], [0], [0], [1], [0, 0, 1, 1], [], []>} : vector<36x384xbf16>, vector<384x128xbf16>, vector<36x128xf32> -> vector<36x128xf32>
    %26 = vector.broadcast %15 : vector<1x128xf32> to vector<36x128xf32>
    %27 = arith.addf %25, %26 : vector<36x128xf32>
    %c0_25 = arith.constant 0 : index
    %c0_26 = arith.constant 0 : index
    %c0_27 = arith.constant 0 : index
    %28 = vector.load %arg8[%c0_25, %c0_26, %c0_27] : memref<6x1x128xf32, #tpu.memory_space<vmem>>, vector<1x1x128xf32>
    %29 = vector.shape_cast %28 : vector<1x1x128xf32> to vector<1x128xf32>
    %30 = vector.broadcast %29 : vector<1x128xf32> to vector<36x128xf32>
    %31 = arith.mulf %27, %30 : vector<36x128xf32>
    %c0_28 = arith.constant 0 : index
    %c0_29 = arith.constant 0 : index
    %c0_30 = arith.constant 0 : index
    %32 = vector.load %arg9[%c0_28, %c0_29, %c0_30] : memref<6x1x128xf32, #tpu.memory_space<vmem>>, vector<1x1x128xf32>
    %33 = vector.shape_cast %32 : vector<1x1x128xf32> to vector<1x128xf32>
    %34 = vector.broadcast %33 : vector<1x128xf32> to vector<36x128xf32>
    %35 = arith.addf %31, %34 : vector<36x128xf32>
    %cst_31 = arith.constant 0.000000e+00 : f32
    %36 = vector.broadcast %cst_31 : f32 to vector<36x128xf32>
    %37 = arith.maximumf %35, %36 : vector<36x128xf32>
    %c0_32 = arith.constant 0 : index
    %c0_33 = arith.constant 0 : index
    %c0_34 = arith.constant 0 : index
    %38 = vector.load %arg6[%c0_32, %c0_33, %c0_34] : memref<6x384x128xbf16, #tpu.memory_space<vmem>>, vector<1x384x128xbf16>
    %39 = vector.shape_cast %38 : vector<1x384x128xbf16> to vector<384x128xbf16>
    %c0_35 = arith.constant 0 : index
    %c0_36 = arith.constant 0 : index
    %c0_37 = arith.constant 0 : index
    %40 = vector.load %arg7[%c0_35, %c0_36, %c0_37] : memref<6x1x128xf32, #tpu.memory_space<vmem>>, vector<1x1x128xf32>
    %41 = vector.shape_cast %40 : vector<1x1x128xf32> to vector<1x128xf32>
    %cst_38 = arith.constant 0.000000e+00 : f32
    %42 = vector.broadcast %cst_38 : f32 to vector<1x128xf32>
    %c0_39 = arith.constant 0 : index
    %c0_40 = arith.constant 0 : index
    %43 = vector.load %arg19[%c0_39, %c0_40] : memref<38x128xf32, #tpu.memory_space<vmem>>, vector<1x128xf32>
    tpu.vector_store %arg19[%c0_39, %c0_40], %42 {strides = array<i32>} : memref<38x128xf32, #tpu.memory_space<vmem>>, vector<1x128xf32>,
    %c1_41 = arith.constant 1 : index
    %c0_42 = arith.constant 0 : index
    %44 = vector.load %arg19[%c1_41, %c0_42] : memref<38x128xf32, #tpu.memory_space<vmem>>, vector<36x128xf32>
    tpu.vector_store %arg19[%c1_41, %c0_42], %37 {strides = array<i32>} : memref<38x128xf32, #tpu.memory_space<vmem>>, vector<36x128xf32>,
    %c37_43 = arith.constant 37 : index
    %c0_44 = arith.constant 0 : index
    %45 = vector.load %arg19[%c37_43, %c0_44] : memref<38x128xf32, #tpu.memory_space<vmem>>, vector<1x128xf32>
    tpu.vector_store %arg19[%c37_43, %c0_44], %42 {strides = array<i32>} : memref<38x128xf32, #tpu.memory_space<vmem>>, vector<1x128xf32>,
    %c0_45 = arith.constant 0 : index
    %c0_46 = arith.constant 0 : index
    %46 = vector.load %arg19[%c0_45, %c0_46] : memref<38x128xf32, #tpu.memory_space<vmem>>, vector<36x128xf32>
    %c1_47 = arith.constant 1 : index
    %c0_48 = arith.constant 0 : index
    %47 = vector.load %arg19[%c1_47, %c0_48] : memref<38x128xf32, #tpu.memory_space<vmem>>, vector<36x128xf32>
    %c2_49 = arith.constant 2 : index
    %c0_50 = arith.constant 0 : index
    %48 = vector.load %arg19[%c2_49, %c0_50] : memref<38x128xf32, #tpu.memory_space<vmem>>, vector<36x128xf32>
    %49 = tpu.concatenate %46, %47, %48 in 1 : vector<36x128xf32>, vector<36x128xf32>, vector<36x128xf32> -> vector<36x384xf32>
    %50 = arith.truncf %49 : vector<36x384xf32> to vector<36x384xbf16>
    %cst_51 = arith.constant dense<0.000000e+00> : vector<36x128xf32>
    %51 = tpu.matmul %50, %39, %cst_51 {dimension_numbers = #tpu.dot_dimension_numbers<[1], [0], [0], [1], [0, 0, 1, 1], [], []>} : vector<36x384xbf16>, vector<384x128xbf16>, vector<36x128xf32> -> vector<36x128xf32>
    %52 = vector.broadcast %41 : vector<1x128xf32> to vector<36x128xf32>
    %53 = arith.addf %51, %52 : vector<36x128xf32>
    %54 = arith.addf %1, %53 : vector<36x128xf32>
    %55 = arith.truncf %54 : vector<36x128xf32> to vector<36x128xbf16>
    %c0_52 = arith.constant 0 : index
    %c0_53 = arith.constant 0 : index
    %c0_54 = arith.constant 0 : index
    %56 = vector.load %arg14[%c0_52, %c0_53, %c0_54] : memref<3x12x36xbf16, #tpu.memory_space<vmem>>, vector<1x12x36xbf16>
    %57 = vector.shape_cast %56 : vector<1x12x36xbf16> to vector<12x36xbf16>
    %cst_55 = arith.constant dense<0.000000e+00> : vector<12x128xf32>
    %58 = tpu.matmul %57, %55, %cst_55 {dimension_numbers = #tpu.dot_dimension_numbers<[1], [0], [0], [1], [0, 0, 1, 1], [], []>} : vector<12x36xbf16>, vector<36x128xbf16>, vector<12x128xf32> -> vector<12x128xf32>
    %c1_56 = arith.constant 1 : index
    %c0_57 = arith.constant 0 : index
    %c0_58 = arith.constant 0 : index
    %59 = vector.load %arg14[%c1_56, %c0_57, %c0_58] : memref<3x12x36xbf16, #tpu.memory_space<vmem>>, vector<1x12x36xbf16>
    %60 = vector.shape_cast %59 : vector<1x12x36xbf16> to vector<12x36xbf16>
    %cst_59 = arith.constant dense<0.000000e+00> : vector<12x128xf32>
    %61 = tpu.matmul %60, %55, %cst_59 {dimension_numbers = #tpu.dot_dimension_numbers<[1], [0], [0], [1], [0, 0, 1, 1], [], []>} : vector<12x36xbf16>, vector<36x128xbf16>, vector<12x128xf32> -> vector<12x128xf32>
    %c2_60 = arith.constant 2 : index
    %c0_61 = arith.constant 0 : index
    %c0_62 = arith.constant 0 : index
    %62 = vector.load %arg14[%c2_60, %c0_61, %c0_62] : memref<3x12x36xbf16, #tpu.memory_space<vmem>>, vector<1x12x36xbf16>
    %63 = vector.shape_cast %62 : vector<1x12x36xbf16> to vector<12x36xbf16>
    %cst_63 = arith.constant dense<0.000000e+00> : vector<12x128xf32>
    %64 = tpu.matmul %63, %55, %cst_63 {dimension_numbers = #tpu.dot_dimension_numbers<[1], [0], [0], [1], [0, 0, 1, 1], [], []>} : vector<12x36xbf16>, vector<36x128xbf16>, vector<12x128xf32> -> vector<12x128xf32>
    %65 = arith.maximumf %58, %61 : vector<12x128xf32>
    %66 = arith.cmpf ogt, %61, %58 : vector<12x128xf32>
    %cst_64 = arith.constant 1.000000e+00 : f32
    %cst_65 = arith.constant 0.000000e+00 : f32
    %67 = vector.broadcast %cst_64 : f32 to vector<12x128xf32>
    %68 = vector.broadcast %cst_65 : f32 to vector<12x128xf32>
    %69 = arith.select %66, %67, %68 : vector<12x128xi1>, vector<12x128xf32>
    %70 = arith.maximumf %65, %64 : vector<12x128xf32>
    %71 = arith.cmpf ogt, %64, %65 : vector<12x128xf32>
    %cst_66 = arith.constant 2.000000e+00 : f32
    %72 = vector.broadcast %cst_66 : f32 to vector<12x128xf32>
    %73 = arith.select %71, %72, %69 : vector<12x128xi1>, vector<12x128xf32>
    %c1_67 = arith.constant 1 : index
    %c0_68 = arith.constant 0 : index
    %c0_69 = arith.constant 0 : index
    %74 = vector.load %arg4[%c1_67, %c0_68, %c0_69] : memref<6x1x128xf32, #tpu.memory_space<vmem>>, vector<1x1x128xf32>
    %75 = vector.shape_cast %74 : vector<1x1x128xf32> to vector<1x128xf32>
    %76 = vector.broadcast %75 : vector<1x128xf32> to vector<12x128xf32>
    %77 = arith.mulf %70, %76 : vector<12x128xf32>
    %c1_70 = arith.constant 1 : index
    %c0_71 = arith.constant 0 : index
    %c0_72 = arith.constant 0 : index
    %78 = vector.load %arg5[%c1_70, %c0_71, %c0_72] : memref<6x1x128xf32, #tpu.memory_space<vmem>>, vector<1x1x128xf32>
    %79 = vector.shape_cast %78 : vector<1x1x128xf32> to vector<1x128xf32>
    %80 = vector.broadcast %79 : vector<1x128xf32> to vector<12x128xf32>
    %81 = arith.addf %77, %80 : vector<12x128xf32>
    %cst_73 = arith.constant 0.000000e+00 : f32
    %82 = vector.broadcast %cst_73 : f32 to vector<12x128xf32>
    %83 = arith.maximumf %81, %82 : vector<12x128xf32>
    %c1_74 = arith.constant 1 : index
    %c0_75 = arith.constant 0 : index
    %c0_76 = arith.constant 0 : index
    %84 = vector.load %arg2[%c1_74, %c0_75, %c0_76] : memref<6x384x128xbf16, #tpu.memory_space<vmem>>, vector<1x384x128xbf16>
    %85 = vector.shape_cast %84 : vector<1x384x128xbf16> to vector<384x128xbf16>
    %c1_77 = arith.constant 1 : index
    %c0_78 = arith.constant 0 : index
    %c0_79 = arith.constant 0 : index
    %86 = vector.load %arg3[%c1_77, %c0_78, %c0_79] : memref<6x1x128xf32, #tpu.memory_space<vmem>>, vector<1x1x128xf32>
    %87 = vector.shape_cast %86 : vector<1x1x128xf32> to vector<1x128xf32>
    %cst_80 = arith.constant 0.000000e+00 : f32
    %88 = vector.broadcast %cst_80 : f32 to vector<1x128xf32>
    %c0_81 = arith.constant 0 : index
    %c0_82 = arith.constant 0 : index
    %89 = vector.load %arg19[%c0_81, %c0_82] : memref<38x128xf32, #tpu.memory_space<vmem>>, vector<1x128xf32>
    tpu.vector_store %arg19[%c0_81, %c0_82], %88 {strides = array<i32>} : memref<38x128xf32, #tpu.memory_space<vmem>>, vector<1x128xf32>,
    %c1_83 = arith.constant 1 : index
    %c0_84 = arith.constant 0 : index
    %90 = vector.load %arg19[%c1_83, %c0_84] : memref<38x128xf32, #tpu.memory_space<vmem>>, vector<12x128xf32>
    tpu.vector_store %arg19[%c1_83, %c0_84], %83 {strides = array<i32>} : memref<38x128xf32, #tpu.memory_space<vmem>>, vector<12x128xf32>,
    %c13 = arith.constant 13 : index
    %c0_85 = arith.constant 0 : index
    %91 = vector.load %arg19[%c13, %c0_85] : memref<38x128xf32, #tpu.memory_space<vmem>>, vector<1x128xf32>
    tpu.vector_store %arg19[%c13, %c0_85], %88 {strides = array<i32>} : memref<38x128xf32, #tpu.memory_space<vmem>>, vector<1x128xf32>,
    %c0_86 = arith.constant 0 : index
    %c0_87 = arith.constant 0 : index
    %92 = vector.load %arg19[%c0_86, %c0_87] : memref<38x128xf32, #tpu.memory_space<vmem>>, vector<12x128xf32>
    %c1_88 = arith.constant 1 : index
    %c0_89 = arith.constant 0 : index
    %93 = vector.load %arg19[%c1_88, %c0_89] : memref<38x128xf32, #tpu.memory_space<vmem>>, vector<12x128xf32>
    %c2_90 = arith.constant 2 : index
    %c0_91 = arith.constant 0 : index
    %94 = vector.load %arg19[%c2_90, %c0_91] : memref<38x128xf32, #tpu.memory_space<vmem>>, vector<12x128xf32>
    %95 = tpu.concatenate %92, %93, %94 in 1 : vector<12x128xf32>, vector<12x128xf32>, vector<12x128xf32> -> vector<12x384xf32>
    %96 = arith.truncf %95 : vector<12x384xf32> to vector<12x384xbf16>
    %cst_92 = arith.constant dense<0.000000e+00> : vector<12x128xf32>
    %97 = tpu.matmul %96, %85, %cst_92 {dimension_numbers = #tpu.dot_dimension_numbers<[1], [0], [0], [1], [0, 0, 1, 1], [], []>} : vector<12x384xbf16>, vector<384x128xbf16>, vector<12x128xf32> -> vector<12x128xf32>
    %98 = vector.broadcast %87 : vector<1x128xf32> to vector<12x128xf32>
    %99 = arith.addf %97, %98 : vector<12x128xf32>
    %c1_93 = arith.constant 1 : index
    %c0_94 = arith.constant 0 : index
    %c0_95 = arith.constant 0 : index
    %100 = vector.load %arg8[%c1_93, %c0_94, %c0_95] : memref<6x1x128xf32, #tpu.memory_space<vmem>>, vector<1x1x128xf32>
    %101 = vector.shape_cast %100 : vector<1x1x128xf32> to vector<1x128xf32>
    %102 = vector.broadcast %101 : vector<1x128xf32> to vector<12x128xf32>
    %103 = arith.mulf %99, %102 : vector<12x128xf32>
    %c1_96 = arith.constant 1 : index
    %c0_97 = arith.constant 0 : index
    %c0_98 = arith.constant 0 : index
    %104 = vector.load %arg9[%c1_96, %c0_97, %c0_98] : memref<6x1x128xf32, #tpu.memory_space<vmem>>, vector<1x1x128xf32>
    %105 = vector.shape_cast %104 : vector<1x1x128xf32> to vector<1x128xf32>
    %106 = vector.broadcast %105 : vector<1x128xf32> to vector<12x128xf32>
    %107 = arith.addf %103, %106 : vector<12x128xf32>
    %cst_99 = arith.constant 0.000000e+00 : f32
    %108 = vector.broadcast %cst_99 : f32 to vector<12x128xf32>
    %109 = arith.maximumf %107, %108 : vector<12x128xf32>
    %c1_100 = arith.constant 1 : index
    %c0_101 = arith.constant 0 : index
    %c0_102 = arith.constant 0 : index
    %110 = vector.load %arg6[%c1_100, %c0_101, %c0_102] : memref<6x384x128xbf16, #tpu.memory_space<vmem>>, vector<1x384x128xbf16>
    %111 = vector.shape_cast %110 : vector<1x384x128xbf16> to vector<384x128xbf16>
    %c1_103 = arith.constant 1 : index
    %c0_104 = arith.constant 0 : index
    %c0_105 = arith.constant 0 : index
    %112 = vector.load %arg7[%c1_103, %c0_104, %c0_105] : memref<6x1x128xf32, #tpu.memory_space<vmem>>, vector<1x1x128xf32>
    %113 = vector.shape_cast %112 : vector<1x1x128xf32> to vector<1x128xf32>
    %cst_106 = arith.constant 0.000000e+00 : f32
    %114 = vector.broadcast %cst_106 : f32 to vector<1x128xf32>
    %c0_107 = arith.constant 0 : index
    %c0_108 = arith.constant 0 : index
    %115 = vector.load %arg19[%c0_107, %c0_108] : memref<38x128xf32, #tpu.memory_space<vmem>>, vector<1x128xf32>
    tpu.vector_store %arg19[%c0_107, %c0_108], %114 {strides = array<i32>} : memref<38x128xf32, #tpu.memory_space<vmem>>, vector<1x128xf32>,
    %c1_109 = arith.constant 1 : index
    %c0_110 = arith.constant 0 : index
    %116 = vector.load %arg19[%c1_109, %c0_110] : memref<38x128xf32, #tpu.memory_space<vmem>>, vector<12x128xf32>
    tpu.vector_store %arg19[%c1_109, %c0_110], %109 {strides = array<i32>} : memref<38x128xf32, #tpu.memory_space<vmem>>, vector<12x128xf32>,
    %c13_111 = arith.constant 13 : index
    %c0_112 = arith.constant 0 : index
    %117 = vector.load %arg19[%c13_111, %c0_112] : memref<38x128xf32, #tpu.memory_space<vmem>>, vector<1x128xf32>
    tpu.vector_store %arg19[%c13_111, %c0_112], %114 {strides = array<i32>} : memref<38x128xf32, #tpu.memory_space<vmem>>, vector<1x128xf32>,
    %c0_113 = arith.constant 0 : index
    %c0_114 = arith.constant 0 : index
    %118 = vector.load %arg19[%c0_113, %c0_114] : memref<38x128xf32, #tpu.memory_space<vmem>>, vector<12x128xf32>
    %c1_115 = arith.constant 1 : index
    %c0_116 = arith.constant 0 : index
    %119 = vector.load %arg19[%c1_115, %c0_116] : memref<38x128xf32, #tpu.memory_space<vmem>>, vector<12x128xf32>
    %c2_117 = arith.constant 2 : index
    %c0_118 = arith.constant 0 : index
    %120 = vector.load %arg19[%c2_117, %c0_118] : memref<38x128xf32, #tpu.memory_space<vmem>>, vector<12x128xf32>
    %121 = tpu.concatenate %118, %119, %120 in 1 : vector<12x128xf32>, vector<12x128xf32>, vector<12x128xf32> -> vector<12x384xf32>
    %122 = arith.truncf %121 : vector<12x384xf32> to vector<12x384xbf16>
    %cst_119 = arith.constant dense<0.000000e+00> : vector<12x128xf32>
    %123 = tpu.matmul %122, %111, %cst_119 {dimension_numbers = #tpu.dot_dimension_numbers<[1], [0], [0], [1], [0, 0, 1, 1], [], []>} : vector<12x384xbf16>, vector<384x128xbf16>, vector<12x128xf32> -> vector<12x128xf32>
    %124 = vector.broadcast %113 : vector<1x128xf32> to vector<12x128xf32>
    %125 = arith.addf %123, %124 : vector<12x128xf32>
    %126 = arith.addf %70, %125 : vector<12x128xf32>
    %c2_120 = arith.constant 2 : index
    %c0_121 = arith.constant 0 : index
    %c0_122 = arith.constant 0 : index
    %127 = vector.load %arg4[%c2_120, %c0_121, %c0_122] : memref<6x1x128xf32, #tpu.memory_space<vmem>>, vector<1x1x128xf32>
    %128 = vector.shape_cast %127 : vector<1x1x128xf32> to vector<1x128xf32>
    %129 = vector.broadcast %128 : vector<1x128xf32> to vector<12x128xf32>
    %130 = arith.mulf %126, %129 : vector<12x128xf32>
    %c2_123 = arith.constant 2 : index
    %c0_124 = arith.constant 0 : index
    %c0_125 = arith.constant 0 : index
    %131 = vector.load %arg5[%c2_123, %c0_124, %c0_125] : memref<6x1x128xf32, #tpu.memory_space<vmem>>, vector<1x1x128xf32>
    %132 = vector.shape_cast %131 : vector<1x1x128xf32> to vector<1x128xf32>
    %133 = vector.broadcast %132 : vector<1x128xf32> to vector<12x128xf32>
    %134 = arith.addf %130, %133 : vector<12x128xf32>
    %cst_126 = arith.constant 0.000000e+00 : f32
    %135 = vector.broadcast %cst_126 : f32 to vector<12x128xf32>
    %136 = arith.maximumf %134, %135 : vector<12x128xf32>
    %c2_127 = arith.constant 2 : index
    %c0_128 = arith.constant 0 : index
    %c0_129 = arith.constant 0 : index
    %137 = vector.load %arg2[%c2_127, %c0_128, %c0_129] : memref<6x384x128xbf16, #tpu.memory_space<vmem>>, vector<1x384x128xbf16>
    %138 = vector.shape_cast %137 : vector<1x384x128xbf16> to vector<384x128xbf16>
    %c2_130 = arith.constant 2 : index
    %c0_131 = arith.constant 0 : index
    %c0_132 = arith.constant 0 : index
    %139 = vector.load %arg3[%c2_130, %c0_131, %c0_132] : memref<6x1x128xf32, #tpu.memory_space<vmem>>, vector<1x1x128xf32>
    %140 = vector.shape_cast %139 : vector<1x1x128xf32> to vector<1x128xf32>
    %cst_133 = arith.constant 0.000000e+00 : f32
    %141 = vector.broadcast %cst_133 : f32 to vector<1x128xf32>
    %c0_134 = arith.constant 0 : index
    %c0_135 = arith.constant 0 : index
    %142 = vector.load %arg19[%c0_134, %c0_135] : memref<38x128xf32, #tpu.memory_space<vmem>>, vector<1x128xf32>
    tpu.vector_store %arg19[%c0_134, %c0_135], %141 {strides = array<i32>} : memref<38x128xf32, #tpu.memory_space<vmem>>, vector<1x128xf32>,
    %c1_136 = arith.constant 1 : index
    %c0_137 = arith.constant 0 : index
    %143 = vector.load %arg19[%c1_136, %c0_137] : memref<38x128xf32, #tpu.memory_space<vmem>>, vector<12x128xf32>
    tpu.vector_store %arg19[%c1_136, %c0_137], %136 {strides = array<i32>} : memref<38x128xf32, #tpu.memory_space<vmem>>, vector<12x128xf32>,
    %c13_138 = arith.constant 13 : index
    %c0_139 = arith.constant 0 : index
    %144 = vector.load %arg19[%c13_138, %c0_139] : memref<38x128xf32, #tpu.memory_space<vmem>>, vector<1x128xf32>
    tpu.vector_store %arg19[%c13_138, %c0_139], %141 {strides = array<i32>} : memref<38x128xf32, #tpu.memory_space<vmem>>, vector<1x128xf32>,
    %c0_140 = arith.constant 0 : index
    %c0_141 = arith.constant 0 : index
    %145 = vector.load %arg19[%c0_140, %c0_141] : memref<38x128xf32, #tpu.memory_space<vmem>>, vector<12x128xf32>
    %c1_142 = arith.constant 1 : index
    %c0_143 = arith.constant 0 : index
    %146 = vector.load %arg19[%c1_142, %c0_143] : memref<38x128xf32, #tpu.memory_space<vmem>>, vector<12x128xf32>
    %c2_144 = arith.constant 2 : index
    %c0_145 = arith.constant 0 : index
    %147 = vector.load %arg19[%c2_144, %c0_145] : memref<38x128xf32, #tpu.memory_space<vmem>>, vector<12x128xf32>
    %148 = tpu.concatenate %145, %146, %147 in 1 : vector<12x128xf32>, vector<12x128xf32>, vector<12x128xf32> -> vector<12x384xf32>
    %149 = arith.truncf %148 : vector<12x384xf32> to vector<12x384xbf16>
    %cst_146 = arith.constant dense<0.000000e+00> : vector<12x128xf32>
    %150 = tpu.matmul %149, %138, %cst_146 {dimension_numbers = #tpu.dot_dimension_numbers<[1], [0], [0], [1], [0, 0, 1, 1], [], []>} : vector<12x384xbf16>, vector<384x128xbf16>, vector<12x128xf32> -> vector<12x128xf32>
    %151 = vector.broadcast %140 : vector<1x128xf32> to vector<12x128xf32>
    %152 = arith.addf %150, %151 : vector<12x128xf32>
    %c2_147 = arith.constant 2 : index
    %c0_148 = arith.constant 0 : index
    %c0_149 = arith.constant 0 : index
    %153 = vector.load %arg8[%c2_147, %c0_148, %c0_149] : memref<6x1x128xf32, #tpu.memory_space<vmem>>, vector<1x1x128xf32>
    %154 = vector.shape_cast %153 : vector<1x1x128xf32> to vector<1x128xf32>
    %155 = vector.broadcast %154 : vector<1x128xf32> to vector<12x128xf32>
    %156 = arith.mulf %152, %155 : vector<12x128xf32>
    %c2_150 = arith.constant 2 : index
    %c0_151 = arith.constant 0 : index
    %c0_152 = arith.constant 0 : index
    %157 = vector.load %arg9[%c2_150, %c0_151, %c0_152] : memref<6x1x128xf32, #tpu.memory_space<vmem>>, vector<1x1x128xf32>
    %158 = vector.shape_cast %157 : vector<1x1x128xf32> to vector<1x128xf32>
    %159 = vector.broadcast %158 : vector<1x128xf32> to vector<12x128xf32>
    %160 = arith.addf %156, %159 : vector<12x128xf32>
    %cst_153 = arith.constant 0.000000e+00 : f32
    %161 = vector.broadcast %cst_153 : f32 to vector<12x128xf32>
    %162 = arith.maximumf %160, %161 : vector<12x128xf32>
    %c2_154 = arith.constant 2 : index
    %c0_155 = arith.constant 0 : index
    %c0_156 = arith.constant 0 : index
    %163 = vector.load %arg6[%c2_154, %c0_155, %c0_156] : memref<6x384x128xbf16, #tpu.memory_space<vmem>>, vector<1x384x128xbf16>
    %164 = vector.shape_cast %163 : vector<1x384x128xbf16> to vector<384x128xbf16>
    %c2_157 = arith.constant 2 : index
    %c0_158 = arith.constant 0 : index
    %c0_159 = arith.constant 0 : index
    %165 = vector.load %arg7[%c2_157, %c0_158, %c0_159] : memref<6x1x128xf32, #tpu.memory_space<vmem>>, vector<1x1x128xf32>
    %166 = vector.shape_cast %165 : vector<1x1x128xf32> to vector<1x128xf32>
    %cst_160 = arith.constant 0.000000e+00 : f32
    %167 = vector.broadcast %cst_160 : f32 to vector<1x128xf32>
    %c0_161 = arith.constant 0 : index
    %c0_162 = arith.constant 0 : index
    %168 = vector.load %arg19[%c0_161, %c0_162] : memref<38x128xf32, #tpu.memory_space<vmem>>, vector<1x128xf32>
    tpu.vector_store %arg19[%c0_161, %c0_162], %167 {strides = array<i32>} : memref<38x128xf32, #tpu.memory_space<vmem>>, vector<1x128xf32>,
    %c1_163 = arith.constant 1 : index
    %c0_164 = arith.constant 0 : index
    %169 = vector.load %arg19[%c1_163, %c0_164] : memref<38x128xf32, #tpu.memory_space<vmem>>, vector<12x128xf32>
    tpu.vector_store %arg19[%c1_163, %c0_164], %162 {strides = array<i32>} : memref<38x128xf32, #tpu.memory_space<vmem>>, vector<12x128xf32>,
    %c13_165 = arith.constant 13 : index
    %c0_166 = arith.constant 0 : index
    %170 = vector.load %arg19[%c13_165, %c0_166] : memref<38x128xf32, #tpu.memory_space<vmem>>, vector<1x128xf32>
    tpu.vector_store %arg19[%c13_165, %c0_166], %167 {strides = array<i32>} : memref<38x128xf32, #tpu.memory_space<vmem>>, vector<1x128xf32>,
    %c0_167 = arith.constant 0 : index
    %c0_168 = arith.constant 0 : index
    %171 = vector.load %arg19[%c0_167, %c0_168] : memref<38x128xf32, #tpu.memory_space<vmem>>, vector<12x128xf32>
    %c1_169 = arith.constant 1 : index
    %c0_170 = arith.constant 0 : index
    %172 = vector.load %arg19[%c1_169, %c0_170] : memref<38x128xf32, #tpu.memory_space<vmem>>, vector<12x128xf32>
    %c2_171 = arith.constant 2 : index
    %c0_172 = arith.constant 0 : index
    %173 = vector.load %arg19[%c2_171, %c0_172] : memref<38x128xf32, #tpu.memory_space<vmem>>, vector<12x128xf32>
    %174 = tpu.concatenate %171, %172, %173 in 1 : vector<12x128xf32>, vector<12x128xf32>, vector<12x128xf32> -> vector<12x384xf32>
    %175 = arith.truncf %174 : vector<12x384xf32> to vector<12x384xbf16>
    %cst_173 = arith.constant dense<0.000000e+00> : vector<12x128xf32>
    %176 = tpu.matmul %175, %164, %cst_173 {dimension_numbers = #tpu.dot_dimension_numbers<[1], [0], [0], [1], [0, 0, 1, 1], [], []>} : vector<12x384xbf16>, vector<384x128xbf16>, vector<12x128xf32> -> vector<12x128xf32>
    %177 = vector.broadcast %166 : vector<1x128xf32> to vector<12x128xf32>
    %178 = arith.addf %176, %177 : vector<12x128xf32>
    %179 = arith.addf %126, %178 : vector<12x128xf32>
    %180 = arith.truncf %179 : vector<12x128xf32> to vector<12x128xbf16>
    %c0_174 = arith.constant 0 : index
    %c0_175 = arith.constant 0 : index
    %c0_176 = arith.constant 0 : index
    %181 = vector.load %arg16[%c0_174, %c0_175, %c0_176] : memref<3x4x12xbf16, #tpu.memory_space<vmem>>, vector<1x4x12xbf16>
    %182 = vector.shape_cast %181 : vector<1x4x12xbf16> to vector<4x12xbf16>
    %cst_177 = arith.constant dense<0.000000e+00> : vector<4x128xf32>
    %183 = tpu.matmul %182, %180, %cst_177 {dimension_numbers = #tpu.dot_dimension_numbers<[1], [0], [0], [1], [0, 0, 1, 1], [], []>} : vector<4x12xbf16>, vector<12x128xbf16>, vector<4x128xf32> -> vector<4x128xf32>
    %c1_178 = arith.constant 1 : index
    %c0_179 = arith.constant 0 : index
    %c0_180 = arith.constant 0 : index
    %184 = vector.load %arg16[%c1_178, %c0_179, %c0_180] : memref<3x4x12xbf16, #tpu.memory_space<vmem>>, vector<1x4x12xbf16>
    %185 = vector.shape_cast %184 : vector<1x4x12xbf16> to vector<4x12xbf16>
    %cst_181 = arith.constant dense<0.000000e+00> : vector<4x128xf32>
    %186 = tpu.matmul %185, %180, %cst_181 {dimension_numbers = #tpu.dot_dimension_numbers<[1], [0], [0], [1], [0, 0, 1, 1], [], []>} : vector<4x12xbf16>, vector<12x128xbf16>, vector<4x128xf32> -> vector<4x128xf32>
    %c2_182 = arith.constant 2 : index
    %c0_183 = arith.constant 0 : index
    %c0_184 = arith.constant 0 : index
    %187 = vector.load %arg16[%c2_182, %c0_183, %c0_184] : memref<3x4x12xbf16, #tpu.memory_space<vmem>>, vector<1x4x12xbf16>
    %188 = vector.shape_cast %187 : vector<1x4x12xbf16> to vector<4x12xbf16>
    %cst_185 = arith.constant dense<0.000000e+00> : vector<4x128xf32>
    %189 = tpu.matmul %188, %180, %cst_185 {dimension_numbers = #tpu.dot_dimension_numbers<[1], [0], [0], [1], [0, 0, 1, 1], [], []>} : vector<4x12xbf16>, vector<12x128xbf16>, vector<4x128xf32> -> vector<4x128xf32>
    %190 = arith.maximumf %183, %186 : vector<4x128xf32>
    %191 = arith.cmpf ogt, %186, %183 : vector<4x128xf32>
    %cst_186 = arith.constant 1.000000e+00 : f32
    %cst_187 = arith.constant 0.000000e+00 : f32
    %192 = vector.broadcast %cst_186 : f32 to vector<4x128xf32>
    %193 = vector.broadcast %cst_187 : f32 to vector<4x128xf32>
    %194 = arith.select %191, %192, %193 : vector<4x128xi1>, vector<4x128xf32>
    %195 = arith.maximumf %190, %189 : vector<4x128xf32>
    %196 = arith.cmpf ogt, %189, %190 : vector<4x128xf32>
    %cst_188 = arith.constant 2.000000e+00 : f32
    %197 = vector.broadcast %cst_188 : f32 to vector<4x128xf32>
    %198 = arith.select %196, %197, %194 : vector<4x128xi1>, vector<4x128xf32>
    %c3 = arith.constant 3 : index
    %c0_189 = arith.constant 0 : index
    %c0_190 = arith.constant 0 : index
    %199 = vector.load %arg4[%c3, %c0_189, %c0_190] : memref<6x1x128xf32, #tpu.memory_space<vmem>>, vector<1x1x128xf32>
    %200 = vector.shape_cast %199 : vector<1x1x128xf32> to vector<1x128xf32>
    %201 = vector.broadcast %200 : vector<1x128xf32> to vector<4x128xf32>
    %202 = arith.mulf %195, %201 : vector<4x128xf32>
    %c3_191 = arith.constant 3 : index
    %c0_192 = arith.constant 0 : index
    %c0_193 = arith.constant 0 : index
    %203 = vector.load %arg5[%c3_191, %c0_192, %c0_193] : memref<6x1x128xf32, #tpu.memory_space<vmem>>, vector<1x1x128xf32>
    %204 = vector.shape_cast %203 : vector<1x1x128xf32> to vector<1x128xf32>
    %205 = vector.broadcast %204 : vector<1x128xf32> to vector<4x128xf32>
    %206 = arith.addf %202, %205 : vector<4x128xf32>
    %cst_194 = arith.constant 0.000000e+00 : f32
    %207 = vector.broadcast %cst_194 : f32 to vector<4x128xf32>
    %208 = arith.maximumf %206, %207 : vector<4x128xf32>
    %c3_195 = arith.constant 3 : index
    %c0_196 = arith.constant 0 : index
    %c0_197 = arith.constant 0 : index
    %209 = vector.load %arg2[%c3_195, %c0_196, %c0_197] : memref<6x384x128xbf16, #tpu.memory_space<vmem>>, vector<1x384x128xbf16>
    %210 = vector.shape_cast %209 : vector<1x384x128xbf16> to vector<384x128xbf16>
    %c3_198 = arith.constant 3 : index
    %c0_199 = arith.constant 0 : index
    %c0_200 = arith.constant 0 : index
    %211 = vector.load %arg3[%c3_198, %c0_199, %c0_200] : memref<6x1x128xf32, #tpu.memory_space<vmem>>, vector<1x1x128xf32>
    %212 = vector.shape_cast %211 : vector<1x1x128xf32> to vector<1x128xf32>
    %cst_201 = arith.constant 0.000000e+00 : f32
    %213 = vector.broadcast %cst_201 : f32 to vector<1x128xf32>
    %c0_202 = arith.constant 0 : index
    %c0_203 = arith.constant 0 : index
    %214 = vector.load %arg19[%c0_202, %c0_203] : memref<38x128xf32, #tpu.memory_space<vmem>>, vector<1x128xf32>
    tpu.vector_store %arg19[%c0_202, %c0_203], %213 {strides = array<i32>} : memref<38x128xf32, #tpu.memory_space<vmem>>, vector<1x128xf32>,
    %c1_204 = arith.constant 1 : index
    %c0_205 = arith.constant 0 : index
    %215 = vector.load %arg19[%c1_204, %c0_205] : memref<38x128xf32, #tpu.memory_space<vmem>>, vector<4x128xf32>
    tpu.vector_store %arg19[%c1_204, %c0_205], %208 {strides = array<i32>} : memref<38x128xf32, #tpu.memory_space<vmem>>, vector<4x128xf32>,
    %c5 = arith.constant 5 : index
    %c0_206 = arith.constant 0 : index
    %216 = vector.load %arg19[%c5, %c0_206] : memref<38x128xf32, #tpu.memory_space<vmem>>, vector<1x128xf32>
    tpu.vector_store %arg19[%c5, %c0_206], %213 {strides = array<i32>} : memref<38x128xf32, #tpu.memory_space<vmem>>, vector<1x128xf32>,
    %c0_207 = arith.constant 0 : index
    %c0_208 = arith.constant 0 : index
    %217 = vector.load %arg19[%c0_207, %c0_208] : memref<38x128xf32, #tpu.memory_space<vmem>>, vector<4x128xf32>
    %c1_209 = arith.constant 1 : index
    %c0_210 = arith.constant 0 : index
    %218 = vector.load %arg19[%c1_209, %c0_210] : memref<38x128xf32, #tpu.memory_space<vmem>>, vector<4x128xf32>
    %c2_211 = arith.constant 2 : index
    %c0_212 = arith.constant 0 : index
    %219 = vector.load %arg19[%c2_211, %c0_212] : memref<38x128xf32, #tpu.memory_space<vmem>>, vector<4x128xf32>
    %220 = tpu.concatenate %217, %218, %219 in 1 : vector<4x128xf32>, vector<4x128xf32>, vector<4x128xf32> -> vector<4x384xf32>
    %221 = arith.truncf %220 : vector<4x384xf32> to vector<4x384xbf16>
    %cst_213 = arith.constant dense<0.000000e+00> : vector<4x128xf32>
    %222 = tpu.matmul %221, %210, %cst_213 {dimension_numbers = #tpu.dot_dimension_numbers<[1], [0], [0], [1], [0, 0, 1, 1], [], []>} : vector<4x384xbf16>, vector<384x128xbf16>, vector<4x128xf32> -> vector<4x128xf32>
    %223 = vector.broadcast %212 : vector<1x128xf32> to vector<4x128xf32>
    %224 = arith.addf %222, %223 : vector<4x128xf32>
    %c3_214 = arith.constant 3 : index
    %c0_215 = arith.constant 0 : index
    %c0_216 = arith.constant 0 : index
    %225 = vector.load %arg8[%c3_214, %c0_215, %c0_216] : memref<6x1x128xf32, #tpu.memory_space<vmem>>, vector<1x1x128xf32>
    %226 = vector.shape_cast %225 : vector<1x1x128xf32> to vector<1x128xf32>
    %227 = vector.broadcast %226 : vector<1x128xf32> to vector<4x128xf32>
    %228 = arith.mulf %224, %227 : vector<4x128xf32>
    %c3_217 = arith.constant 3 : index
    %c0_218 = arith.constant 0 : index
    %c0_219 = arith.constant 0 : index
    %229 = vector.load %arg9[%c3_217, %c0_218, %c0_219] : memref<6x1x128xf32, #tpu.memory_space<vmem>>, vector<1x1x128xf32>
    %230 = vector.shape_cast %229 : vector<1x1x128xf32> to vector<1x128xf32>
    %231 = vector.broadcast %230 : vector<1x128xf32> to vector<4x128xf32>
    %232 = arith.addf %228, %231 : vector<4x128xf32>
    %cst_220 = arith.constant 0.000000e+00 : f32
    %233 = vector.broadcast %cst_220 : f32 to vector<4x128xf32>
    %234 = arith.maximumf %232, %233 : vector<4x128xf32>
    %c3_221 = arith.constant 3 : index
    %c0_222 = arith.constant 0 : index
    %c0_223 = arith.constant 0 : index
    %235 = vector.load %arg6[%c3_221, %c0_222, %c0_223] : memref<6x384x128xbf16, #tpu.memory_space<vmem>>, vector<1x384x128xbf16>
    %236 = vector.shape_cast %235 : vector<1x384x128xbf16> to vector<384x128xbf16>
    %c3_224 = arith.constant 3 : index
    %c0_225 = arith.constant 0 : index
    %c0_226 = arith.constant 0 : index
    %237 = vector.load %arg7[%c3_224, %c0_225, %c0_226] : memref<6x1x128xf32, #tpu.memory_space<vmem>>, vector<1x1x128xf32>
    %238 = vector.shape_cast %237 : vector<1x1x128xf32> to vector<1x128xf32>
    %cst_227 = arith.constant 0.000000e+00 : f32
    %239 = vector.broadcast %cst_227 : f32 to vector<1x128xf32>
    %c0_228 = arith.constant 0 : index
    %c0_229 = arith.constant 0 : index
    %240 = vector.load %arg19[%c0_228, %c0_229] : memref<38x128xf32, #tpu.memory_space<vmem>>, vector<1x128xf32>
    tpu.vector_store %arg19[%c0_228, %c0_229], %239 {strides = array<i32>} : memref<38x128xf32, #tpu.memory_space<vmem>>, vector<1x128xf32>,
    %c1_230 = arith.constant 1 : index
    %c0_231 = arith.constant 0 : index
    %241 = vector.load %arg19[%c1_230, %c0_231] : memref<38x128xf32, #tpu.memory_space<vmem>>, vector<4x128xf32>
    tpu.vector_store %arg19[%c1_230, %c0_231], %234 {strides = array<i32>} : memref<38x128xf32, #tpu.memory_space<vmem>>, vector<4x128xf32>,
    %c5_232 = arith.constant 5 : index
    %c0_233 = arith.constant 0 : index
    %242 = vector.load %arg19[%c5_232, %c0_233] : memref<38x128xf32, #tpu.memory_space<vmem>>, vector<1x128xf32>
    tpu.vector_store %arg19[%c5_232, %c0_233], %239 {strides = array<i32>} : memref<38x128xf32, #tpu.memory_space<vmem>>, vector<1x128xf32>,
    %c0_234 = arith.constant 0 : index
    %c0_235 = arith.constant 0 : index
    %243 = vector.load %arg19[%c0_234, %c0_235] : memref<38x128xf32, #tpu.memory_space<vmem>>, vector<4x128xf32>
    %c1_236 = arith.constant 1 : index
    %c0_237 = arith.constant 0 : index
    %244 = vector.load %arg19[%c1_236, %c0_237] : memref<38x128xf32, #tpu.memory_space<vmem>>, vector<4x128xf32>
    %c2_238 = arith.constant 2 : index
    %c0_239 = arith.constant 0 : index
    %245 = vector.load %arg19[%c2_238, %c0_239] : memref<38x128xf32, #tpu.memory_space<vmem>>, vector<4x128xf32>
    %246 = tpu.concatenate %243, %244, %245 in 1 : vector<4x128xf32>, vector<4x128xf32>, vector<4x128xf32> -> vector<4x384xf32>
    %247 = arith.truncf %246 : vector<4x384xf32> to vector<4x384xbf16>
    %cst_240 = arith.constant dense<0.000000e+00> : vector<4x128xf32>
    %248 = tpu.matmul %247, %236, %cst_240 {dimension_numbers = #tpu.dot_dimension_numbers<[1], [0], [0], [1], [0, 0, 1, 1], [], []>} : vector<4x384xbf16>, vector<384x128xbf16>, vector<4x128xf32> -> vector<4x128xf32>
    %249 = vector.broadcast %238 : vector<1x128xf32> to vector<4x128xf32>
    %250 = arith.addf %248, %249 : vector<4x128xf32>
    %251 = arith.addf %195, %250 : vector<4x128xf32>
    %c4 = arith.constant 4 : index
    %c0_241 = arith.constant 0 : index
    %c0_242 = arith.constant 0 : index
    %252 = vector.load %arg4[%c4, %c0_241, %c0_242] : memref<6x1x128xf32, #tpu.memory_space<vmem>>, vector<1x1x128xf32>
    %253 = vector.shape_cast %252 : vector<1x1x128xf32> to vector<1x128xf32>
    %254 = vector.broadcast %253 : vector<1x128xf32> to vector<4x128xf32>
    %255 = arith.mulf %251, %254 : vector<4x128xf32>
    %c4_243 = arith.constant 4 : index
    %c0_244 = arith.constant 0 : index
    %c0_245 = arith.constant 0 : index
    %256 = vector.load %arg5[%c4_243, %c0_244, %c0_245] : memref<6x1x128xf32, #tpu.memory_space<vmem>>, vector<1x1x128xf32>
    %257 = vector.shape_cast %256 : vector<1x1x128xf32> to vector<1x128xf32>
    %258 = vector.broadcast %257 : vector<1x128xf32> to vector<4x128xf32>
    %259 = arith.addf %255, %258 : vector<4x128xf32>
    %cst_246 = arith.constant 0.000000e+00 : f32
    %260 = vector.broadcast %cst_246 : f32 to vector<4x128xf32>
    %261 = arith.maximumf %259, %260 : vector<4x128xf32>
    %c4_247 = arith.constant 4 : index
    %c0_248 = arith.constant 0 : index
    %c0_249 = arith.constant 0 : index
    %262 = vector.load %arg2[%c4_247, %c0_248, %c0_249] : memref<6x384x128xbf16, #tpu.memory_space<vmem>>, vector<1x384x128xbf16>
    %263 = vector.shape_cast %262 : vector<1x384x128xbf16> to vector<384x128xbf16>
    %c4_250 = arith.constant 4 : index
    %c0_251 = arith.constant 0 : index
    %c0_252 = arith.constant 0 : index
    %264 = vector.load %arg3[%c4_250, %c0_251, %c0_252] : memref<6x1x128xf32, #tpu.memory_space<vmem>>, vector<1x1x128xf32>
    %265 = vector.shape_cast %264 : vector<1x1x128xf32> to vector<1x128xf32>
    %cst_253 = arith.constant 0.000000e+00 : f32
    %266 = vector.broadcast %cst_253 : f32 to vector<1x128xf32>
    %c0_254 = arith.constant 0 : index
    %c0_255 = arith.constant 0 : index
    %267 = vector.load %arg19[%c0_254, %c0_255] : memref<38x128xf32, #tpu.memory_space<vmem>>, vector<1x128xf32>
    tpu.vector_store %arg19[%c0_254, %c0_255], %266 {strides = array<i32>} : memref<38x128xf32, #tpu.memory_space<vmem>>, vector<1x128xf32>,
    %c1_256 = arith.constant 1 : index
    %c0_257 = arith.constant 0 : index
    %268 = vector.load %arg19[%c1_256, %c0_257] : memref<38x128xf32, #tpu.memory_space<vmem>>, vector<4x128xf32>
    tpu.vector_store %arg19[%c1_256, %c0_257], %261 {strides = array<i32>} : memref<38x128xf32, #tpu.memory_space<vmem>>, vector<4x128xf32>,
    %c5_258 = arith.constant 5 : index
    %c0_259 = arith.constant 0 : index
    %269 = vector.load %arg19[%c5_258, %c0_259] : memref<38x128xf32, #tpu.memory_space<vmem>>, vector<1x128xf32>
    tpu.vector_store %arg19[%c5_258, %c0_259], %266 {strides = array<i32>} : memref<38x128xf32, #tpu.memory_space<vmem>>, vector<1x128xf32>,
    %c0_260 = arith.constant 0 : index
    %c0_261 = arith.constant 0 : index
    %270 = vector.load %arg19[%c0_260, %c0_261] : memref<38x128xf32, #tpu.memory_space<vmem>>, vector<4x128xf32>
    %c1_262 = arith.constant 1 : index
    %c0_263 = arith.constant 0 : index
    %271 = vector.load %arg19[%c1_262, %c0_263] : memref<38x128xf32, #tpu.memory_space<vmem>>, vector<4x128xf32>
    %c2_264 = arith.constant 2 : index
    %c0_265 = arith.constant 0 : index
    %272 = vector.load %arg19[%c2_264, %c0_265] : memref<38x128xf32, #tpu.memory_space<vmem>>, vector<4x128xf32>
    %273 = tpu.concatenate %270, %271, %272 in 1 : vector<4x128xf32>, vector<4x128xf32>, vector<4x128xf32> -> vector<4x384xf32>
    %274 = arith.truncf %273 : vector<4x384xf32> to vector<4x384xbf16>
    %cst_266 = arith.constant dense<0.000000e+00> : vector<4x128xf32>
    %275 = tpu.matmul %274, %263, %cst_266 {dimension_numbers = #tpu.dot_dimension_numbers<[1], [0], [0], [1], [0, 0, 1, 1], [], []>} : vector<4x384xbf16>, vector<384x128xbf16>, vector<4x128xf32> -> vector<4x128xf32>
    %276 = vector.broadcast %265 : vector<1x128xf32> to vector<4x128xf32>
    %277 = arith.addf %275, %276 : vector<4x128xf32>
    %c4_267 = arith.constant 4 : index
    %c0_268 = arith.constant 0 : index
    %c0_269 = arith.constant 0 : index
    %278 = vector.load %arg8[%c4_267, %c0_268, %c0_269] : memref<6x1x128xf32, #tpu.memory_space<vmem>>, vector<1x1x128xf32>
    %279 = vector.shape_cast %278 : vector<1x1x128xf32> to vector<1x128xf32>
    %280 = vector.broadcast %279 : vector<1x128xf32> to vector<4x128xf32>
    %281 = arith.mulf %277, %280 : vector<4x128xf32>
    %c4_270 = arith.constant 4 : index
    %c0_271 = arith.constant 0 : index
    %c0_272 = arith.constant 0 : index
    %282 = vector.load %arg9[%c4_270, %c0_271, %c0_272] : memref<6x1x128xf32, #tpu.memory_space<vmem>>, vector<1x1x128xf32>
    %283 = vector.shape_cast %282 : vector<1x1x128xf32> to vector<1x128xf32>
    %284 = vector.broadcast %283 : vector<1x128xf32> to vector<4x128xf32>
    %285 = arith.addf %281, %284 : vector<4x128xf32>
    %cst_273 = arith.constant 0.000000e+00 : f32
    %286 = vector.broadcast %cst_273 : f32 to vector<4x128xf32>
    %287 = arith.maximumf %285, %286 : vector<4x128xf32>
    %c4_274 = arith.constant 4 : index
    %c0_275 = arith.constant 0 : index
    %c0_276 = arith.constant 0 : index
    %288 = vector.load %arg6[%c4_274, %c0_275, %c0_276] : memref<6x384x128xbf16, #tpu.memory_space<vmem>>, vector<1x384x128xbf16>
    %289 = vector.shape_cast %288 : vector<1x384x128xbf16> to vector<384x128xbf16>
    %c4_277 = arith.constant 4 : index
    %c0_278 = arith.constant 0 : index
    %c0_279 = arith.constant 0 : index
    %290 = vector.load %arg7[%c4_277, %c0_278, %c0_279] : memref<6x1x128xf32, #tpu.memory_space<vmem>>, vector<1x1x128xf32>
    %291 = vector.shape_cast %290 : vector<1x1x128xf32> to vector<1x128xf32>
    %cst_280 = arith.constant 0.000000e+00 : f32
    %292 = vector.broadcast %cst_280 : f32 to vector<1x128xf32>
    %c0_281 = arith.constant 0 : index
    %c0_282 = arith.constant 0 : index
    %293 = vector.load %arg19[%c0_281, %c0_282] : memref<38x128xf32, #tpu.memory_space<vmem>>, vector<1x128xf32>
    tpu.vector_store %arg19[%c0_281, %c0_282], %292 {strides = array<i32>} : memref<38x128xf32, #tpu.memory_space<vmem>>, vector<1x128xf32>,
    %c1_283 = arith.constant 1 : index
    %c0_284 = arith.constant 0 : index
    %294 = vector.load %arg19[%c1_283, %c0_284] : memref<38x128xf32, #tpu.memory_space<vmem>>, vector<4x128xf32>
    tpu.vector_store %arg19[%c1_283, %c0_284], %287 {strides = array<i32>} : memref<38x128xf32, #tpu.memory_space<vmem>>, vector<4x128xf32>,
    %c5_285 = arith.constant 5 : index
    %c0_286 = arith.constant 0 : index
    %295 = vector.load %arg19[%c5_285, %c0_286] : memref<38x128xf32, #tpu.memory_space<vmem>>, vector<1x128xf32>
    tpu.vector_store %arg19[%c5_285, %c0_286], %292 {strides = array<i32>} : memref<38x128xf32, #tpu.memory_space<vmem>>, vector<1x128xf32>,
    %c0_287 = arith.constant 0 : index
    %c0_288 = arith.constant 0 : index
    %296 = vector.load %arg19[%c0_287, %c0_288] : memref<38x128xf32, #tpu.memory_space<vmem>>, vector<4x128xf32>
    %c1_289 = arith.constant 1 : index
    %c0_290 = arith.constant 0 : index
    %297 = vector.load %arg19[%c1_289, %c0_290] : memref<38x128xf32, #tpu.memory_space<vmem>>, vector<4x128xf32>
    %c2_291 = arith.constant 2 : index
    %c0_292 = arith.constant 0 : index
    %298 = vector.load %arg19[%c2_291, %c0_292] : memref<38x128xf32, #tpu.memory_space<vmem>>, vector<4x128xf32>
    %299 = tpu.concatenate %296, %297, %298 in 1 : vector<4x128xf32>, vector<4x128xf32>, vector<4x128xf32> -> vector<4x384xf32>
    %300 = arith.truncf %299 : vector<4x384xf32> to vector<4x384xbf16>
    %cst_293 = arith.constant dense<0.000000e+00> : vector<4x128xf32>
    %301 = tpu.matmul %300, %289, %cst_293 {dimension_numbers = #tpu.dot_dimension_numbers<[1], [0], [0], [1], [0, 0, 1, 1], [], []>} : vector<4x384xbf16>, vector<384x128xbf16>, vector<4x128xf32> -> vector<4x128xf32>
    %302 = vector.broadcast %291 : vector<1x128xf32> to vector<4x128xf32>
    %303 = arith.addf %301, %302 : vector<4x128xf32>
    %304 = arith.addf %251, %303 : vector<4x128xf32>
    %cst_294 = arith.constant 0.000000e+00 : f32
    %305 = vector.broadcast %cst_294 : f32 to vector<4x128xf32>
    %306 = arith.cmpf oeq, %198, %305 : vector<4x128xf32>
    %cst_295 = arith.constant 0.000000e+00 : f32
    %307 = vector.broadcast %cst_295 : f32 to vector<4x128xf32>
    %308 = arith.select %306, %304, %307 : vector<4x128xi1>, vector<4x128xf32>
    %309 = arith.truncf %308 : vector<4x128xf32> to vector<4x128xbf16>
    %c0_296 = arith.constant 0 : index
    %c0_297 = arith.constant 0 : index
    %c0_298 = arith.constant 0 : index
    %310 = vector.load %arg17[%c0_296, %c0_297, %c0_298] : memref<3x12x4xbf16, #tpu.memory_space<vmem>>, vector<1x12x4xbf16>
    %311 = vector.shape_cast %310 : vector<1x12x4xbf16> to vector<12x4xbf16>
    %cst_299 = arith.constant dense<0.000000e+00> : vector<12x128xf32>
    %312 = tpu.matmul %311, %309, %cst_299 {dimension_numbers = #tpu.dot_dimension_numbers<[1], [0], [0], [1], [0, 0, 1, 1], [], []>} : vector<12x4xbf16>, vector<4x128xbf16>, vector<12x128xf32> -> vector<12x128xf32>
    %cst_300 = arith.constant 1.000000e+00 : f32
    %313 = vector.broadcast %cst_300 : f32 to vector<4x128xf32>
    %314 = arith.cmpf oeq, %198, %313 : vector<4x128xf32>
    %cst_301 = arith.constant 0.000000e+00 : f32
    %315 = vector.broadcast %cst_301 : f32 to vector<4x128xf32>
    %316 = arith.select %314, %304, %315 : vector<4x128xi1>, vector<4x128xf32>
    %317 = arith.truncf %316 : vector<4x128xf32> to vector<4x128xbf16>
    %c1_302 = arith.constant 1 : index
    %c0_303 = arith.constant 0 : index
    %c0_304 = arith.constant 0 : index
    %318 = vector.load %arg17[%c1_302, %c0_303, %c0_304] : memref<3x12x4xbf16, #tpu.memory_space<vmem>>, vector<1x12x4xbf16>
    %319 = vector.shape_cast %318 : vector<1x12x4xbf16> to vector<12x4xbf16>
    %cst_305 = arith.constant dense<0.000000e+00> : vector<12x128xf32>
    %320 = tpu.matmul %319, %317, %cst_305 {dimension_numbers = #tpu.dot_dimension_numbers<[1], [0], [0], [1], [0, 0, 1, 1], [], []>} : vector<12x4xbf16>, vector<4x128xbf16>, vector<12x128xf32> -> vector<12x128xf32>
    %321 = arith.addf %312, %320 : vector<12x128xf32>
    %cst_306 = arith.constant 2.000000e+00 : f32
    %322 = vector.broadcast %cst_306 : f32 to vector<4x128xf32>
    %323 = arith.cmpf oeq, %198, %322 : vector<4x128xf32>
    %cst_307 = arith.constant 0.000000e+00 : f32
    %324 = vector.broadcast %cst_307 : f32 to vector<4x128xf32>
    %325 = arith.select %323, %304, %324 : vector<4x128xi1>, vector<4x128xf32>
    %326 = arith.truncf %325 : vector<4x128xf32> to vector<4x128xbf16>
    %c2_308 = arith.constant 2 : index
    %c0_309 = arith.constant 0 : index
    %c0_310 = arith.constant 0 : index
    %327 = vector.load %arg17[%c2_308, %c0_309, %c0_310] : memref<3x12x4xbf16, #tpu.memory_space<vmem>>, vector<1x12x4xbf16>
    %328 = vector.shape_cast %327 : vector<1x12x4xbf16> to vector<12x4xbf16>
    %cst_311 = arith.constant dense<0.000000e+00> : vector<12x128xf32>
    %329 = tpu.matmul %328, %326, %cst_311 {dimension_numbers = #tpu.dot_dimension_numbers<[1], [0], [0], [1], [0, 0, 1, 1], [], []>} : vector<12x4xbf16>, vector<4x128xbf16>, vector<12x128xf32> -> vector<12x128xf32>
    %330 = arith.addf %321, %329 : vector<12x128xf32>
    %331 = arith.addf %330, %70 : vector<12x128xf32>
    %c5_312 = arith.constant 5 : index
    %c0_313 = arith.constant 0 : index
    %c0_314 = arith.constant 0 : index
    %332 = vector.load %arg4[%c5_312, %c0_313, %c0_314] : memref<6x1x128xf32, #tpu.memory_space<vmem>>, vector<1x1x128xf32>
    %333 = vector.shape_cast %332 : vector<1x1x128xf32> to vector<1x128xf32>
    %334 = vector.broadcast %333 : vector<1x128xf32> to vector<12x128xf32>
    %335 = arith.mulf %331, %334 : vector<12x128xf32>
    %c5_315 = arith.constant 5 : index
    %c0_316 = arith.constant 0 : index
    %c0_317 = arith.constant 0 : index
    %336 = vector.load %arg5[%c5_315, %c0_316, %c0_317] : memref<6x1x128xf32, #tpu.memory_space<vmem>>, vector<1x1x128xf32>
    %337 = vector.shape_cast %336 : vector<1x1x128xf32> to vector<1x128xf32>
    %338 = vector.broadcast %337 : vector<1x128xf32> to vector<12x128xf32>
    %339 = arith.addf %335, %338 : vector<12x128xf32>
    %cst_318 = arith.constant 0.000000e+00 : f32
    %340 = vector.broadcast %cst_318 : f32 to vector<12x128xf32>
    %341 = arith.maximumf %339, %340 : vector<12x128xf32>
    %c5_319 = arith.constant 5 : index
    %c0_320 = arith.constant 0 : index
    %c0_321 = arith.constant 0 : index
    %342 = vector.load %arg2[%c5_319, %c0_320, %c0_321] : memref<6x384x128xbf16, #tpu.memory_space<vmem>>, vector<1x384x128xbf16>
    %343 = vector.shape_cast %342 : vector<1x384x128xbf16> to vector<384x128xbf16>
    %c5_322 = arith.constant 5 : index
    %c0_323 = arith.constant 0 : index
    %c0_324 = arith.constant 0 : index
    %344 = vector.load %arg3[%c5_322, %c0_323, %c0_324] : memref<6x1x128xf32, #tpu.memory_space<vmem>>, vector<1x1x128xf32>
    %345 = vector.shape_cast %344 : vector<1x1x128xf32> to vector<1x128xf32>
    %cst_325 = arith.constant 0.000000e+00 : f32
    %346 = vector.broadcast %cst_325 : f32 to vector<1x128xf32>
    %c0_326 = arith.constant 0 : index
    %c0_327 = arith.constant 0 : index
    %347 = vector.load %arg19[%c0_326, %c0_327] : memref<38x128xf32, #tpu.memory_space<vmem>>, vector<1x128xf32>
    tpu.vector_store %arg19[%c0_326, %c0_327], %346 {strides = array<i32>} : memref<38x128xf32, #tpu.memory_space<vmem>>, vector<1x128xf32>,
    %c1_328 = arith.constant 1 : index
    %c0_329 = arith.constant 0 : index
    %348 = vector.load %arg19[%c1_328, %c0_329] : memref<38x128xf32, #tpu.memory_space<vmem>>, vector<12x128xf32>
    tpu.vector_store %arg19[%c1_328, %c0_329], %341 {strides = array<i32>} : memref<38x128xf32, #tpu.memory_space<vmem>>, vector<12x128xf32>,
    %c13_330 = arith.constant 13 : index
    %c0_331 = arith.constant 0 : index
    %349 = vector.load %arg19[%c13_330, %c0_331] : memref<38x128xf32, #tpu.memory_space<vmem>>, vector<1x128xf32>
    tpu.vector_store %arg19[%c13_330, %c0_331], %346 {strides = array<i32>} : memref<38x128xf32, #tpu.memory_space<vmem>>, vector<1x128xf32>,
    %c0_332 = arith.constant 0 : index
    %c0_333 = arith.constant 0 : index
    %350 = vector.load %arg19[%c0_332, %c0_333] : memref<38x128xf32, #tpu.memory_space<vmem>>, vector<12x128xf32>
    %c1_334 = arith.constant 1 : index
    %c0_335 = arith.constant 0 : index
    %351 = vector.load %arg19[%c1_334, %c0_335] : memref<38x128xf32, #tpu.memory_space<vmem>>, vector<12x128xf32>
    %c2_336 = arith.constant 2 : index
    %c0_337 = arith.constant 0 : index
    %352 = vector.load %arg19[%c2_336, %c0_337] : memref<38x128xf32, #tpu.memory_space<vmem>>, vector<12x128xf32>
    %353 = tpu.concatenate %350, %351, %352 in 1 : vector<12x128xf32>, vector<12x128xf32>, vector<12x128xf32> -> vector<12x384xf32>
    %354 = arith.truncf %353 : vector<12x384xf32> to vector<12x384xbf16>
    %cst_338 = arith.constant dense<0.000000e+00> : vector<12x128xf32>
    %355 = tpu.matmul %354, %343, %cst_338 {dimension_numbers = #tpu.dot_dimension_numbers<[1], [0], [0], [1], [0, 0, 1, 1], [], []>} : vector<12x384xbf16>, vector<384x128xbf16>, vector<12x128xf32> -> vector<12x128xf32>
    %356 = vector.broadcast %345 : vector<1x128xf32> to vector<12x128xf32>
    %357 = arith.addf %355, %356 : vector<12x128xf32>
    %c5_339 = arith.constant 5 : index
    %c0_340 = arith.constant 0 : index
    %c0_341 = arith.constant 0 : index
    %358 = vector.load %arg8[%c5_339, %c0_340, %c0_341] : memref<6x1x128xf32, #tpu.memory_space<vmem>>, vector<1x1x128xf32>
    %359 = vector.shape_cast %358 : vector<1x1x128xf32> to vector<1x128xf32>
    %360 = vector.broadcast %359 : vector<1x128xf32> to vector<12x128xf32>
    %361 = arith.mulf %357, %360 : vector<12x128xf32>
    %c5_342 = arith.constant 5 : index
    %c0_343 = arith.constant 0 : index
    %c0_344 = arith.constant 0 : index
    %362 = vector.load %arg9[%c5_342, %c0_343, %c0_344] : memref<6x1x128xf32, #tpu.memory_space<vmem>>, vector<1x1x128xf32>
    %363 = vector.shape_cast %362 : vector<1x1x128xf32> to vector<1x128xf32>
    %364 = vector.broadcast %363 : vector<1x128xf32> to vector<12x128xf32>
    %365 = arith.addf %361, %364 : vector<12x128xf32>
    %cst_345 = arith.constant 0.000000e+00 : f32
    %366 = vector.broadcast %cst_345 : f32 to vector<12x128xf32>
    %367 = arith.maximumf %365, %366 : vector<12x128xf32>
    %c5_346 = arith.constant 5 : index
    %c0_347 = arith.constant 0 : index
    %c0_348 = arith.constant 0 : index
    %368 = vector.load %arg6[%c5_346, %c0_347, %c0_348] : memref<6x384x128xbf16, #tpu.memory_space<vmem>>, vector<1x384x128xbf16>
    %369 = vector.shape_cast %368 : vector<1x384x128xbf16> to vector<384x128xbf16>
    %c5_349 = arith.constant 5 : index
    %c0_350 = arith.constant 0 : index
    %c0_351 = arith.constant 0 : index
    %370 = vector.load %arg7[%c5_349, %c0_350, %c0_351] : memref<6x1x128xf32, #tpu.memory_space<vmem>>, vector<1x1x128xf32>
    %371 = vector.shape_cast %370 : vector<1x1x128xf32> to vector<1x128xf32>
    %cst_352 = arith.constant 0.000000e+00 : f32
    %372 = vector.broadcast %cst_352 : f32 to vector<1x128xf32>
    %c0_353 = arith.constant 0 : index
    %c0_354 = arith.constant 0 : index
    %373 = vector.load %arg19[%c0_353, %c0_354] : memref<38x128xf32, #tpu.memory_space<vmem>>, vector<1x128xf32>
    tpu.vector_store %arg19[%c0_353, %c0_354], %372 {strides = array<i32>} : memref<38x128xf32, #tpu.memory_space<vmem>>, vector<1x128xf32>,
    %c1_355 = arith.constant 1 : index
    %c0_356 = arith.constant 0 : index
    %374 = vector.load %arg19[%c1_355, %c0_356] : memref<38x128xf32, #tpu.memory_space<vmem>>, vector<12x128xf32>
    tpu.vector_store %arg19[%c1_355, %c0_356], %367 {strides = array<i32>} : memref<38x128xf32, #tpu.memory_space<vmem>>, vector<12x128xf32>,
    %c13_357 = arith.constant 13 : index
    %c0_358 = arith.constant 0 : index
    %375 = vector.load %arg19[%c13_357, %c0_358] : memref<38x128xf32, #tpu.memory_space<vmem>>, vector<1x128xf32>
    tpu.vector_store %arg19[%c13_357, %c0_358], %372 {strides = array<i32>} : memref<38x128xf32, #tpu.memory_space<vmem>>, vector<1x128xf32>,
    %c0_359 = arith.constant 0 : index
    %c0_360 = arith.constant 0 : index
    %376 = vector.load %arg19[%c0_359, %c0_360] : memref<38x128xf32, #tpu.memory_space<vmem>>, vector<12x128xf32>
    %c1_361 = arith.constant 1 : index
    %c0_362 = arith.constant 0 : index
    %377 = vector.load %arg19[%c1_361, %c0_362] : memref<38x128xf32, #tpu.memory_space<vmem>>, vector<12x128xf32>
    %c2_363 = arith.constant 2 : index
    %c0_364 = arith.constant 0 : index
    %378 = vector.load %arg19[%c2_363, %c0_364] : memref<38x128xf32, #tpu.memory_space<vmem>>, vector<12x128xf32>
    %379 = tpu.concatenate %376, %377, %378 in 1 : vector<12x128xf32>, vector<12x128xf32>, vector<12x128xf32> -> vector<12x384xf32>
    %380 = arith.truncf %379 : vector<12x384xf32> to vector<12x384xbf16>
    %cst_365 = arith.constant dense<0.000000e+00> : vector<12x128xf32>
    %381 = tpu.matmul %380, %369, %cst_365 {dimension_numbers = #tpu.dot_dimension_numbers<[1], [0], [0], [1], [0, 0, 1, 1], [], []>} : vector<12x384xbf16>, vector<384x128xbf16>, vector<12x128xf32> -> vector<12x128xf32>
    %382 = vector.broadcast %371 : vector<1x128xf32> to vector<12x128xf32>
    %383 = arith.addf %381, %382 : vector<12x128xf32>
    %384 = arith.addf %331, %383 : vector<12x128xf32>
    %cst_366 = arith.constant 0.000000e+00 : f32
    %385 = vector.broadcast %cst_366 : f32 to vector<12x128xf32>
    %386 = arith.cmpf oeq, %73, %385 : vector<12x128xf32>
    %cst_367 = arith.constant 0.000000e+00 : f32
    %387 = vector.broadcast %cst_367 : f32 to vector<12x128xf32>
    %388 = arith.select %386, %384, %387 : vector<12x128xi1>, vector<12x128xf32>
    %389 = arith.truncf %388 : vector<12x128xf32> to vector<12x128xbf16>
    %c0_368 = arith.constant 0 : index
    %c0_369 = arith.constant 0 : index
    %c0_370 = arith.constant 0 : index
    %390 = vector.load %arg15[%c0_368, %c0_369, %c0_370] : memref<3x36x12xbf16, #tpu.memory_space<vmem>>, vector<1x36x12xbf16>
    %391 = vector.shape_cast %390 : vector<1x36x12xbf16> to vector<36x12xbf16>
    %cst_371 = arith.constant dense<0.000000e+00> : vector<36x128xf32>
    %392 = tpu.matmul %391, %389, %cst_371 {dimension_numbers = #tpu.dot_dimension_numbers<[1], [0], [0], [1], [0, 0, 1, 1], [], []>} : vector<36x12xbf16>, vector<12x128xbf16>, vector<36x128xf32> -> vector<36x128xf32>
    %cst_372 = arith.constant 1.000000e+00 : f32
    %393 = vector.broadcast %cst_372 : f32 to vector<12x128xf32>
    %394 = arith.cmpf oeq, %73, %393 : vector<12x128xf32>
    %cst_373 = arith.constant 0.000000e+00 : f32
    %395 = vector.broadcast %cst_373 : f32 to vector<12x128xf32>
    %396 = arith.select %394, %384, %395 : vector<12x128xi1>, vector<12x128xf32>
    %397 = arith.truncf %396 : vector<12x128xf32> to vector<12x128xbf16>
    %c1_374 = arith.constant 1 : index
    %c0_375 = arith.constant 0 : index
    %c0_376 = arith.constant 0 : index
    %398 = vector.load %arg15[%c1_374, %c0_375, %c0_376] : memref<3x36x12xbf16, #tpu.memory_space<vmem>>, vector<1x36x12xbf16>
    %399 = vector.shape_cast %398 : vector<1x36x12xbf16> to vector<36x12xbf16>
    %cst_377 = arith.constant dense<0.000000e+00> : vector<36x128xf32>
    %400 = tpu.matmul %399, %397, %cst_377 {dimension_numbers = #tpu.dot_dimension_numbers<[1], [0], [0], [1], [0, 0, 1, 1], [], []>} : vector<36x12xbf16>, vector<12x128xbf16>, vector<36x128xf32> -> vector<36x128xf32>
    %401 = arith.addf %392, %400 : vector<36x128xf32>
    %cst_378 = arith.constant 2.000000e+00 : f32
    %402 = vector.broadcast %cst_378 : f32 to vector<12x128xf32>
    %403 = arith.cmpf oeq, %73, %402 : vector<12x128xf32>
    %cst_379 = arith.constant 0.000000e+00 : f32
    %404 = vector.broadcast %cst_379 : f32 to vector<12x128xf32>
    %405 = arith.select %403, %384, %404 : vector<12x128xi1>, vector<12x128xf32>
    %406 = arith.truncf %405 : vector<12x128xf32> to vector<12x128xbf16>
    %c2_380 = arith.constant 2 : index
    %c0_381 = arith.constant 0 : index
    %c0_382 = arith.constant 0 : index
    %407 = vector.load %arg15[%c2_380, %c0_381, %c0_382] : memref<3x36x12xbf16, #tpu.memory_space<vmem>>, vector<1x36x12xbf16>
    %408 = vector.shape_cast %407 : vector<1x36x12xbf16> to vector<36x12xbf16>
    %cst_383 = arith.constant dense<0.000000e+00> : vector<36x128xf32>
    %409 = tpu.matmul %408, %406, %cst_383 {dimension_numbers = #tpu.dot_dimension_numbers<[1], [0], [0], [1], [0, 0, 1, 1], [], []>} : vector<36x12xbf16>, vector<12x128xbf16>, vector<36x128xf32> -> vector<36x128xf32>
    %410 = arith.addf %401, %409 : vector<36x128xf32>
    %411 = arith.addf %1, %410 : vector<36x128xf32>
    %c0_384 = arith.constant 0 : index
    %c0_385 = arith.constant 0 : index
    %412 = vector.load %arg10[%c0_384, %c0_385] : memref<128x128xbf16, #tpu.memory_space<vmem>>, vector<128x128xbf16>
    %c0_386 = arith.constant 0 : index
    %c0_387 = arith.constant 0 : index
    %413 = vector.load %arg11[%c0_386, %c0_387] : memref<1x128xf32, #tpu.memory_space<vmem>>, vector<1x128xf32>
    %414 = arith.truncf %411 : vector<36x128xf32> to vector<36x128xbf16>
    %cst_388 = arith.constant dense<0.000000e+00> : vector<36x128xf32>
    %415 = tpu.matmul %414, %412, %cst_388 {dimension_numbers = #tpu.dot_dimension_numbers<[1], [0], [0], [1], [0, 0, 1, 1], [], []>} : vector<36x128xbf16>, vector<128x128xbf16>, vector<36x128xf32> -> vector<36x128xf32>
    %416 = vector.broadcast %413 : vector<1x128xf32> to vector<36x128xf32>
    %417 = arith.addf %415, %416 : vector<36x128xf32>
    %c0_389 = arith.constant 0 : index
    %c0_390 = arith.constant 0 : index
    %418 = vector.load %arg12[%c0_389, %c0_390] : memref<128x128xbf16, #tpu.memory_space<vmem>>, vector<128x128xbf16>
    %c0_391 = arith.constant 0 : index
    %c0_392 = arith.constant 0 : index
    %419 = vector.load %arg13[%c0_391, %c0_392] : memref<1x128xf32, #tpu.memory_space<vmem>>, vector<1x128xf32>
    %420 = arith.truncf %417 : vector<36x128xf32> to vector<36x128xbf16>
    %cst_393 = arith.constant dense<0.000000e+00> : vector<36x128xf32>
    %421 = tpu.matmul %420, %418, %cst_393 {dimension_numbers = #tpu.dot_dimension_numbers<[1], [0], [0], [1], [0, 0, 1, 1], [], []>} : vector<36x128xbf16>, vector<128x128xbf16>, vector<36x128xf32> -> vector<36x128xf32>
    %422 = vector.broadcast %419 : vector<1x128xf32> to vector<36x128xf32>
    %423 = arith.addf %421, %422 : vector<36x128xf32>
    %424 = arith.negf %423 : vector<36x128xf32>
    %425 = math.exp %424 : vector<36x128xf32>
    %cst_394 = arith.constant 1.000000e+00 : f32
    %426 = vector.broadcast %cst_394 : f32 to vector<36x128xf32>
    %427 = arith.addf %426, %425 : vector<36x128xf32>
    %428 = arith.divf %426, %427 : vector<36x128xf32>
    %c0_395 = arith.constant 0 : index
    %c0_396 = arith.constant 0 : index
    %c0_397 = arith.constant 0 : index
    %429 = vector.load %arg18[%c0_395, %c0_396, %c0_397] : memref<1x36x128xf32, #tpu.memory_space<vmem>>, vector<1x36x128xf32>
    %430 = vector.shape_cast %429 : vector<1x36x128xf32> to vector<36x128xf32>
    %431 = vector.shape_cast %428 : vector<36x128xf32> to vector<1x36x128xf32>
    tpu.vector_store %arg18[%c0_395, %c0_396, %c0_397], %431 {strides = array<i32>} : memref<1x36x128xf32, #tpu.memory_space<vmem>>, vector<1x36x128xf32>,
    return
  }
  func.func @transform_0(%arg0: i32) -> (i32, i32, i32) {
    %c0_i32 = arith.constant 0 : i32
    %c0_i32_0 = arith.constant 0 : i32
    %c0_i32_1 = arith.constant 0 : i32
    return %arg0, %c0_i32, %c0_i32_0 : i32, i32, i32
  }
  func.func @transform_1(%arg0: i32) -> (i32, i32, i32) {
    %c0_i32 = arith.constant 0 : i32
    %c0_i32_0 = arith.constant 0 : i32
    %c0_i32_1 = arith.constant 0 : i32
    %c0_i32_2 = arith.constant 0 : i32
    return %c0_i32, %c0_i32_0, %c0_i32_1 : i32, i32, i32
  }
  func.func @transform_2(%arg0: i32) -> (i32, i32, i32) {
    %c0_i32 = arith.constant 0 : i32
    %c0_i32_0 = arith.constant 0 : i32
    %c0_i32_1 = arith.constant 0 : i32
    %c0_i32_2 = arith.constant 0 : i32
    return %c0_i32, %c0_i32_0, %c0_i32_1 : i32, i32, i32
  }
  func.func @transform_3(%arg0: i32) -> (i32, i32, i32) {
    %c0_i32 = arith.constant 0 : i32
    %c0_i32_0 = arith.constant 0 : i32
    %c0_i32_1 = arith.constant 0 : i32
    %c0_i32_2 = arith.constant 0 : i32
    return %c0_i32, %c0_i32_0, %c0_i32_1 : i32, i32, i32
  }
  func.func @transform_4(%arg0: i32) -> (i32, i32, i32) {
    %c0_i32 = arith.constant 0 : i32
    %c0_i32_0 = arith.constant 0 : i32
    %c0_i32_1 = arith.constant 0 : i32
    %c0_i32_2 = arith.constant 0 : i32
    return %c0_i32, %c0_i32_0, %c0_i32_1 : i32, i32, i32
  }
  func.func @transform_5(%arg0: i32) -> (i32, i32, i32) {
    %c0_i32 = arith.constant 0 : i32
    %c0_i32_0 = arith.constant 0 : i32
    %c0_i32_1 = arith.constant 0 : i32
    %c0_i32_2 = arith.constant 0 : i32
    return %c0_i32, %c0_i32_0, %c0_i32_1 : i32, i32, i32
  }
  func.func @transform_6(%arg0: i32) -> (i32, i32, i32) {
    %c0_i32 = arith.constant 0 : i32
    %c0_i32_0 = arith.constant 0 : i32
    %c0_i32_1 = arith.constant 0 : i32
    %c0_i32_2 = arith.constant 0 : i32
    return %c0_i32, %c0_i32_0, %c0_i32_1 : i32, i32, i32
  }
  func.func @transform_7(%arg0: i32) -> (i32, i32, i32) {
    %c0_i32 = arith.constant 0 : i32
    %c0_i32_0 = arith.constant 0 : i32
    %c0_i32_1 = arith.constant 0 : i32
    %c0_i32_2 = arith.constant 0 : i32
    return %c0_i32, %c0_i32_0, %c0_i32_1 : i32, i32, i32
  }
  func.func @transform_8(%arg0: i32) -> (i32, i32, i32) {
    %c0_i32 = arith.constant 0 : i32
    %c0_i32_0 = arith.constant 0 : i32
    %c0_i32_1 = arith.constant 0 : i32
    %c0_i32_2 = arith.constant 0 : i32
    return %c0_i32, %c0_i32_0, %c0_i32_1 : i32, i32, i32
  }
  func.func @transform_9(%arg0: i32) -> (i32, i32) {
    %c0_i32 = arith.constant 0 : i32
    %c0_i32_0 = arith.constant 0 : i32
    %c0_i32_1 = arith.constant 0 : i32
    return %c0_i32, %c0_i32_0 : i32, i32
  }
  func.func @transform_10(%arg0: i32) -> (i32, i32) {
    %c0_i32 = arith.constant 0 : i32
    %c0_i32_0 = arith.constant 0 : i32
    %c0_i32_1 = arith.constant 0 : i32
    return %c0_i32, %c0_i32_0 : i32, i32
  }
  func.func @transform_11(%arg0: i32) -> (i32, i32) {
    %c0_i32 = arith.constant 0 : i32
    %c0_i32_0 = arith.constant 0 : i32
    %c0_i32_1 = arith.constant 0 : i32
    return %c0_i32, %c0_i32_0 : i32, i32
  }
  func.func @transform_12(%arg0: i32) -> (i32, i32) {
    %c0_i32 = arith.constant 0 : i32
    %c0_i32_0 = arith.constant 0 : i32
    %c0_i32_1 = arith.constant 0 : i32
    return %c0_i32, %c0_i32_0 : i32, i32
  }
  func.func @transform_13(%arg0: i32) -> (i32, i32, i32) {
    %c0_i32 = arith.constant 0 : i32
    %c0_i32_0 = arith.constant 0 : i32
    %c0_i32_1 = arith.constant 0 : i32
    %c0_i32_2 = arith.constant 0 : i32
    return %c0_i32, %c0_i32_0, %c0_i32_1 : i32, i32, i32
  }
  func.func @transform_14(%arg0: i32) -> (i32, i32, i32) {
    %c0_i32 = arith.constant 0 : i32
    %c0_i32_0 = arith.constant 0 : i32
    %c0_i32_1 = arith.constant 0 : i32
    %c0_i32_2 = arith.constant 0 : i32
    return %c0_i32, %c0_i32_0, %c0_i32_1 : i32, i32, i32
  }
  func.func @transform_15(%arg0: i32) -> (i32, i32, i32) {
    %c0_i32 = arith.constant 0 : i32
    %c0_i32_0 = arith.constant 0 : i32
    %c0_i32_1 = arith.constant 0 : i32
    %c0_i32_2 = arith.constant 0 : i32
    return %c0_i32, %c0_i32_0, %c0_i32_1 : i32, i32, i32
  }
  func.func @transform_16(%arg0: i32) -> (i32, i32, i32) {
    %c0_i32 = arith.constant 0 : i32
    %c0_i32_0 = arith.constant 0 : i32
    %c0_i32_1 = arith.constant 0 : i32
    %c0_i32_2 = arith.constant 0 : i32
    return %c0_i32, %c0_i32_0, %c0_i32_1 : i32, i32, i32
  }
  func.func @transform_17(%arg0: i32) -> (i32, i32, i32) {
    %c0_i32 = arith.constant 0 : i32
    %c0_i32_0 = arith.constant 0 : i32
    %c0_i32_1 = arith.constant 0 : i32
    return %arg0, %c0_i32, %c0_i32_0 : i32, i32, i32
  }
}

</mosaic_0001>

<llo_original>
// kernel: attention_branch_forward.1
$region0: #{attention_branch_forward.1}
  #allocation0 [shape = 'u32[]', space=smem, size = 0x4, offset = 0x4, fixed_abs, tag = 'smem constant byte address 0x4 - core index']
  #allocation1 [shape = 'u32[144,128]{1,0:T(1,128)}', space=vmem, size = 0x12000, scoped, tag = 'internal scratch']
  #allocation2 [shape = 'f32[38,128]{1,0:T(8,128)}', space=vmem, size = 0x5000, scoped, tag = 'scratch operand']
  %s0 = inlined_call_operand.vmem [shape: f32[2,36,128], index: 0, kind: input, shape index: {}]
  %s1 = inlined_call_operand.hbm [shape: bf16[6,384,128], index: 1, kind: input, shape index: {}]
  %s2 = inlined_call_operand.vmem [shape: f32[6,1,128], index: 2, kind: input, shape index: {}]
  %s3 = inlined_call_operand.vmem [shape: f32[6,1,128], index: 3, kind: input, shape index: {}]
  %s4 = inlined_call_operand.vmem [shape: f32[6,1,128], index: 4, kind: input, shape index: {}]
  %s5 = inlined_call_operand.hbm [shape: bf16[6,384,128], index: 5, kind: input, shape index: {}]
  %s6 = inlined_call_operand.vmem [shape: f32[6,1,128], index: 6, kind: input, shape index: {}]
  %s7 = inlined_call_operand.vmem [shape: f32[6,1,128], index: 7, kind: input, shape index: {}]
  %s8 = inlined_call_operand.vmem [shape: f32[6,1,128], index: 8, kind: input, shape index: {}]
  %s9 = inlined_call_operand.vmem [shape: bf16[128,128], index: 9, kind: input, shape index: {}]
  %s10 = inlined_call_operand.vmem [shape: f32[1,128], index: 10, kind: input, shape index: {}]
  %s11 = inlined_call_operand.vmem [shape: bf16[128,128], index: 11, kind: input, shape index: {}]
  %s12 = inlined_call_operand.vmem [shape: f32[1,128], index: 12, kind: input, shape index: {}]
  %s13 = inlined_call_operand.vmem [shape: bf16[3,12,36], index: 13, kind: input, shape index: {}]
  %s14 = inlined_call_operand.vmem [shape: bf16[3,36,12], index: 14, kind: input, shape index: {}]
  %s15 = inlined_call_operand.vmem [shape: bf16[3,4,12], index: 15, kind: input, shape index: {}]
  %s16 = inlined_call_operand.vmem [shape: bf16[3,12,4], index: 16, kind: input, shape index: {}]
  %s17 = inlined_call_operand.vmem [shape: f32[2,36,128], index: 17, kind: output, shape index: {}]
  %s18 = sld [smem:[#allocation0]]
  $region109: #{attention_branch_forward.1} parent=0
    _
  %s20 = ssub.s32 1, %s18
  %s21 = scalar_select 0, %s20, %s18
  $region1: #{attention_branch_forward.1} parent=0
    #allocation3 [shape = 'u8[589824]{0}', space=vmem, size = 0x90000, scoped, tag = 'input window, operand 1, single buffered']
    #allocation4 [shape = 's32[2]{0}', space=sflag, size = 0x8, scoped, tag = 'scoped memory for attention_branch_forward.1']
    #allocation5 [shape = 'u8[589824]{0}', space=vmem, size = 0x90000, scoped, tag = 'input window, operand 5, single buffered']
    #allocation6 [shape = 's32[1]{0}', space=sflag, size = 0x4, scoped, tag = 'scoped memory for attention_branch_forward.1']
    %22 = vsyncpa [#allocation4], 0
    %23 = vsyncpa [#allocation6], 0
    loop: start=0, step=1, limit=4
    $region2: #{attention_branch_forward.1} parent=1 // loop_pre_header
      _
    $region3: #{attention_branch_forward.1} parent=1 // loop_header
      %s25 = sphi 0, %s29
      %p26 = scmp.ge.s32.totalorder %s25, 4
      %s35 = sphi 0, %s37
      %s38 = sphi 0, %s35
      %s39 = sphi 0, %s38
      %s55 = sphi 0, %s39
      %s59 = sphi 0, %s59
      %s61 = sphi 0, %s59
      %s62 = sphi 0, %s61
      %s76 = sphi 0, %s62
      %s80 = sphi 0, %s80
      %s82 = sphi 0, %s80
      %s83 = sphi 0, %s82
      %s97 = sphi 0, %s83
      %s101 = sphi 0, %s101
      %s103 = sphi 0, %s101
      %s104 = sphi 0, %s103
      %s118 = sphi 0, %s104
      %s122 = sphi 0, %s122
      %s124 = sphi 0, %s122
      %s125 = sphi 0, %s124
      %s139 = sphi 0, %s125
      %s143 = sphi 0, %s143
      %s145 = sphi 0, %s143
      %s146 = sphi 0, %s145
      %s160 = sphi 0, %s146
      %s164 = sphi 0, %s164
      %s166 = sphi 0, %s164
      %s167 = sphi 0, %s166
      %s181 = sphi 0, %s167
      %s185 = sphi 0, %s185
      %s187 = sphi 0, %s185
      %s188 = sphi 0, %s187
      %s202 = sphi 0, %s188
      %s206 = sphi 0, %s206
      %s208 = sphi 0, %s206
      %s209 = sphi 0, %s208
      %s223 = sphi 0, %s209
      %s227 = sphi 0, %s227
      %s229 = sphi 0, %s227
      %s230 = sphi 0, %s229
      %s244 = sphi 0, %s230
      %s248 = sphi 0, %s248
      %s250 = sphi 0, %s248
      %s251 = sphi 0, %s250
      %s265 = sphi 0, %s251
      %s269 = sphi 0, %s269
      %s271 = sphi 0, %s269
      %s272 = sphi 0, %s271
      %s286 = sphi 0, %s272
      %s290 = sphi 0, %s290
      %s292 = sphi 0, %s290
      %s293 = sphi 0, %s292
      %s307 = sphi 0, %s293
      %s311 = sphi 0, %s311
      %s313 = sphi 0, %s311
      %s314 = sphi 0, %s313
      %s328 = sphi 0, %s314
      %s332 = sphi 0, %s332
      %s334 = sphi 0, %s332
      %s335 = sphi 0, %s334
      %s349 = sphi 0, %s335
      %s353 = sphi 0, %s353
      %s355 = sphi 0, %s353
      %s356 = sphi 0, %s355
      %s370 = sphi 0, %s356
      %s374 = sphi 0, %s374
      %s376 = sphi 0, %s374
      %s377 = sphi 0, %s376
      %s391 = sphi 0, %s377
      %s397 = sphi 0, %s399
      %s400 = sphi 0, %s397
      %s401 = sphi 0, %s400
      %s417 = sphi 0, %s401
    $region4: #{attention_branch_forward.1} parent=1 // loop_header_branch
      %28 = sbr.rel (%p26) target = $region8
    $region5: #{attention_branch_forward.1} parent=1 // loop_body
      %s30 = ssub.s32 %s25, 1
      %s31 = ssub.s32 %s25, 2
      %s32 = sadd.s32 %s25, 1
      %s33 = ssub.s32 %s25, %s32
      %p34 = scmp.eq.s32.totalorder %s33, 0
      %s36 = sadd.s32 %s35, 1
      %s37 = scalar_select %p34, %s35, %s36
      %p40 = pneg %p34
      %p41 = scmp.eq.s32.totalorder %s25, 1
      %p42 = por %p40, %p41
      %p43 = scmp.ne.s32.totalorder %s35, %s38
      %p44 = scmp.eq.s32.totalorder %s25, 0
      %p45 = por %p43, %p44
      %p46 = scmp.ne.s32.totalorder %s35, %s38
      %p47 = scmp.eq.s32.totalorder %s30, 1
      %p48 = por %p46, %p47
      %p49 = scmp.ne.s32.totalorder %s38, %s39
      %p50 = scmp.eq.s32.totalorder %s30, 0
      %p51 = por %p49, %p50
      %p52 = scmp.ne.s32.totalorder %s38, %s39
      %p53 = scmp.eq.s32.totalorder %s31, 1
      %p54 = por %p52, %p53
      %p56 = scmp.ne.s32.totalorder %s39, %s55
      %p57 = scmp.eq.s32.totalorder %s31, 0
      %p58 = por %p56, %p57
      %s60 = sadd.s32 %s59, 1
      %p63 = scmp.eq.s32.totalorder %s25, 1
      %p64 = scmp.ne.s32.totalorder %s59, %s61
      %p65 = scmp.eq.s32.totalorder %s25, 0
      %p66 = por %p64, %p65
      %p67 = scmp.ne.s32.totalorder %s59, %s61
      %p68 = scmp.eq.s32.totalorder %s30, 1
      %p69 = por %p67, %p68
      %p70 = scmp.ne.s32.totalorder %s61, %s62
      %p71 = scmp.eq.s32.totalorder %s30, 0
      %p72 = por %p70, %p71
      %p73 = scmp.ne.s32.totalorder %s61, %s62
      %p74 = scmp.eq.s32.totalorder %s31, 1
      %p75 = por %p73, %p74
      %p77 = scmp.ne.s32.totalorder %s62, %s76
      %p78 = scmp.eq.s32.totalorder %s31, 0
      %p79 = por %p77, %p78
      %s81 = sadd.s32 %s80, 1
      %p84 = scmp.eq.s32.totalorder %s25, 1
      %p85 = scmp.ne.s32.totalorder %s80, %s82
      %p86 = scmp.eq.s32.totalorder %s25, 0
      %p87 = por %p85, %p86
      %p88 = scmp.ne.s32.totalorder %s80, %s82
      %p89 = scmp.eq.s32.totalorder %s30, 1
      %p90 = por %p88, %p89
      %p91 = scmp.ne.s32.totalorder %s82, %s83
      %p92 = scmp.eq.s32.totalorder %s30, 0
      %p93 = por %p91, %p92
      %p94 = scmp.ne.s32.totalorder %s82, %s83
      %p95 = scmp.eq.s32.totalorder %s31, 1
      %p96 = por %p94, %p95
      %p98 = scmp.ne.s32.totalorder %s83, %s97
      %p99 = scmp.eq.s32.totalorder %s31, 0
      %p100 = por %p98, %p99
      %s102 = sadd.s32 %s101, 1
      %p105 = scmp.eq.s32.totalorder %s25, 1
      %p106 = scmp.ne.s32.totalorder %s101, %s103
      %p107 = scmp.eq.s32.totalorder %s25, 0
      %p108 = por %p106, %p107
      %p109 = scmp.ne.s32.totalorder %s101, %s103
      %p110 = scmp.eq.s32.totalorder %s30, 1
      %p111 = por %p109, %p110
      %p112 = scmp.ne.s32.totalorder %s103, %s104
      %p113 = scmp.eq.s32.totalorder %s30, 0
      %p114 = por %p112, %p113
      %p115 = scmp.ne.s32.totalorder %s103, %s104
      %p116 = scmp.eq.s32.totalorder %s31, 1
      %p117 = por %p115, %p116
      %p119 = scmp.ne.s32.totalorder %s104, %s118
      %p120 = scmp.eq.s32.totalorder %s31, 0
      %p121 = por %p119, %p120
      %s123 = sadd.s32 %s122, 1
      %p126 = scmp.eq.s32.totalorder %s25, 1
      %p127 = scmp.ne.s32.totalorder %s122, %s124
      %p128 = scmp.eq.s32.totalorder %s25, 0
      %p129 = por %p127, %p128
      %p130 = scmp.ne.s32.totalorder %s122, %s124
      %p131 = scmp.eq.s32.totalorder %s30, 1
      %p132 = por %p130, %p131
      %p133 = scmp.ne.s32.totalorder %s124, %s125
      %p134 = scmp.eq.s32.totalorder %s30, 0
      %p135 = por %p133, %p134
      %p136 = scmp.ne.s32.totalorder %s124, %s125
      %p137 = scmp.eq.s32.totalorder %s31, 1
      %p138 = por %p136, %p137
      %p140 = scmp.ne.s32.totalorder %s125, %s139
      %p141 = scmp.eq.s32.totalorder %s31, 0
      %p142 = por %p140, %p141
      %s144 = sadd.s32 %s143, 1
      %p147 = scmp.eq.s32.totalorder %s25, 1
      %p148 = scmp.ne.s32.totalorder %s143, %s145
      %p149 = scmp.eq.s32.totalorder %s25, 0
      %p150 = por %p148, %p149
      %p151 = scmp.ne.s32.totalorder %s143, %s145
      %p152 = scmp.eq.s32.totalorder %s30, 1
      %p153 = por %p151, %p152
      %p154 = scmp.ne.s32.totalorder %s145, %s146
      %p155 = scmp.eq.s32.totalorder %s30, 0
      %p156 = por %p154, %p155
      %p157 = scmp.ne.s32.totalorder %s145, %s146
      %p158 = scmp.eq.s32.totalorder %s31, 1
      %p159 = por %p157, %p158
      %p161 = scmp.ne.s32.totalorder %s146, %s160
      %p162 = scmp.eq.s32.totalorder %s31, 0
      %p163 = por %p161, %p162
      %s165 = sadd.s32 %s164, 1
      %p168 = scmp.eq.s32.totalorder %s25, 1
      %p169 = scmp.ne.s32.totalorder %s164, %s166
      %p170 = scmp.eq.s32.totalorder %s25, 0
      %p171 = por %p169, %p170
      %p172 = scmp.ne.s32.totalorder %s164, %s166
      %p173 = scmp.eq.s32.totalorder %s30, 1
      %p174 = por %p172, %p173
      %p175 = scmp.ne.s32.totalorder %s166, %s167
      %p176 = scmp.eq.s32.totalorder %s30, 0
      %p177 = por %p175, %p176
      %p178 = scmp.ne.s32.totalorder %s166, %s167
      %p179 = scmp.eq.s32.totalorder %s31, 1
      %p180 = por %p178, %p179
      %p182 = scmp.ne.s32.totalorder %s167, %s181
      %p183 = scmp.eq.s32.totalorder %s31, 0
      %p184 = por %p182, %p183
      %s186 = sadd.s32 %s185, 1
      %p189 = scmp.eq.s32.totalorder %s25, 1
      %p190 = scmp.ne.s32.totalorder %s185, %s187
      %p191 = scmp.eq.s32.totalorder %s25, 0
      %p192 = por %p190, %p191
      %p193 = scmp.ne.s32.totalorder %s185, %s187
      %p194 = scmp.eq.s32.totalorder %s30, 1
      %p195 = por %p193, %p194
      %p196 = scmp.ne.s32.totalorder %s187, %s188
      %p197 = scmp.eq.s32.totalorder %s30, 0
      %p198 = por %p196, %p197
      %p199 = scmp.ne.s32.totalorder %s187, %s188
      %p200 = scmp.eq.s32.totalorder %s31, 1
      %p201 = por %p199, %p200
      %p203 = scmp.ne.s32.totalorder %s188, %s202
      %p204 = scmp.eq.s32.totalorder %s31, 0
      %p205 = por %p203, %p204
      %s207 = sadd.s32 %s206, 1
      %p210 = scmp.eq.s32.totalorder %s25, 1
      %p211 = scmp.ne.s32.totalorder %s206, %s208
      %p212 = scmp.eq.s32.totalorder %s25, 0
      %p213 = por %p211, %p212
      %p214 = scmp.ne.s32.totalorder %s206, %s208
      %p215 = scmp.eq.s32.totalorder %s30, 1
      %p216 = por %p214, %p215
      %p217 = scmp.ne.s32.totalorder %s208, %s209
      %p218 = scmp.eq.s32.totalorder %s30, 0
      %p219 = por %p217, %p218
      %p220 = scmp.ne.s32.totalorder %s208, %s209
      %p221 = scmp.eq.s32.totalorder %s31, 1
      %p222 = por %p220, %p221
      %p224 = scmp.ne.s32.totalorder %s209, %s223
      %p225 = scmp.eq.s32.totalorder %s31, 0
      %p226 = por %p224, %p225
      %s228 = sadd.s32 %s227, 1
      %p231 = scmp.eq.s32.totalorder %s25, 1
      %p232 = scmp.ne.s32.totalorder %s227, %s229
      %p233 = scmp.eq.s32.totalorder %s25, 0
      %p234 = por %p232, %p233
      %p235 = scmp.ne.s32.totalorder %s227, %s229
      %p236 = scmp.eq.s32.totalorder %s30, 1
      %p237 = por %p235, %p236
      %p238 = scmp.ne.s32.totalorder %s229, %s230
      %p239 = scmp.eq.s32.totalorder %s30, 0
      %p240 = por %p238, %p239
      %p241 = scmp.ne.s32.totalorder %s229, %s230
      %p242 = scmp.eq.s32.totalorder %s31, 1
      %p243 = por %p241, %p242
      %p245 = scmp.ne.s32.totalorder %s230, %s244
      %p246 = scmp.eq.s32.totalorder %s31, 0
      %p247 = por %p245, %p246
      %s249 = sadd.s32 %s248, 1
      %p252 = scmp.eq.s32.totalorder %s25, 1
      %p253 = scmp.ne.s32.totalorder %s248, %s250
      %p254 = scmp.eq.s32.totalorder %s25, 0
      %p255 = por %p253, %p254
      %p256 = scmp.ne.s32.totalorder %s248, %s250
      %p257 = scmp.eq.s32.totalorder %s30, 1
      %p258 = por %p256, %p257
      %p259 = scmp.ne.s32.totalorder %s250, %s251
      %p260 = scmp.eq.s32.totalorder %s30, 0
      %p261 = por %p259, %p260
      %p262 = scmp.ne.s32.totalorder %s250, %s251
      %p263 = scmp.eq.s32.totalorder %s31, 1
      %p264 = por %p262, %p263
      %p266 = scmp.ne.s32.totalorder %s251, %s265
      %p267 = scmp.eq.s32.totalorder %s31, 0
      %p268 = por %p266, %p267
      %s270 = sadd.s32 %s269, 1
      %p273 = scmp.eq.s32.totalorder %s25, 1
      %p274 = scmp.ne.s32.totalorder %s269, %s271
      %p275 = scmp.eq.s32.totalorder %s25, 0
      %p276 = por %p274, %p275
      %p277 = scmp.ne.s32.totalorder %s269, %s271
      %p278 = scmp.eq.s32.totalorder %s30, 1
      %p279 = por %p277, %p278
      %p280 = scmp.ne.s32.totalorder %s271, %s272
      %p281 = scmp.eq.s32.totalorder %s30, 0
      %p282 = por %p280, %p281
      %p283 = scmp.ne.s32.totalorder %s271, %s272
      %p284 = scmp.eq.s32.totalorder %s31, 1
      %p285 = por %p283, %p284
      %p287 = scmp.ne.s32.totalorder %s272, %s286
      %p288 = scmp.eq.s32.totalorder %s31, 0
      %p289 = por %p287, %p288
      %s291 = sadd.s32 %s290, 1
      %p294 = scmp.eq.s32.totalorder %s25, 1
      %p295 = scmp.ne.s32.totalorder %s290, %s292
      %p296 = scmp.eq.s32.totalorder %s25, 0
      %p297 = por %p295, %p296
      %p298 = scmp.ne.s32.totalorder %s290, %s292
      %p299 = scmp.eq.s32.totalorder %s30, 1
      %p300 = por %p298, %p299
      %p301 = scmp.ne.s32.totalorder %s292, %s293
      %p302 = scmp.eq.s32.totalorder %s30, 0
      %p303 = por %p301, %p302
      %p304 = scmp.ne.s32.totalorder %s292, %s293
      %p305 = scmp.eq.s32.totalorder %s31, 1
      %p306 = por %p304, %p305
      %p308 = scmp.ne.s32.totalorder %s293, %s307
      %p309 = scmp.eq.s32.totalorder %s31, 0
      %p310 = por %p308, %p309
      %s312 = sadd.s32 %s311, 1
      %p315 = scmp.eq.s32.totalorder %s25, 1
      %p316 = scmp.ne.s32.totalorder %s311, %s313
      %p317 = scmp.eq.s32.totalorder %s25, 0
      %p318 = por %p316, %p317
      %p319 = scmp.ne.s32.totalorder %s311, %s313
      %p320 = scmp.eq.s32.totalorder %s30, 1
      %p321 = por %p319, %p320
      %p322 = scmp.ne.s32.totalorder %s313, %s314
      %p323 = scmp.eq.s32.totalorder %s30, 0
      %p324 = por %p322, %p323
      %p325 = scmp.ne.s32.totalorder %s313, %s314
      %p326 = scmp.eq.s32.totalorder %s31, 1
      %p327 = por %p325, %p326
      %p329 = scmp.ne.s32.totalorder %s314, %s328
      %p330 = scmp.eq.s32.totalorder %s31, 0
      %p331 = por %p329, %p330
      %s333 = sadd.s32 %s332, 1
      %p336 = scmp.eq.s32.totalorder %s25, 1
      %p337 = scmp.ne.s32.totalorder %s332, %s334
      %p338 = scmp.eq.s32.totalorder %s25, 0
      %p339 = por %p337, %p338
      %p340 = scmp.ne.s32.totalorder %s332, %s334
      %p341 = scmp.eq.s32.totalorder %s30, 1
      %p342 = por %p340, %p341
      %p343 = scmp.ne.s32.totalorder %s334, %s335
      %p344 = scmp.eq.s32.totalorder %s30, 0
      %p345 = por %p343, %p344
      %p346 = scmp.ne.s32.totalorder %s334, %s335
      %p347 = scmp.eq.s32.totalorder %s31, 1
      %p348 = por %p346, %p347
      %p350 = scmp.ne.s32.totalorder %s335, %s349
      %p351 = scmp.eq.s32.totalorder %s31, 0
      %p352 = por %p350, %p351
      %s354 = sadd.s32 %s353, 1
      %p357 = scmp.eq.s32.totalorder %s25, 1
      %p358 = scmp.ne.s32.totalorder %s353, %s355
      %p359 = scmp.eq.s32.totalorder %s25, 0
      %p360 = por %p358, %p359
      %p361 = scmp.ne.s32.totalorder %s353, %s355
      %p362 = scmp.eq.s32.totalorder %s30, 1
      %p363 = por %p361, %p362
      %p364 = scmp.ne.s32.totalorder %s355, %s356
      %p365 = scmp.eq.s32.totalorder %s30, 0
      %p366 = por %p364, %p365
      %p367 = scmp.ne.s32.totalorder %s355, %s356
      %p368 = scmp.eq.s32.totalorder %s31, 1
      %p369 = por %p367, %p368
      %p371 = scmp.ne.s32.totalorder %s356, %s370
      %p372 = scmp.eq.s32.totalorder %s31, 0
      %p373 = por %p371, %p372
      %s375 = sadd.s32 %s374, 1
      %p378 = scmp.eq.s32.totalorder %s25, 1
      %p379 = scmp.ne.s32.totalorder %s374, %s376
      %p380 = scmp.eq.s32.totalorder %s25, 0
      %p381 = por %p379, %p380
      %p382 = scmp.ne.s32.totalorder %s374, %s376
      %p383 = scmp.eq.s32.totalorder %s30, 1
      %p384 = por %p382, %p383
      %p385 = scmp.ne.s32.totalorder %s376, %s377
      %p386 = scmp.eq.s32.totalorder %s30, 0
      %p387 = por %p385, %p386
      %p388 = scmp.ne.s32.totalorder %s376, %s377
      %p389 = scmp.eq.s32.totalorder %s31, 1
      %p390 = por %p388, %p389
      %p392 = scmp.ne.s32.totalorder %s377, %s391
      %p393 = scmp.eq.s32.totalorder %s31, 0
      %p394 = por %p392, %p393
      %s395 = ssub.s32 %s25, %s32
      %p396 = scmp.eq.s32.totalorder %s395, 0
      %s398 = sadd.s32 %s397, 1
      %s399 = scalar_select %p396, %s397, %s398
      %p402 = pneg %p396
      %p403 = scmp.eq.s32.totalorder %s25, 1
      %p404 = por %p402, %p403
      %p405 = scmp.ne.s32.totalorder %s397, %s400
      %p406 = scmp.eq.s32.totalorder %s25, 0
      %p407 = por %p405, %p406
      %p408 = scmp.ne.s32.totalorder %s397, %s400
      %p409 = scmp.eq.s32.totalorder %s30, 1
      %p410 = por %p408, %p409
      %p411 = scmp.ne.s32.totalorder %s400, %s401
      %p412 = scmp.eq.s32.totalorder %s30, 0
      %p413 = por %p411, %p412
      %p414 = scmp.ne.s32.totalorder %s400, %s401
      %p415 = scmp.eq.s32.totalorder %s31, 1
      %p416 = por %p414, %p415
      %p418 = scmp.ne.s32.totalorder %s401, %s417
      %p419 = scmp.eq.s32.totalorder %s31, 0
      %p420 = por %p418, %p419
      %p421 = scmp.le.s32.totalorder 1, %s25
      %p422 = scmp.lt.s32.totalorder %s25, 3
      %p423 = pnand %p421, %p422
      %p424 = pneg %p423
      // Predicated region
      $region9: #{attention_branch_forward.1} parent=5 // pred_check
        _
      $region10: #{attention_branch_forward.1} parent=5 // pred_check_branch
        %426 = sbr.rel (%p423) target = $region12
      $region11: #{attention_branch_forward.1} parent=5 // pred_region
        %s427 = ssub.s32 %s25, 1
        // Predicated region
        $region13: #{attention_branch_forward.1} parent=11 // pred_check
          %p428 = pneg %p72
        $region14: #{attention_branch_forward.1} parent=11 // pred_check_branch
          %430 = sbr.rel (%p428) target = $region16
        $region15: #{attention_branch_forward.1} parent=11 // pred_region
          %s432 = ssub.s32 18432, 18432
          %433 = vsyncadd [#allocation4], %s432
          %s434 = sshll.u32 [#allocation3], 4
          %s435 = int_to_ptr.vmem [resolvable:$true] %s434
          %440 = dma.hbm_to_vmem [thread:$0]  %s1, 18432, %s435, [#allocation4], 64, 64, 4
        $region16: #{attention_branch_forward.1} parent=11 // pred_fallthru
          _
        // Predicated region
        $region17: #{attention_branch_forward.1} parent=11 // pred_check
          %p441 = pneg %p93
        $region18: #{attention_branch_forward.1} parent=11 // pred_check_branch
          %443 = sbr.rel (%p441) target = $region20
        $region19: #{attention_branch_forward.1} parent=11 // pred_region
          _
        $region20: #{attention_branch_forward.1} parent=11 // pred_fallthru
          _
        // Predicated region
        $region21: #{attention_branch_forward.1} parent=11 // pred_check
          %p444 = pneg %p114
        $region22: #{attention_branch_forward.1} parent=11 // pred_check_branch
          %446 = sbr.rel (%p444) target = $region24
        $region23: #{attention_branch_forward.1} parent=11 // pred_region
          _
        $region24: #{attention_branch_forward.1} parent=11 // pred_fallthru
          _
        // Predicated region
        $region25: #{attention_branch_forward.1} parent=11 // pred_check
          %p447 = pneg %p135
        $region26: #{attention_branch_forward.1} parent=11 // pred_check_branch
          %449 = sbr.rel (%p447) target = $region28
        $region27: #{attention_branch_forward.1} parent=11 // pred_region
          _
        $region28: #{attention_branch_forward.1} parent=11 // pred_fallthru
          _
        // Predicated region
        $region29: #{attention_branch_forward.1} parent=11 // pred_check
          %p450 = pneg %p156
        $region30: #{attention_branch_forward.1} parent=11 // pred_check_branch
          %452 = sbr.rel (%p450) target = $region32
        $region31: #{attention_branch_forward.1} parent=11 // pred_region
          %s454 = ssub.s32 18432, 18432
          %455 = vsyncadd [#allocation6], %s454
          %s456 = sshll.u32 [#allocation5], 4
          %s457 = int_to_ptr.vmem [resolvable:$true] %s456
          %462 = dma.hbm_to_vmem [thread:$0]  %s5, 18432, %s457, [#allocation6], 64, 64, 4
        $region32: #{attention_branch_forward.1} parent=11 // pred_fallthru
          _
        // Predicated region
        $region33: #{attention_branch_forward.1} parent=11 // pred_check
          %p463 = pneg %p177
        $region34: #{attention_branch_forward.1} parent=11 // pred_check_branch
          %465 = sbr.rel (%p463) target = $region36
        $region35: #{attention_branch_forward.1} parent=11 // pred_region
          _
        $region36: #{attention_branch_forward.1} parent=11 // pred_fallthru
          _
        // Predicated region
        $region37: #{attention_branch_forward.1} parent=11 // pred_check
          %p466 = pneg %p198
        $region38: #{attention_branch_forward.1} parent=11 // pred_check_branch
          %468 = sbr.rel (%p466) target = $region40
        $region39: #{attention_branch_forward.1} parent=11 // pred_region
          _
        $region40: #{attention_branch_forward.1} parent=11 // pred_fallthru
          _
        // Predicated region
        $region41: #{attention_branch_forward.1} parent=11 // pred_check
          %p469 = pneg %p219
        $region42: #{attention_branch_forward.1} parent=11 // pred_check_branch
          %471 = sbr.rel (%p469) target = $region44
        $region43: #{attention_branch_forward.1} parent=11 // pred_region
          _
        $region44: #{attention_branch_forward.1} parent=11 // pred_fallthru
          _
        // Predicated region
        $region45: #{attention_branch_forward.1} parent=11 // pred_check
          %p472 = pneg %p240
        $region46: #{attention_branch_forward.1} parent=11 // pred_check_branch
          %474 = sbr.rel (%p472) target = $region48
        $region47: #{attention_branch_forward.1} parent=11 // pred_region
          _
        $region48: #{attention_branch_forward.1} parent=11 // pred_fallthru
          _
        // Predicated region
        $region49: #{attention_branch_forward.1} parent=11 // pred_check
          %p475 = pneg %p261
        $region50: #{attention_branch_forward.1} parent=11 // pred_check_branch
          %477 = sbr.rel (%p475) target = $region52
        $region51: #{attention_branch_forward.1} parent=11 // pred_region
          _
        $region52: #{attention_branch_forward.1} parent=11 // pred_fallthru
          _
        // Predicated region
        $region53: #{attention_branch_forward.1} parent=11 // pred_check
          %p478 = pneg %p282
        $region54: #{attention_branch_forward.1} parent=11 // pred_check_branch
          %480 = sbr.rel (%p478) target = $region56
        $region55: #{attention_branch_forward.1} parent=11 // pred_region
          _
        $region56: #{attention_branch_forward.1} parent=11 // pred_fallthru
          _
        // Predicated region
        $region57: #{attention_branch_forward.1} parent=11 // pred_check
          %p481 = pneg %p303
        $region58: #{attention_branch_forward.1} parent=11 // pred_check_branch
          %483 = sbr.rel (%p481) target = $region60
        $region59: #{attention_branch_forward.1} parent=11 // pred_region
          _
        $region60: #{attention_branch_forward.1} parent=11 // pred_fallthru
          _
        // Predicated region
        $region61: #{attention_branch_forward.1} parent=11 // pred_check
          %p484 = pneg %p324
        $region62: #{attention_branch_forward.1} parent=11 // pred_check_branch
          %486 = sbr.rel (%p484) target = $region64
        $region63: #{attention_branch_forward.1} parent=11 // pred_region
          _
        $region64: #{attention_branch_forward.1} parent=11 // pred_fallthru
          _
        // Predicated region
        $region65: #{attention_branch_forward.1} parent=11 // pred_check
          %p487 = pneg %p345
        $region66: #{attention_branch_forward.1} parent=11 // pred_check_branch
          %489 = sbr.rel (%p487) target = $region68
        $region67: #{attention_branch_forward.1} parent=11 // pred_region
          _
        $region68: #{attention_branch_forward.1} parent=11 // pred_fallthru
          _
        // Predicated region
        $region69: #{attention_branch_forward.1} parent=11 // pred_check
          %p490 = pneg %p366
        $region70: #{attention_branch_forward.1} parent=11 // pred_check_branch
          %492 = sbr.rel (%p490) target = $region72
        $region71: #{attention_branch_forward.1} parent=11 // pred_region
          _
        $region72: #{attention_branch_forward.1} parent=11 // pred_fallthru
          _
        // Predicated region
        $region73: #{attention_branch_forward.1} parent=11 // pred_check
          %p493 = pneg %p387
        $region74: #{attention_branch_forward.1} parent=11 // pred_check_branch
          %495 = sbr.rel (%p493) target = $region76
        $region75: #{attention_branch_forward.1} parent=11 // pred_region
          _
        $region76: #{attention_branch_forward.1} parent=11 // pred_fallthru
          _
      $region12: #{attention_branch_forward.1} parent=5 // pred_fallthru
        _
      %p496 = scmp.lt.s32.totalorder %s25, 2
      // Predicated region
      $region77: #{attention_branch_forward.1} parent=5 // pred_check
        %p497 = pneg %p496
      $region78: #{attention_branch_forward.1} parent=5 // pred_check_branch
        %499 = sbr.rel (%p497) target = $region80
      $region79: #{attention_branch_forward.1} parent=5 // pred_region
        // Predicated region
        $region81: #{attention_branch_forward.1} parent=79 // pred_check
          %p500 = pneg %p45
        $region82: #{attention_branch_forward.1} parent=79 // pred_check_branch
          %502 = sbr.rel (%p500) target = $region84
        $region83: #{attention_branch_forward.1} parent=79 // pred_region
          %p503 = scmp.lt.s32.totalorder %s25, 1
          %s504 = scalar_select %p503, %s25, 1
          %s505 = smul.addr %s504, 5
          %s506 = smul.addr %s505, 8
          %s507 = scalar_lea.vmem %s0, %s506
        $region84: #{attention_branch_forward.1} parent=79 // pred_fallthru
          _
      $region80: #{attention_branch_forward.1} parent=5 // pred_fallthru
        _
      %p508 = scmp.le.s32.totalorder 1, %s25
      %p509 = scmp.lt.s32.totalorder %s25, 3
      %p510 = pnand %p508, %p509
      %p511 = pneg %p510
      // Predicated region
      $region85: #{attention_branch_forward.1} parent=5 // pred_check
        _
      $region86: #{attention_branch_forward.1} parent=5 // pred_check_branch
        %513 = sbr.rel (%p510) target = $region88
      $region87: #{attention_branch_forward.1} parent=5 // pred_region
        %s514 = ssub.s32 %s25, 1
        // Predicated region
        $region89: #{attention_branch_forward.1} parent=87 // pred_check
          %p515 = pneg %p72
        $region90: #{attention_branch_forward.1} parent=87 // pred_check_branch
          %517 = sbr.rel (%p515) target = $region92
        $region91: #{attention_branch_forward.1} parent=87 // pred_region
          %518 = dma.done [#allocation4], 18432
        $region92: #{attention_branch_forward.1} parent=87 // pred_fallthru
          _
        // Predicated region
        $region93: #{attention_branch_forward.1} parent=87 // pred_check
          %p519 = pneg %p156
        $region94: #{attention_branch_forward.1} parent=87 // pred_check_branch
          %521 = sbr.rel (%p519) target = $region96
        $region95: #{attention_branch_forward.1} parent=87 // pred_region
          %522 = dma.done [#allocation6], 18432
        $region96: #{attention_branch_forward.1} parent=87 // pred_fallthru
          _
        %p523 = scmp.lt.s32.totalorder %s30, 1
        %s524 = scalar_select %p523, %s30, 1
        %s525 = smul.addr %s524, 5
        %s526 = smul.addr %s525, 8
        %s527 = scalar_lea.vmem %s0, %s526
        %p528 = pneg %p51
        %p529 = pneg %p48
        %p530 = pneg %p72
        %p531 = pneg %p69
        %p532 = pneg %p93
        %p533 = pneg %p90
        %p534 = pneg %p114
        %p535 = pneg %p111
        %p536 = pneg %p135
        %p537 = pneg %p132
        %p538 = pneg %p156
        %p539 = pneg %p153
        %p540 = pneg %p177
        %p541 = pneg %p174
        %p542 = pneg %p198
        %p543 = pneg %p195
        %p544 = pneg %p219
        %p545 = pneg %p216
        %p546 = pneg %p240
        %p547 = pneg %p237
        %p548 = pneg %p261
        %p549 = pneg %p258
        %p550 = pneg %p282
        %p551 = pneg %p279
        %p552 = pneg %p303
        %p553 = pneg %p300
        %p554 = pneg %p324
        %p555 = pneg %p321
        %p556 = pneg %p345
        %p557 = pneg %p342
        %p558 = pneg %p366
        %p559 = pneg %p363
        %p560 = pneg %p387
        %p561 = pneg %p384
        %p562 = pneg %p413
        %p563 = pneg %p410
        %p564 = scmp.lt.s32.totalorder %s30, 1
        %s565 = scalar_select %p564, %s30, 1
        %s566 = smul.addr %s565, 5
        %s567 = smul.addr %s566, 8
        %s568 = scalar_lea.vmem %s17, %s567
        %p569 = scmp.lt.s32.totalorder %s30, 1
        %s570 = scalar_select %p569, %s30, 1
        %s571 = smul.addr %s570, 5
        %s572 = smul.addr %s571, 8
        %s573 = scalar_lea.vmem %s0, %s572
        %p574 = scmp.lt.s32.totalorder %s30, 1
        %s575 = scalar_select %p574, %s30, 1
        %s576 = smul.addr %s575, 5
        %s577 = smul.addr %s576, 8
        %s578 = scalar_lea.vmem %s17, %s577
        %v580 = vld [vmem:[%s573] sm:$0xff]
        %v581 = vld [vmem:[%s573 + $0x8] sm:$0xff]
        %v582 = vld [vmem:[%s573 + $0x10] sm:$0xff]
        %v583 = vld [vmem:[%s573 + $0x18] sm:$0xff]
        %v584 = vld [vmem:[%s573 + $0x20] sm:$0xf]
        %v585 = vld [vmem:[%s3] sm:$0x1]
        %v587 = vlaneseq
        %v588 = vshrl.u32 %v587, 7
        %v589 = vsub.s32 0, %v588
        %v590 = vrot.slane %v585, %v589
        %v592 = vmul.f32 %v580, %v590
        %v593 = vmul.f32 %v581, %v590
        %v594 = vmul.f32 %v582, %v590
        %v595 = vmul.f32 %v583, %v590
        %v596 = vmul.f32 %v584, %v590
        %v597 = vld [vmem:[%s4] sm:$0x1]
        %v599 = vlaneseq
        %v600 = vshrl.u32 %v599, 7
        %v601 = vsub.s32 0, %v600
        %v602 = vrot.slane %v597, %v601
        %v604 = vadd.f32 %v592, %v602
        %v605 = vadd.f32 %v593, %v602
        %v606 = vadd.f32 %v594, %v602
        %v607 = vadd.f32 %v595, %v602
        %v608 = vadd.f32 %v596, %v602
        %v609 = vmax.f32 %v604, 0.0
        %v610 = vmax.f32 %v605, 0.0
        %v611 = vmax.f32 %v606, 0.0
        %v612 = vmax.f32 %v607, 0.0
        %v613 = vmax.f32 %v608, 0.0
        %v614 = vld [vmem:[#allocation3] sm:$0xf]
        %v615 = vld [vmem:[#allocation3 + $0x4] sm:$0xf]
        %v616 = vld [vmem:[#allocation3 + $0x8] sm:$0xf]
        %v617 = vld [vmem:[#allocation3 + $0xc] sm:$0xf]
        %v618 = vld [vmem:[#allocation3 + $0x10] sm:$0xf]
        %v619 = vld [vmem:[#allocation3 + $0x14] sm:$0xf]
        %v620 = vld [vmem:[#allocation3 + $0x18] sm:$0xf]
        %v621 = vld [vmem:[#allocation3 + $0x1c] sm:$0xf]
        %v622 = vld [vmem:[#allocation3 + $0x20] sm:$0xf]
        %v623 = vld [vmem:[#allocation3 + $0x24] sm:$0xf]
        %v624 = vld [vmem:[#allocation3 + $0x28] sm:$0xf]
        %v625 = vld [vmem:[#allocation3 + $0x2c] sm:$0xf]
        %v626 = vld [vmem:[#allocation3 + $0x30] sm:$0xf]
        %v627 = vld [vmem:[#allocation3 + $0x34] sm:$0xf]
        %v628 = vld [vmem:[#allocation3 + $0x38] sm:$0xf]
        %v629 = vld [vmem:[#allocation3 + $0x3c] sm:$0xf]
        %v630 = vld [vmem:[#allocation3 + $0x40] sm:$0xf]
        %v631 = vld [vmem:[#allocation3 + $0x44] sm:$0xf]
        %v632 = vld [vmem:[#allocation3 + $0x48] sm:$0xf]
        %v633 = vld [vmem:[#allocation3 + $0x4c] sm:$0xf]
        %v634 = vld [vmem:[#allocation3 + $0x50] sm:$0xf]
        %v635 = vld [vmem:[#allocation3 + $0x54] sm:$0xf]
        %v636 = vld [vmem:[#allocation3 + $0x58] sm:$0xf]
        %v637 = vld [vmem:[#allocation3 + $0x5c] sm:$0xf]
        %v638 = vld [vmem:[#allocation3 + $0x60] sm:$0xf]
        %v639 = vld [vmem:[#allocation3 + $0x64] sm:$0xf]
        %v640 = vld [vmem:[#allocation3 + $0x68] sm:$0xf]
        %v641 = vld [vmem:[#allocation3 + $0x6c] sm:$0xf]
        %v642 = vld [vmem:[#allocation3 + $0x70] sm:$0xf]
        %v643 = vld [vmem:[#allocation3 + $0x74] sm:$0xf]
        %v644 = vld [vmem:[#allocation3 + $0x78] sm:$0xf]
        %v645 = vld [vmem:[#allocation3 + $0x7c] sm:$0xf]
        %v646 = vld [vmem:[#allocation3 + $0x80] sm:$0xf]
        %v647 = vld [vmem:[#allocation3 + $0x84] sm:$0xf]
        %v648 = vld [vmem:[#allocation3 + $0x88] sm:$0xf]
        %v649 = vld [vmem:[#allocation3 + $0x8c] sm:$0xf]
        %v650 = vld [vmem:[#allocation3 + $0x90] sm:$0xf]
        %v651 = vld [vmem:[#allocation3 + $0x94] sm:$0xf]
        %v652 = vld [vmem:[#allocation3 + $0x98] sm:$0xf]
        %v653 = vld [vmem:[#allocation3 + $0x9c] sm:$0xf]
        %v654 = vld [vmem:[#allocation3 + $0xa0] sm:$0xf]
        %v655 = vld [vmem:[#allocation3 + $0xa4] sm:$0xf]
        %v656 = vld [vmem:[#allocation3 + $0xa8] sm:$0xf]
        %v657 = vld [vmem:[#allocation3 + $0xac] sm:$0xf]
        %v658 = vld [vmem:[#allocation3 + $0xb0] sm:$0xf]
        %v659 = vld [vmem:[#allocation3 + $0xb4] sm:$0xf]
        %v660 = vld [vmem:[#allocation3 + $0xb8] sm:$0xf]
        %v661 = vld [vmem:[#allocation3 + $0xbc] sm:$0xf]
        %v662 = vld [vmem:[%s2] sm:$0x1]
        %663 = vst [vmem:[#allocation2] sm:$0x1] 0.0
        %664 = vst [vmem:[#allocation2 + $0x1] sm:$0xff] %v609
        %665 = vst [vmem:[#allocation2 + $0x9] sm:$0xff] %v610
        %666 = vst [vmem:[#allocation2 + $0x11] sm:$0xff] %v611
        %667 = vst [vmem:[#allocation2 + $0x19] sm:$0xff] %v612
        %668 = vst [vmem:[#allocation2 + $0x21] sm:$0xf] %v613
        %669 = vst [vmem:[#allocation2 + $0x25] sm:$0x1] 0.0
        %v670 = vld [vmem:[#allocation2] sm:$0xff]
        %v671 = vld [vmem:[#allocation2 + $0x8] sm:$0xff]
        %v672 = vld [vmem:[#allocation2 + $0x10] sm:$0xff]
        %v673 = vld [vmem:[#allocation2 + $0x18] sm:$0xff]
        %v674 = vld [vmem:[#allocation2 + $0x20] sm:$0xf]
        %v675 = vld [vmem:[#allocation2 + $0x1] sm:$0xff]
        %v676 = vld [vmem:[#allocation2 + $0x9] sm:$0xff]
        %v677 = vld [vmem:[#allocation2 + $0x11] sm:$0xff]
        %v678 = vld [vmem:[#allocation2 + $0x19] sm:$0xff]
        %v679 = vld [vmem:[#allocation2 + $0x21] sm:$0xf]
        %v680 = vld [vmem:[#allocation2 + $0x2] sm:$0xff]
        %v681 = vld [vmem:[#allocation2 + $0xa] sm:$0xff]
        %v682 = vld [vmem:[#allocation2 + $0x12] sm:$0xff]
        %v683 = vld [vmem:[#allocation2 + $0x1a] sm:$0xff]
        %v684 = vld [vmem:[#allocation2 + $0x22] sm:$0xf]
        %v685 = vpack.c.bf16 %v671, %v670
        %v686 = vpack.c.bf16 %v676, %v675
        %v687 = vpack.c.bf16 %v681, %v680
        %v688 = vpack.c.bf16 %v673, %v672
        %v689 = vpack.c.bf16 %v678, %v677
        %v690 = vpack.c.bf16 %v683, %v682
        %v691 = vpack.c.bf16 %v674, %v674
        %v692 = vpack.c.bf16 %v679, %v679
        %v693 = vpack.c.bf16 %v684, %v684
        %v695 = vlaneseq
        %v696 = vshrl.u32 %v695, 7
        %v697 = vsub.s32 0, %v696
        %v698 = vrot.slane %v662, %v697
        %v748 = vunpack.c.l.b16 %v614
        %v749 = vunpack.c.l.b16 %v615
        %v750 = vunpack.c.l.b16 %v616
        %v751 = vunpack.c.l.b16 %v617
        %v752 = vunpack.c.l.b16 %v618
        %v753 = vunpack.c.l.b16 %v619
        %v754 = vunpack.c.l.b16 %v620
        %v755 = vunpack.c.l.b16 %v621
        %v756 = vunpack.c.l.b16 %v622
        %v757 = vunpack.c.l.b16 %v623
        %v758 = vunpack.c.l.b16 %v624
        %v759 = vunpack.c.l.b16 %v625
        %v760 = vunpack.c.l.b16 %v626
        %v761 = vunpack.c.l.b16 %v627
        %v762 = vunpack.c.l.b16 %v628
        %v763 = vunpack.c.l.b16 %v629
        %v764 = vunpack.c.l.b16 %v630
        %v765 = vunpack.c.l.b16 %v631
        %v766 = vunpack.c.l.b16 %v632
        %v767 = vunpack.c.l.b16 %v633
        %v768 = vunpack.c.l.b16 %v634
        %v769 = vunpack.c.l.b16 %v635
        %v770 = vunpack.c.l.b16 %v636
        %v771 = vunpack.c.l.b16 %v637
        %v772 = vunpack.c.l.b16 %v638
        %v773 = vunpack.c.l.b16 %v639
        %v774 = vunpack.c.l.b16 %v640
        %v775 = vunpack.c.l.b16 %v641
        %v776 = vunpack.c.l.b16 %v642
        %v777 = vunpack.c.l.b16 %v643
        %v778 = vunpack.c.l.b16 %v644
        %v779 = vunpack.c.l.b16 %v645
        %v780 = vunpack.c.l.b16 %v646
        %v781 = vunpack.c.l.b16 %v647
        %v782 = vunpack.c.l.b16 %v648
        %v783 = vunpack.c.l.b16 %v649
        %v784 = vunpack.c.l.b16 %v650
        %v785 = vunpack.c.l.b16 %v651
        %v786 = vunpack.c.l.b16 %v652
        %v787 = vunpack.c.l.b16 %v653
        %v788 = vunpack.c.l.b16 %v654
        %v789 = vunpack.c.l.b16 %v655
        %v790 = vunpack.c.l.b16 %v656
        %v791 = vunpack.c.l.b16 %v657
        %v792 = vunpack.c.l.b16 %v658
        %v793 = vunpack.c.l.b16 %v659
        %v794 = vunpack.c.l.b16 %v660
        %v795 = vunpack.c.l.b16 %v661
        %v796 = vpack.c.b16 %v749, %v748
        %v797 = vpack.c.b16 %v751, %v750
        %v798 = vpack.c.b16 %v753, %v752
        %v799 = vpack.c.b16 %v755, %v754
        %v800 = vpack.c.b16 %v757, %v756
        %v801 = vpack.c.b16 %v759, %v758
        %v802 = vpack.c.b16 %v761, %v760
        %v803 = vpack.c.b16 %v763, %v762
        %v804 = vpack.c.b16 %v765, %v764
        %v805 = vpack.c.b16 %v767, %v766
        %v806 = vpack.c.b16 %v769, %v768
        %v807 = vpack.c.b16 %v771, %v770
        %v808 = vpack.c.b16 %v773, %v772
        %v809 = vpack.c.b16 %v775, %v774
        %v810 = vpack.c.b16 %v777, %v776
        %v811 = vpack.c.b16 %v779, %v778
        %v812 = vpack.c.b16 %v781, %v780
        %v813 = vpack.c.b16 %v783, %v782
        %v814 = vpack.c.b16 %v785, %v784
        %v815 = vpack.c.b16 %v787, %v786
        %v816 = vpack.c.b16 %v789, %v788
        %v817 = vpack.c.b16 %v791, %v790
        %v818 = vpack.c.b16 %v793, %v792
        %v819 = vpack.c.b16 %v795, %v794
        %844 = vmatprep.subr.bf16.mxu0 0
        %845 = vmatpush1.bf16.msra.mxu0 %v796
        %846 = vmatprep.subr.bf16.mxu0 0
        %847 = vmatpush1.bf16.msra.mxu0 %v797
        %848 = vmatprep.subr.bf16.mxu0 0
        %849 = vmatpush1.bf16.msra.mxu0 %v798
        %850 = vmatprep.subr.bf16.mxu0 0
        %851 = vmatpush1.bf16.msra.mxu0 %v799
        %852 = vmatprep.subr.bf16.mxu0 0
        %853 = vmatpush1.bf16.msra.mxu0 %v800
        %854 = vmatprep.subr.bf16.mxu0 0
        %855 = vmatpush1.bf16.msra.mxu0 %v801
        %856 = vmatprep.subr.bf16.mxu0 0
        %857 = vmatpush1.bf16.msra.mxu0 %v802
        %858 = vmatprep.subr.bf16.mxu0 0
        %859 = vmatpush1.bf16.msra.mxu0 %v803
        %860 = vmatprep.subr.bf16.mxu0 0
        %861 = vmatpush1.bf16.msra.mxu0 %v804
        %862 = vmatprep.subr.bf16.mxu0 0
        %863 = vmatpush1.bf16.msra.mxu0 %v805
        %864 = vmatprep.subr.bf16.mxu0 0
        %865 = vmatpush1.bf16.msra.mxu0 %v806
        %866 = vmatprep.subr.bf16.mxu0 0
        %867 = vmatpush1.bf16.msra.mxu0 %v807
        %868 = vmatprep.subr.bf16.mxu0 0
        %869 = vmatpush1.bf16.msra.mxu0 %v808
        %870 = vmatprep.subr.bf16.mxu0 0
        %871 = vmatpush1.bf16.msra.mxu0 %v809
        %872 = vmatprep.subr.bf16.mxu0 0
        %873 = vmatpush1.bf16.msra.mxu0 %v810
        %874 = vmatprep.subr.bf16.mxu0 0
        %875 = vmatpush1.bf16.msra.mxu0 %v811
        %876 = vmatprep.mubr.bf16.mxu0 %v686
        %877 = vmatmul.mubr.bf16.gmra.mrb[0].mxu0 %v685
        %v878 = vpop.f32.mrb[0].mxu0
        %v879 = vadd.f32 %v698, %v878
        %v880 = vpop.f32.mrb[0].mxu0
        %v881 = vpop.f32.mrb[0].mxu0
        %v882 = vadd.f32 %v698, %v881
        %v883 = vpop.f32.mrb[0].mxu0
        %884 = vmatprep.mubr.bf16.mxu0 %v689
        %885 = vmatmul.mubr.bf16.gmra.mrb[0].mxu0 %v688
        %v886 = vpop.f32.mrb[0].mxu0
        %v887 = vadd.f32 %v698, %v886
        %v888 = vpop.f32.mrb[0].mxu0
        %v889 = vpop.f32.mrb[0].mxu0
        %v890 = vadd.f32 %v698, %v889
        %v891 = vpop.f32.mrb[0].mxu0
        %892 = vmatprep.mubr.bf16.mxu0 %v692
        %893 = vmatmul.mubr.bf16.gmra.mrb[0].mxu0 %v691
        %v894 = vpop.f32.mrb[0].mxu0
        %v895 = vadd.f32 %v698, %v894
        %v896 = vpop.f32.mrb[0].mxu0
        %v897 = vpop.f32.mrb[0].mxu0
        %v898 = vpop.f32.mrb[0].mxu0
        %899 = vdwg.mxu0
        %900 = vmatprep.subr.bf16.mxu0 0
        %901 = vmatpush1.bf16.msra.mxu0 %v812
        %902 = vmatprep.subr.bf16.mxu0 0
        %903 = vmatpush1.bf16.msra.mxu0 %v813
        %904 = vmatprep.subr.bf16.mxu0 0
        %905 = vmatpush1.bf16.msra.mxu0 %v814
        %906 = vmatprep.subr.bf16.mxu0 0
        %907 = vmatpush1.bf16.msra.mxu0 %v815
        %908 = vmatprep.subr.bf16.mxu0 0
        %909 = vmatpush1.bf16.msra.mxu0 %v816
        %910 = vmatprep.subr.bf16.mxu0 0
        %911 = vmatpush1.bf16.msra.mxu0 %v817
        %912 = vmatprep.subr.bf16.mxu0 0
        %913 = vmatpush1.bf16.msra.mxu0 %v818
        %914 = vmatprep.subr.bf16.mxu0 0
        %915 = vmatpush1.bf16.msra.mxu0 %v819
        %916 = vmatprep.subr.bf16.mxu0 0
        %917 = vmatpush1.bf16.msra.mxu0 0
        %918 = vmatprep.subr.bf16.mxu0 0
        %919 = vmatpush1.bf16.msra.mxu0 0
        %920 = vmatprep.subr.bf16.mxu0 0
        %921 = vmatpush1.bf16.msra.mxu0 0
        %922 = vmatprep.subr.bf16.mxu0 0
        %923 = vmatpush1.bf16.msra.mxu0 0
        %924 = vmatprep.subr.bf16.mxu0 0
        %925 = vmatpush1.bf16.msra.mxu0 0
        %926 = vmatprep.subr.bf16.mxu0 0
        %927 = vmatpush1.bf16.msra.mxu0 0
        %928 = vmatprep.subr.bf16.mxu0 0
        %929 = vmatpush1.bf16.msra.mxu0 0
        %930 = vmatprep.subr.bf16.mxu0 0
        %931 = vmatpush1.bf16.msra.mxu0 0
        %932 = vmatprep.mubr.bf16.mxu0 0
        %933 = vmatmul.mubr.bf16.gmra.mrb[0].mxu0 %v687
        %v934 = vpop.f32.mrb[0].mxu0
        %v935 = vadd.f32 %v879, %v934
        %v936 = vpop.f32.mrb[0].mxu0
        %v937 = vpop.f32.mrb[0].mxu0
        %v938 = vadd.f32 %v882, %v937
        %v939 = vpop.f32.mrb[0].mxu0
        %940 = vmatprep.mubr.bf16.mxu0 0
        %941 = vmatmul.mubr.bf16.gmra.mrb[0].mxu0 %v690
        %v942 = vpop.f32.mrb[0].mxu0
        %v943 = vadd.f32 %v887, %v942
        %v944 = vpop.f32.mrb[0].mxu0
        %v945 = vpop.f32.mrb[0].mxu0
        %v946 = vadd.f32 %v890, %v945
        %v947 = vpop.f32.mrb[0].mxu0
        %948 = vmatprep.mubr.bf16.mxu0 0
        %949 = vmatmul.mubr.bf16.gmra.mrb[0].mxu0 %v693
        %v950 = vpop.f32.mrb[0].mxu0
        %v951 = vadd.f32 %v895, %v950
        %v952 = vpop.f32.mrb[0].mxu0
        %v953 = vpop.f32.mrb[0].mxu0
        %v954 = vpop.f32.mrb[0].mxu0
        %955 = vdwg.mxu0
        %v956 = vld [vmem:[%s7] sm:$0x1]
        %v958 = vlaneseq
        %v959 = vshrl.u32 %v958, 7
        %v960 = vsub.s32 0, %v959
        %v961 = vrot.slane %v956, %v960
        %v963 = vmul.f32 %v935, %v961
        %v964 = vmul.f32 %v938, %v961
        %v965 = vmul.f32 %v943, %v961
        %v966 = vmul.f32 %v946, %v961
        %v967 = vmul.f32 %v951, %v961
        %v968 = vld [vmem:[%s8] sm:$0x1]
        %v970 = vlaneseq
        %v971 = vshrl.u32 %v970, 7
        %v972 = vsub.s32 0, %v971
        %v973 = vrot.slane %v968, %v972
        %v975 = vadd.f32 %v963, %v973
        %v976 = vadd.f32 %v964, %v973
        %v977 = vadd.f32 %v965, %v973
        %v978 = vadd.f32 %v966, %v973
        %v979 = vadd.f32 %v967, %v973
        %v980 = vmax.f32 %v975, 0.0
        %v981 = vmax.f32 %v976, 0.0
        %v982 = vmax.f32 %v977, 0.0
        %v983 = vmax.f32 %v978, 0.0
        %v984 = vmax.f32 %v979, 0.0
        %v985 = vld [vmem:[#allocation5] sm:$0xf]
        %v986 = vld [vmem:[#allocation5 + $0x4] sm:$0xf]
        %v987 = vld [vmem:[#allocation5 + $0x8] sm:$0xf]
        %v988 = vld [vmem:[#allocation5 + $0xc] sm:$0xf]
        %v989 = vld [vmem:[#allocation5 + $0x10] sm:$0xf]
        %v990 = vld [vmem:[#allocation5 + $0x14] sm:$0xf]
        %v991 = vld [vmem:[#allocation5 + $0x18] sm:$0xf]
        %v992 = vld [vmem:[#allocation5 + $0x1c] sm:$0xf]
        %v993 = vld [vmem:[#allocation5 + $0x20] sm:$0xf]
        %v994 = vld [vmem:[#allocation5 + $0x24] sm:$0xf]
        %v995 = vld [vmem:[#allocation5 + $0x28] sm:$0xf]
        %v996 = vld [vmem:[#allocation5 + $0x2c] sm:$0xf]
        %v997 = vld [vmem:[#allocation5 + $0x30] sm:$0xf]
        %v998 = vld [vmem:[#allocation5 + $0x34] sm:$0xf]
        %v999 = vld [vmem:[#allocation5 + $0x38] sm:$0xf]
        %v1000 = vld [vmem:[#allocation5 + $0x3c] sm:$0xf]
        %v1001 = vld [vmem:[#allocation5 + $0x40] sm:$0xf]
        %v1002 = vld [vmem:[#allocation5 + $0x44] sm:$0xf]
        %v1003 = vld [vmem:[#allocation5 + $0x48] sm:$0xf]
        %v1004 = vld [vmem:[#allocation5 + $0x4c] sm:$0xf]
        %v1005 = vld [vmem:[#allocation5 + $0x50] sm:$0xf]
        %v1006 = vld [vmem:[#allocation5 + $0x54] sm:$0xf]
        %v1007 = vld [vmem:[#allocation5 + $0x58] sm:$0xf]
        %v1008 = vld [vmem:[#allocation5 + $0x5c] sm:$0xf]
        %v1009 = vld [vmem:[#allocation5 + $0x60] sm:$0xf]
        %v1010 = vld [vmem:[#allocation5 + $0x64] sm:$0xf]
        %v1011 = vld [vmem:[#allocation5 + $0x68] sm:$0xf]
        %v1012 = vld [vmem:[#allocation5 + $0x6c] sm:$0xf]
        %v1013 = vld [vmem:[#allocation5 + $0x70] sm:$0xf]
        %v1014 = vld [vmem:[#allocation5 + $0x74] sm:$0xf]
        %v1015 = vld [vmem:[#allocation5 + $0x78] sm:$0xf]
        %v1016 = vld [vmem:[#allocation5 + $0x7c] sm:$0xf]
        %v1017 = vld [vmem:[#allocation5 + $0x80] sm:$0xf]
        %v1018 = vld [vmem:[#allocation5 + $0x84] sm:$0xf]
        %v1019 = vld [vmem:[#allocation5 + $0x88] sm:$0xf]
        %v1020 = vld [vmem:[#allocation5 + $0x8c] sm:$0xf]
        %v1021 = vld [vmem:[#allocation5 + $0x90] sm:$0xf]
        %v1022 = vld [vmem:[#allocation5 + $0x94] sm:$0xf]
        %v1023 = vld [vmem:[#allocation5 + $0x98] sm:$0xf]
        %v1024 = vld [vmem:[#allocation5 + $0x9c] sm:$0xf]
        %v1025 = vld [vmem:[#allocation5 + $0xa0] sm:$0xf]
        %v1026 = vld [vmem:[#allocation5 + $0xa4] sm:$0xf]
        %v1027 = vld [vmem:[#allocation5 + $0xa8] sm:$0xf]
        %v1028 = vld [vmem:[#allocation5 + $0xac] sm:$0xf]
        %v1029 = vld [vmem:[#allocation5 + $0xb0] sm:$0xf]
        %v1030 = vld [vmem:[#allocation5 + $0xb4] sm:$0xf]
        %v1031 = vld [vmem:[#allocation5 + $0xb8] sm:$0xf]
        %v1032 = vld [vmem:[#allocation5 + $0xbc] sm:$0xf]
        %v1033 = vld [vmem:[%s6] sm:$0x1]
        %1034 = vst [vmem:[#allocation2] sm:$0x1] 0.0
        %1035 = vst [vmem:[#allocation2 + $0x1] sm:$0xff] %v980
        %1036 = vst [vmem:[#allocation2 + $0x9] sm:$0xff] %v981
        %1037 = vst [vmem:[#allocation2 + $0x11] sm:$0xff] %v982
        %1038 = vst [vmem:[#allocation2 + $0x19] sm:$0xff] %v983
        %1039 = vst [vmem:[#allocation2 + $0x21] sm:$0xf] %v984
        %1040 = vst [vmem:[#allocation2 + $0x25] sm:$0x1] 0.0
        %v1041 = vld [vmem:[#allocation2] sm:$0xff]
        %v1042 = vld [vmem:[#allocation2 + $0x8] sm:$0xff]
        %v1043 = vld [vmem:[#allocation2 + $0x10] sm:$0xff]
        %v1044 = vld [vmem:[#allocation2 + $0x18] sm:$0xff]
        %v1045 = vld [vmem:[#allocation2 + $0x20] sm:$0xf]
        %v1046 = vld [vmem:[#allocation2 + $0x1] sm:$0xff]
        %v1047 = vld [vmem:[#allocation2 + $0x9] sm:$0xff]
        %v1048 = vld [vmem:[#allocation2 + $0x11] sm:$0xff]
        %v1049 = vld [vmem:[#allocation2 + $0x19] sm:$0xff]
        %v1050 = vld [vmem:[#allocation2 + $0x21] sm:$0xf]
        %v1051 = vld [vmem:[#allocation2 + $0x2] sm:$0xff]
        %v1052 = vld [vmem:[#allocation2 + $0xa] sm:$0xff]
        %v1053 = vld [vmem:[#allocation2 + $0x12] sm:$0xff]
        %v1054 = vld [vmem:[#allocation2 + $0x1a] sm:$0xff]
        %v1055 = vld [vmem:[#allocation2 + $0x22] sm:$0xf]
        %v1056 = vpack.c.bf16 %v1042, %v1041
        %v1057 = vpack.c.bf16 %v1047, %v1046
        %v1058 = vpack.c.bf16 %v1052, %v1051
        %v1059 = vpack.c.bf16 %v1044, %v1043
        %v1060 = vpack.c.bf16 %v1049, %v1048
        %v1061 = vpack.c.bf16 %v1054, %v1053
        %v1062 = vpack.c.bf16 %v1045, %v1045
        %v1063 = vpack.c.bf16 %v1050, %v1050
        %v1064 = vpack.c.bf16 %v1055, %v1055
        %v1066 = vlaneseq
        %v1067 = vshrl.u32 %v1066, 7
        %v1068 = vsub.s32 0, %v1067
        %v1069 = vrot.slane %v1033, %v1068
        %v1119 = vunpack.c.l.b16 %v985
        %v1120 = vunpack.c.l.b16 %v986
        %v1121 = vunpack.c.l.b16 %v987
        %v1122 = vunpack.c.l.b16 %v988
        %v1123 = vunpack.c.l.b16 %v989
        %v1124 = vunpack.c.l.b16 %v990
        %v1125 = vunpack.c.l.b16 %v991
        %v1126 = vunpack.c.l.b16 %v992
        %v1127 = vunpack.c.l.b16 %v993
        %v1128 = vunpack.c.l.b16 %v994
        %v1129 = vunpack.c.l.b16 %v995
        %v1130 = vunpack.c.l.b16 %v996
        %v1131 = vunpack.c.l.b16 %v997
        %v1132 = vunpack.c.l.b16 %v998
        %v1133 = vunpack.c.l.b16 %v999
        %v1134 = vunpack.c.l.b16 %v1000
        %v1135 = vunpack.c.l.b16 %v1001
        %v1136 = vunpack.c.l.b16 %v1002
        %v1137 = vunpack.c.l.b16 %v1003
        %v1138 = vunpack.c.l.b16 %v1004
        %v1139 = vunpack.c.l.b16 %v1005
        %v1140 = vunpack.c.l.b16 %v1006
        %v1141 = vunpack.c.l.b16 %v1007
        %v1142 = vunpack.c.l.b16 %v1008
        %v1143 = vunpack.c.l.b16 %v1009
        %v1144 = vunpack.c.l.b16 %v1010
        %v1145 = vunpack.c.l.b16 %v1011
        %v1146 = vunpack.c.l.b16 %v1012
        %v1147 = vunpack.c.l.b16 %v1013
        %v1148 = vunpack.c.l.b16 %v1014
        %v1149 = vunpack.c.l.b16 %v1015
        %v1150 = vunpack.c.l.b16 %v1016
        %v1151 = vunpack.c.l.b16 %v1017
        %v1152 = vunpack.c.l.b16 %v1018
        %v1153 = vunpack.c.l.b16 %v1019
        %v1154 = vunpack.c.l.b16 %v1020
        %v1155 = vunpack.c.l.b16 %v1021
        %v1156 = vunpack.c.l.b16 %v1022
        %v1157 = vunpack.c.l.b16 %v1023
        %v1158 = vunpack.c.l.b16 %v1024
        %v1159 = vunpack.c.l.b16 %v1025
        %v1160 = vunpack.c.l.b16 %v1026
        %v1161 = vunpack.c.l.b16 %v1027
        %v1162 = vunpack.c.l.b16 %v1028
        %v1163 = vunpack.c.l.b16 %v1029
        %v1164 = vunpack.c.l.b16 %v1030
        %v1165 = vunpack.c.l.b16 %v1031
        %v1166 = vunpack.c.l.b16 %v1032
        %v1167 = vpack.c.b16 %v1120, %v1119
        %v1168 = vpack.c.b16 %v1122, %v1121
        %v1169 = vpack.c.b16 %v1124, %v1123
        %v1170 = vpack.c.b16 %v1126, %v1125
        %v1171 = vpack.c.b16 %v1128, %v1127
        %v1172 = vpack.c.b16 %v1130, %v1129
        %v1173 = vpack.c.b16 %v1132, %v1131
        %v1174 = vpack.c.b16 %v1134, %v1133
        %v1175 = vpack.c.b16 %v1136, %v1135
        %v1176 = vpack.c.b16 %v1138, %v1137
        %v1177 = vpack.c.b16 %v1140, %v1139
        %v1178 = vpack.c.b16 %v1142, %v1141
        %v1179 = vpack.c.b16 %v1144, %v1143
        %v1180 = vpack.c.b16 %v1146, %v1145
        %v1181 = vpack.c.b16 %v1148, %v1147
        %v1182 = vpack.c.b16 %v1150, %v1149
        %v1183 = vpack.c.b16 %v1152, %v1151
        %v1184 = vpack.c.b16 %v1154, %v1153
        %v1185 = vpack.c.b16 %v1156, %v1155
        %v1186 = vpack.c.b16 %v1158, %v1157
        %v1187 = vpack.c.b16 %v1160, %v1159
        %v1188 = vpack.c.b16 %v1162, %v1161
        %v1189 = vpack.c.b16 %v1164, %v1163
        %v1190 = vpack.c.b16 %v1166, %v1165
        %1215 = vmatprep.subr.bf16.mxu0 0
        %1216 = vmatpush1.bf16.msra.mxu0 %v1167
        %1217 = vmatprep.subr.bf16.mxu0 0
        %1218 = vmatpush1.bf16.msra.mxu0 %v1168
        %1219 = vmatprep.subr.bf16.mxu0 0
        %1220 = vmatpush1.bf16.msra.mxu0 %v1169
        %1221 = vmatprep.subr.bf16.mxu0 0
        %1222 = vmatpush1.bf16.msra.mxu0 %v1170
        %1223 = vmatprep.subr.bf16.mxu0 0
        %1224 = vmatpush1.bf16.msra.mxu0 %v1171
        %1225 = vmatprep.subr.bf16.mxu0 0
        %1226 = vmatpush1.bf16.msra.mxu0 %v1172
        %1227 = vmatprep.subr.bf16.mxu0 0
        %1228 = vmatpush1.bf16.msra.mxu0 %v1173
        %1229 = vmatprep.subr.bf16.mxu0 0
        %1230 = vmatpush1.bf16.msra.mxu0 %v1174
        %1231 = vmatprep.subr.bf16.mxu0 0
        %1232 = vmatpush1.bf16.msra.mxu0 %v1175
        %1233 = vmatprep.subr.bf16.mxu0 0
        %1234 = vmatpush1.bf16.msra.mxu0 %v1176
        %1235 = vmatprep.subr.bf16.mxu0 0
        %1236 = vmatpush1.bf16.msra.mxu0 %v1177
        %1237 = vmatprep.subr.bf16.mxu0 0
        %1238 = vmatpush1.bf16.msra.mxu0 %v1178
        %1239 = vmatprep.subr.bf16.mxu0 0
        %1240 = vmatpush1.bf16.msra.mxu0 %v1179
        %1241 = vmatprep.subr.bf16.mxu0 0
        %1242 = vmatpush1.bf16.msra.mxu0 %v1180
        %1243 = vmatprep.subr.bf16.mxu0 0
        %1244 = vmatpush1.bf16.msra.mxu0 %v1181
        %1245 = vmatprep.subr.bf16.mxu0 0
        %1246 = vmatpush1.bf16.msra.mxu0 %v1182
        %1247 = vmatprep.mubr.bf16.mxu0 %v1057
        %1248 = vmatmul.mubr.bf16.gmra.mrb[0].mxu0 %v1056
        %v1249 = vpop.f32.mrb[0].mxu0
        %v1250 = vadd.f32 %v1069, %v1249
        %v1251 = vpop.f32.mrb[0].mxu0
        %v1252 = vpop.f32.mrb[0].mxu0
        %v1253 = vadd.f32 %v1069, %v1252
        %v1254 = vpop.f32.mrb[0].mxu0
        %1255 = vmatprep.mubr.bf16.mxu0 %v1060
        %1256 = vmatmul.mubr.bf16.gmra.mrb[0].mxu0 %v1059
        %v1257 = vpop.f32.mrb[0].mxu0
        %v1258 = vadd.f32 %v1069, %v1257
        %v1259 = vpop.f32.mrb[0].mxu0
        %v1260 = vpop.f32.mrb[0].mxu0
        %v1261 = vadd.f32 %v1069, %v1260
        %v1262 = vpop.f32.mrb[0].mxu0
        %1263 = vmatprep.mubr.bf16.mxu0 %v1063
        %1264 = vmatmul.mubr.bf16.gmra.mrb[0].mxu0 %v1062
        %v1265 = vpop.f32.mrb[0].mxu0
        %v1266 = vadd.f32 %v1069, %v1265
        %v1267 = vpop.f32.mrb[0].mxu0
        %v1268 = vpop.f32.mrb[0].mxu0
        %v1269 = vpop.f32.mrb[0].mxu0
        %1270 = vdwg.mxu0
        %1271 = vmatprep.subr.bf16.mxu0 0
        %1272 = vmatpush1.bf16.msra.mxu0 %v1183
        %1273 = vmatprep.subr.bf16.mxu0 0
        %1274 = vmatpush1.bf16.msra.mxu0 %v1184
        %1275 = vmatprep.subr.bf16.mxu0 0
        %1276 = vmatpush1.bf16.msra.mxu0 %v1185
        %1277 = vmatprep.subr.bf16.mxu0 0
        %1278 = vmatpush1.bf16.msra.mxu0 %v1186
        %1279 = vmatprep.subr.bf16.mxu0 0
        %1280 = vmatpush1.bf16.msra.mxu0 %v1187
        %1281 = vmatprep.subr.bf16.mxu0 0
        %1282 = vmatpush1.bf16.msra.mxu0 %v1188
        %1283 = vmatprep.subr.bf16.mxu0 0
        %1284 = vmatpush1.bf16.msra.mxu0 %v1189
        %1285 = vmatprep.subr.bf16.mxu0 0
        %1286 = vmatpush1.bf16.msra.mxu0 %v1190
        %1287 = vmatprep.subr.bf16.mxu0 0
        %1288 = vmatpush1.bf16.msra.mxu0 0
        %1289 = vmatprep.subr.bf16.mxu0 0
        %1290 = vmatpush1.bf16.msra.mxu0 0
        %1291 = vmatprep.subr.bf16.mxu0 0
        %1292 = vmatpush1.bf16.msra.mxu0 0
        %1293 = vmatprep.subr.bf16.mxu0 0
        %1294 = vmatpush1.bf16.msra.mxu0 0
        %1295 = vmatprep.subr.bf16.mxu0 0
        %1296 = vmatpush1.bf16.msra.mxu0 0
        %1297 = vmatprep.subr.bf16.mxu0 0
        %1298 = vmatpush1.bf16.msra.mxu0 0
        %1299 = vmatprep.subr.bf16.mxu0 0
        %1300 = vmatpush1.bf16.msra.mxu0 0
        %1301 = vmatprep.subr.bf16.mxu0 0
        %1302 = vmatpush1.bf16.msra.mxu0 0
        %1303 = vmatprep.mubr.bf16.mxu0 0
        %1304 = vmatmul.mubr.bf16.gmra.mrb[0].mxu0 %v1058
        %v1305 = vpop.f32.mrb[0].mxu0
        %v1306 = vadd.f32 %v1250, %v1305
        %v1307 = vpop.f32.mrb[0].mxu0
        %v1308 = vpop.f32.mrb[0].mxu0
        %v1309 = vadd.f32 %v1253, %v1308
        %v1310 = vpop.f32.mrb[0].mxu0
        %1311 = vmatprep.mubr.bf16.mxu0 0
        %1312 = vmatmul.mubr.bf16.gmra.mrb[0].mxu0 %v1061
        %v1313 = vpop.f32.mrb[0].mxu0
        %v1314 = vadd.f32 %v1258, %v1313
        %v1315 = vpop.f32.mrb[0].mxu0
        %v1316 = vpop.f32.mrb[0].mxu0
        %v1317 = vadd.f32 %v1261, %v1316
        %v1318 = vpop.f32.mrb[0].mxu0
        %1319 = vmatprep.mubr.bf16.mxu0 0
        %1320 = vmatmul.mubr.bf16.gmra.mrb[0].mxu0 %v1064
        %v1321 = vpop.f32.mrb[0].mxu0
        %v1322 = vadd.f32 %v1266, %v1321
        %v1323 = vpop.f32.mrb[0].mxu0
        %v1324 = vpop.f32.mrb[0].mxu0
        %v1325 = vpop.f32.mrb[0].mxu0
        %1326 = vdwg.mxu0
        %v1327 = vadd.f32 %v580, %v1306
        %v1328 = vadd.f32 %v581, %v1309
        %v1329 = vadd.f32 %v582, %v1314
        %v1330 = vadd.f32 %v583, %v1317
        %v1331 = vadd.f32 %v584, %v1322
        %v1332 = vpack.c.bf16 %v1328, %v1327
        %v1333 = vpack.c.bf16 %v1330, %v1329
        %v1334 = vpack.c.bf16 %v1331, %v1331
        %v1335 = vld [vmem:[%s13] sm:$0xf]
        %v1336 = vld [vmem:[%s13 + $0x4] sm:$0x3]
        %v1339 = vunpack.c.l.b16 %v1335
        %v1340 = vunpack.c.l.b16 %v1336
        %v1341 = vpack.c.b16 %v1340, %v1339
        %vm1342 = vcmask 293888
        %v1344 = vsel %vm1342, %v1341, 0
        %vm1346 = vcmask 1041408
        %v1348 = vsel %vm1346, %v1334, 0
        %1350 = vmatprep.subr.bf16.mxu0 0
        %1351 = vmatpush1.bf16.msra.mxu0 %v1332
        %1352 = vmatprep.subr.bf16.mxu0 0
        %1353 = vmatpush1.bf16.msra.mxu0 %v1333
        %1354 = vmatprep.subr.bf16.mxu0 0
        %1355 = vmatpush1.bf16.msra.mxu0 %v1348
        %1356 = vmatprep.subr.bf16.mxu0 0
        %1357 = vmatpush1.bf16.msra.mxu0 0
        %1358 = vmatprep.subr.bf16.mxu0 0
        %1359 = vmatpush1.bf16.msra.mxu0 0
        %1360 = vmatprep.subr.bf16.mxu0 0
        %1361 = vmatpush1.bf16.msra.mxu0 0
        %1362 = vmatprep.subr.bf16.mxu0 0
        %1363 = vmatpush1.bf16.msra.mxu0 0
        %1364 = vmatprep.subr.bf16.mxu0 0
        %1365 = vmatpush1.bf16.msra.mxu0 0
        %1366 = vmatprep.subr.bf16.mxu0 0
        %1367 = vmatpush1.bf16.msra.mxu0 0
        %1368 = vmatprep.subr.bf16.mxu0 0
        %1369 = vmatpush1.bf16.msra.mxu0 0
        %1370 = vmatprep.subr.bf16.mxu0 0
        %1371 = vmatpush1.bf16.msra.mxu0 0
        %1372 = vmatprep.subr.bf16.mxu0 0
        %1373 = vmatpush1.bf16.msra.mxu0 0
        %1374 = vmatprep.subr.bf16.mxu0 0
        %1375 = vmatpush1.bf16.msra.mxu0 0
        %1376 = vmatprep.subr.bf16.mxu0 0
        %1377 = vmatpush1.bf16.msra.mxu0 0
        %1378 = vmatprep.subr.bf16.mxu0 0
        %1379 = vmatpush1.bf16.msra.mxu0 0
        %1380 = vmatprep.subr.bf16.mxu0 0
        %1381 = vmatpush1.bf16.msra.mxu0 0
        %1382 = vmatprep.mubr.bf16.mxu0 0
        %1383 = vmatmul.mubr.bf16.gmra.mrb[0].mxu0 %v1344
        %v1384 = vpop.f32.mrb[0].mxu0
        %v1385 = vadd.f32 0.0, %v1384
        %v1386 = vpop.f32.mrb[0].mxu0
        %v1387 = vpop.f32.mrb[0].mxu0
        %v1388 = vadd.f32 0.0, %v1387
        %v1389 = vpop.f32.mrb[0].mxu0
        %1390 = vdwg.mxu0
        %s1391 = scalar_lea.vmem %s13, 8
        %v1392 = vld [vmem:[%s1391] sm:$0xf]
        %v1393 = vld [vmem:[%s1391 + $0x4] sm:$0x3]
        %v1396 = vunpack.c.l.b16 %v1392
        %v1397 = vunpack.c.l.b16 %v1393
        %v1398 = vpack.c.b16 %v1397, %v1396
        %v1400 = vsel %vm1342, %v1398, 0
        %1402 = vmatprep.subr.bf16.mxu0 0
        %1403 = vmatpush1.bf16.msra.mxu0 %v1332
        %1404 = vmatprep.subr.bf16.mxu0 0
        %1405 = vmatpush1.bf16.msra.mxu0 %v1333
        %1406 = vmatprep.subr.bf16.mxu0 0
        %1407 = vmatpush1.bf16.msra.mxu0 %v1348
        %1408 = vmatprep.subr.bf16.mxu0 0
        %1409 = vmatpush1.bf16.msra.mxu0 0
        %1410 = vmatprep.subr.bf16.mxu0 0
        %1411 = vmatpush1.bf16.msra.mxu0 0
        %1412 = vmatprep.subr.bf16.mxu0 0
        %1413 = vmatpush1.bf16.msra.mxu0 0
        %1414 = vmatprep.subr.bf16.mxu0 0
        %1415 = vmatpush1.bf16.msra.mxu0 0
        %1416 = vmatprep.subr.bf16.mxu0 0
        %1417 = vmatpush1.bf16.msra.mxu0 0
        %1418 = vmatprep.subr.bf16.mxu0 0
        %1419 = vmatpush1.bf16.msra.mxu0 0
        %1420 = vmatprep.subr.bf16.mxu0 0
        %1421 = vmatpush1.bf16.msra.mxu0 0
        %1422 = vmatprep.subr.bf16.mxu0 0
        %1423 = vmatpush1.bf16.msra.mxu0 0
        %1424 = vmatprep.subr.bf16.mxu0 0
        %1425 = vmatpush1.bf16.msra.mxu0 0
        %1426 = vmatprep.subr.bf16.mxu0 0
        %1427 = vmatpush1.bf16.msra.mxu0 0
        %1428 = vmatprep.subr.bf16.mxu0 0
        %1429 = vmatpush1.bf16.msra.mxu0 0
        %1430 = vmatprep.subr.bf16.mxu0 0
        %1431 = vmatpush1.bf16.msra.mxu0 0
        %1432 = vmatprep.subr.bf16.mxu0 0
        %1433 = vmatpush1.bf16.msra.mxu0 0
        %1434 = vmatprep.mubr.bf16.mxu0 0
        %1435 = vmatmul.mubr.bf16.gmra.mrb[0].mxu0 %v1400
        %v1436 = vpop.f32.mrb[0].mxu0
        %v1437 = vadd.f32 0.0, %v1436
        %v1438 = vpop.f32.mrb[0].mxu0
        %v1439 = vpop.f32.mrb[0].mxu0
        %v1440 = vadd.f32 0.0, %v1439
        %v1441 = vpop.f32.mrb[0].mxu0
        %1442 = vdwg.mxu0
        %s1443 = scalar_lea.vmem %s13, 16
        %v1444 = vld [vmem:[%s1443] sm:$0xf]
        %v1445 = vld [vmem:[%s1443 + $0x4] sm:$0x3]
        %v1448 = vunpack.c.l.b16 %v1444
        %v1449 = vunpack.c.l.b16 %v1445
        %v1450 = vpack.c.b16 %v1449, %v1448
        %v1452 = vsel %vm1342, %v1450, 0
        %1454 = vmatprep.subr.bf16.mxu0 0
        %1455 = vmatpush1.bf16.msra.mxu0 %v1332
        %1456 = vmatprep.subr.bf16.mxu0 0
        %1457 = vmatpush1.bf16.msra.mxu0 %v1333
        %1458 = vmatprep.subr.bf16.mxu0 0
        %1459 = vmatpush1.bf16.msra.mxu0 %v1348
        %1460 = vmatprep.subr.bf16.mxu0 0
        %1461 = vmatpush1.bf16.msra.mxu0 0
        %1462 = vmatprep.subr.bf16.mxu0 0
        %1463 = vmatpush1.bf16.msra.mxu0 0
        %1464 = vmatprep.subr.bf16.mxu0 0
        %1465 = vmatpush1.bf16.msra.mxu0 0
        %1466 = vmatprep.subr.bf16.mxu0 0
        %1467 = vmatpush1.bf16.msra.mxu0 0
        %1468 = vmatprep.subr.bf16.mxu0 0
        %1469 = vmatpush1.bf16.msra.mxu0 0
        %1470 = vmatprep.subr.bf16.mxu0 0
        %1471 = vmatpush1.bf16.msra.mxu0 0
        %1472 = vmatprep.subr.bf16.mxu0 0
        %1473 = vmatpush1.bf16.msra.mxu0 0
        %1474 = vmatprep.subr.bf16.mxu0 0
        %1475 = vmatpush1.bf16.msra.mxu0 0
        %1476 = vmatprep.subr.bf16.mxu0 0
        %1477 = vmatpush1.bf16.msra.mxu0 0
        %1478 = vmatprep.subr.bf16.mxu0 0
        %1479 = vmatpush1.bf16.msra.mxu0 0
        %1480 = vmatprep.subr.bf16.mxu0 0
        %1481 = vmatpush1.bf16.msra.mxu0 0
        %1482 = vmatprep.subr.bf16.mxu0 0
        %1483 = vmatpush1.bf16.msra.mxu0 0
        %1484 = vmatprep.subr.bf16.mxu0 0
        %1485 = vmatpush1.bf16.msra.mxu0 0
        %1486 = vmatprep.mubr.bf16.mxu0 0
        %1487 = vmatmul.mubr.bf16.gmra.mrb[0].mxu0 %v1452
        %v1488 = vpop.f32.mrb[0].mxu0
        %v1489 = vadd.f32 0.0, %v1488
        %v1490 = vpop.f32.mrb[0].mxu0
        %v1491 = vpop.f32.mrb[0].mxu0
        %v1492 = vadd.f32 0.0, %v1491
        %v1493 = vpop.f32.mrb[0].mxu0
        %1494 = vdwg.mxu0
        %v1495 = vmax.f32 %v1385, %v1437
        %v1496 = vmax.f32 %v1388, %v1440
        %vm1497 = vcmp.gt.f32.partialorder %v1437, %v1385
        %vm1498 = vcmp.gt.f32.partialorder %v1440, %v1388
        %v1499 = vsel %vm1497, 1.0, 0.0
        %v1500 = vsel %vm1498, 1.0, 0.0
        %v1501 = vmax.f32 %v1495, %v1489
        %v1502 = vmax.f32 %v1496, %v1492
        %vm1503 = vcmp.gt.f32.partialorder %v1489, %v1495
        %vm1504 = vcmp.gt.f32.partialorder %v1492, %v1496
        %v1505 = vsel %vm1503, 2.0, %v1499
        %v1506 = vsel %vm1504, 2.0, %v1500
        %s1507 = scalar_lea.vmem %s3, 1
        %v1508 = vld [vmem:[%s1507] sm:$0x1]
        %v1510 = vlaneseq
        %v1511 = vshrl.u32 %v1510, 7
        %v1512 = vsub.s32 0, %v1511
        %v1513 = vrot.slane %v1508, %v1512
        %v1515 = vmul.f32 %v1501, %v1513
        %v1516 = vmul.f32 %v1502, %v1513
        %s1517 = scalar_lea.vmem %s4, 1
        %v1518 = vld [vmem:[%s1517] sm:$0x1]
        %v1520 = vlaneseq
        %v1521 = vshrl.u32 %v1520, 7
        %v1522 = vsub.s32 0, %v1521
        %v1523 = vrot.slane %v1518, %v1522
        %v1525 = vadd.f32 %v1515, %v1523
        %v1526 = vadd.f32 %v1516, %v1523
        %v1527 = vmax.f32 %v1525, 0.0
        %v1528 = vmax.f32 %v1526, 0.0
        %s1529 = scalar_lea.vmem [#allocation3], 192
        %v1530 = vld [vmem:[%s1529] sm:$0xf]
        %v1531 = vld [vmem:[%s1529 + $0x4] sm:$0xf]
        %v1532 = vld [vmem:[%s1529 + $0x8] sm:$0xf]
        %v1533 = vld [vmem:[%s1529 + $0xc] sm:$0xf]
        %v1534 = vld [vmem:[%s1529 + $0x10] sm:$0xf]
        %v1535 = vld [vmem:[%s1529 + $0x14] sm:$0xf]
        %v1536 = vld [vmem:[%s1529 + $0x18] sm:$0xf]
        %v1537 = vld [vmem:[%s1529 + $0x1c] sm:$0xf]
        %v1538 = vld [vmem:[%s1529 + $0x20] sm:$0xf]
        %v1539 = vld [vmem:[%s1529 + $0x24] sm:$0xf]
        %v1540 = vld [vmem:[%s1529 + $0x28] sm:$0xf]
        %v1541 = vld [vmem:[%s1529 + $0x2c] sm:$0xf]
        %v1542 = vld [vmem:[%s1529 + $0x30] sm:$0xf]
        %v1543 = vld [vmem:[%s1529 + $0x34] sm:$0xf]
        %v1544 = vld [vmem:[%s1529 + $0x38] sm:$0xf]
        %v1545 = vld [vmem:[%s1529 + $0x3c] sm:$0xf]
        %v1546 = vld [vmem:[%s1529 + $0x40] sm:$0xf]
        %v1547 = vld [vmem:[%s1529 + $0x44] sm:$0xf]
        %v1548 = vld [vmem:[%s1529 + $0x48] sm:$0xf]
        %v1549 = vld [vmem:[%s1529 + $0x4c] sm:$0xf]
        %v1550 = vld [vmem:[%s1529 + $0x50] sm:$0xf]
        %v1551 = vld [vmem:[%s1529 + $0x54] sm:$0xf]
        %v1552 = vld [vmem:[%s1529 + $0x58] sm:$0xf]
        %v1553 = vld [vmem:[%s1529 + $0x5c] sm:$0xf]
        %v1554 = vld [vmem:[%s1529 + $0x60] sm:$0xf]
        %v1555 = vld [vmem:[%s1529 + $0x64] sm:$0xf]
        %v1556 = vld [vmem:[%s1529 + $0x68] sm:$0xf]
        %v1557 = vld [vmem:[%s1529 + $0x6c] sm:$0xf]
        %v1558 = vld [vmem:[%s1529 + $0x70] sm:$0xf]
        %v1559 = vld [vmem:[%s1529 + $0x74] sm:$0xf]
        %v1560 = vld [vmem:[%s1529 + $0x78] sm:$0xf]
        %v1561 = vld [vmem:[%s1529 + $0x7c] sm:$0xf]
        %v1562 = vld [vmem:[%s1529 + $0x80] sm:$0xf]
        %v1563 = vld [vmem:[%s1529 + $0x84] sm:$0xf]
        %v1564 = vld [vmem:[%s1529 + $0x88] sm:$0xf]
        %v1565 = vld [vmem:[%s1529 + $0x8c] sm:$0xf]
        %v1566 = vld [vmem:[%s1529 + $0x90] sm:$0xf]
        %v1567 = vld [vmem:[%s1529 + $0x94] sm:$0xf]
        %v1568 = vld [vmem:[%s1529 + $0x98] sm:$0xf]
        %v1569 = vld [vmem:[%s1529 + $0x9c] sm:$0xf]
        %v1570 = vld [vmem:[%s1529 + $0xa0] sm:$0xf]
        %v1571 = vld [vmem:[%s1529 + $0xa4] sm:$0xf]
        %v1572 = vld [vmem:[%s1529 + $0xa8] sm:$0xf]
        %v1573 = vld [vmem:[%s1529 + $0xac] sm:$0xf]
        %v1574 = vld [vmem:[%s1529 + $0xb0] sm:$0xf]
        %v1575 = vld [vmem:[%s1529 + $0xb4] sm:$0xf]
        %v1576 = vld [vmem:[%s1529 + $0xb8] sm:$0xf]
        %v1577 = vld [vmem:[%s1529 + $0xbc] sm:$0xf]
        %s1578 = scalar_lea.vmem %s2, 1
        %v1579 = vld [vmem:[%s1578] sm:$0x1]
        %1580 = vst [vmem:[#allocation2] sm:$0x1] 0.0
        %1581 = vst [vmem:[#allocation2 + $0x1] sm:$0xff] %v1527
        %1582 = vst [vmem:[#allocation2 + $0x9] sm:$0xf] %v1528
        %1583 = vst [vmem:[#allocation2 + $0xd] sm:$0x1] 0.0
        %v1584 = vld [vmem:[#allocation2] sm:$0xff]
        %v1585 = vld [vmem:[#allocation2 + $0x8] sm:$0xf]
        %v1586 = vld [vmem:[#allocation2 + $0x1] sm:$0xff]
        %v1587 = vld [vmem:[#allocation2 + $0x9] sm:$0xf]
        %v1588 = vld [vmem:[#allocation2 + $0x2] sm:$0xff]
        %v1589 = vld [vmem:[#allocation2 + $0xa] sm:$0xf]
        %v1590 = vpack.c.bf16 %v1585, %v1584
        %v1591 = vpack.c.bf16 %v1587, %v1586
        %v1592 = vpack.c.bf16 %v1589, %v1588
        %v1594 = vlaneseq
        %v1595 = vshrl.u32 %v1594, 7
        %v1596 = vsub.s32 0, %v1595
        %v1597 = vrot.slane %v1579, %v1596
        %v1647 = vunpack.c.l.b16 %v1530
        %v1648 = vunpack.c.l.b16 %v1531
        %v1649 = vunpack.c.l.b16 %v1532
        %v1650 = vunpack.c.l.b16 %v1533
        %v1651 = vunpack.c.l.b16 %v1534
        %v1652 = vunpack.c.l.b16 %v1535
        %v1653 = vunpack.c.l.b16 %v1536
        %v1654 = vunpack.c.l.b16 %v1537
        %v1655 = vunpack.c.l.b16 %v1538
        %v1656 = vunpack.c.l.b16 %v1539
        %v1657 = vunpack.c.l.b16 %v1540
        %v1658 = vunpack.c.l.b16 %v1541
        %v1659 = vunpack.c.l.b16 %v1542
        %v1660 = vunpack.c.l.b16 %v1543
        %v1661 = vunpack.c.l.b16 %v1544
        %v1662 = vunpack.c.l.b16 %v1545
        %v1663 = vunpack.c.l.b16 %v1546
        %v1664 = vunpack.c.l.b16 %v1547
        %v1665 = vunpack.c.l.b16 %v1548
        %v1666 = vunpack.c.l.b16 %v1549
        %v1667 = vunpack.c.l.b16 %v1550
        %v1668 = vunpack.c.l.b16 %v1551
        %v1669 = vunpack.c.l.b16 %v1552
        %v1670 = vunpack.c.l.b16 %v1553
        %v1671 = vunpack.c.l.b16 %v1554
        %v1672 = vunpack.c.l.b16 %v1555
        %v1673 = vunpack.c.l.b16 %v1556
        %v1674 = vunpack.c.l.b16 %v1557
        %v1675 = vunpack.c.l.b16 %v1558
        %v1676 = vunpack.c.l.b16 %v1559
        %v1677 = vunpack.c.l.b16 %v1560
        %v1678 = vunpack.c.l.b16 %v1561
        %v1679 = vunpack.c.l.b16 %v1562
        %v1680 = vunpack.c.l.b16 %v1563
        %v1681 = vunpack.c.l.b16 %v1564
        %v1682 = vunpack.c.l.b16 %v1565
        %v1683 = vunpack.c.l.b16 %v1566
        %v1684 = vunpack.c.l.b16 %v1567
        %v1685 = vunpack.c.l.b16 %v1568
        %v1686 = vunpack.c.l.b16 %v1569
        %v1687 = vunpack.c.l.b16 %v1570
        %v1688 = vunpack.c.l.b16 %v1571
        %v1689 = vunpack.c.l.b16 %v1572
        %v1690 = vunpack.c.l.b16 %v1573
        %v1691 = vunpack.c.l.b16 %v1574
        %v1692 = vunpack.c.l.b16 %v1575
        %v1693 = vunpack.c.l.b16 %v1576
        %v1694 = vunpack.c.l.b16 %v1577
        %v1695 = vpack.c.b16 %v1648, %v1647
        %v1696 = vpack.c.b16 %v1650, %v1649
        %v1697 = vpack.c.b16 %v1652, %v1651
        %v1698 = vpack.c.b16 %v1654, %v1653
        %v1699 = vpack.c.b16 %v1656, %v1655
        %v1700 = vpack.c.b16 %v1658, %v1657
        %v1701 = vpack.c.b16 %v1660, %v1659
        %v1702 = vpack.c.b16 %v1662, %v1661
        %v1703 = vpack.c.b16 %v1664, %v1663
        %v1704 = vpack.c.b16 %v1666, %v1665
        %v1705 = vpack.c.b16 %v1668, %v1667
        %v1706 = vpack.c.b16 %v1670, %v1669
        %v1707 = vpack.c.b16 %v1672, %v1671
        %v1708 = vpack.c.b16 %v1674, %v1673
        %v1709 = vpack.c.b16 %v1676, %v1675
        %v1710 = vpack.c.b16 %v1678, %v1677
        %v1711 = vpack.c.b16 %v1680, %v1679
        %v1712 = vpack.c.b16 %v1682, %v1681
        %v1713 = vpack.c.b16 %v1684, %v1683
        %v1714 = vpack.c.b16 %v1686, %v1685
        %v1715 = vpack.c.b16 %v1688, %v1687
        %v1716 = vpack.c.b16 %v1690, %v1689
        %v1717 = vpack.c.b16 %v1692, %v1691
        %v1718 = vpack.c.b16 %v1694, %v1693
        %1743 = vmatprep.subr.bf16.mxu0 0
        %1744 = vmatpush1.bf16.msra.mxu0 %v1695
        %1745 = vmatprep.subr.bf16.mxu0 0
        %1746 = vmatpush1.bf16.msra.mxu0 %v1696
        %1747 = vmatprep.subr.bf16.mxu0 0
        %1748 = vmatpush1.bf16.msra.mxu0 %v1697
        %1749 = vmatprep.subr.bf16.mxu0 0
        %1750 = vmatpush1.bf16.msra.mxu0 %v1698
        %1751 = vmatprep.subr.bf16.mxu0 0
        %1752 = vmatpush1.bf16.msra.mxu0 %v1699
        %1753 = vmatprep.subr.bf16.mxu0 0
        %1754 = vmatpush1.bf16.msra.mxu0 %v1700
        %1755 = vmatprep.subr.bf16.mxu0 0
        %1756 = vmatpush1.bf16.msra.mxu0 %v1701
        %1757 = vmatprep.subr.bf16.mxu0 0
        %1758 = vmatpush1.bf16.msra.mxu0 %v1702
        %1759 = vmatprep.subr.bf16.mxu0 0
        %1760 = vmatpush1.bf16.msra.mxu0 %v1703
        %1761 = vmatprep.subr.bf16.mxu0 0
        %1762 = vmatpush1.bf16.msra.mxu0 %v1704
        %1763 = vmatprep.subr.bf16.mxu0 0
        %1764 = vmatpush1.bf16.msra.mxu0 %v1705
        %1765 = vmatprep.subr.bf16.mxu0 0
        %1766 = vmatpush1.bf16.msra.mxu0 %v1706
        %1767 = vmatprep.subr.bf16.mxu0 0
        %1768 = vmatpush1.bf16.msra.mxu0 %v1707
        %1769 = vmatprep.subr.bf16.mxu0 0
        %1770 = vmatpush1.bf16.msra.mxu0 %v1708
        %1771 = vmatprep.subr.bf16.mxu0 0
        %1772 = vmatpush1.bf16.msra.mxu0 %v1709
        %1773 = vmatprep.subr.bf16.mxu0 0
        %1774 = vmatpush1.bf16.msra.mxu0 %v1710
        %1775 = vmatprep.mubr.bf16.mxu0 %v1591
        %1776 = vmatmul.mubr.bf16.gmra.mrb[0].mxu0 %v1590
        %v1777 = vpop.f32.mrb[0].mxu0
        %v1778 = vadd.f32 %v1597, %v1777
        %v1779 = vpop.f32.mrb[0].mxu0
        %v1780 = vpop.f32.mrb[0].mxu0
        %v1781 = vadd.f32 %v1597, %v1780
        %v1782 = vpop.f32.mrb[0].mxu0
        %1783 = vdwg.mxu0
        %1784 = vmatprep.subr.bf16.mxu0 0
        %1785 = vmatpush1.bf16.msra.mxu0 %v1711
        %1786 = vmatprep.subr.bf16.mxu0 0
        %1787 = vmatpush1.bf16.msra.mxu0 %v1712
        %1788 = vmatprep.subr.bf16.mxu0 0
        %1789 = vmatpush1.bf16.msra.mxu0 %v1713
        %1790 = vmatprep.subr.bf16.mxu0 0
        %1791 = vmatpush1.bf16.msra.mxu0 %v1714
        %1792 = vmatprep.subr.bf16.mxu0 0
        %1793 = vmatpush1.bf16.msra.mxu0 %v1715
        %1794 = vmatprep.subr.bf16.mxu0 0
        %1795 = vmatpush1.bf16.msra.mxu0 %v1716
        %1796 = vmatprep.subr.bf16.mxu0 0
        %1797 = vmatpush1.bf16.msra.mxu0 %v1717
        %1798 = vmatprep.subr.bf16.mxu0 0
        %1799 = vmatpush1.bf16.msra.mxu0 %v1718
        %1800 = vmatprep.subr.bf16.mxu0 0
        %1801 = vmatpush1.bf16.msra.mxu0 0
        %1802 = vmatprep.subr.bf16.mxu0 0
        %1803 = vmatpush1.bf16.msra.mxu0 0
        %1804 = vmatprep.subr.bf16.mxu0 0
        %1805 = vmatpush1.bf16.msra.mxu0 0
        %1806 = vmatprep.subr.bf16.mxu0 0
        %1807 = vmatpush1.bf16.msra.mxu0 0
        %1808 = vmatprep.subr.bf16.mxu0 0
        %1809 = vmatpush1.bf16.msra.mxu0 0
        %1810 = vmatprep.subr.bf16.mxu0 0
        %1811 = vmatpush1.bf16.msra.mxu0 0
        %1812 = vmatprep.subr.bf16.mxu0 0
        %1813 = vmatpush1.bf16.msra.mxu0 0
        %1814 = vmatprep.subr.bf16.mxu0 0
        %1815 = vmatpush1.bf16.msra.mxu0 0
        %1816 = vmatprep.mubr.bf16.mxu0 0
        %1817 = vmatmul.mubr.bf16.gmra.mrb[0].mxu0 %v1592
        %v1818 = vpop.f32.mrb[0].mxu0
        %v1819 = vadd.f32 %v1778, %v1818
        %v1820 = vpop.f32.mrb[0].mxu0
        %v1821 = vpop.f32.mrb[0].mxu0
        %v1822 = vadd.f32 %v1781, %v1821
        %v1823 = vpop.f32.mrb[0].mxu0
        %1824 = vdwg.mxu0
        %s1825 = scalar_lea.vmem %s7, 1
        %v1826 = vld [vmem:[%s1825] sm:$0x1]
        %v1828 = vlaneseq
        %v1829 = vshrl.u32 %v1828, 7
        %v1830 = vsub.s32 0, %v1829
        %v1831 = vrot.slane %v1826, %v1830
        %v1833 = vmul.f32 %v1819, %v1831
        %v1834 = vmul.f32 %v1822, %v1831
        %s1835 = scalar_lea.vmem %s8, 1
        %v1836 = vld [vmem:[%s1835] sm:$0x1]
        %v1838 = vlaneseq
        %v1839 = vshrl.u32 %v1838, 7
        %v1840 = vsub.s32 0, %v1839
        %v1841 = vrot.slane %v1836, %v1840
        %v1843 = vadd.f32 %v1833, %v1841
        %v1844 = vadd.f32 %v1834, %v1841
        %v1845 = vmax.f32 %v1843, 0.0
        %v1846 = vmax.f32 %v1844, 0.0
        %s1847 = scalar_lea.vmem [#allocation5], 192
        %v1848 = vld [vmem:[%s1847] sm:$0xf]
        %v1849 = vld [vmem:[%s1847 + $0x4] sm:$0xf]
        %v1850 = vld [vmem:[%s1847 + $0x8] sm:$0xf]
        %v1851 = vld [vmem:[%s1847 + $0xc] sm:$0xf]
        %v1852 = vld [vmem:[%s1847 + $0x10] sm:$0xf]
        %v1853 = vld [vmem:[%s1847 + $0x14] sm:$0xf]
        %v1854 = vld [vmem:[%s1847 + $0x18] sm:$0xf]
        %v1855 = vld [vmem:[%s1847 + $0x1c] sm:$0xf]
        %v1856 = vld [vmem:[%s1847 + $0x20] sm:$0xf]
        %v1857 = vld [vmem:[%s1847 + $0x24] sm:$0xf]
        %v1858 = vld [vmem:[%s1847 + $0x28] sm:$0xf]
        %v1859 = vld [vmem:[%s1847 + $0x2c] sm:$0xf]
        %v1860 = vld [vmem:[%s1847 + $0x30] sm:$0xf]
        %v1861 = vld [vmem:[%s1847 + $0x34] sm:$0xf]
        %v1862 = vld [vmem:[%s1847 + $0x38] sm:$0xf]
        %v1863 = vld [vmem:[%s1847 + $0x3c] sm:$0xf]
        %v1864 = vld [vmem:[%s1847 + $0x40] sm:$0xf]
        %v1865 = vld [vmem:[%s1847 + $0x44] sm:$0xf]
        %v1866 = vld [vmem:[%s1847 + $0x48] sm:$0xf]
        %v1867 = vld [vmem:[%s1847 + $0x4c] sm:$0xf]
        %v1868 = vld [vmem:[%s1847 + $0x50] sm:$0xf]
        %v1869 = vld [vmem:[%s1847 + $0x54] sm:$0xf]
        %v1870 = vld [vmem:[%s1847 + $0x58] sm:$0xf]
        %v1871 = vld [vmem:[%s1847 + $0x5c] sm:$0xf]
        %v1872 = vld [vmem:[%s1847 + $0x60] sm:$0xf]
        %v1873 = vld [vmem:[%s1847 + $0x64] sm:$0xf]
        %v1874 = vld [vmem:[%s1847 + $0x68] sm:$0xf]
        %v1875 = vld [vmem:[%s1847 + $0x6c] sm:$0xf]
        %v1876 = vld [vmem:[%s1847 + $0x70] sm:$0xf]
        %v1877 = vld [vmem:[%s1847 + $0x74] sm:$0xf]
        %v1878 = vld [vmem:[%s1847 + $0x78] sm:$0xf]
        %v1879 = vld [vmem:[%s1847 + $0x7c] sm:$0xf]
        %v1880 = vld [vmem:[%s1847 + $0x80] sm:$0xf]
        %v1881 = vld [vmem:[%s1847 + $0x84] sm:$0xf]
        %v1882 = vld [vmem:[%s1847 + $0x88] sm:$0xf]
        %v1883 = vld [vmem:[%s1847 + $0x8c] sm:$0xf]
        %v1884 = vld [vmem:[%s1847 + $0x90] sm:$0xf]
        %v1885 = vld [vmem:[%s1847 + $0x94] sm:$0xf]
        %v1886 = vld [vmem:[%s1847 + $0x98] sm:$0xf]
        %v1887 = vld [vmem:[%s1847 + $0x9c] sm:$0xf]
        %v1888 = vld [vmem:[%s1847 + $0xa0] sm:$0xf]
        %v1889 = vld [vmem:[%s1847 + $0xa4] sm:$0xf]
        %v1890 = vld [vmem:[%s1847 + $0xa8] sm:$0xf]
        %v1891 = vld [vmem:[%s1847 + $0xac] sm:$0xf]
        %v1892 = vld [vmem:[%s1847 + $0xb0] sm:$0xf]
        %v1893 = vld [vmem:[%s1847 + $0xb4] sm:$0xf]
        %v1894 = vld [vmem:[%s1847 + $0xb8] sm:$0xf]
        %v1895 = vld [vmem:[%s1847 + $0xbc] sm:$0xf]
        %s1896 = scalar_lea.vmem %s6, 1
        %v1897 = vld [vmem:[%s1896] sm:$0x1]
        %1898 = vst [vmem:[#allocation2] sm:$0x1] 0.0
        %1899 = vst [vmem:[#allocation2 + $0x1] sm:$0xff] %v1845
        %1900 = vst [vmem:[#allocation2 + $0x9] sm:$0xf] %v1846
        %1901 = vst [vmem:[#allocation2 + $0xd] sm:$0x1] 0.0
        %v1902 = vld [vmem:[#allocation2] sm:$0xff]
        %v1903 = vld [vmem:[#allocation2 + $0x8] sm:$0xf]
        %v1904 = vld [vmem:[#allocation2 + $0x1] sm:$0xff]
        %v1905 = vld [vmem:[#allocation2 + $0x9] sm:$0xf]
        %v1906 = vld [vmem:[#allocation2 + $0x2] sm:$0xff]
        %v1907 = vld [vmem:[#allocation2 + $0xa] sm:$0xf]
        %v1908 = vpack.c.bf16 %v1903, %v1902
        %v1909 = vpack.c.bf16 %v1905, %v1904
        %v1910 = vpack.c.bf16 %v1907, %v1906
        %v1912 = vlaneseq
        %v1913 = vshrl.u32 %v1912, 7
        %v1914 = vsub.s32 0, %v1913
        %v1915 = vrot.slane %v1897, %v1914
        %v1965 = vunpack.c.l.b16 %v1848
        %v1966 = vunpack.c.l.b16 %v1849
        %v1967 = vunpack.c.l.b16 %v1850
        %v1968 = vunpack.c.l.b16 %v1851
        %v1969 = vunpack.c.l.b16 %v1852
        %v1970 = vunpack.c.l.b16 %v1853
        %v1971 = vunpack.c.l.b16 %v1854
        %v1972 = vunpack.c.l.b16 %v1855
        %v1973 = vunpack.c.l.b16 %v1856
        %v1974 = vunpack.c.l.b16 %v1857
        %v1975 = vunpack.c.l.b16 %v1858
        %v1976 = vunpack.c.l.b16 %v1859
        %v1977 = vunpack.c.l.b16 %v1860
        %v1978 = vunpack.c.l.b16 %v1861
        %v1979 = vunpack.c.l.b16 %v1862
        %v1980 = vunpack.c.l.b16 %v1863
        %v1981 = vunpack.c.l.b16 %v1864
        %v1982 = vunpack.c.l.b16 %v1865
        %v1983 = vunpack.c.l.b16 %v1866
        %v1984 = vunpack.c.l.b16 %v1867
        %v1985 = vunpack.c.l.b16 %v1868
        %v1986 = vunpack.c.l.b16 %v1869
        %v1987 = vunpack.c.l.b16 %v1870
        %v1988 = vunpack.c.l.b16 %v1871
        %v1989 = vunpack.c.l.b16 %v1872
        %v1990 = vunpack.c.l.b16 %v1873
        %v1991 = vunpack.c.l.b16 %v1874
        %v1992 = vunpack.c.l.b16 %v1875
        %v1993 = vunpack.c.l.b16 %v1876
        %v1994 = vunpack.c.l.b16 %v1877
        %v1995 = vunpack.c.l.b16 %v1878
        %v1996 = vunpack.c.l.b16 %v1879
        %v1997 = vunpack.c.l.b16 %v1880
        %v1998 = vunpack.c.l.b16 %v1881
        %v1999 = vunpack.c.l.b16 %v1882
        %v2000 = vunpack.c.l.b16 %v1883
        %v2001 = vunpack.c.l.b16 %v1884
        %v2002 = vunpack.c.l.b16 %v1885
        %v2003 = vunpack.c.l.b16 %v1886
        %v2004 = vunpack.c.l.b16 %v1887
        %v2005 = vunpack.c.l.b16 %v1888
        %v2006 = vunpack.c.l.b16 %v1889
        %v2007 = vunpack.c.l.b16 %v1890
        %v2008 = vunpack.c.l.b16 %v1891
        %v2009 = vunpack.c.l.b16 %v1892
        %v2010 = vunpack.c.l.b16 %v1893
        %v2011 = vunpack.c.l.b16 %v1894
        %v2012 = vunpack.c.l.b16 %v1895
        %v2013 = vpack.c.b16 %v1966, %v1965
        %v2014 = vpack.c.b16 %v1968, %v1967
        %v2015 = vpack.c.b16 %v1970, %v1969
        %v2016 = vpack.c.b16 %v1972, %v1971
        %v2017 = vpack.c.b16 %v1974, %v1973
        %v2018 = vpack.c.b16 %v1976, %v1975
        %v2019 = vpack.c.b16 %v1978, %v1977
        %v2020 = vpack.c.b16 %v1980, %v1979
        %v2021 = vpack.c.b16 %v1982, %v1981
        %v2022 = vpack.c.b16 %v1984, %v1983
        %v2023 = vpack.c.b16 %v1986, %v1985
        %v2024 = vpack.c.b16 %v1988, %v1987
        %v2025 = vpack.c.b16 %v1990, %v1989
        %v2026 = vpack.c.b16 %v1992, %v1991
        %v2027 = vpack.c.b16 %v1994, %v1993
        %v2028 = vpack.c.b16 %v1996, %v1995
        %v2029 = vpack.c.b16 %v1998, %v1997
        %v2030 = vpack.c.b16 %v2000, %v1999
        %v2031 = vpack.c.b16 %v2002, %v2001
        %v2032 = vpack.c.b16 %v2004, %v2003
        %v2033 = vpack.c.b16 %v2006, %v2005
        %v2034 = vpack.c.b16 %v2008, %v2007
        %v2035 = vpack.c.b16 %v2010, %v2009
        %v2036 = vpack.c.b16 %v2012, %v2011
        %2061 = vmatprep.subr.bf16.mxu0 0
        %2062 = vmatpush1.bf16.msra.mxu0 %v2013
        %2063 = vmatprep.subr.bf16.mxu0 0
        %2064 = vmatpush1.bf16.msra.mxu0 %v2014
        %2065 = vmatprep.subr.bf16.mxu0 0
        %2066 = vmatpush1.bf16.msra.mxu0 %v2015
        %2067 = vmatprep.subr.bf16.mxu0 0
        %2068 = vmatpush1.bf16.msra.mxu0 %v2016
        %2069 = vmatprep.subr.bf16.mxu0 0
        %2070 = vmatpush1.bf16.msra.mxu0 %v2017
        %2071 = vmatprep.subr.bf16.mxu0 0
        %2072 = vmatpush1.bf16.msra.mxu0 %v2018
        %2073 = vmatprep.subr.bf16.mxu0 0
        %2074 = vmatpush1.bf16.msra.mxu0 %v2019
        %2075 = vmatprep.subr.bf16.mxu0 0
        %2076 = vmatpush1.bf16.msra.mxu0 %v2020
        %2077 = vmatprep.subr.bf16.mxu0 0
        %2078 = vmatpush1.bf16.msra.mxu0 %v2021
        %2079 = vmatprep.subr.bf16.mxu0 0
        %2080 = vmatpush1.bf16.msra.mxu0 %v2022
        %2081 = vmatprep.subr.bf16.mxu0 0
        %2082 = vmatpush1.bf16.msra.mxu0 %v2023
        %2083 = vmatprep.subr.bf16.mxu0 0
        %2084 = vmatpush1.bf16.msra.mxu0 %v2024
        %2085 = vmatprep.subr.bf16.mxu0 0
        %2086 = vmatpush1.bf16.msra.mxu0 %v2025
        %2087 = vmatprep.subr.bf16.mxu0 0
        %2088 = vmatpush1.bf16.msra.mxu0 %v2026
        %2089 = vmatprep.subr.bf16.mxu0 0
        %2090 = vmatpush1.bf16.msra.mxu0 %v2027
        %2091 = vmatprep.subr.bf16.mxu0 0
        %2092 = vmatpush1.bf16.msra.mxu0 %v2028
        %2093 = vmatprep.mubr.bf16.mxu0 %v1909
        %2094 = vmatmul.mubr.bf16.gmra.mrb[0].mxu0 %v1908
        %v2095 = vpop.f32.mrb[0].mxu0
        %v2096 = vadd.f32 %v1915, %v2095
        %v2097 = vpop.f32.mrb[0].mxu0
        %v2098 = vpop.f32.mrb[0].mxu0
        %v2099 = vadd.f32 %v1915, %v2098
        %v2100 = vpop.f32.mrb[0].mxu0
        %2101 = vdwg.mxu0
        %2102 = vmatprep.subr.bf16.mxu0 0
        %2103 = vmatpush1.bf16.msra.mxu0 %v2029
        %2104 = vmatprep.subr.bf16.mxu0 0
        %2105 = vmatpush1.bf16.msra.mxu0 %v2030
        %2106 = vmatprep.subr.bf16.mxu0 0
        %2107 = vmatpush1.bf16.msra.mxu0 %v2031
        %2108 = vmatprep.subr.bf16.mxu0 0
        %2109 = vmatpush1.bf16.msra.mxu0 %v2032
        %2110 = vmatprep.subr.bf16.mxu0 0
        %2111 = vmatpush1.bf16.msra.mxu0 %v2033
        %2112 = vmatprep.subr.bf16.mxu0 0
        %2113 = vmatpush1.bf16.msra.mxu0 %v2034
        %2114 = vmatprep.subr.bf16.mxu0 0
        %2115 = vmatpush1.bf16.msra.mxu0 %v2035
        %2116 = vmatprep.subr.bf16.mxu0 0
        %2117 = vmatpush1.bf16.msra.mxu0 %v2036
        %2118 = vmatprep.subr.bf16.mxu0 0
        %2119 = vmatpush1.bf16.msra.mxu0 0
        %2120 = vmatprep.subr.bf16.mxu0 0
        %2121 = vmatpush1.bf16.msra.mxu0 0
        %2122 = vmatprep.subr.bf16.mxu0 0
        %2123 = vmatpush1.bf16.msra.mxu0 0
        %2124 = vmatprep.subr.bf16.mxu0 0
        %2125 = vmatpush1.bf16.msra.mxu0 0
        %2126 = vmatprep.subr.bf16.mxu0 0
        %2127 = vmatpush1.bf16.msra.mxu0 0
        %2128 = vmatprep.subr.bf16.mxu0 0
        %2129 = vmatpush1.bf16.msra.mxu0 0
        %2130 = vmatprep.subr.bf16.mxu0 0
        %2131 = vmatpush1.bf16.msra.mxu0 0
        %2132 = vmatprep.subr.bf16.mxu0 0
        %2133 = vmatpush1.bf16.msra.mxu0 0
        %2134 = vmatprep.mubr.bf16.mxu0 0
        %2135 = vmatmul.mubr.bf16.gmra.mrb[0].mxu0 %v1910
        %v2136 = vpop.f32.mrb[0].mxu0
        %v2137 = vadd.f32 %v2096, %v2136
        %v2138 = vpop.f32.mrb[0].mxu0
        %v2139 = vpop.f32.mrb[0].mxu0
        %v2140 = vadd.f32 %v2099, %v2139
        %v2141 = vpop.f32.mrb[0].mxu0
        %2142 = vdwg.mxu0
        %v2143 = vadd.f32 %v1501, %v2137
        %v2144 = vadd.f32 %v1502, %v2140
        %s2145 = scalar_lea.vmem %s3, 2
        %v2146 = vld [vmem:[%s2145] sm:$0x1]
        %v2148 = vlaneseq
        %v2149 = vshrl.u32 %v2148, 7
        %v2150 = vsub.s32 0, %v2149
        %v2151 = vrot.slane %v2146, %v2150
        %v2153 = vmul.f32 %v2143, %v2151
        %v2154 = vmul.f32 %v2144, %v2151
        %s2155 = scalar_lea.vmem %s4, 2
        %v2156 = vld [vmem:[%s2155] sm:$0x1]
        %v2158 = vlaneseq
        %v2159 = vshrl.u32 %v2158, 7
        %v2160 = vsub.s32 0, %v2159
        %v2161 = vrot.slane %v2156, %v2160
        %v2163 = vadd.f32 %v2153, %v2161
        %v2164 = vadd.f32 %v2154, %v2161
        %v2165 = vmax.f32 %v2163, 0.0
        %v2166 = vmax.f32 %v2164, 0.0
        %s2167 = scalar_lea.vmem [#allocation3], 384
        %v2168 = vld [vmem:[%s2167] sm:$0xf]
        %v2169 = vld [vmem:[%s2167 + $0x4] sm:$0xf]
        %v2170 = vld [vmem:[%s2167 + $0x8] sm:$0xf]
        %v2171 = vld [vmem:[%s2167 + $0xc] sm:$0xf]
        %v2172 = vld [vmem:[%s2167 + $0x10] sm:$0xf]
        %v2173 = vld [vmem:[%s2167 + $0x14] sm:$0xf]
        %v2174 = vld [vmem:[%s2167 + $0x18] sm:$0xf]
        %v2175 = vld [vmem:[%s2167 + $0x1c] sm:$0xf]
        %v2176 = vld [vmem:[%s2167 + $0x20] sm:$0xf]
        %v2177 = vld [vmem:[%s2167 + $0x24] sm:$0xf]
        %v2178 = vld [vmem:[%s2167 + $0x28] sm:$0xf]
        %v2179 = vld [vmem:[%s2167 + $0x2c] sm:$0xf]
        %v2180 = vld [vmem:[%s2167 + $0x30] sm:$0xf]
        %v2181 = vld [vmem:[%s2167 + $0x34] sm:$0xf]
        %v2182 = vld [vmem:[%s2167 + $0x38] sm:$0xf]
        %v2183 = vld [vmem:[%s2167 + $0x3c] sm:$0xf]
        %v2184 = vld [vmem:[%s2167 + $0x40] sm:$0xf]
        %v2185 = vld [vmem:[%s2167 + $0x44] sm:$0xf]
        %v2186 = vld [vmem:[%s2167 + $0x48] sm:$0xf]
        %v2187 = vld [vmem:[%s2167 + $0x4c] sm:$0xf]
        %v2188 = vld [vmem:[%s2167 + $0x50] sm:$0xf]
        %v2189 = vld [vmem:[%s2167 + $0x54] sm:$0xf]
        %v2190 = vld [vmem:[%s2167 + $0x58] sm:$0xf]
        %v2191 = vld [vmem:[%s2167 + $0x5c] sm:$0xf]
        %v2192 = vld [vmem:[%s2167 + $0x60] sm:$0xf]
        %v2193 = vld [vmem:[%s2167 + $0x64] sm:$0xf]
        %v2194 = vld [vmem:[%s2167 + $0x68] sm:$0xf]
        %v2195 = vld [vmem:[%s2167 + $0x6c] sm:$0xf]
        %v2196 = vld [vmem:[%s2167 + $0x70] sm:$0xf]
        %v2197 = vld [vmem:[%s2167 + $0x74] sm:$0xf]
        %v2198 = vld [vmem:[%s2167 + $0x78] sm:$0xf]
        %v2199 = vld [vmem:[%s2167 + $0x7c] sm:$0xf]
        %v2200 = vld [vmem:[%s2167 + $0x80] sm:$0xf]
        %v2201 = vld [vmem:[%s2167 + $0x84] sm:$0xf]
        %v2202 = vld [vmem:[%s2167 + $0x88] sm:$0xf]
        %v2203 = vld [vmem:[%s2167 + $0x8c] sm:$0xf]
        %v2204 = vld [vmem:[%s2167 + $0x90] sm:$0xf]
        %v2205 = vld [vmem:[%s2167 + $0x94] sm:$0xf]
        %v2206 = vld [vmem:[%s2167 + $0x98] sm:$0xf]
        %v2207 = vld [vmem:[%s2167 + $0x9c] sm:$0xf]
        %v2208 = vld [vmem:[%s2167 + $0xa0] sm:$0xf]
        %v2209 = vld [vmem:[%s2167 + $0xa4] sm:$0xf]
        %v2210 = vld [vmem:[%s2167 + $0xa8] sm:$0xf]
        %v2211 = vld [vmem:[%s2167 + $0xac] sm:$0xf]
        %v2212 = vld [vmem:[%s2167 + $0xb0] sm:$0xf]
        %v2213 = vld [vmem:[%s2167 + $0xb4] sm:$0xf]
        %v2214 = vld [vmem:[%s2167 + $0xb8] sm:$0xf]
        %v2215 = vld [vmem:[%s2167 + $0xbc] sm:$0xf]
        %s2216 = scalar_lea.vmem %s2, 2
        %v2217 = vld [vmem:[%s2216] sm:$0x1]
        %2218 = vst [vmem:[#allocation2] sm:$0x1] 0.0
        %2219 = vst [vmem:[#allocation2 + $0x1] sm:$0xff] %v2165
        %2220 = vst [vmem:[#allocation2 + $0x9] sm:$0xf] %v2166
        %2221 = vst [vmem:[#allocation2 + $0xd] sm:$0x1] 0.0
        %v2222 = vld [vmem:[#allocation2] sm:$0xff]
        %v2223 = vld [vmem:[#allocation2 + $0x8] sm:$0xf]
        %v2224 = vld [vmem:[#allocation2 + $0x1] sm:$0xff]
        %v2225 = vld [vmem:[#allocation2 + $0x9] sm:$0xf]
        %v2226 = vld [vmem:[#allocation2 + $0x2] sm:$0xff]
        %v2227 = vld [vmem:[#allocation2 + $0xa] sm:$0xf]
        %v2228 = vpack.c.bf16 %v2223, %v2222
        %v2229 = vpack.c.bf16 %v2225, %v2224
        %v2230 = vpack.c.bf16 %v2227, %v2226
        %v2232 = vlaneseq
        %v2233 = vshrl.u32 %v2232, 7
        %v2234 = vsub.s32 0, %v2233
        %v2235 = vrot.slane %v2217, %v2234
        %v2285 = vunpack.c.l.b16 %v2168
        %v2286 = vunpack.c.l.b16 %v2169
        %v2287 = vunpack.c.l.b16 %v2170
        %v2288 = vunpack.c.l.b16 %v2171
        %v2289 = vunpack.c.l.b16 %v2172
        %v2290 = vunpack.c.l.b16 %v2173
        %v2291 = vunpack.c.l.b16 %v2174
        %v2292 = vunpack.c.l.b16 %v2175
        %v2293 = vunpack.c.l.b16 %v2176
        %v2294 = vunpack.c.l.b16 %v2177
        %v2295 = vunpack.c.l.b16 %v2178
        %v2296 = vunpack.c.l.b16 %v2179
        %v2297 = vunpack.c.l.b16 %v2180
        %v2298 = vunpack.c.l.b16 %v2181
        %v2299 = vunpack.c.l.b16 %v2182
        %v2300 = vunpack.c.l.b16 %v2183
        %v2301 = vunpack.c.l.b16 %v2184
        %v2302 = vunpack.c.l.b16 %v2185
        %v2303 = vunpack.c.l.b16 %v2186
        %v2304 = vunpack.c.l.b16 %v2187
        %v2305 = vunpack.c.l.b16 %v2188
        %v2306 = vunpack.c.l.b16 %v2189
        %v2307 = vunpack.c.l.b16 %v2190
        %v2308 = vunpack.c.l.b16 %v2191
        %v2309 = vunpack.c.l.b16 %v2192
        %v2310 = vunpack.c.l.b16 %v2193
        %v2311 = vunpack.c.l.b16 %v2194
        %v2312 = vunpack.c.l.b16 %v2195
        %v2313 = vunpack.c.l.b16 %v2196
        %v2314 = vunpack.c.l.b16 %v2197
        %v2315 = vunpack.c.l.b16 %v2198
        %v2316 = vunpack.c.l.b16 %v2199
        %v2317 = vunpack.c.l.b16 %v2200
        %v2318 = vunpack.c.l.b16 %v2201
        %v2319 = vunpack.c.l.b16 %v2202
        %v2320 = vunpack.c.l.b16 %v2203
        %v2321 = vunpack.c.l.b16 %v2204
        %v2322 = vunpack.c.l.b16 %v2205
        %v2323 = vunpack.c.l.b16 %v2206
        %v2324 = vunpack.c.l.b16 %v2207
        %v2325 = vunpack.c.l.b16 %v2208
        %v2326 = vunpack.c.l.b16 %v2209
        %v2327 = vunpack.c.l.b16 %v2210
        %v2328 = vunpack.c.l.b16 %v2211
        %v2329 = vunpack.c.l.b16 %v2212
        %v2330 = vunpack.c.l.b16 %v2213
        %v2331 = vunpack.c.l.b16 %v2214
        %v2332 = vunpack.c.l.b16 %v2215
        %v2333 = vpack.c.b16 %v2286, %v2285
        %v2334 = vpack.c.b16 %v2288, %v2287
        %v2335 = vpack.c.b16 %v2290, %v2289
        %v2336 = vpack.c.b16 %v2292, %v2291
        %v2337 = vpack.c.b16 %v2294, %v2293
        %v2338 = vpack.c.b16 %v2296, %v2295
        %v2339 = vpack.c.b16 %v2298, %v2297
        %v2340 = vpack.c.b16 %v2300, %v2299
        %v2341 = vpack.c.b16 %v2302, %v2301
        %v2342 = vpack.c.b16 %v2304, %v2303
        %v2343 = vpack.c.b16 %v2306, %v2305
        %v2344 = vpack.c.b16 %v2308, %v2307
        %v2345 = vpack.c.b16 %v2310, %v2309
        %v2346 = vpack.c.b16 %v2312, %v2311
        %v2347 = vpack.c.b16 %v2314, %v2313
        %v2348 = vpack.c.b16 %v2316, %v2315
        %v2349 = vpack.c.b16 %v2318, %v2317
        %v2350 = vpack.c.b16 %v2320, %v2319
        %v2351 = vpack.c.b16 %v2322, %v2321
        %v2352 = vpack.c.b16 %v2324, %v2323
        %v2353 = vpack.c.b16 %v2326, %v2325
        %v2354 = vpack.c.b16 %v2328, %v2327
        %v2355 = vpack.c.b16 %v2330, %v2329
        %v2356 = vpack.c.b16 %v2332, %v2331
        %2381 = vmatprep.subr.bf16.mxu0 0
        %2382 = vmatpush1.bf16.msra.mxu0 %v2333
        %2383 = vmatprep.subr.bf16.mxu0 0
        %2384 = vmatpush1.bf16.msra.mxu0 %v2334
        %2385 = vmatprep.subr.bf16.mxu0 0
        %2386 = vmatpush1.bf16.msra.mxu0 %v2335
        %2387 = vmatprep.subr.bf16.mxu0 0
        %2388 = vmatpush1.bf16.msra.mxu0 %v2336
        %2389 = vmatprep.subr.bf16.mxu0 0
        %2390 = vmatpush1.bf16.msra.mxu0 %v2337
        %2391 = vmatprep.subr.bf16.mxu0 0
        %2392 = vmatpush1.bf16.msra.mxu0 %v2338
        %2393 = vmatprep.subr.bf16.mxu0 0
        %2394 = vmatpush1.bf16.msra.mxu0 %v2339
        %2395 = vmatprep.subr.bf16.mxu0 0
        %2396 = vmatpush1.bf16.msra.mxu0 %v2340
        %2397 = vmatprep.subr.bf16.mxu0 0
        %2398 = vmatpush1.bf16.msra.mxu0 %v2341
        %2399 = vmatprep.subr.bf16.mxu0 0
        %2400 = vmatpush1.bf16.msra.mxu0 %v2342
        %2401 = vmatprep.subr.bf16.mxu0 0
        %2402 = vmatpush1.bf16.msra.mxu0 %v2343
        %2403 = vmatprep.subr.bf16.mxu0 0
        %2404 = vmatpush1.bf16.msra.mxu0 %v2344
        %2405 = vmatprep.subr.bf16.mxu0 0
        %2406 = vmatpush1.bf16.msra.mxu0 %v2345
        %2407 = vmatprep.subr.bf16.mxu0 0
        %2408 = vmatpush1.bf16.msra.mxu0 %v2346
        %2409 = vmatprep.subr.bf16.mxu0 0
        %2410 = vmatpush1.bf16.msra.mxu0 %v2347
        %2411 = vmatprep.subr.bf16.mxu0 0
        %2412 = vmatpush1.bf16.msra.mxu0 %v2348
        %2413 = vmatprep.mubr.bf16.mxu0 %v2229
        %2414 = vmatmul.mubr.bf16.gmra.mrb[0].mxu0 %v2228
        %v2415 = vpop.f32.mrb[0].mxu0
        %v2416 = vadd.f32 %v2235, %v2415
        %v2417 = vpop.f32.mrb[0].mxu0
        %v2418 = vpop.f32.mrb[0].mxu0
        %v2419 = vadd.f32 %v2235, %v2418
        %v2420 = vpop.f32.mrb[0].mxu0
        %2421 = vdwg.mxu0
        %2422 = vmatprep.subr.bf16.mxu0 0
        %2423 = vmatpush1.bf16.msra.mxu0 %v2349
        %2424 = vmatprep.subr.bf16.mxu0 0
        %2425 = vmatpush1.bf16.msra.mxu0 %v2350
        %2426 = vmatprep.subr.bf16.mxu0 0
        %2427 = vmatpush1.bf16.msra.mxu0 %v2351
        %2428 = vmatprep.subr.bf16.mxu0 0
        %2429 = vmatpush1.bf16.msra.mxu0 %v2352
        %2430 = vmatprep.subr.bf16.mxu0 0
        %2431 = vmatpush1.bf16.msra.mxu0 %v2353
        %2432 = vmatprep.subr.bf16.mxu0 0
        %2433 = vmatpush1.bf16.msra.mxu0 %v2354
        %2434 = vmatprep.subr.bf16.mxu0 0
        %2435 = vmatpush1.bf16.msra.mxu0 %v2355
        %2436 = vmatprep.subr.bf16.mxu0 0
        %2437 = vmatpush1.bf16.msra.mxu0 %v2356
        %2438 = vmatprep.subr.bf16.mxu0 0
        %2439 = vmatpush1.bf16.msra.mxu0 0
        %2440 = vmatprep.subr.bf16.mxu0 0
        %2441 = vmatpush1.bf16.msra.mxu0 0
        %2442 = vmatprep.subr.bf16.mxu0 0
        %2443 = vmatpush1.bf16.msra.mxu0 0
        %2444 = vmatprep.subr.bf16.mxu0 0
        %2445 = vmatpush1.bf16.msra.mxu0 0
        %2446 = vmatprep.subr.bf16.mxu0 0
        %2447 = vmatpush1.bf16.msra.mxu0 0
        %2448 = vmatprep.subr.bf16.mxu0 0
        %2449 = vmatpush1.bf16.msra.mxu0 0
        %2450 = vmatprep.subr.bf16.mxu0 0
        %2451 = vmatpush1.bf16.msra.mxu0 0
        %2452 = vmatprep.subr.bf16.mxu0 0
        %2453 = vmatpush1.bf16.msra.mxu0 0
        %2454 = vmatprep.mubr.bf16.mxu0 0
        %2455 = vmatmul.mubr.bf16.gmra.mrb[0].mxu0 %v2230
        %v2456 = vpop.f32.mrb[0].mxu0
        %v2457 = vadd.f32 %v2416, %v2456
        %v2458 = vpop.f32.mrb[0].mxu0
        %v2459 = vpop.f32.mrb[0].mxu0
        %v2460 = vadd.f32 %v2419, %v2459
        %v2461 = vpop.f32.mrb[0].mxu0
        %2462 = vdwg.mxu0
        %s2463 = scalar_lea.vmem %s7, 2
        %v2464 = vld [vmem:[%s2463] sm:$0x1]
        %v2466 = vlaneseq
        %v2467 = vshrl.u32 %v2466, 7
        %v2468 = vsub.s32 0, %v2467
        %v2469 = vrot.slane %v2464, %v2468
        %v2471 = vmul.f32 %v2457, %v2469
        %v2472 = vmul.f32 %v2460, %v2469
        %s2473 = scalar_lea.vmem %s8, 2
        %v2474 = vld [vmem:[%s2473] sm:$0x1]
        %v2476 = vlaneseq
        %v2477 = vshrl.u32 %v2476, 7
        %v2478 = vsub.s32 0, %v2477
        %v2479 = vrot.slane %v2474, %v2478
        %v2481 = vadd.f32 %v2471, %v2479
        %v2482 = vadd.f32 %v2472, %v2479
        %v2483 = vmax.f32 %v2481, 0.0
        %v2484 = vmax.f32 %v2482, 0.0
        %s2485 = scalar_lea.vmem [#allocation5], 384
        %v2486 = vld [vmem:[%s2485] sm:$0xf]
        %v2487 = vld [vmem:[%s2485 + $0x4] sm:$0xf]
        %v2488 = vld [vmem:[%s2485 + $0x8] sm:$0xf]
        %v2489 = vld [vmem:[%s2485 + $0xc] sm:$0xf]
        %v2490 = vld [vmem:[%s2485 + $0x10] sm:$0xf]
        %v2491 = vld [vmem:[%s2485 + $0x14] sm:$0xf]
        %v2492 = vld [vmem:[%s2485 + $0x18] sm:$0xf]
        %v2493 = vld [vmem:[%s2485 + $0x1c] sm:$0xf]
        %v2494 = vld [vmem:[%s2485 + $0x20] sm:$0xf]
        %v2495 = vld [vmem:[%s2485 + $0x24] sm:$0xf]
        %v2496 = vld [vmem:[%s2485 + $0x28] sm:$0xf]
        %v2497 = vld [vmem:[%s2485 + $0x2c] sm:$0xf]
        %v2498 = vld [vmem:[%s2485 + $0x30] sm:$0xf]
        %v2499 = vld [vmem:[%s2485 + $0x34] sm:$0xf]
        %v2500 = vld [vmem:[%s2485 + $0x38] sm:$0xf]
        %v2501 = vld [vmem:[%s2485 + $0x3c] sm:$0xf]
        %v2502 = vld [vmem:[%s2485 + $0x40] sm:$0xf]
        %v2503 = vld [vmem:[%s2485 + $0x44] sm:$0xf]
        %v2504 = vld [vmem:[%s2485 + $0x48] sm:$0xf]
        %v2505 = vld [vmem:[%s2485 + $0x4c] sm:$0xf]
        %v2506 = vld [vmem:[%s2485 + $0x50] sm:$0xf]
        %v2507 = vld [vmem:[%s2485 + $0x54] sm:$0xf]
        %v2508 = vld [vmem:[%s2485 + $0x58] sm:$0xf]
        %v2509 = vld [vmem:[%s2485 + $0x5c] sm:$0xf]
        %v2510 = vld [vmem:[%s2485 + $0x60] sm:$0xf]
        %v2511 = vld [vmem:[%s2485 + $0x64] sm:$0xf]
        %v2512 = vld [vmem:[%s2485 + $0x68] sm:$0xf]
        %v2513 = vld [vmem:[%s2485 + $0x6c] sm:$0xf]
        %v2514 = vld [vmem:[%s2485 + $0x70] sm:$0xf]
        %v2515 = vld [vmem:[%s2485 + $0x74] sm:$0xf]
        %v2516 = vld [vmem:[%s2485 + $0x78] sm:$0xf]
        %v2517 = vld [vmem:[%s2485 + $0x7c] sm:$0xf]
        %v2518 = vld [vmem:[%s2485 + $0x80] sm:$0xf]
        %v2519 = vld [vmem:[%s2485 + $0x84] sm:$0xf]
        %v2520 = vld [vmem:[%s2485 + $0x88] sm:$0xf]
        %v2521 = vld [vmem:[%s2485 + $0x8c] sm:$0xf]
        %v2522 = vld [vmem:[%s2485 + $0x90] sm:$0xf]
        %v2523 = vld [vmem:[%s2485 + $0x94] sm:$0xf]
        %v2524 = vld [vmem:[%s2485 + $0x98] sm:$0xf]
        %v2525 = vld [vmem:[%s2485 + $0x9c] sm:$0xf]
        %v2526 = vld [vmem:[%s2485 + $0xa0] sm:$0xf]
        %v2527 = vld [vmem:[%s2485 + $0xa4] sm:$0xf]
        %v2528 = vld [vmem:[%s2485 + $0xa8] sm:$0xf]
        %v2529 = vld [vmem:[%s2485 + $0xac] sm:$0xf]
        %v2530 = vld [vmem:[%s2485 + $0xb0] sm:$0xf]
        %v2531 = vld [vmem:[%s2485 + $0xb4] sm:$0xf]
        %v2532 = vld [vmem:[%s2485 + $0xb8] sm:$0xf]
        %v2533 = vld [vmem:[%s2485 + $0xbc] sm:$0xf]
        %s2534 = scalar_lea.vmem %s6, 2
        %v2535 = vld [vmem:[%s2534] sm:$0x1]
        %2536 = vst [vmem:[#allocation2] sm:$0x1] 0.0
        %2537 = vst [vmem:[#allocation2 + $0x1] sm:$0xff] %v2483
        %2538 = vst [vmem:[#allocation2 + $0x9] sm:$0xf] %v2484
        %2539 = vst [vmem:[#allocation2 + $0xd] sm:$0x1] 0.0
        %v2540 = vld [vmem:[#allocation2] sm:$0xff]
        %v2541 = vld [vmem:[#allocation2 + $0x8] sm:$0xf]
        %v2542 = vld [vmem:[#allocation2 + $0x1] sm:$0xff]
        %v2543 = vld [vmem:[#allocation2 + $0x9] sm:$0xf]
        %v2544 = vld [vmem:[#allocation2 + $0x2] sm:$0xff]
        %v2545 = vld [vmem:[#allocation2 + $0xa] sm:$0xf]
        %v2546 = vpack.c.bf16 %v2541, %v2540
        %v2547 = vpack.c.bf16 %v2543, %v2542
        %v2548 = vpack.c.bf16 %v2545, %v2544
        %v2550 = vlaneseq
        %v2551 = vshrl.u32 %v2550, 7
        %v2552 = vsub.s32 0, %v2551
        %v2553 = vrot.slane %v2535, %v2552
        %v2603 = vunpack.c.l.b16 %v2486
        %v2604 = vunpack.c.l.b16 %v2487
        %v2605 = vunpack.c.l.b16 %v2488
        %v2606 = vunpack.c.l.b16 %v2489
        %v2607 = vunpack.c.l.b16 %v2490
        %v2608 = vunpack.c.l.b16 %v2491
        %v2609 = vunpack.c.l.b16 %v2492
        %v2610 = vunpack.c.l.b16 %v2493
        %v2611 = vunpack.c.l.b16 %v2494
        %v2612 = vunpack.c.l.b16 %v2495
        %v2613 = vunpack.c.l.b16 %v2496
        %v2614 = vunpack.c.l.b16 %v2497
        %v2615 = vunpack.c.l.b16 %v2498
        %v2616 = vunpack.c.l.b16 %v2499
        %v2617 = vunpack.c.l.b16 %v2500
        %v2618 = vunpack.c.l.b16 %v2501
        %v2619 = vunpack.c.l.b16 %v2502
        %v2620 = vunpack.c.l.b16 %v2503
        %v2621 = vunpack.c.l.b16 %v2504
        %v2622 = vunpack.c.l.b16 %v2505
        %v2623 = vunpack.c.l.b16 %v2506
        %v2624 = vunpack.c.l.b16 %v2507
        %v2625 = vunpack.c.l.b16 %v2508
        %v2626 = vunpack.c.l.b16 %v2509
        %v2627 = vunpack.c.l.b16 %v2510
        %v2628 = vunpack.c.l.b16 %v2511
        %v2629 = vunpack.c.l.b16 %v2512
        %v2630 = vunpack.c.l.b16 %v2513
        %v2631 = vunpack.c.l.b16 %v2514
        %v2632 = vunpack.c.l.b16 %v2515
        %v2633 = vunpack.c.l.b16 %v2516
        %v2634 = vunpack.c.l.b16 %v2517
        %v2635 = vunpack.c.l.b16 %v2518
        %v2636 = vunpack.c.l.b16 %v2519
        %v2637 = vunpack.c.l.b16 %v2520
        %v2638 = vunpack.c.l.b16 %v2521
        %v2639 = vunpack.c.l.b16 %v2522
        %v2640 = vunpack.c.l.b16 %v2523
        %v2641 = vunpack.c.l.b16 %v2524
        %v2642 = vunpack.c.l.b16 %v2525
        %v2643 = vunpack.c.l.b16 %v2526
        %v2644 = vunpack.c.l.b16 %v2527
        %v2645 = vunpack.c.l.b16 %v2528
        %v2646 = vunpack.c.l.b16 %v2529
        %v2647 = vunpack.c.l.b16 %v2530
        %v2648 = vunpack.c.l.b16 %v2531
        %v2649 = vunpack.c.l.b16 %v2532
        %v2650 = vunpack.c.l.b16 %v2533
        %v2651 = vpack.c.b16 %v2604, %v2603
        %v2652 = vpack.c.b16 %v2606, %v2605
        %v2653 = vpack.c.b16 %v2608, %v2607
        %v2654 = vpack.c.b16 %v2610, %v2609
        %v2655 = vpack.c.b16 %v2612, %v2611
        %v2656 = vpack.c.b16 %v2614, %v2613
        %v2657 = vpack.c.b16 %v2616, %v2615
        %v2658 = vpack.c.b16 %v2618, %v2617
        %v2659 = vpack.c.b16 %v2620, %v2619
        %v2660 = vpack.c.b16 %v2622, %v2621
        %v2661 = vpack.c.b16 %v2624, %v2623
        %v2662 = vpack.c.b16 %v2626, %v2625
        %v2663 = vpack.c.b16 %v2628, %v2627
        %v2664 = vpack.c.b16 %v2630, %v2629
        %v2665 = vpack.c.b16 %v2632, %v2631
        %v2666 = vpack.c.b16 %v2634, %v2633
        %v2667 = vpack.c.b16 %v2636, %v2635
        %v2668 = vpack.c.b16 %v2638, %v2637
        %v2669 = vpack.c.b16 %v2640, %v2639
        %v2670 = vpack.c.b16 %v2642, %v2641
        %v2671 = vpack.c.b16 %v2644, %v2643
        %v2672 = vpack.c.b16 %v2646, %v2645
        %v2673 = vpack.c.b16 %v2648, %v2647
        %v2674 = vpack.c.b16 %v2650, %v2649
        %2699 = vmatprep.subr.bf16.mxu0 0
        %2700 = vmatpush1.bf16.msra.mxu0 %v2651
        %2701 = vmatprep.subr.bf16.mxu0 0
        %2702 = vmatpush1.bf16.msra.mxu0 %v2652
        %2703 = vmatprep.subr.bf16.mxu0 0
        %2704 = vmatpush1.bf16.msra.mxu0 %v2653
        %2705 = vmatprep.subr.bf16.mxu0 0
        %2706 = vmatpush1.bf16.msra.mxu0 %v2654
        %2707 = vmatprep.subr.bf16.mxu0 0
        %2708 = vmatpush1.bf16.msra.mxu0 %v2655
        %2709 = vmatprep.subr.bf16.mxu0 0
        %2710 = vmatpush1.bf16.msra.mxu0 %v2656
        %2711 = vmatprep.subr.bf16.mxu0 0
        %2712 = vmatpush1.bf16.msra.mxu0 %v2657
        %2713 = vmatprep.subr.bf16.mxu0 0
        %2714 = vmatpush1.bf16.msra.mxu0 %v2658
        %2715 = vmatprep.subr.bf16.mxu0 0
        %2716 = vmatpush1.bf16.msra.mxu0 %v2659
        %2717 = vmatprep.subr.bf16.mxu0 0
        %2718 = vmatpush1.bf16.msra.mxu0 %v2660
        %2719 = vmatprep.subr.bf16.mxu0 0
        %2720 = vmatpush1.bf16.msra.mxu0 %v2661
        %2721 = vmatprep.subr.bf16.mxu0 0
        %2722 = vmatpush1.bf16.msra.mxu0 %v2662
        %2723 = vmatprep.subr.bf16.mxu0 0
        %2724 = vmatpush1.bf16.msra.mxu0 %v2663
        %2725 = vmatprep.subr.bf16.mxu0 0
        %2726 = vmatpush1.bf16.msra.mxu0 %v2664
        %2727 = vmatprep.subr.bf16.mxu0 0
        %2728 = vmatpush1.bf16.msra.mxu0 %v2665
        %2729 = vmatprep.subr.bf16.mxu0 0
        %2730 = vmatpush1.bf16.msra.mxu0 %v2666
        %2731 = vmatprep.mubr.bf16.mxu0 %v2547
        %2732 = vmatmul.mubr.bf16.gmra.mrb[0].mxu0 %v2546
        %v2733 = vpop.f32.mrb[0].mxu0
        %v2734 = vadd.f32 %v2553, %v2733
        %v2735 = vpop.f32.mrb[0].mxu0
        %v2736 = vpop.f32.mrb[0].mxu0
        %v2737 = vadd.f32 %v2553, %v2736
        %v2738 = vpop.f32.mrb[0].mxu0
        %2739 = vdwg.mxu0
        %2740 = vmatprep.subr.bf16.mxu0 0
        %2741 = vmatpush1.bf16.msra.mxu0 %v2667
        %2742 = vmatprep.subr.bf16.mxu0 0
        %2743 = vmatpush1.bf16.msra.mxu0 %v2668
        %2744 = vmatprep.subr.bf16.mxu0 0
        %2745 = vmatpush1.bf16.msra.mxu0 %v2669
        %2746 = vmatprep.subr.bf16.mxu0 0
        %2747 = vmatpush1.bf16.msra.mxu0 %v2670
        %2748 = vmatprep.subr.bf16.mxu0 0
        %2749 = vmatpush1.bf16.msra.mxu0 %v2671
        %2750 = vmatprep.subr.bf16.mxu0 0
        %2751 = vmatpush1.bf16.msra.mxu0 %v2672
        %2752 = vmatprep.subr.bf16.mxu0 0
        %2753 = vmatpush1.bf16.msra.mxu0 %v2673
        %2754 = vmatprep.subr.bf16.mxu0 0
        %2755 = vmatpush1.bf16.msra.mxu0 %v2674
        %2756 = vmatprep.subr.bf16.mxu0 0
        %2757 = vmatpush1.bf16.msra.mxu0 0
        %2758 = vmatprep.subr.bf16.mxu0 0
        %2759 = vmatpush1.bf16.msra.mxu0 0
        %2760 = vmatprep.subr.bf16.mxu0 0
        %2761 = vmatpush1.bf16.msra.mxu0 0
        %2762 = vmatprep.subr.bf16.mxu0 0
        %2763 = vmatpush1.bf16.msra.mxu0 0
        %2764 = vmatprep.subr.bf16.mxu0 0
        %2765 = vmatpush1.bf16.msra.mxu0 0
        %2766 = vmatprep.subr.bf16.mxu0 0
        %2767 = vmatpush1.bf16.msra.mxu0 0
        %2768 = vmatprep.subr.bf16.mxu0 0
        %2769 = vmatpush1.bf16.msra.mxu0 0
        %2770 = vmatprep.subr.bf16.mxu0 0
        %2771 = vmatpush1.bf16.msra.mxu0 0
        %2772 = vmatprep.mubr.bf16.mxu0 0
        %2773 = vmatmul.mubr.bf16.gmra.mrb[0].mxu0 %v2548
        %v2774 = vpop.f32.mrb[0].mxu0
        %v2775 = vadd.f32 %v2734, %v2774
        %v2776 = vpop.f32.mrb[0].mxu0
        %v2777 = vpop.f32.mrb[0].mxu0
        %v2778 = vadd.f32 %v2737, %v2777
        %v2779 = vpop.f32.mrb[0].mxu0
        %2780 = vdwg.mxu0
        %v2781 = vadd.f32 %v2143, %v2775
        %v2782 = vadd.f32 %v2144, %v2778
        %v2783 = vpack.c.bf16 %v2782, %v2781
        %v2784 = vld [vmem:[%s15] sm:$0x3]
        %vm2785 = vcmask 97280
        %v2787 = vsel %vm2785, %v2784, 0
        %vm2789 = vcmask 1045504
        %v2791 = vsel %vm2789, %v2783, 0
        %2793 = vmatprep.subr.bf16.mxu0 0
        %2794 = vmatpush1.bf16.msra.mxu0 %v2791
        %2795 = vmatprep.subr.bf16.mxu0 0
        %2796 = vmatpush1.bf16.msra.mxu0 0
        %2797 = vmatprep.subr.bf16.mxu0 0
        %2798 = vmatpush1.bf16.msra.mxu0 0
        %2799 = vmatprep.subr.bf16.mxu0 0
        %2800 = vmatpush1.bf16.msra.mxu0 0
        %2801 = vmatprep.subr.bf16.mxu0 0
        %2802 = vmatpush1.bf16.msra.mxu0 0
        %2803 = vmatprep.subr.bf16.mxu0 0
        %2804 = vmatpush1.bf16.msra.mxu0 0
        %2805 = vmatprep.subr.bf16.mxu0 0
        %2806 = vmatpush1.bf16.msra.mxu0 0
        %2807 = vmatprep.subr.bf16.mxu0 0
        %2808 = vmatpush1.bf16.msra.mxu0 0
        %2809 = vmatprep.subr.bf16.mxu0 0
        %2810 = vmatpush1.bf16.msra.mxu0 0
        %2811 = vmatprep.subr.bf16.mxu0 0
        %2812 = vmatpush1.bf16.msra.mxu0 0
        %2813 = vmatprep.subr.bf16.mxu0 0
        %2814 = vmatpush1.bf16.msra.mxu0 0
        %2815 = vmatprep.subr.bf16.mxu0 0
        %2816 = vmatpush1.bf16.msra.mxu0 0
        %2817 = vmatprep.subr.bf16.mxu0 0
        %2818 = vmatpush1.bf16.msra.mxu0 0
        %2819 = vmatprep.subr.bf16.mxu0 0
        %2820 = vmatpush1.bf16.msra.mxu0 0
        %2821 = vmatprep.subr.bf16.mxu0 0
        %2822 = vmatpush1.bf16.msra.mxu0 0
        %2823 = vmatprep.subr.bf16.mxu0 0
        %2824 = vmatpush1.bf16.msra.mxu0 0
        %2825 = vmatprep.mubr.bf16.mxu0 0
        %2826 = vmatmul.mubr.bf16.gmra.mrb[0].mxu0 %v2787
        %v2827 = vpop.f32.mrb[0].mxu0
        %v2828 = vadd.f32 0.0, %v2827
        %v2829 = vpop.f32.mrb[0].mxu0
        %v2830 = vpop.f32.mrb[0].mxu0
        %v2831 = vpop.f32.mrb[0].mxu0
        %2832 = vdwg.mxu0
        %s2833 = scalar_lea.vmem %s15, 2
        %v2834 = vld [vmem:[%s2833] sm:$0x3]
        %v2836 = vsel %vm2785, %v2834, 0
        %2838 = vmatprep.subr.bf16.mxu0 0
        %2839 = vmatpush1.bf16.msra.mxu0 %v2791
        %2840 = vmatprep.subr.bf16.mxu0 0
        %2841 = vmatpush1.bf16.msra.mxu0 0
        %2842 = vmatprep.subr.bf16.mxu0 0
        %2843 = vmatpush1.bf16.msra.mxu0 0
        %2844 = vmatprep.subr.bf16.mxu0 0
        %2845 = vmatpush1.bf16.msra.mxu0 0
        %2846 = vmatprep.subr.bf16.mxu0 0
        %2847 = vmatpush1.bf16.msra.mxu0 0
        %2848 = vmatprep.subr.bf16.mxu0 0
        %2849 = vmatpush1.bf16.msra.mxu0 0
        %2850 = vmatprep.subr.bf16.mxu0 0
        %2851 = vmatpush1.bf16.msra.mxu0 0
        %2852 = vmatprep.subr.bf16.mxu0 0
        %2853 = vmatpush1.bf16.msra.mxu0 0
        %2854 = vmatprep.subr.bf16.mxu0 0
        %2855 = vmatpush1.bf16.msra.mxu0 0
        %2856 = vmatprep.subr.bf16.mxu0 0
        %2857 = vmatpush1.bf16.msra.mxu0 0
        %2858 = vmatprep.subr.bf16.mxu0 0
        %2859 = vmatpush1.bf16.msra.mxu0 0
        %2860 = vmatprep.subr.bf16.mxu0 0
        %2861 = vmatpush1.bf16.msra.mxu0 0
        %2862 = vmatprep.subr.bf16.mxu0 0
        %2863 = vmatpush1.bf16.msra.mxu0 0
        %2864 = vmatprep.subr.bf16.mxu0 0
        %2865 = vmatpush1.bf16.msra.mxu0 0
        %2866 = vmatprep.subr.bf16.mxu0 0
        %2867 = vmatpush1.bf16.msra.mxu0 0
        %2868 = vmatprep.subr.bf16.mxu0 0
        %2869 = vmatpush1.bf16.msra.mxu0 0
        %2870 = vmatprep.mubr.bf16.mxu0 0
        %2871 = vmatmul.mubr.bf16.gmra.mrb[0].mxu0 %v2836
        %v2872 = vpop.f32.mrb[0].mxu0
        %v2873 = vadd.f32 0.0, %v2872
        %v2874 = vpop.f32.mrb[0].mxu0
        %v2875 = vpop.f32.mrb[0].mxu0
        %v2876 = vpop.f32.mrb[0].mxu0
        %2877 = vdwg.mxu0
        %s2878 = scalar_lea.vmem %s15, 4
        %v2879 = vld [vmem:[%s2878] sm:$0x3]
        %v2881 = vsel %vm2785, %v2879, 0
        %2883 = vmatprep.subr.bf16.mxu0 0
        %2884 = vmatpush1.bf16.msra.mxu0 %v2791
        %2885 = vmatprep.subr.bf16.mxu0 0
        %2886 = vmatpush1.bf16.msra.mxu0 0
        %2887 = vmatprep.subr.bf16.mxu0 0
        %2888 = vmatpush1.bf16.msra.mxu0 0
        %2889 = vmatprep.subr.bf16.mxu0 0
        %2890 = vmatpush1.bf16.msra.mxu0 0
        %2891 = vmatprep.subr.bf16.mxu0 0
        %2892 = vmatpush1.bf16.msra.mxu0 0
        %2893 = vmatprep.subr.bf16.mxu0 0
        %2894 = vmatpush1.bf16.msra.mxu0 0
        %2895 = vmatprep.subr.bf16.mxu0 0
        %2896 = vmatpush1.bf16.msra.mxu0 0
        %2897 = vmatprep.subr.bf16.mxu0 0
        %2898 = vmatpush1.bf16.msra.mxu0 0
        %2899 = vmatprep.subr.bf16.mxu0 0
        %2900 = vmatpush1.bf16.msra.mxu0 0
        %2901 = vmatprep.subr.bf16.mxu0 0
        %2902 = vmatpush1.bf16.msra.mxu0 0
        %2903 = vmatprep.subr.bf16.mxu0 0
        %2904 = vmatpush1.bf16.msra.mxu0 0
        %2905 = vmatprep.subr.bf16.mxu0 0
        %2906 = vmatpush1.bf16.msra.mxu0 0
        %2907 = vmatprep.subr.bf16.mxu0 0
        %2908 = vmatpush1.bf16.msra.mxu0 0
        %2909 = vmatprep.subr.bf16.mxu0 0
        %2910 = vmatpush1.bf16.msra.mxu0 0
        %2911 = vmatprep.subr.bf16.mxu0 0
        %2912 = vmatpush1.bf16.msra.mxu0 0
        %2913 = vmatprep.subr.bf16.mxu0 0
        %2914 = vmatpush1.bf16.msra.mxu0 0
        %2915 = vmatprep.mubr.bf16.mxu0 0
        %2916 = vmatmul.mubr.bf16.gmra.mrb[0].mxu0 %v2881
        %v2917 = vpop.f32.mrb[0].mxu0
        %v2918 = vadd.f32 0.0, %v2917
        %v2919 = vpop.f32.mrb[0].mxu0
        %v2920 = vpop.f32.mrb[0].mxu0
        %v2921 = vpop.f32.mrb[0].mxu0
        %2922 = vdwg.mxu0
        %v2923 = vmax.f32 %v2828, %v2873
        %vm2924 = vcmp.gt.f32.partialorder %v2873, %v2828
        %v2925 = vsel %vm2924, 1.0, 0.0
        %v2926 = vmax.f32 %v2923, %v2918
        %vm2927 = vcmp.gt.f32.partialorder %v2918, %v2923
        %v2928 = vsel %vm2927, 2.0, %v2925
        %s2929 = scalar_lea.vmem %s3, 3
        %v2930 = vld [vmem:[%s2929] sm:$0x1]
        %v2932 = vlaneseq
        %v2933 = vshrl.u32 %v2932, 7
        %v2934 = vsub.s32 0, %v2933
        %v2935 = vrot.slane %v2930, %v2934
        %v2937 = vmul.f32 %v2926, %v2935
        %s2938 = scalar_lea.vmem %s4, 3
        %v2939 = vld [vmem:[%s2938] sm:$0x1]
        %v2941 = vlaneseq
        %v2942 = vshrl.u32 %v2941, 7
        %v2943 = vsub.s32 0, %v2942
        %v2944 = vrot.slane %v2939, %v2943
        %v2946 = vadd.f32 %v2937, %v2944
        %v2947 = vmax.f32 %v2946, 0.0
        %s2948 = scalar_lea.vmem [#allocation3], 576
        %v2949 = vld [vmem:[%s2948] sm:$0xf]
        %v2950 = vld [vmem:[%s2948 + $0x4] sm:$0xf]
        %v2951 = vld [vmem:[%s2948 + $0x8] sm:$0xf]
        %v2952 = vld [vmem:[%s2948 + $0xc] sm:$0xf]
        %v2953 = vld [vmem:[%s2948 + $0x10] sm:$0xf]
        %v2954 = vld [vmem:[%s2948 + $0x14] sm:$0xf]
        %v2955 = vld [vmem:[%s2948 + $0x18] sm:$0xf]
        %v2956 = vld [vmem:[%s2948 + $0x1c] sm:$0xf]
        %v2957 = vld [vmem:[%s2948 + $0x20] sm:$0xf]
        %v2958 = vld [vmem:[%s2948 + $0x24] sm:$0xf]
        %v2959 = vld [vmem:[%s2948 + $0x28] sm:$0xf]
        %v2960 = vld [vmem:[%s2948 + $0x2c] sm:$0xf]
        %v2961 = vld [vmem:[%s2948 + $0x30] sm:$0xf]
        %v2962 = vld [vmem:[%s2948 + $0x34] sm:$0xf]
        %v2963 = vld [vmem:[%s2948 + $0x38] sm:$0xf]
        %v2964 = vld [vmem:[%s2948 + $0x3c] sm:$0xf]
        %v2965 = vld [vmem:[%s2948 + $0x40] sm:$0xf]
        %v2966 = vld [vmem:[%s2948 + $0x44] sm:$0xf]
        %v2967 = vld [vmem:[%s2948 + $0x48] sm:$0xf]
        %v2968 = vld [vmem:[%s2948 + $0x4c] sm:$0xf]
        %v2969 = vld [vmem:[%s2948 + $0x50] sm:$0xf]
        %v2970 = vld [vmem:[%s2948 + $0x54] sm:$0xf]
        %v2971 = vld [vmem:[%s2948 + $0x58] sm:$0xf]
        %v2972 = vld [vmem:[%s2948 + $0x5c] sm:$0xf]
        %v2973 = vld [vmem:[%s2948 + $0x60] sm:$0xf]
        %v2974 = vld [vmem:[%s2948 + $0x64] sm:$0xf]
        %v2975 = vld [vmem:[%s2948 + $0x68] sm:$0xf]
        %v2976 = vld [vmem:[%s2948 + $0x6c] sm:$0xf]
        %v2977 = vld [vmem:[%s2948 + $0x70] sm:$0xf]
        %v2978 = vld [vmem:[%s2948 + $0x74] sm:$0xf]
        %v2979 = vld [vmem:[%s2948 + $0x78] sm:$0xf]
        %v2980 = vld [vmem:[%s2948 + $0x7c] sm:$0xf]
        %v2981 = vld [vmem:[%s2948 + $0x80] sm:$0xf]
        %v2982 = vld [vmem:[%s2948 + $0x84] sm:$0xf]
        %v2983 = vld [vmem:[%s2948 + $0x88] sm:$0xf]
        %v2984 = vld [vmem:[%s2948 + $0x8c] sm:$0xf]
        %v2985 = vld [vmem:[%s2948 + $0x90] sm:$0xf]
        %v2986 = vld [vmem:[%s2948 + $0x94] sm:$0xf]
        %v2987 = vld [vmem:[%s2948 + $0x98] sm:$0xf]
        %v2988 = vld [vmem:[%s2948 + $0x9c] sm:$0xf]
        %v2989 = vld [vmem:[%s2948 + $0xa0] sm:$0xf]
        %v2990 = vld [vmem:[%s2948 + $0xa4] sm:$0xf]
        %v2991 = vld [vmem:[%s2948 + $0xa8] sm:$0xf]
        %v2992 = vld [vmem:[%s2948 + $0xac] sm:$0xf]
        %v2993 = vld [vmem:[%s2948 + $0xb0] sm:$0xf]
        %v2994 = vld [vmem:[%s2948 + $0xb4] sm:$0xf]
        %v2995 = vld [vmem:[%s2948 + $0xb8] sm:$0xf]
        %v2996 = vld [vmem:[%s2948 + $0xbc] sm:$0xf]
        %s2997 = scalar_lea.vmem %s2, 3
        %v2998 = vld [vmem:[%s2997] sm:$0x1]
        %2999 = vst [vmem:[#allocation2] sm:$0x1] 0.0
        %3000 = vst [vmem:[#allocation2 + $0x1] sm:$0xf] %v2947
        %3001 = vst [vmem:[#allocation2 + $0x5] sm:$0x1] 0.0
        %v3002 = vld [vmem:[#allocation2] sm:$0xf]
        %v3003 = vld [vmem:[#allocation2 + $0x1] sm:$0xf]
        %v3004 = vld [vmem:[#allocation2 + $0x2] sm:$0xf]
        %v3005 = vpack.c.bf16 %v3002, %v3002
        %v3006 = vpack.c.bf16 %v3003, %v3003
        %v3007 = vpack.c.bf16 %v3004, %v3004
        %v3009 = vlaneseq
        %v3010 = vshrl.u32 %v3009, 7
        %v3011 = vsub.s32 0, %v3010
        %v3012 = vrot.slane %v2998, %v3011
        %v3062 = vunpack.c.l.b16 %v2949
        %v3063 = vunpack.c.l.b16 %v2950
        %v3064 = vunpack.c.l.b16 %v2951
        %v3065 = vunpack.c.l.b16 %v2952
        %v3066 = vunpack.c.l.b16 %v2953
        %v3067 = vunpack.c.l.b16 %v2954
        %v3068 = vunpack.c.l.b16 %v2955
        %v3069 = vunpack.c.l.b16 %v2956
        %v3070 = vunpack.c.l.b16 %v2957
        %v3071 = vunpack.c.l.b16 %v2958
        %v3072 = vunpack.c.l.b16 %v2959
        %v3073 = vunpack.c.l.b16 %v2960
        %v3074 = vunpack.c.l.b16 %v2961
        %v3075 = vunpack.c.l.b16 %v2962
        %v3076 = vunpack.c.l.b16 %v2963
        %v3077 = vunpack.c.l.b16 %v2964
        %v3078 = vunpack.c.l.b16 %v2965
        %v3079 = vunpack.c.l.b16 %v2966
        %v3080 = vunpack.c.l.b16 %v2967
        %v3081 = vunpack.c.l.b16 %v2968
        %v3082 = vunpack.c.l.b16 %v2969
        %v3083 = vunpack.c.l.b16 %v2970
        %v3084 = vunpack.c.l.b16 %v2971
        %v3085 = vunpack.c.l.b16 %v2972
        %v3086 = vunpack.c.l.b16 %v2973
        %v3087 = vunpack.c.l.b16 %v2974
        %v3088 = vunpack.c.l.b16 %v2975
        %v3089 = vunpack.c.l.b16 %v2976
        %v3090 = vunpack.c.l.b16 %v2977
        %v3091 = vunpack.c.l.b16 %v2978
        %v3092 = vunpack.c.l.b16 %v2979
        %v3093 = vunpack.c.l.b16 %v2980
        %v3094 = vunpack.c.l.b16 %v2981
        %v3095 = vunpack.c.l.b16 %v2982
        %v3096 = vunpack.c.l.b16 %v2983
        %v3097 = vunpack.c.l.b16 %v2984
        %v3098 = vunpack.c.l.b16 %v2985
        %v3099 = vunpack.c.l.b16 %v2986
        %v3100 = vunpack.c.l.b16 %v2987
        %v3101 = vunpack.c.l.b16 %v2988
        %v3102 = vunpack.c.l.b16 %v2989
        %v3103 = vunpack.c.l.b16 %v2990
        %v3104 = vunpack.c.l.b16 %v2991
        %v3105 = vunpack.c.l.b16 %v2992
        %v3106 = vunpack.c.l.b16 %v2993
        %v3107 = vunpack.c.l.b16 %v2994
        %v3108 = vunpack.c.l.b16 %v2995
        %v3109 = vunpack.c.l.b16 %v2996
        %v3110 = vpack.c.b16 %v3063, %v3062
        %v3111 = vpack.c.b16 %v3065, %v3064
        %v3112 = vpack.c.b16 %v3067, %v3066
        %v3113 = vpack.c.b16 %v3069, %v3068
        %v3114 = vpack.c.b16 %v3071, %v3070
        %v3115 = vpack.c.b16 %v3073, %v3072
        %v3116 = vpack.c.b16 %v3075, %v3074
        %v3117 = vpack.c.b16 %v3077, %v3076
        %v3118 = vpack.c.b16 %v3079, %v3078
        %v3119 = vpack.c.b16 %v3081, %v3080
        %v3120 = vpack.c.b16 %v3083, %v3082
        %v3121 = vpack.c.b16 %v3085, %v3084
        %v3122 = vpack.c.b16 %v3087, %v3086
        %v3123 = vpack.c.b16 %v3089, %v3088
        %v3124 = vpack.c.b16 %v3091, %v3090
        %v3125 = vpack.c.b16 %v3093, %v3092
        %v3126 = vpack.c.b16 %v3095, %v3094
        %v3127 = vpack.c.b16 %v3097, %v3096
        %v3128 = vpack.c.b16 %v3099, %v3098
        %v3129 = vpack.c.b16 %v3101, %v3100
        %v3130 = vpack.c.b16 %v3103, %v3102
        %v3131 = vpack.c.b16 %v3105, %v3104
        %v3132 = vpack.c.b16 %v3107, %v3106
        %v3133 = vpack.c.b16 %v3109, %v3108
        %3158 = vmatprep.subr.bf16.mxu0 0
        %3159 = vmatpush1.bf16.msra.mxu0 %v3110
        %3160 = vmatprep.subr.bf16.mxu0 0
        %3161 = vmatpush1.bf16.msra.mxu0 %v3111
        %3162 = vmatprep.subr.bf16.mxu0 0
        %3163 = vmatpush1.bf16.msra.mxu0 %v3112
        %3164 = vmatprep.subr.bf16.mxu0 0
        %3165 = vmatpush1.bf16.msra.mxu0 %v3113
        %3166 = vmatprep.subr.bf16.mxu0 0
        %3167 = vmatpush1.bf16.msra.mxu0 %v3114
        %3168 = vmatprep.subr.bf16.mxu0 0
        %3169 = vmatpush1.bf16.msra.mxu0 %v3115
        %3170 = vmatprep.subr.bf16.mxu0 0
        %3171 = vmatpush1.bf16.msra.mxu0 %v3116
        %3172 = vmatprep.subr.bf16.mxu0 0
        %3173 = vmatpush1.bf16.msra.mxu0 %v3117
        %3174 = vmatprep.subr.bf16.mxu0 0
        %3175 = vmatpush1.bf16.msra.mxu0 %v3118
        %3176 = vmatprep.subr.bf16.mxu0 0
        %3177 = vmatpush1.bf16.msra.mxu0 %v3119
        %3178 = vmatprep.subr.bf16.mxu0 0
        %3179 = vmatpush1.bf16.msra.mxu0 %v3120
        %3180 = vmatprep.subr.bf16.mxu0 0
        %3181 = vmatpush1.bf16.msra.mxu0 %v3121
        %3182 = vmatprep.subr.bf16.mxu0 0
        %3183 = vmatpush1.bf16.msra.mxu0 %v3122
        %3184 = vmatprep.subr.bf16.mxu0 0
        %3185 = vmatpush1.bf16.msra.mxu0 %v3123
        %3186 = vmatprep.subr.bf16.mxu0 0
        %3187 = vmatpush1.bf16.msra.mxu0 %v3124
        %3188 = vmatprep.subr.bf16.mxu0 0
        %3189 = vmatpush1.bf16.msra.mxu0 %v3125
        %3190 = vmatprep.mubr.bf16.mxu0 %v3006
        %3191 = vmatmul.mubr.bf16.gmra.mrb[0].mxu0 %v3005
        %v3192 = vpop.f32.mrb[0].mxu0
        %v3193 = vadd.f32 %v3012, %v3192
        %v3194 = vpop.f32.mrb[0].mxu0
        %v3195 = vpop.f32.mrb[0].mxu0
        %v3196 = vpop.f32.mrb[0].mxu0
        %3197 = vdwg.mxu0
        %3198 = vmatprep.subr.bf16.mxu0 0
        %3199 = vmatpush1.bf16.msra.mxu0 %v3126
        %3200 = vmatprep.subr.bf16.mxu0 0
        %3201 = vmatpush1.bf16.msra.mxu0 %v3127
        %3202 = vmatprep.subr.bf16.mxu0 0
        %3203 = vmatpush1.bf16.msra.mxu0 %v3128
        %3204 = vmatprep.subr.bf16.mxu0 0
        %3205 = vmatpush1.bf16.msra.mxu0 %v3129
        %3206 = vmatprep.subr.bf16.mxu0 0
        %3207 = vmatpush1.bf16.msra.mxu0 %v3130
        %3208 = vmatprep.subr.bf16.mxu0 0
        %3209 = vmatpush1.bf16.msra.mxu0 %v3131
        %3210 = vmatprep.subr.bf16.mxu0 0
        %3211 = vmatpush1.bf16.msra.mxu0 %v3132
        %3212 = vmatprep.subr.bf16.mxu0 0
        %3213 = vmatpush1.bf16.msra.mxu0 %v3133
        %3214 = vmatprep.subr.bf16.mxu0 0
        %3215 = vmatpush1.bf16.msra.mxu0 0
        %3216 = vmatprep.subr.bf16.mxu0 0
        %3217 = vmatpush1.bf16.msra.mxu0 0
        %3218 = vmatprep.subr.bf16.mxu0 0
        %3219 = vmatpush1.bf16.msra.mxu0 0
        %3220 = vmatprep.subr.bf16.mxu0 0
        %3221 = vmatpush1.bf16.msra.mxu0 0
        %3222 = vmatprep.subr.bf16.mxu0 0
        %3223 = vmatpush1.bf16.msra.mxu0 0
        %3224 = vmatprep.subr.bf16.mxu0 0
        %3225 = vmatpush1.bf16.msra.mxu0 0
        %3226 = vmatprep.subr.bf16.mxu0 0
        %3227 = vmatpush1.bf16.msra.mxu0 0
        %3228 = vmatprep.subr.bf16.mxu0 0
        %3229 = vmatpush1.bf16.msra.mxu0 0
        %3230 = vmatprep.mubr.bf16.mxu0 0
        %3231 = vmatmul.mubr.bf16.gmra.mrb[0].mxu0 %v3007
        %v3232 = vpop.f32.mrb[0].mxu0
        %v3233 = vadd.f32 %v3193, %v3232
        %v3234 = vpop.f32.mrb[0].mxu0
        %v3235 = vpop.f32.mrb[0].mxu0
        %v3236 = vpop.f32.mrb[0].mxu0
        %3237 = vdwg.mxu0
        %s3238 = scalar_lea.vmem %s7, 3
        %v3239 = vld [vmem:[%s3238] sm:$0x1]
        %v3241 = vlaneseq
        %v3242 = vshrl.u32 %v3241, 7
        %v3243 = vsub.s32 0, %v3242
        %v3244 = vrot.slane %v3239, %v3243
        %v3246 = vmul.f32 %v3233, %v3244
        %s3247 = scalar_lea.vmem %s8, 3
        %v3248 = vld [vmem:[%s3247] sm:$0x1]
        %v3250 = vlaneseq
        %v3251 = vshrl.u32 %v3250, 7
        %v3252 = vsub.s32 0, %v3251
        %v3253 = vrot.slane %v3248, %v3252
        %v3255 = vadd.f32 %v3246, %v3253
        %v3256 = vmax.f32 %v3255, 0.0
        %s3257 = scalar_lea.vmem [#allocation5], 576
        %v3258 = vld [vmem:[%s3257] sm:$0xf]
        %v3259 = vld [vmem:[%s3257 + $0x4] sm:$0xf]
        %v3260 = vld [vmem:[%s3257 + $0x8] sm:$0xf]
        %v3261 = vld [vmem:[%s3257 + $0xc] sm:$0xf]
        %v3262 = vld [vmem:[%s3257 + $0x10] sm:$0xf]
        %v3263 = vld [vmem:[%s3257 + $0x14] sm:$0xf]
        %v3264 = vld [vmem:[%s3257 + $0x18] sm:$0xf]
        %v3265 = vld [vmem:[%s3257 + $0x1c] sm:$0xf]
        %v3266 = vld [vmem:[%s3257 + $0x20] sm:$0xf]
        %v3267 = vld [vmem:[%s3257 + $0x24] sm:$0xf]
        %v3268 = vld [vmem:[%s3257 + $0x28] sm:$0xf]
        %v3269 = vld [vmem:[%s3257 + $0x2c] sm:$0xf]
        %v3270 = vld [vmem:[%s3257 + $0x30] sm:$0xf]
        %v3271 = vld [vmem:[%s3257 + $0x34] sm:$0xf]
        %v3272 = vld [vmem:[%s3257 + $0x38] sm:$0xf]
        %v3273 = vld [vmem:[%s3257 + $0x3c] sm:$0xf]
        %v3274 = vld [vmem:[%s3257 + $0x40] sm:$0xf]
        %v3275 = vld [vmem:[%s3257 + $0x44] sm:$0xf]
        %v3276 = vld [vmem:[%s3257 + $0x48] sm:$0xf]
        %v3277 = vld [vmem:[%s3257 + $0x4c] sm:$0xf]
        %v3278 = vld [vmem:[%s3257 + $0x50] sm:$0xf]
        %v3279 = vld [vmem:[%s3257 + $0x54] sm:$0xf]
        %v3280 = vld [vmem:[%s3257 + $0x58] sm:$0xf]
        %v3281 = vld [vmem:[%s3257 + $0x5c] sm:$0xf]
        %v3282 = vld [vmem:[%s3257 + $0x60] sm:$0xf]
        %v3283 = vld [vmem:[%s3257 + $0x64] sm:$0xf]
        %v3284 = vld [vmem:[%s3257 + $0x68] sm:$0xf]
        %v3285 = vld [vmem:[%s3257 + $0x6c] sm:$0xf]
        %v3286 = vld [vmem:[%s3257 + $0x70] sm:$0xf]
        %v3287 = vld [vmem:[%s3257 + $0x74] sm:$0xf]
        %v3288 = vld [vmem:[%s3257 + $0x78] sm:$0xf]
        %v3289 = vld [vmem:[%s3257 + $0x7c] sm:$0xf]
        %v3290 = vld [vmem:[%s3257 + $0x80] sm:$0xf]
        %v3291 = vld [vmem:[%s3257 + $0x84] sm:$0xf]
        %v3292 = vld [vmem:[%s3257 + $0x88] sm:$0xf]
        %v3293 = vld [vmem:[%s3257 + $0x8c] sm:$0xf]
        %v3294 = vld [vmem:[%s3257 + $0x90] sm:$0xf]
        %v3295 = vld [vmem:[%s3257 + $0x94] sm:$0xf]
        %v3296 = vld [vmem:[%s3257 + $0x98] sm:$0xf]
        %v3297 = vld [vmem:[%s3257 + $0x9c] sm:$0xf]
        %v3298 = vld [vmem:[%s3257 + $0xa0] sm:$0xf]
        %v3299 = vld [vmem:[%s3257 + $0xa4] sm:$0xf]
        %v3300 = vld [vmem:[%s3257 + $0xa8] sm:$0xf]
        %v3301 = vld [vmem:[%s3257 + $0xac] sm:$0xf]
        %v3302 = vld [vmem:[%s3257 + $0xb0] sm:$0xf]
        %v3303 = vld [vmem:[%s3257 + $0xb4] sm:$0xf]
        %v3304 = vld [vmem:[%s3257 + $0xb8] sm:$0xf]
        %v3305 = vld [vmem:[%s3257 + $0xbc] sm:$0xf]
        %s3306 = scalar_lea.vmem %s6, 3
        %v3307 = vld [vmem:[%s3306] sm:$0x1]
        %3308 = vst [vmem:[#allocation2] sm:$0x1] 0.0
        %3309 = vst [vmem:[#allocation2 + $0x1] sm:$0xf] %v3256
        %3310 = vst [vmem:[#allocation2 + $0x5] sm:$0x1] 0.0
        %v3311 = vld [vmem:[#allocation2] sm:$0xf]
        %v3312 = vld [vmem:[#allocation2 + $0x1] sm:$0xf]
        %v3313 = vld [vmem:[#allocation2 + $0x2] sm:$0xf]
        %v3314 = vpack.c.bf16 %v3311, %v3311
        %v3315 = vpack.c.bf16 %v3312, %v3312
        %v3316 = vpack.c.bf16 %v3313, %v3313
        %v3318 = vlaneseq
        %v3319 = vshrl.u32 %v3318, 7
        %v3320 = vsub.s32 0, %v3319
        %v3321 = vrot.slane %v3307, %v3320
        %v3371 = vunpack.c.l.b16 %v3258
        %v3372 = vunpack.c.l.b16 %v3259
        %v3373 = vunpack.c.l.b16 %v3260
        %v3374 = vunpack.c.l.b16 %v3261
        %v3375 = vunpack.c.l.b16 %v3262
        %v3376 = vunpack.c.l.b16 %v3263
        %v3377 = vunpack.c.l.b16 %v3264
        %v3378 = vunpack.c.l.b16 %v3265
        %v3379 = vunpack.c.l.b16 %v3266
        %v3380 = vunpack.c.l.b16 %v3267
        %v3381 = vunpack.c.l.b16 %v3268
        %v3382 = vunpack.c.l.b16 %v3269
        %v3383 = vunpack.c.l.b16 %v3270
        %v3384 = vunpack.c.l.b16 %v3271
        %v3385 = vunpack.c.l.b16 %v3272
        %v3386 = vunpack.c.l.b16 %v3273
        %v3387 = vunpack.c.l.b16 %v3274
        %v3388 = vunpack.c.l.b16 %v3275
        %v3389 = vunpack.c.l.b16 %v3276
        %v3390 = vunpack.c.l.b16 %v3277
        %v3391 = vunpack.c.l.b16 %v3278
        %v3392 = vunpack.c.l.b16 %v3279
        %v3393 = vunpack.c.l.b16 %v3280
        %v3394 = vunpack.c.l.b16 %v3281
        %v3395 = vunpack.c.l.b16 %v3282
        %v3396 = vunpack.c.l.b16 %v3283
        %v3397 = vunpack.c.l.b16 %v3284
        %v3398 = vunpack.c.l.b16 %v3285
        %v3399 = vunpack.c.l.b16 %v3286
        %v3400 = vunpack.c.l.b16 %v3287
        %v3401 = vunpack.c.l.b16 %v3288
        %v3402 = vunpack.c.l.b16 %v3289
        %v3403 = vunpack.c.l.b16 %v3290
        %v3404 = vunpack.c.l.b16 %v3291
        %v3405 = vunpack.c.l.b16 %v3292
        %v3406 = vunpack.c.l.b16 %v3293
        %v3407 = vunpack.c.l.b16 %v3294
        %v3408 = vunpack.c.l.b16 %v3295
        %v3409 = vunpack.c.l.b16 %v3296
        %v3410 = vunpack.c.l.b16 %v3297
        %v3411 = vunpack.c.l.b16 %v3298
        %v3412 = vunpack.c.l.b16 %v3299
        %v3413 = vunpack.c.l.b16 %v3300
        %v3414 = vunpack.c.l.b16 %v3301
        %v3415 = vunpack.c.l.b16 %v3302
        %v3416 = vunpack.c.l.b16 %v3303
        %v3417 = vunpack.c.l.b16 %v3304
        %v3418 = vunpack.c.l.b16 %v3305
        %v3419 = vpack.c.b16 %v3372, %v3371
        %v3420 = vpack.c.b16 %v3374, %v3373
        %v3421 = vpack.c.b16 %v3376, %v3375
        %v3422 = vpack.c.b16 %v3378, %v3377
        %v3423 = vpack.c.b16 %v3380, %v3379
        %v3424 = vpack.c.b16 %v3382, %v3381
        %v3425 = vpack.c.b16 %v3384, %v3383
        %v3426 = vpack.c.b16 %v3386, %v3385
        %v3427 = vpack.c.b16 %v3388, %v3387
        %v3428 = vpack.c.b16 %v3390, %v3389
        %v3429 = vpack.c.b16 %v3392, %v3391
        %v3430 = vpack.c.b16 %v3394, %v3393
        %v3431 = vpack.c.b16 %v3396, %v3395
        %v3432 = vpack.c.b16 %v3398, %v3397
        %v3433 = vpack.c.b16 %v3400, %v3399
        %v3434 = vpack.c.b16 %v3402, %v3401
        %v3435 = vpack.c.b16 %v3404, %v3403
        %v3436 = vpack.c.b16 %v3406, %v3405
        %v3437 = vpack.c.b16 %v3408, %v3407
        %v3438 = vpack.c.b16 %v3410, %v3409
        %v3439 = vpack.c.b16 %v3412, %v3411
        %v3440 = vpack.c.b16 %v3414, %v3413
        %v3441 = vpack.c.b16 %v3416, %v3415
        %v3442 = vpack.c.b16 %v3418, %v3417
        %3467 = vmatprep.subr.bf16.mxu0 0
        %3468 = vmatpush1.bf16.msra.mxu0 %v3419
        %3469 = vmatprep.subr.bf16.mxu0 0
        %3470 = vmatpush1.bf16.msra.mxu0 %v3420
        %3471 = vmatprep.subr.bf16.mxu0 0
        %3472 = vmatpush1.bf16.msra.mxu0 %v3421
        %3473 = vmatprep.subr.bf16.mxu0 0
        %3474 = vmatpush1.bf16.msra.mxu0 %v3422
        %3475 = vmatprep.subr.bf16.mxu0 0
        %3476 = vmatpush1.bf16.msra.mxu0 %v3423
        %3477 = vmatprep.subr.bf16.mxu0 0
        %3478 = vmatpush1.bf16.msra.mxu0 %v3424
        %3479 = vmatprep.subr.bf16.mxu0 0
        %3480 = vmatpush1.bf16.msra.mxu0 %v3425
        %3481 = vmatprep.subr.bf16.mxu0 0
        %3482 = vmatpush1.bf16.msra.mxu0 %v3426
        %3483 = vmatprep.subr.bf16.mxu0 0
        %3484 = vmatpush1.bf16.msra.mxu0 %v3427
        %3485 = vmatprep.subr.bf16.mxu0 0
        %3486 = vmatpush1.bf16.msra.mxu0 %v3428
        %3487 = vmatprep.subr.bf16.mxu0 0
        %3488 = vmatpush1.bf16.msra.mxu0 %v3429
        %3489 = vmatprep.subr.bf16.mxu0 0
        %3490 = vmatpush1.bf16.msra.mxu0 %v3430
        %3491 = vmatprep.subr.bf16.mxu0 0
        %3492 = vmatpush1.bf16.msra.mxu0 %v3431
        %3493 = vmatprep.subr.bf16.mxu0 0
        %3494 = vmatpush1.bf16.msra.mxu0 %v3432
        %3495 = vmatprep.subr.bf16.mxu0 0
        %3496 = vmatpush1.bf16.msra.mxu0 %v3433
        %3497 = vmatprep.subr.bf16.mxu0 0
        %3498 = vmatpush1.bf16.msra.mxu0 %v3434
        %3499 = vmatprep.mubr.bf16.mxu0 %v3315
        %3500 = vmatmul.mubr.bf16.gmra.mrb[0].mxu0 %v3314
        %v3501 = vpop.f32.mrb[0].mxu0
        %v3502 = vadd.f32 %v3321, %v3501
        %v3503 = vpop.f32.mrb[0].mxu0
        %v3504 = vpop.f32.mrb[0].mxu0
        %v3505 = vpop.f32.mrb[0].mxu0
        %3506 = vdwg.mxu0
        %3507 = vmatprep.subr.bf16.mxu0 0
        %3508 = vmatpush1.bf16.msra.mxu0 %v3435
        %3509 = vmatprep.subr.bf16.mxu0 0
        %3510 = vmatpush1.bf16.msra.mxu0 %v3436
        %3511 = vmatprep.subr.bf16.mxu0 0
        %3512 = vmatpush1.bf16.msra.mxu0 %v3437
        %3513 = vmatprep.subr.bf16.mxu0 0
        %3514 = vmatpush1.bf16.msra.mxu0 %v3438
        %3515 = vmatprep.subr.bf16.mxu0 0
        %3516 = vmatpush1.bf16.msra.mxu0 %v3439
        %3517 = vmatprep.subr.bf16.mxu0 0
        %3518 = vmatpush1.bf16.msra.mxu0 %v3440
        %3519 = vmatprep.subr.bf16.mxu0 0
        %3520 = vmatpush1.bf16.msra.mxu0 %v3441
        %3521 = vmatprep.subr.bf16.mxu0 0
        %3522 = vmatpush1.bf16.msra.mxu0 %v3442
        %3523 = vmatprep.subr.bf16.mxu0 0
        %3524 = vmatpush1.bf16.msra.mxu0 0
        %3525 = vmatprep.subr.bf16.mxu0 0
        %3526 = vmatpush1.bf16.msra.mxu0 0
        %3527 = vmatprep.subr.bf16.mxu0 0
        %3528 = vmatpush1.bf16.msra.mxu0 0
        %3529 = vmatprep.subr.bf16.mxu0 0
        %3530 = vmatpush1.bf16.msra.mxu0 0
        %3531 = vmatprep.subr.bf16.mxu0 0
        %3532 = vmatpush1.bf16.msra.mxu0 0
        %3533 = vmatprep.subr.bf16.mxu0 0
        %3534 = vmatpush1.bf16.msra.mxu0 0
        %3535 = vmatprep.subr.bf16.mxu0 0
        %3536 = vmatpush1.bf16.msra.mxu0 0
        %3537 = vmatprep.subr.bf16.mxu0 0
        %3538 = vmatpush1.bf16.msra.mxu0 0
        %3539 = vmatprep.mubr.bf16.mxu0 0
        %3540 = vmatmul.mubr.bf16.gmra.mrb[0].mxu0 %v3316
        %v3541 = vpop.f32.mrb[0].mxu0
        %v3542 = vadd.f32 %v3502, %v3541
        %v3543 = vpop.f32.mrb[0].mxu0
        %v3544 = vpop.f32.mrb[0].mxu0
        %v3545 = vpop.f32.mrb[0].mxu0
        %3546 = vdwg.mxu0
        %v3547 = vadd.f32 %v2926, %v3542
        %s3548 = scalar_lea.vmem %s3, 4
        %v3549 = vld [vmem:[%s3548] sm:$0x1]
        %v3551 = vlaneseq
        %v3552 = vshrl.u32 %v3551, 7
        %v3553 = vsub.s32 0, %v3552
        %v3554 = vrot.slane %v3549, %v3553
        %v3556 = vmul.f32 %v3547, %v3554
        %s3557 = scalar_lea.vmem %s4, 4
        %v3558 = vld [vmem:[%s3557] sm:$0x1]
        %v3560 = vlaneseq
        %v3561 = vshrl.u32 %v3560, 7
        %v3562 = vsub.s32 0, %v3561
        %v3563 = vrot.slane %v3558, %v3562
        %v3565 = vadd.f32 %v3556, %v3563
        %v3566 = vmax.f32 %v3565, 0.0
        %s3567 = scalar_lea.vmem [#allocation3], 768
        %v3568 = vld [vmem:[%s3567] sm:$0xf]
        %v3569 = vld [vmem:[%s3567 + $0x4] sm:$0xf]
        %v3570 = vld [vmem:[%s3567 + $0x8] sm:$0xf]
        %v3571 = vld [vmem:[%s3567 + $0xc] sm:$0xf]
        %v3572 = vld [vmem:[%s3567 + $0x10] sm:$0xf]
        %v3573 = vld [vmem:[%s3567 + $0x14] sm:$0xf]
        %v3574 = vld [vmem:[%s3567 + $0x18] sm:$0xf]
        %v3575 = vld [vmem:[%s3567 + $0x1c] sm:$0xf]
        %v3576 = vld [vmem:[%s3567 + $0x20] sm:$0xf]
        %v3577 = vld [vmem:[%s3567 + $0x24] sm:$0xf]
        %v3578 = vld [vmem:[%s3567 + $0x28] sm:$0xf]
        %v3579 = vld [vmem:[%s3567 + $0x2c] sm:$0xf]
        %v3580 = vld [vmem:[%s3567 + $0x30] sm:$0xf]
        %v3581 = vld [vmem:[%s3567 + $0x34] sm:$0xf]
        %v3582 = vld [vmem:[%s3567 + $0x38] sm:$0xf]
        %v3583 = vld [vmem:[%s3567 + $0x3c] sm:$0xf]
        %v3584 = vld [vmem:[%s3567 + $0x40] sm:$0xf]
        %v3585 = vld [vmem:[%s3567 + $0x44] sm:$0xf]
        %v3586 = vld [vmem:[%s3567 + $0x48] sm:$0xf]
        %v3587 = vld [vmem:[%s3567 + $0x4c] sm:$0xf]
        %v3588 = vld [vmem:[%s3567 + $0x50] sm:$0xf]
        %v3589 = vld [vmem:[%s3567 + $0x54] sm:$0xf]
        %v3590 = vld [vmem:[%s3567 + $0x58] sm:$0xf]
        %v3591 = vld [vmem:[%s3567 + $0x5c] sm:$0xf]
        %v3592 = vld [vmem:[%s3567 + $0x60] sm:$0xf]
        %v3593 = vld [vmem:[%s3567 + $0x64] sm:$0xf]
        %v3594 = vld [vmem:[%s3567 + $0x68] sm:$0xf]
        %v3595 = vld [vmem:[%s3567 + $0x6c] sm:$0xf]
        %v3596 = vld [vmem:[%s3567 + $0x70] sm:$0xf]
        %v3597 = vld [vmem:[%s3567 + $0x74] sm:$0xf]
        %v3598 = vld [vmem:[%s3567 + $0x78] sm:$0xf]
        %v3599 = vld [vmem:[%s3567 + $0x7c] sm:$0xf]
        %v3600 = vld [vmem:[%s3567 + $0x80] sm:$0xf]
        %v3601 = vld [vmem:[%s3567 + $0x84] sm:$0xf]
        %v3602 = vld [vmem:[%s3567 + $0x88] sm:$0xf]
        %v3603 = vld [vmem:[%s3567 + $0x8c] sm:$0xf]
        %v3604 = vld [vmem:[%s3567 + $0x90] sm:$0xf]
        %v3605 = vld [vmem:[%s3567 + $0x94] sm:$0xf]
        %v3606 = vld [vmem:[%s3567 + $0x98] sm:$0xf]
        %v3607 = vld [vmem:[%s3567 + $0x9c] sm:$0xf]
        %v3608 = vld [vmem:[%s3567 + $0xa0] sm:$0xf]
        %v3609 = vld [vmem:[%s3567 + $0xa4] sm:$0xf]
        %v3610 = vld [vmem:[%s3567 + $0xa8] sm:$0xf]
        %v3611 = vld [vmem:[%s3567 + $0xac] sm:$0xf]
        %v3612 = vld [vmem:[%s3567 + $0xb0] sm:$0xf]
        %v3613 = vld [vmem:[%s3567 + $0xb4] sm:$0xf]
        %v3614 = vld [vmem:[%s3567 + $0xb8] sm:$0xf]
        %v3615 = vld [vmem:[%s3567 + $0xbc] sm:$0xf]
        %s3616 = scalar_lea.vmem %s2, 4
        %v3617 = vld [vmem:[%s3616] sm:$0x1]
        %3618 = vst [vmem:[#allocation2] sm:$0x1] 0.0
        %3619 = vst [vmem:[#allocation2 + $0x1] sm:$0xf] %v3566
        %3620 = vst [vmem:[#allocation2 + $0x5] sm:$0x1] 0.0
        %v3621 = vld [vmem:[#allocation2] sm:$0xf]
        %v3622 = vld [vmem:[#allocation2 + $0x1] sm:$0xf]
        %v3623 = vld [vmem:[#allocation2 + $0x2] sm:$0xf]
        %v3624 = vpack.c.bf16 %v3621, %v3621
        %v3625 = vpack.c.bf16 %v3622, %v3622
        %v3626 = vpack.c.bf16 %v3623, %v3623
        %v3628 = vlaneseq
        %v3629 = vshrl.u32 %v3628, 7
        %v3630 = vsub.s32 0, %v3629
        %v3631 = vrot.slane %v3617, %v3630
        %v3681 = vunpack.c.l.b16 %v3568
        %v3682 = vunpack.c.l.b16 %v3569
        %v3683 = vunpack.c.l.b16 %v3570
        %v3684 = vunpack.c.l.b16 %v3571
        %v3685 = vunpack.c.l.b16 %v3572
        %v3686 = vunpack.c.l.b16 %v3573
        %v3687 = vunpack.c.l.b16 %v3574
        %v3688 = vunpack.c.l.b16 %v3575
        %v3689 = vunpack.c.l.b16 %v3576
        %v3690 = vunpack.c.l.b16 %v3577
        %v3691 = vunpack.c.l.b16 %v3578
        %v3692 = vunpack.c.l.b16 %v3579
        %v3693 = vunpack.c.l.b16 %v3580
        %v3694 = vunpack.c.l.b16 %v3581
        %v3695 = vunpack.c.l.b16 %v3582
        %v3696 = vunpack.c.l.b16 %v3583
        %v3697 = vunpack.c.l.b16 %v3584
        %v3698 = vunpack.c.l.b16 %v3585
        %v3699 = vunpack.c.l.b16 %v3586
        %v3700 = vunpack.c.l.b16 %v3587
        %v3701 = vunpack.c.l.b16 %v3588
        %v3702 = vunpack.c.l.b16 %v3589
        %v3703 = vunpack.c.l.b16 %v3590
        %v3704 = vunpack.c.l.b16 %v3591
        %v3705 = vunpack.c.l.b16 %v3592
        %v3706 = vunpack.c.l.b16 %v3593
        %v3707 = vunpack.c.l.b16 %v3594
        %v3708 = vunpack.c.l.b16 %v3595
        %v3709 = vunpack.c.l.b16 %v3596
        %v3710 = vunpack.c.l.b16 %v3597
        %v3711 = vunpack.c.l.b16 %v3598
        %v3712 = vunpack.c.l.b16 %v3599
        %v3713 = vunpack.c.l.b16 %v3600
        %v3714 = vunpack.c.l.b16 %v3601
        %v3715 = vunpack.c.l.b16 %v3602
        %v3716 = vunpack.c.l.b16 %v3603
        %v3717 = vunpack.c.l.b16 %v3604
        %v3718 = vunpack.c.l.b16 %v3605
        %v3719 = vunpack.c.l.b16 %v3606
        %v3720 = vunpack.c.l.b16 %v3607
        %v3721 = vunpack.c.l.b16 %v3608
        %v3722 = vunpack.c.l.b16 %v3609
        %v3723 = vunpack.c.l.b16 %v3610
        %v3724 = vunpack.c.l.b16 %v3611
        %v3725 = vunpack.c.l.b16 %v3612
        %v3726 = vunpack.c.l.b16 %v3613
        %v3727 = vunpack.c.l.b16 %v3614
        %v3728 = vunpack.c.l.b16 %v3615
        %v3729 = vpack.c.b16 %v3682, %v3681
        %v3730 = vpack.c.b16 %v3684, %v3683
        %v3731 = vpack.c.b16 %v3686, %v3685
        %v3732 = vpack.c.b16 %v3688, %v3687
        %v3733 = vpack.c.b16 %v3690, %v3689
        %v3734 = vpack.c.b16 %v3692, %v3691
        %v3735 = vpack.c.b16 %v3694, %v3693
        %v3736 = vpack.c.b16 %v3696, %v3695
        %v3737 = vpack.c.b16 %v3698, %v3697
        %v3738 = vpack.c.b16 %v3700, %v3699
        %v3739 = vpack.c.b16 %v3702, %v3701
        %v3740 = vpack.c.b16 %v3704, %v3703
        %v3741 = vpack.c.b16 %v3706, %v3705
        %v3742 = vpack.c.b16 %v3708, %v3707
        %v3743 = vpack.c.b16 %v3710, %v3709
        %v3744 = vpack.c.b16 %v3712, %v3711
        %v3745 = vpack.c.b16 %v3714, %v3713
        %v3746 = vpack.c.b16 %v3716, %v3715
        %v3747 = vpack.c.b16 %v3718, %v3717
        %v3748 = vpack.c.b16 %v3720, %v3719
        %v3749 = vpack.c.b16 %v3722, %v3721
        %v3750 = vpack.c.b16 %v3724, %v3723
        %v3751 = vpack.c.b16 %v3726, %v3725
        %v3752 = vpack.c.b16 %v3728, %v3727
        %3777 = vmatprep.subr.bf16.mxu0 0
        %3778 = vmatpush1.bf16.msra.mxu0 %v3729
        %3779 = vmatprep.subr.bf16.mxu0 0
        %3780 = vmatpush1.bf16.msra.mxu0 %v3730
        %3781 = vmatprep.subr.bf16.mxu0 0
        %3782 = vmatpush1.bf16.msra.mxu0 %v3731
        %3783 = vmatprep.subr.bf16.mxu0 0
        %3784 = vmatpush1.bf16.msra.mxu0 %v3732
        %3785 = vmatprep.subr.bf16.mxu0 0
        %3786 = vmatpush1.bf16.msra.mxu0 %v3733
        %3787 = vmatprep.subr.bf16.mxu0 0
        %3788 = vmatpush1.bf16.msra.mxu0 %v3734
        %3789 = vmatprep.subr.bf16.mxu0 0
        %3790 = vmatpush1.bf16.msra.mxu0 %v3735
        %3791 = vmatprep.subr.bf16.mxu0 0
        %3792 = vmatpush1.bf16.msra.mxu0 %v3736
        %3793 = vmatprep.subr.bf16.mxu0 0
        %3794 = vmatpush1.bf16.msra.mxu0 %v3737
        %3795 = vmatprep.subr.bf16.mxu0 0
        %3796 = vmatpush1.bf16.msra.mxu0 %v3738
        %3797 = vmatprep.subr.bf16.mxu0 0
        %3798 = vmatpush1.bf16.msra.mxu0 %v3739
        %3799 = vmatprep.subr.bf16.mxu0 0
        %3800 = vmatpush1.bf16.msra.mxu0 %v3740
        %3801 = vmatprep.subr.bf16.mxu0 0
        %3802 = vmatpush1.bf16.msra.mxu0 %v3741
        %3803 = vmatprep.subr.bf16.mxu0 0
        %3804 = vmatpush1.bf16.msra.mxu0 %v3742
        %3805 = vmatprep.subr.bf16.mxu0 0
        %3806 = vmatpush1.bf16.msra.mxu0 %v3743
        %3807 = vmatprep.subr.bf16.mxu0 0
        %3808 = vmatpush1.bf16.msra.mxu0 %v3744
        %3809 = vmatprep.mubr.bf16.mxu0 %v3625
        %3810 = vmatmul.mubr.bf16.gmra.mrb[0].mxu0 %v3624
        %v3811 = vpop.f32.mrb[0].mxu0
        %v3812 = vadd.f32 %v3631, %v3811
        %v3813 = vpop.f32.mrb[0].mxu0
        %v3814 = vpop.f32.mrb[0].mxu0
        %v3815 = vpop.f32.mrb[0].mxu0
        %3816 = vdwg.mxu0
        %3817 = vmatprep.subr.bf16.mxu0 0
        %3818 = vmatpush1.bf16.msra.mxu0 %v3745
        %3819 = vmatprep.subr.bf16.mxu0 0
        %3820 = vmatpush1.bf16.msra.mxu0 %v3746
        %3821 = vmatprep.subr.bf16.mxu0 0
        %3822 = vmatpush1.bf16.msra.mxu0 %v3747
        %3823 = vmatprep.subr.bf16.mxu0 0
        %3824 = vmatpush1.bf16.msra.mxu0 %v3748
        %3825 = vmatprep.subr.bf16.mxu0 0
        %3826 = vmatpush1.bf16.msra.mxu0 %v3749
        %3827 = vmatprep.subr.bf16.mxu0 0
        %3828 = vmatpush1.bf16.msra.mxu0 %v3750
        %3829 = vmatprep.subr.bf16.mxu0 0
        %3830 = vmatpush1.bf16.msra.mxu0 %v3751
        %3831 = vmatprep.subr.bf16.mxu0 0
        %3832 = vmatpush1.bf16.msra.mxu0 %v3752
        %3833 = vmatprep.subr.bf16.mxu0 0
        %3834 = vmatpush1.bf16.msra.mxu0 0
        %3835 = vmatprep.subr.bf16.mxu0 0
        %3836 = vmatpush1.bf16.msra.mxu0 0
        %3837 = vmatprep.subr.bf16.mxu0 0
        %3838 = vmatpush1.bf16.msra.mxu0 0
        %3839 = vmatprep.subr.bf16.mxu0 0
        %3840 = vmatpush1.bf16.msra.mxu0 0
        %3841 = vmatprep.subr.bf16.mxu0 0
        %3842 = vmatpush1.bf16.msra.mxu0 0
        %3843 = vmatprep.subr.bf16.mxu0 0
        %3844 = vmatpush1.bf16.msra.mxu0 0
        %3845 = vmatprep.subr.bf16.mxu0 0
        %3846 = vmatpush1.bf16.msra.mxu0 0
        %3847 = vmatprep.subr.bf16.mxu0 0
        %3848 = vmatpush1.bf16.msra.mxu0 0
        %3849 = vmatprep.mubr.bf16.mxu0 0
        %3850 = vmatmul.mubr.bf16.gmra.mrb[0].mxu0 %v3626
        %v3851 = vpop.f32.mrb[0].mxu0
        %v3852 = vadd.f32 %v3812, %v3851
        %v3853 = vpop.f32.mrb[0].mxu0
        %v3854 = vpop.f32.mrb[0].mxu0
        %v3855 = vpop.f32.mrb[0].mxu0
        %3856 = vdwg.mxu0
        %s3857 = scalar_lea.vmem %s7, 4
        %v3858 = vld [vmem:[%s3857] sm:$0x1]
        %v3860 = vlaneseq
        %v3861 = vshrl.u32 %v3860, 7
        %v3862 = vsub.s32 0, %v3861
        %v3863 = vrot.slane %v3858, %v3862
        %v3865 = vmul.f32 %v3852, %v3863
        %s3866 = scalar_lea.vmem %s8, 4
        %v3867 = vld [vmem:[%s3866] sm:$0x1]
        %v3869 = vlaneseq
        %v3870 = vshrl.u32 %v3869, 7
        %v3871 = vsub.s32 0, %v3870
        %v3872 = vrot.slane %v3867, %v3871
        %v3874 = vadd.f32 %v3865, %v3872
        %v3875 = vmax.f32 %v3874, 0.0
        %s3876 = scalar_lea.vmem [#allocation5], 768
        %v3877 = vld [vmem:[%s3876] sm:$0xf]
        %v3878 = vld [vmem:[%s3876 + $0x4] sm:$0xf]
        %v3879 = vld [vmem:[%s3876 + $0x8] sm:$0xf]
        %v3880 = vld [vmem:[%s3876 + $0xc] sm:$0xf]
        %v3881 = vld [vmem:[%s3876 + $0x10] sm:$0xf]
        %v3882 = vld [vmem:[%s3876 + $0x14] sm:$0xf]
        %v3883 = vld [vmem:[%s3876 + $0x18] sm:$0xf]
        %v3884 = vld [vmem:[%s3876 + $0x1c] sm:$0xf]
        %v3885 = vld [vmem:[%s3876 + $0x20] sm:$0xf]
        %v3886 = vld [vmem:[%s3876 + $0x24] sm:$0xf]
        %v3887 = vld [vmem:[%s3876 + $0x28] sm:$0xf]
        %v3888 = vld [vmem:[%s3876 + $0x2c] sm:$0xf]
        %v3889 = vld [vmem:[%s3876 + $0x30] sm:$0xf]
        %v3890 = vld [vmem:[%s3876 + $0x34] sm:$0xf]
        %v3891 = vld [vmem:[%s3876 + $0x38] sm:$0xf]
        %v3892 = vld [vmem:[%s3876 + $0x3c] sm:$0xf]
        %v3893 = vld [vmem:[%s3876 + $0x40] sm:$0xf]
        %v3894 = vld [vmem:[%s3876 + $0x44] sm:$0xf]
        %v3895 = vld [vmem:[%s3876 + $0x48] sm:$0xf]
        %v3896 = vld [vmem:[%s3876 + $0x4c] sm:$0xf]
        %v3897 = vld [vmem:[%s3876 + $0x50] sm:$0xf]
        %v3898 = vld [vmem:[%s3876 + $0x54] sm:$0xf]
        %v3899 = vld [vmem:[%s3876 + $0x58] sm:$0xf]
        %v3900 = vld [vmem:[%s3876 + $0x5c] sm:$0xf]
        %v3901 = vld [vmem:[%s3876 + $0x60] sm:$0xf]
        %v3902 = vld [vmem:[%s3876 + $0x64] sm:$0xf]
        %v3903 = vld [vmem:[%s3876 + $0x68] sm:$0xf]
        %v3904 = vld [vmem:[%s3876 + $0x6c] sm:$0xf]
        %v3905 = vld [vmem:[%s3876 + $0x70] sm:$0xf]
        %v3906 = vld [vmem:[%s3876 + $0x74] sm:$0xf]
        %v3907 = vld [vmem:[%s3876 + $0x78] sm:$0xf]
        %v3908 = vld [vmem:[%s3876 + $0x7c] sm:$0xf]
        %v3909 = vld [vmem:[%s3876 + $0x80] sm:$0xf]
        %v3910 = vld [vmem:[%s3876 + $0x84] sm:$0xf]
        %v3911 = vld [vmem:[%s3876 + $0x88] sm:$0xf]
        %v3912 = vld [vmem:[%s3876 + $0x8c] sm:$0xf]
        %v3913 = vld [vmem:[%s3876 + $0x90] sm:$0xf]
        %v3914 = vld [vmem:[%s3876 + $0x94] sm:$0xf]
        %v3915 = vld [vmem:[%s3876 + $0x98] sm:$0xf]
        %v3916 = vld [vmem:[%s3876 + $0x9c] sm:$0xf]
        %v3917 = vld [vmem:[%s3876 + $0xa0] sm:$0xf]
        %v3918 = vld [vmem:[%s3876 + $0xa4] sm:$0xf]
        %v3919 = vld [vmem:[%s3876 + $0xa8] sm:$0xf]
        %v3920 = vld [vmem:[%s3876 + $0xac] sm:$0xf]
        %v3921 = vld [vmem:[%s3876 + $0xb0] sm:$0xf]
        %v3922 = vld [vmem:[%s3876 + $0xb4] sm:$0xf]
        %v3923 = vld [vmem:[%s3876 + $0xb8] sm:$0xf]
        %v3924 = vld [vmem:[%s3876 + $0xbc] sm:$0xf]
        %s3925 = scalar_lea.vmem %s6, 4
        %v3926 = vld [vmem:[%s3925] sm:$0x1]
        %3927 = vst [vmem:[#allocation2] sm:$0x1] 0.0
        %3928 = vst [vmem:[#allocation2 + $0x1] sm:$0xf] %v3875
        %3929 = vst [vmem:[#allocation2 + $0x5] sm:$0x1] 0.0
        %v3930 = vld [vmem:[#allocation2] sm:$0xf]
        %v3931 = vld [vmem:[#allocation2 + $0x1] sm:$0xf]
        %v3932 = vld [vmem:[#allocation2 + $0x2] sm:$0xf]
        %v3933 = vpack.c.bf16 %v3930, %v3930
        %v3934 = vpack.c.bf16 %v3931, %v3931
        %v3935 = vpack.c.bf16 %v3932, %v3932
        %v3937 = vlaneseq
        %v3938 = vshrl.u32 %v3937, 7
        %v3939 = vsub.s32 0, %v3938
        %v3940 = vrot.slane %v3926, %v3939
        %v3990 = vunpack.c.l.b16 %v3877
        %v3991 = vunpack.c.l.b16 %v3878
        %v3992 = vunpack.c.l.b16 %v3879
        %v3993 = vunpack.c.l.b16 %v3880
        %v3994 = vunpack.c.l.b16 %v3881
        %v3995 = vunpack.c.l.b16 %v3882
        %v3996 = vunpack.c.l.b16 %v3883
        %v3997 = vunpack.c.l.b16 %v3884
        %v3998 = vunpack.c.l.b16 %v3885
        %v3999 = vunpack.c.l.b16 %v3886
        %v4000 = vunpack.c.l.b16 %v3887
        %v4001 = vunpack.c.l.b16 %v3888
        %v4002 = vunpack.c.l.b16 %v3889
        %v4003 = vunpack.c.l.b16 %v3890
        %v4004 = vunpack.c.l.b16 %v3891
        %v4005 = vunpack.c.l.b16 %v3892
        %v4006 = vunpack.c.l.b16 %v3893
        %v4007 = vunpack.c.l.b16 %v3894
        %v4008 = vunpack.c.l.b16 %v3895
        %v4009 = vunpack.c.l.b16 %v3896
        %v4010 = vunpack.c.l.b16 %v3897
        %v4011 = vunpack.c.l.b16 %v3898
        %v4012 = vunpack.c.l.b16 %v3899
        %v4013 = vunpack.c.l.b16 %v3900
        %v4014 = vunpack.c.l.b16 %v3901
        %v4015 = vunpack.c.l.b16 %v3902
        %v4016 = vunpack.c.l.b16 %v3903
        %v4017 = vunpack.c.l.b16 %v3904
        %v4018 = vunpack.c.l.b16 %v3905
        %v4019 = vunpack.c.l.b16 %v3906
        %v4020 = vunpack.c.l.b16 %v3907
        %v4021 = vunpack.c.l.b16 %v3908
        %v4022 = vunpack.c.l.b16 %v3909
        %v4023 = vunpack.c.l.b16 %v3910
        %v4024 = vunpack.c.l.b16 %v3911
        %v4025 = vunpack.c.l.b16 %v3912
        %v4026 = vunpack.c.l.b16 %v3913
        %v4027 = vunpack.c.l.b16 %v3914
        %v4028 = vunpack.c.l.b16 %v3915
        %v4029 = vunpack.c.l.b16 %v3916
        %v4030 = vunpack.c.l.b16 %v3917
        %v4031 = vunpack.c.l.b16 %v3918
        %v4032 = vunpack.c.l.b16 %v3919
        %v4033 = vunpack.c.l.b16 %v3920
        %v4034 = vunpack.c.l.b16 %v3921
        %v4035 = vunpack.c.l.b16 %v3922
        %v4036 = vunpack.c.l.b16 %v3923
        %v4037 = vunpack.c.l.b16 %v3924
        %v4038 = vpack.c.b16 %v3991, %v3990
        %v4039 = vpack.c.b16 %v3993, %v3992
        %v4040 = vpack.c.b16 %v3995, %v3994
        %v4041 = vpack.c.b16 %v3997, %v3996
        %v4042 = vpack.c.b16 %v3999, %v3998
        %v4043 = vpack.c.b16 %v4001, %v4000
        %v4044 = vpack.c.b16 %v4003, %v4002
        %v4045 = vpack.c.b16 %v4005, %v4004
        %v4046 = vpack.c.b16 %v4007, %v4006
        %v4047 = vpack.c.b16 %v4009, %v4008
        %v4048 = vpack.c.b16 %v4011, %v4010
        %v4049 = vpack.c.b16 %v4013, %v4012
        %v4050 = vpack.c.b16 %v4015, %v4014
        %v4051 = vpack.c.b16 %v4017, %v4016
        %v4052 = vpack.c.b16 %v4019, %v4018
        %v4053 = vpack.c.b16 %v4021, %v4020
        %v4054 = vpack.c.b16 %v4023, %v4022
        %v4055 = vpack.c.b16 %v4025, %v4024
        %v4056 = vpack.c.b16 %v4027, %v4026
        %v4057 = vpack.c.b16 %v4029, %v4028
        %v4058 = vpack.c.b16 %v4031, %v4030
        %v4059 = vpack.c.b16 %v4033, %v4032
        %v4060 = vpack.c.b16 %v4035, %v4034
        %v4061 = vpack.c.b16 %v4037, %v4036
        %4086 = vmatprep.subr.bf16.mxu0 0
        %4087 = vmatpush1.bf16.msra.mxu0 %v4038
        %4088 = vmatprep.subr.bf16.mxu0 0
        %4089 = vmatpush1.bf16.msra.mxu0 %v4039
        %4090 = vmatprep.subr.bf16.mxu0 0
        %4091 = vmatpush1.bf16.msra.mxu0 %v4040
        %4092 = vmatprep.subr.bf16.mxu0 0
        %4093 = vmatpush1.bf16.msra.mxu0 %v4041
        %4094 = vmatprep.subr.bf16.mxu0 0
        %4095 = vmatpush1.bf16.msra.mxu0 %v4042
        %4096 = vmatprep.subr.bf16.mxu0 0
        %4097 = vmatpush1.bf16.msra.mxu0 %v4043
        %4098 = vmatprep.subr.bf16.mxu0 0
        %4099 = vmatpush1.bf16.msra.mxu0 %v4044
        %4100 = vmatprep.subr.bf16.mxu0 0
        %4101 = vmatpush1.bf16.msra.mxu0 %v4045
        %4102 = vmatprep.subr.bf16.mxu0 0
        %4103 = vmatpush1.bf16.msra.mxu0 %v4046
        %4104 = vmatprep.subr.bf16.mxu0 0
        %4105 = vmatpush1.bf16.msra.mxu0 %v4047
        %4106 = vmatprep.subr.bf16.mxu0 0
        %4107 = vmatpush1.bf16.msra.mxu0 %v4048
        %4108 = vmatprep.subr.bf16.mxu0 0
        %4109 = vmatpush1.bf16.msra.mxu0 %v4049
        %4110 = vmatprep.subr.bf16.mxu0 0
        %4111 = vmatpush1.bf16.msra.mxu0 %v4050
        %4112 = vmatprep.subr.bf16.mxu0 0
        %4113 = vmatpush1.bf16.msra.mxu0 %v4051
        %4114 = vmatprep.subr.bf16.mxu0 0
        %4115 = vmatpush1.bf16.msra.mxu0 %v4052
        %4116 = vmatprep.subr.bf16.mxu0 0
        %4117 = vmatpush1.bf16.msra.mxu0 %v4053
        %4118 = vmatprep.mubr.bf16.mxu0 %v3934
        %4119 = vmatmul.mubr.bf16.gmra.mrb[0].mxu0 %v3933
        %v4120 = vpop.f32.mrb[0].mxu0
        %v4121 = vadd.f32 %v3940, %v4120
        %v4122 = vpop.f32.mrb[0].mxu0
        %v4123 = vpop.f32.mrb[0].mxu0
        %v4124 = vpop.f32.mrb[0].mxu0
        %4125 = vdwg.mxu0
        %4126 = vmatprep.subr.bf16.mxu0 0
        %4127 = vmatpush1.bf16.msra.mxu0 %v4054
        %4128 = vmatprep.subr.bf16.mxu0 0
        %4129 = vmatpush1.bf16.msra.mxu0 %v4055
        %4130 = vmatprep.subr.bf16.mxu0 0
        %4131 = vmatpush1.bf16.msra.mxu0 %v4056
        %4132 = vmatprep.subr.bf16.mxu0 0
        %4133 = vmatpush1.bf16.msra.mxu0 %v4057
        %4134 = vmatprep.subr.bf16.mxu0 0
        %4135 = vmatpush1.bf16.msra.mxu0 %v4058
        %4136 = vmatprep.subr.bf16.mxu0 0
        %4137 = vmatpush1.bf16.msra.mxu0 %v4059
        %4138 = vmatprep.subr.bf16.mxu0 0
        %4139 = vmatpush1.bf16.msra.mxu0 %v4060
        %4140 = vmatprep.subr.bf16.mxu0 0
        %4141 = vmatpush1.bf16.msra.mxu0 %v4061
        %4142 = vmatprep.subr.bf16.mxu0 0
        %4143 = vmatpush1.bf16.msra.mxu0 0
        %4144 = vmatprep.subr.bf16.mxu0 0
        %4145 = vmatpush1.bf16.msra.mxu0 0
        %4146 = vmatprep.subr.bf16.mxu0 0
        %4147 = vmatpush1.bf16.msra.mxu0 0
        %4148 = vmatprep.subr.bf16.mxu0 0
        %4149 = vmatpush1.bf16.msra.mxu0 0
        %4150 = vmatprep.subr.bf16.mxu0 0
        %4151 = vmatpush1.bf16.msra.mxu0 0
        %4152 = vmatprep.subr.bf16.mxu0 0
        %4153 = vmatpush1.bf16.msra.mxu0 0
        %4154 = vmatprep.subr.bf16.mxu0 0
        %4155 = vmatpush1.bf16.msra.mxu0 0
        %4156 = vmatprep.subr.bf16.mxu0 0
        %4157 = vmatpush1.bf16.msra.mxu0 0
        %4158 = vmatprep.mubr.bf16.mxu0 0
        %4159 = vmatmul.mubr.bf16.gmra.mrb[0].mxu0 %v3935
        %v4160 = vpop.f32.mrb[0].mxu0
        %v4161 = vadd.f32 %v4121, %v4160
        %v4162 = vpop.f32.mrb[0].mxu0
        %v4163 = vpop.f32.mrb[0].mxu0
        %v4164 = vpop.f32.mrb[0].mxu0
        %4165 = vdwg.mxu0
        %v4166 = vadd.f32 %v3547, %v4161
        %vm4167 = vcmp.eq.f32.partialorder %v2928, 0.0
        %v4168 = vsel %vm4167, %v4166, 0.0
        %v4169 = vpack.c.bf16 %v4168, %v4168
        %v4170 = vld [vmem:[%s16] sm:$0xf]
        %v4171 = vld [vmem:[%s16 + $0x4] sm:$0x3]
        %vm4172 = vcmp.eq.f32.partialorder %v2928, 1.0
        %v4173 = vsel %vm4172, %v4166, 0.0
        %v4174 = vpack.c.bf16 %v4173, %v4173
        %s4175 = scalar_lea.vmem %s16, 8
        %v4176 = vld [vmem:[%s4175] sm:$0xf]
        %v4177 = vld [vmem:[%s4175 + $0x4] sm:$0x3]
        %v4180 = vunpack.c.l.b16 %v4176
        %v4181 = vunpack.c.l.b16 %v4177
        %v4182 = vpack.c.b16 %v4181, %v4180
        %vm4183 = vcmask 31744
        %v4185 = vsel %vm4183, %v4182, 0
        %v4188 = vsel %vm1346, %v4174, 0
        %4190 = vmatprep.subr.bf16.mxu0 0
        %4191 = vmatpush1.bf16.msra.mxu0 %v4188
        %4192 = vmatprep.subr.bf16.mxu0 0
        %4193 = vmatpush1.bf16.msra.mxu0 0
        %4194 = vmatprep.subr.bf16.mxu0 0
        %4195 = vmatpush1.bf16.msra.mxu0 0
        %4196 = vmatprep.subr.bf16.mxu0 0
        %4197 = vmatpush1.bf16.msra.mxu0 0
        %4198 = vmatprep.subr.bf16.mxu0 0
        %4199 = vmatpush1.bf16.msra.mxu0 0
        %4200 = vmatprep.subr.bf16.mxu0 0
        %4201 = vmatpush1.bf16.msra.mxu0 0
        %4202 = vmatprep.subr.bf16.mxu0 0
        %4203 = vmatpush1.bf16.msra.mxu0 0
        %4204 = vmatprep.subr.bf16.mxu0 0
        %4205 = vmatpush1.bf16.msra.mxu0 0
        %4206 = vmatprep.subr.bf16.mxu0 0
        %4207 = vmatpush1.bf16.msra.mxu0 0
        %4208 = vmatprep.subr.bf16.mxu0 0
        %4209 = vmatpush1.bf16.msra.mxu0 0
        %4210 = vmatprep.subr.bf16.mxu0 0
        %4211 = vmatpush1.bf16.msra.mxu0 0
        %4212 = vmatprep.subr.bf16.mxu0 0
        %4213 = vmatpush1.bf16.msra.mxu0 0
        %4214 = vmatprep.subr.bf16.mxu0 0
        %4215 = vmatpush1.bf16.msra.mxu0 0
        %4216 = vmatprep.subr.bf16.mxu0 0
        %4217 = vmatpush1.bf16.msra.mxu0 0
        %4218 = vmatprep.subr.bf16.mxu0 0
        %4219 = vmatpush1.bf16.msra.mxu0 0
        %4220 = vmatprep.subr.bf16.mxu0 0
        %4221 = vmatpush1.bf16.msra.mxu0 0
        %4222 = vmatprep.mubr.bf16.mxu0 0
        %4223 = vmatmul.mubr.bf16.gmra.mrb[0].mxu0 %v4185
        %v4224 = vpop.f32.mrb[0].mxu0
        %v4225 = vadd.f32 0.0, %v4224
        %v4226 = vpop.f32.mrb[0].mxu0
        %v4227 = vpop.f32.mrb[0].mxu0
        %v4228 = vadd.f32 0.0, %v4227
        %v4229 = vpop.f32.mrb[0].mxu0
        %4230 = vdwg.mxu0
        %v4233 = vunpack.c.l.b16 %v4170
        %v4234 = vunpack.c.l.b16 %v4171
        %v4235 = vpack.c.b16 %v4234, %v4233
        %v4237 = vsel %vm4183, %v4235, 0
        %v4240 = vsel %vm1346, %v4169, 0
        %4242 = vmatprep.subr.bf16.mxu0 0
        %4243 = vmatpush1.bf16.msra.mxu0 %v4240
        %4244 = vmatprep.subr.bf16.mxu0 0
        %4245 = vmatpush1.bf16.msra.mxu0 0
        %4246 = vmatprep.subr.bf16.mxu0 0
        %4247 = vmatpush1.bf16.msra.mxu0 0
        %4248 = vmatprep.subr.bf16.mxu0 0
        %4249 = vmatpush1.bf16.msra.mxu0 0
        %4250 = vmatprep.subr.bf16.mxu0 0
        %4251 = vmatpush1.bf16.msra.mxu0 0
        %4252 = vmatprep.subr.bf16.mxu0 0
        %4253 = vmatpush1.bf16.msra.mxu0 0
        %4254 = vmatprep.subr.bf16.mxu0 0
        %4255 = vmatpush1.bf16.msra.mxu0 0
        %4256 = vmatprep.subr.bf16.mxu0 0
        %4257 = vmatpush1.bf16.msra.mxu0 0
        %4258 = vmatprep.subr.bf16.mxu0 0
        %4259 = vmatpush1.bf16.msra.mxu0 0
        %4260 = vmatprep.subr.bf16.mxu0 0
        %4261 = vmatpush1.bf16.msra.mxu0 0
        %4262 = vmatprep.subr.bf16.mxu0 0
        %4263 = vmatpush1.bf16.msra.mxu0 0
        %4264 = vmatprep.subr.bf16.mxu0 0
        %4265 = vmatpush1.bf16.msra.mxu0 0
        %4266 = vmatprep.subr.bf16.mxu0 0
        %4267 = vmatpush1.bf16.msra.mxu0 0
        %4268 = vmatprep.subr.bf16.mxu0 0
        %4269 = vmatpush1.bf16.msra.mxu0 0
        %4270 = vmatprep.subr.bf16.mxu0 0
        %4271 = vmatpush1.bf16.msra.mxu0 0
        %4272 = vmatprep.subr.bf16.mxu0 0
        %4273 = vmatpush1.bf16.msra.mxu0 0
        %4274 = vmatprep.mubr.bf16.mxu0 0
        %4275 = vmatmul.mubr.bf16.gmra.mrb[0].mxu0 %v4237
        %v4276 = vpop.f32.mrb[0].mxu0
        %v4277 = vadd.f32 %v4225, %v4276
        %v4278 = vpop.f32.mrb[0].mxu0
        %v4279 = vpop.f32.mrb[0].mxu0
        %v4280 = vadd.f32 %v4228, %v4279
        %v4281 = vpop.f32.mrb[0].mxu0
        %4282 = vdwg.mxu0
        %vm4283 = vcmp.eq.f32.partialorder %v2928, 2.0
        %v4284 = vsel %vm4283, %v4166, 0.0
        %v4285 = vpack.c.bf16 %v4284, %v4284
        %s4286 = scalar_lea.vmem %s16, 16
        %v4287 = vld [vmem:[%s4286] sm:$0xf]
        %v4288 = vld [vmem:[%s4286 + $0x4] sm:$0x3]
        %v4291 = vunpack.c.l.b16 %v4287
        %v4292 = vunpack.c.l.b16 %v4288
        %v4293 = vpack.c.b16 %v4292, %v4291
        %v4295 = vsel %vm4183, %v4293, 0
        %v4298 = vsel %vm1346, %v4285, 0
        %4300 = vmatprep.subr.bf16.mxu0 0
        %4301 = vmatpush1.bf16.msra.mxu0 %v4298
        %4302 = vmatprep.subr.bf16.mxu0 0
        %4303 = vmatpush1.bf16.msra.mxu0 0
        %4304 = vmatprep.subr.bf16.mxu0 0
        %4305 = vmatpush1.bf16.msra.mxu0 0
        %4306 = vmatprep.subr.bf16.mxu0 0
        %4307 = vmatpush1.bf16.msra.mxu0 0
        %4308 = vmatprep.subr.bf16.mxu0 0
        %4309 = vmatpush1.bf16.msra.mxu0 0
        %4310 = vmatprep.subr.bf16.mxu0 0
        %4311 = vmatpush1.bf16.msra.mxu0 0
        %4312 = vmatprep.subr.bf16.mxu0 0
        %4313 = vmatpush1.bf16.msra.mxu0 0
        %4314 = vmatprep.subr.bf16.mxu0 0
        %4315 = vmatpush1.bf16.msra.mxu0 0
        %4316 = vmatprep.subr.bf16.mxu0 0
        %4317 = vmatpush1.bf16.msra.mxu0 0
        %4318 = vmatprep.subr.bf16.mxu0 0
        %4319 = vmatpush1.bf16.msra.mxu0 0
        %4320 = vmatprep.subr.bf16.mxu0 0
        %4321 = vmatpush1.bf16.msra.mxu0 0
        %4322 = vmatprep.subr.bf16.mxu0 0
        %4323 = vmatpush1.bf16.msra.mxu0 0
        %4324 = vmatprep.subr.bf16.mxu0 0
        %4325 = vmatpush1.bf16.msra.mxu0 0
        %4326 = vmatprep.subr.bf16.mxu0 0
        %4327 = vmatpush1.bf16.msra.mxu0 0
        %4328 = vmatprep.subr.bf16.mxu0 0
        %4329 = vmatpush1.bf16.msra.mxu0 0
        %4330 = vmatprep.subr.bf16.mxu0 0
        %4331 = vmatpush1.bf16.msra.mxu0 0
        %4332 = vmatprep.mubr.bf16.mxu0 0
        %4333 = vmatmul.mubr.bf16.gmra.mrb[0].mxu0 %v4295
        %v4334 = vpop.f32.mrb[0].mxu0
        %v4335 = vadd.f32 0.0, %v4334
        %v4336 = vpop.f32.mrb[0].mxu0
        %v4337 = vpop.f32.mrb[0].mxu0
        %v4338 = vadd.f32 0.0, %v4337
        %v4339 = vpop.f32.mrb[0].mxu0
        %4340 = vdwg.mxu0
        %v4341 = vadd.f32 %v4277, %v4335
        %v4342 = vadd.f32 %v4280, %v4338
        %v4343 = vadd.f32 %v4341, %v1501
        %v4344 = vadd.f32 %v4342, %v1502
        %s4345 = scalar_lea.vmem %s3, 5
        %v4346 = vld [vmem:[%s4345] sm:$0x1]
        %v4348 = vlaneseq
        %v4349 = vshrl.u32 %v4348, 7
        %v4350 = vsub.s32 0, %v4349
        %v4351 = vrot.slane %v4346, %v4350
        %v4353 = vmul.f32 %v4343, %v4351
        %v4354 = vmul.f32 %v4344, %v4351
        %s4355 = scalar_lea.vmem %s4, 5
        %v4356 = vld [vmem:[%s4355] sm:$0x1]
        %v4358 = vlaneseq
        %v4359 = vshrl.u32 %v4358, 7
        %v4360 = vsub.s32 0, %v4359
        %v4361 = vrot.slane %v4356, %v4360
        %v4363 = vadd.f32 %v4353, %v4361
        %v4364 = vadd.f32 %v4354, %v4361
        %v4365 = vmax.f32 %v4363, 0.0
        %v4366 = vmax.f32 %v4364, 0.0
        %s4367 = scalar_lea.vmem [#allocation3], 960
        %v4368 = vld [vmem:[%s4367] sm:$0xf]
        %v4369 = vld [vmem:[%s4367 + $0x4] sm:$0xf]
        %v4370 = vld [vmem:[%s4367 + $0x8] sm:$0xf]
        %v4371 = vld [vmem:[%s4367 + $0xc] sm:$0xf]
        %v4372 = vld [vmem:[%s4367 + $0x10] sm:$0xf]
        %v4373 = vld [vmem:[%s4367 + $0x14] sm:$0xf]
        %v4374 = vld [vmem:[%s4367 + $0x18] sm:$0xf]
        %v4375 = vld [vmem:[%s4367 + $0x1c] sm:$0xf]
        %v4376 = vld [vmem:[%s4367 + $0x20] sm:$0xf]
        %v4377 = vld [vmem:[%s4367 + $0x24] sm:$0xf]
        %v4378 = vld [vmem:[%s4367 + $0x28] sm:$0xf]
        %v4379 = vld [vmem:[%s4367 + $0x2c] sm:$0xf]
        %v4380 = vld [vmem:[%s4367 + $0x30] sm:$0xf]
        %v4381 = vld [vmem:[%s4367 + $0x34] sm:$0xf]
        %v4382 = vld [vmem:[%s4367 + $0x38] sm:$0xf]
        %v4383 = vld [vmem:[%s4367 + $0x3c] sm:$0xf]
        %v4384 = vld [vmem:[%s4367 + $0x40] sm:$0xf]
        %v4385 = vld [vmem:[%s4367 + $0x44] sm:$0xf]
        %v4386 = vld [vmem:[%s4367 + $0x48] sm:$0xf]
        %v4387 = vld [vmem:[%s4367 + $0x4c] sm:$0xf]
        %v4388 = vld [vmem:[%s4367 + $0x50] sm:$0xf]
        %v4389 = vld [vmem:[%s4367 + $0x54] sm:$0xf]
        %v4390 = vld [vmem:[%s4367 + $0x58] sm:$0xf]
        %v4391 = vld [vmem:[%s4367 + $0x5c] sm:$0xf]
        %v4392 = vld [vmem:[%s4367 + $0x60] sm:$0xf]
        %v4393 = vld [vmem:[%s4367 + $0x64] sm:$0xf]
        %v4394 = vld [vmem:[%s4367 + $0x68] sm:$0xf]
        %v4395 = vld [vmem:[%s4367 + $0x6c] sm:$0xf]
        %v4396 = vld [vmem:[%s4367 + $0x70] sm:$0xf]
        %v4397 = vld [vmem:[%s4367 + $0x74] sm:$0xf]
        %v4398 = vld [vmem:[%s4367 + $0x78] sm:$0xf]
        %v4399 = vld [vmem:[%s4367 + $0x7c] sm:$0xf]
        %v4400 = vld [vmem:[%s4367 + $0x80] sm:$0xf]
        %v4401 = vld [vmem:[%s4367 + $0x84] sm:$0xf]
        %v4402 = vld [vmem:[%s4367 + $0x88] sm:$0xf]
        %v4403 = vld [vmem:[%s4367 + $0x8c] sm:$0xf]
        %v4404 = vld [vmem:[%s4367 + $0x90] sm:$0xf]
        %v4405 = vld [vmem:[%s4367 + $0x94] sm:$0xf]
        %v4406 = vld [vmem:[%s4367 + $0x98] sm:$0xf]
        %v4407 = vld [vmem:[%s4367 + $0x9c] sm:$0xf]
        %v4408 = vld [vmem:[%s4367 + $0xa0] sm:$0xf]
        %v4409 = vld [vmem:[%s4367 + $0xa4] sm:$0xf]
        %v4410 = vld [vmem:[%s4367 + $0xa8] sm:$0xf]
        %v4411 = vld [vmem:[%s4367 + $0xac] sm:$0xf]
        %v4412 = vld [vmem:[%s4367 + $0xb0] sm:$0xf]
        %v4413 = vld [vmem:[%s4367 + $0xb4] sm:$0xf]
        %v4414 = vld [vmem:[%s4367 + $0xb8] sm:$0xf]
        %v4415 = vld [vmem:[%s4367 + $0xbc] sm:$0xf]
        %s4416 = scalar_lea.vmem %s2, 5
        %v4417 = vld [vmem:[%s4416] sm:$0x1]
        %4418 = vst [vmem:[#allocation2] sm:$0x1] 0.0
        %4419 = vst [vmem:[#allocation2 + $0x1] sm:$0xff] %v4365
        %4420 = vst [vmem:[#allocation2 + $0x9] sm:$0xf] %v4366
        %4421 = vst [vmem:[#allocation2 + $0xd] sm:$0x1] 0.0
        %v4422 = vld [vmem:[#allocation2] sm:$0xff]
        %v4423 = vld [vmem:[#allocation2 + $0x8] sm:$0xf]
        %v4424 = vld [vmem:[#allocation2 + $0x1] sm:$0xff]
        %v4425 = vld [vmem:[#allocation2 + $0x9] sm:$0xf]
        %v4426 = vld [vmem:[#allocation2 + $0x2] sm:$0xff]
        %v4427 = vld [vmem:[#allocation2 + $0xa] sm:$0xf]
        %v4428 = vpack.c.bf16 %v4423, %v4422
        %v4429 = vpack.c.bf16 %v4425, %v4424
        %v4430 = vpack.c.bf16 %v4427, %v4426
        %v4432 = vlaneseq
        %v4433 = vshrl.u32 %v4432, 7
        %v4434 = vsub.s32 0, %v4433
        %v4435 = vrot.slane %v4417, %v4434
        %v4485 = vunpack.c.l.b16 %v4368
        %v4486 = vunpack.c.l.b16 %v4369
        %v4487 = vunpack.c.l.b16 %v4370
        %v4488 = vunpack.c.l.b16 %v4371
        %v4489 = vunpack.c.l.b16 %v4372
        %v4490 = vunpack.c.l.b16 %v4373
        %v4491 = vunpack.c.l.b16 %v4374
        %v4492 = vunpack.c.l.b16 %v4375
        %v4493 = vunpack.c.l.b16 %v4376
        %v4494 = vunpack.c.l.b16 %v4377
        %v4495 = vunpack.c.l.b16 %v4378
        %v4496 = vunpack.c.l.b16 %v4379
        %v4497 = vunpack.c.l.b16 %v4380
        %v4498 = vunpack.c.l.b16 %v4381
        %v4499 = vunpack.c.l.b16 %v4382
        %v4500 = vunpack.c.l.b16 %v4383
        %v4501 = vunpack.c.l.b16 %v4384
        %v4502 = vunpack.c.l.b16 %v4385
        %v4503 = vunpack.c.l.b16 %v4386
        %v4504 = vunpack.c.l.b16 %v4387
        %v4505 = vunpack.c.l.b16 %v4388
        %v4506 = vunpack.c.l.b16 %v4389
        %v4507 = vunpack.c.l.b16 %v4390
        %v4508 = vunpack.c.l.b16 %v4391
        %v4509 = vunpack.c.l.b16 %v4392
        %v4510 = vunpack.c.l.b16 %v4393
        %v4511 = vunpack.c.l.b16 %v4394
        %v4512 = vunpack.c.l.b16 %v4395
        %v4513 = vunpack.c.l.b16 %v4396
        %v4514 = vunpack.c.l.b16 %v4397
        %v4515 = vunpack.c.l.b16 %v4398
        %v4516 = vunpack.c.l.b16 %v4399
        %v4517 = vunpack.c.l.b16 %v4400
        %v4518 = vunpack.c.l.b16 %v4401
        %v4519 = vunpack.c.l.b16 %v4402
        %v4520 = vunpack.c.l.b16 %v4403
        %v4521 = vunpack.c.l.b16 %v4404
        %v4522 = vunpack.c.l.b16 %v4405
        %v4523 = vunpack.c.l.b16 %v4406
        %v4524 = vunpack.c.l.b16 %v4407
        %v4525 = vunpack.c.l.b16 %v4408
        %v4526 = vunpack.c.l.b16 %v4409
        %v4527 = vunpack.c.l.b16 %v4410
        %v4528 = vunpack.c.l.b16 %v4411
        %v4529 = vunpack.c.l.b16 %v4412
        %v4530 = vunpack.c.l.b16 %v4413
        %v4531 = vunpack.c.l.b16 %v4414
        %v4532 = vunpack.c.l.b16 %v4415
        %v4533 = vpack.c.b16 %v4486, %v4485
        %v4534 = vpack.c.b16 %v4488, %v4487
        %v4535 = vpack.c.b16 %v4490, %v4489
        %v4536 = vpack.c.b16 %v4492, %v4491
        %v4537 = vpack.c.b16 %v4494, %v4493
        %v4538 = vpack.c.b16 %v4496, %v4495
        %v4539 = vpack.c.b16 %v4498, %v4497
        %v4540 = vpack.c.b16 %v4500, %v4499
        %v4541 = vpack.c.b16 %v4502, %v4501
        %v4542 = vpack.c.b16 %v4504, %v4503
        %v4543 = vpack.c.b16 %v4506, %v4505
        %v4544 = vpack.c.b16 %v4508, %v4507
        %v4545 = vpack.c.b16 %v4510, %v4509
        %v4546 = vpack.c.b16 %v4512, %v4511
        %v4547 = vpack.c.b16 %v4514, %v4513
        %v4548 = vpack.c.b16 %v4516, %v4515
        %v4549 = vpack.c.b16 %v4518, %v4517
        %v4550 = vpack.c.b16 %v4520, %v4519
        %v4551 = vpack.c.b16 %v4522, %v4521
        %v4552 = vpack.c.b16 %v4524, %v4523
        %v4553 = vpack.c.b16 %v4526, %v4525
        %v4554 = vpack.c.b16 %v4528, %v4527
        %v4555 = vpack.c.b16 %v4530, %v4529
        %v4556 = vpack.c.b16 %v4532, %v4531
        %4581 = vmatprep.subr.bf16.mxu0 0
        %4582 = vmatpush1.bf16.msra.mxu0 %v4533
        %4583 = vmatprep.subr.bf16.mxu0 0
        %4584 = vmatpush1.bf16.msra.mxu0 %v4534
        %4585 = vmatprep.subr.bf16.mxu0 0
        %4586 = vmatpush1.bf16.msra.mxu0 %v4535
        %4587 = vmatprep.subr.bf16.mxu0 0
        %4588 = vmatpush1.bf16.msra.mxu0 %v4536
        %4589 = vmatprep.subr.bf16.mxu0 0
        %4590 = vmatpush1.bf16.msra.mxu0 %v4537
        %4591 = vmatprep.subr.bf16.mxu0 0
        %4592 = vmatpush1.bf16.msra.mxu0 %v4538
        %4593 = vmatprep.subr.bf16.mxu0 0
        %4594 = vmatpush1.bf16.msra.mxu0 %v4539
        %4595 = vmatprep.subr.bf16.mxu0 0
        %4596 = vmatpush1.bf16.msra.mxu0 %v4540
        %4597 = vmatprep.subr.bf16.mxu0 0
        %4598 = vmatpush1.bf16.msra.mxu0 %v4541
        %4599 = vmatprep.subr.bf16.mxu0 0
        %4600 = vmatpush1.bf16.msra.mxu0 %v4542
        %4601 = vmatprep.subr.bf16.mxu0 0
        %4602 = vmatpush1.bf16.msra.mxu0 %v4543
        %4603 = vmatprep.subr.bf16.mxu0 0
        %4604 = vmatpush1.bf16.msra.mxu0 %v4544
        %4605 = vmatprep.subr.bf16.mxu0 0
        %4606 = vmatpush1.bf16.msra.mxu0 %v4545
        %4607 = vmatprep.subr.bf16.mxu0 0
        %4608 = vmatpush1.bf16.msra.mxu0 %v4546
        %4609 = vmatprep.subr.bf16.mxu0 0
        %4610 = vmatpush1.bf16.msra.mxu0 %v4547
        %4611 = vmatprep.subr.bf16.mxu0 0
        %4612 = vmatpush1.bf16.msra.mxu0 %v4548
        %4613 = vmatprep.mubr.bf16.mxu0 %v4429
        %4614 = vmatmul.mubr.bf16.gmra.mrb[0].mxu0 %v4428
        %v4615 = vpop.f32.mrb[0].mxu0
        %v4616 = vadd.f32 %v4435, %v4615
        %v4617 = vpop.f32.mrb[0].mxu0
        %v4618 = vpop.f32.mrb[0].mxu0
        %v4619 = vadd.f32 %v4435, %v4618
        %v4620 = vpop.f32.mrb[0].mxu0
        %4621 = vdwg.mxu0
        %4622 = vmatprep.subr.bf16.mxu0 0
        %4623 = vmatpush1.bf16.msra.mxu0 %v4549
        %4624 = vmatprep.subr.bf16.mxu0 0
        %4625 = vmatpush1.bf16.msra.mxu0 %v4550
        %4626 = vmatprep.subr.bf16.mxu0 0
        %4627 = vmatpush1.bf16.msra.mxu0 %v4551
        %4628 = vmatprep.subr.bf16.mxu0 0
        %4629 = vmatpush1.bf16.msra.mxu0 %v4552
        %4630 = vmatprep.subr.bf16.mxu0 0
        %4631 = vmatpush1.bf16.msra.mxu0 %v4553
        %4632 = vmatprep.subr.bf16.mxu0 0
        %4633 = vmatpush1.bf16.msra.mxu0 %v4554
        %4634 = vmatprep.subr.bf16.mxu0 0
        %4635 = vmatpush1.bf16.msra.mxu0 %v4555
        %4636 = vmatprep.subr.bf16.mxu0 0
        %4637 = vmatpush1.bf16.msra.mxu0 %v4556
        %4638 = vmatprep.subr.bf16.mxu0 0
        %4639 = vmatpush1.bf16.msra.mxu0 0
        %4640 = vmatprep.subr.bf16.mxu0 0
        %4641 = vmatpush1.bf16.msra.mxu0 0
        %4642 = vmatprep.subr.bf16.mxu0 0
        %4643 = vmatpush1.bf16.msra.mxu0 0
        %4644 = vmatprep.subr.bf16.mxu0 0
        %4645 = vmatpush1.bf16.msra.mxu0 0
        %4646 = vmatprep.subr.bf16.mxu0 0
        %4647 = vmatpush1.bf16.msra.mxu0 0
        %4648 = vmatprep.subr.bf16.mxu0 0
        %4649 = vmatpush1.bf16.msra.mxu0 0
        %4650 = vmatprep.subr.bf16.mxu0 0
        %4651 = vmatpush1.bf16.msra.mxu0 0
        %4652 = vmatprep.subr.bf16.mxu0 0
        %4653 = vmatpush1.bf16.msra.mxu0 0
        %4654 = vmatprep.mubr.bf16.mxu0 0
        %4655 = vmatmul.mubr.bf16.gmra.mrb[0].mxu0 %v4430
        %v4656 = vpop.f32.mrb[0].mxu0
        %v4657 = vadd.f32 %v4616, %v4656
        %v4658 = vpop.f32.mrb[0].mxu0
        %v4659 = vpop.f32.mrb[0].mxu0
        %v4660 = vadd.f32 %v4619, %v4659
        %v4661 = vpop.f32.mrb[0].mxu0
        %4662 = vdwg.mxu0
        %s4663 = scalar_lea.vmem %s7, 5
        %v4664 = vld [vmem:[%s4663] sm:$0x1]
        %v4666 = vlaneseq
        %v4667 = vshrl.u32 %v4666, 7
        %v4668 = vsub.s32 0, %v4667
        %v4669 = vrot.slane %v4664, %v4668
        %v4671 = vmul.f32 %v4657, %v4669
        %v4672 = vmul.f32 %v4660, %v4669
        %s4673 = scalar_lea.vmem %s8, 5
        %v4674 = vld [vmem:[%s4673] sm:$0x1]
        %v4676 = vlaneseq
        %v4677 = vshrl.u32 %v4676, 7
        %v4678 = vsub.s32 0, %v4677
        %v4679 = vrot.slane %v4674, %v4678
        %v4681 = vadd.f32 %v4671, %v4679
        %v4682 = vadd.f32 %v4672, %v4679
        %v4683 = vmax.f32 %v4681, 0.0
        %v4684 = vmax.f32 %v4682, 0.0
        %s4685 = scalar_lea.vmem [#allocation5], 960
        %v4686 = vld [vmem:[%s4685] sm:$0xf]
        %v4687 = vld [vmem:[%s4685 + $0x4] sm:$0xf]
        %v4688 = vld [vmem:[%s4685 + $0x8] sm:$0xf]
        %v4689 = vld [vmem:[%s4685 + $0xc] sm:$0xf]
        %v4690 = vld [vmem:[%s4685 + $0x10] sm:$0xf]
        %v4691 = vld [vmem:[%s4685 + $0x14] sm:$0xf]
        %v4692 = vld [vmem:[%s4685 + $0x18] sm:$0xf]
        %v4693 = vld [vmem:[%s4685 + $0x1c] sm:$0xf]
        %v4694 = vld [vmem:[%s4685 + $0x20] sm:$0xf]
        %v4695 = vld [vmem:[%s4685 + $0x24] sm:$0xf]
        %v4696 = vld [vmem:[%s4685 + $0x28] sm:$0xf]
        %v4697 = vld [vmem:[%s4685 + $0x2c] sm:$0xf]
        %v4698 = vld [vmem:[%s4685 + $0x30] sm:$0xf]
        %v4699 = vld [vmem:[%s4685 + $0x34] sm:$0xf]
        %v4700 = vld [vmem:[%s4685 + $0x38] sm:$0xf]
        %v4701 = vld [vmem:[%s4685 + $0x3c] sm:$0xf]
        %v4702 = vld [vmem:[%s4685 + $0x40] sm:$0xf]
        %v4703 = vld [vmem:[%s4685 + $0x44] sm:$0xf]
        %v4704 = vld [vmem:[%s4685 + $0x48] sm:$0xf]
        %v4705 = vld [vmem:[%s4685 + $0x4c] sm:$0xf]
        %v4706 = vld [vmem:[%s4685 + $0x50] sm:$0xf]
        %v4707 = vld [vmem:[%s4685 + $0x54] sm:$0xf]
        %v4708 = vld [vmem:[%s4685 + $0x58] sm:$0xf]
        %v4709 = vld [vmem:[%s4685 + $0x5c] sm:$0xf]
        %v4710 = vld [vmem:[%s4685 + $0x60] sm:$0xf]
        %v4711 = vld [vmem:[%s4685 + $0x64] sm:$0xf]
        %v4712 = vld [vmem:[%s4685 + $0x68] sm:$0xf]
        %v4713 = vld [vmem:[%s4685 + $0x6c] sm:$0xf]
        %v4714 = vld [vmem:[%s4685 + $0x70] sm:$0xf]
        %v4715 = vld [vmem:[%s4685 + $0x74] sm:$0xf]
        %v4716 = vld [vmem:[%s4685 + $0x78] sm:$0xf]
        %v4717 = vld [vmem:[%s4685 + $0x7c] sm:$0xf]
        %v4718 = vld [vmem:[%s4685 + $0x80] sm:$0xf]
        %v4719 = vld [vmem:[%s4685 + $0x84] sm:$0xf]
        %v4720 = vld [vmem:[%s4685 + $0x88] sm:$0xf]
        %v4721 = vld [vmem:[%s4685 + $0x8c] sm:$0xf]
        %v4722 = vld [vmem:[%s4685 + $0x90] sm:$0xf]
        %v4723 = vld [vmem:[%s4685 + $0x94] sm:$0xf]
        %v4724 = vld [vmem:[%s4685 + $0x98] sm:$0xf]
        %v4725 = vld [vmem:[%s4685 + $0x9c] sm:$0xf]
        %v4726 = vld [vmem:[%s4685 + $0xa0] sm:$0xf]
        %v4727 = vld [vmem:[%s4685 + $0xa4] sm:$0xf]
        %v4728 = vld [vmem:[%s4685 + $0xa8] sm:$0xf]
        %v4729 = vld [vmem:[%s4685 + $0xac] sm:$0xf]
        %v4730 = vld [vmem:[%s4685 + $0xb0] sm:$0xf]
        %v4731 = vld [vmem:[%s4685 + $0xb4] sm:$0xf]
        %v4732 = vld [vmem:[%s4685 + $0xb8] sm:$0xf]
        %v4733 = vld [vmem:[%s4685 + $0xbc] sm:$0xf]
        %s4734 = scalar_lea.vmem %s6, 5
        %v4735 = vld [vmem:[%s4734] sm:$0x1]
        %4736 = vst [vmem:[#allocation2] sm:$0x1] 0.0
        %4737 = vst [vmem:[#allocation2 + $0x1] sm:$0xff] %v4683
        %4738 = vst [vmem:[#allocation2 + $0x9] sm:$0xf] %v4684
        %4739 = vst [vmem:[#allocation2 + $0xd] sm:$0x1] 0.0
        %v4740 = vld [vmem:[#allocation2] sm:$0xff]
        %v4741 = vld [vmem:[#allocation2 + $0x8] sm:$0xf]
        %v4742 = vld [vmem:[#allocation2 + $0x1] sm:$0xff]
        %v4743 = vld [vmem:[#allocation2 + $0x9] sm:$0xf]
        %v4744 = vld [vmem:[#allocation2 + $0x2] sm:$0xff]
        %v4745 = vld [vmem:[#allocation2 + $0xa] sm:$0xf]
        %v4746 = vpack.c.bf16 %v4741, %v4740
        %v4747 = vpack.c.bf16 %v4743, %v4742
        %v4748 = vpack.c.bf16 %v4745, %v4744
        %v4750 = vlaneseq
        %v4751 = vshrl.u32 %v4750, 7
        %v4752 = vsub.s32 0, %v4751
        %v4753 = vrot.slane %v4735, %v4752
        %v4803 = vunpack.c.l.b16 %v4686
        %v4804 = vunpack.c.l.b16 %v4687
        %v4805 = vunpack.c.l.b16 %v4688
        %v4806 = vunpack.c.l.b16 %v4689
        %v4807 = vunpack.c.l.b16 %v4690
        %v4808 = vunpack.c.l.b16 %v4691
        %v4809 = vunpack.c.l.b16 %v4692
        %v4810 = vunpack.c.l.b16 %v4693
        %v4811 = vunpack.c.l.b16 %v4694
        %v4812 = vunpack.c.l.b16 %v4695
        %v4813 = vunpack.c.l.b16 %v4696
        %v4814 = vunpack.c.l.b16 %v4697
        %v4815 = vunpack.c.l.b16 %v4698
        %v4816 = vunpack.c.l.b16 %v4699
        %v4817 = vunpack.c.l.b16 %v4700
        %v4818 = vunpack.c.l.b16 %v4701
        %v4819 = vunpack.c.l.b16 %v4702
        %v4820 = vunpack.c.l.b16 %v4703
        %v4821 = vunpack.c.l.b16 %v4704
        %v4822 = vunpack.c.l.b16 %v4705
        %v4823 = vunpack.c.l.b16 %v4706
        %v4824 = vunpack.c.l.b16 %v4707
        %v4825 = vunpack.c.l.b16 %v4708
        %v4826 = vunpack.c.l.b16 %v4709
        %v4827 = vunpack.c.l.b16 %v4710
        %v4828 = vunpack.c.l.b16 %v4711
        %v4829 = vunpack.c.l.b16 %v4712
        %v4830 = vunpack.c.l.b16 %v4713
        %v4831 = vunpack.c.l.b16 %v4714
        %v4832 = vunpack.c.l.b16 %v4715
        %v4833 = vunpack.c.l.b16 %v4716
        %v4834 = vunpack.c.l.b16 %v4717
        %v4835 = vunpack.c.l.b16 %v4718
        %v4836 = vunpack.c.l.b16 %v4719
        %v4837 = vunpack.c.l.b16 %v4720
        %v4838 = vunpack.c.l.b16 %v4721
        %v4839 = vunpack.c.l.b16 %v4722
        %v4840 = vunpack.c.l.b16 %v4723
        %v4841 = vunpack.c.l.b16 %v4724
        %v4842 = vunpack.c.l.b16 %v4725
        %v4843 = vunpack.c.l.b16 %v4726
        %v4844 = vunpack.c.l.b16 %v4727
        %v4845 = vunpack.c.l.b16 %v4728
        %v4846 = vunpack.c.l.b16 %v4729
        %v4847 = vunpack.c.l.b16 %v4730
        %v4848 = vunpack.c.l.b16 %v4731
        %v4849 = vunpack.c.l.b16 %v4732
        %v4850 = vunpack.c.l.b16 %v4733
        %v4851 = vpack.c.b16 %v4804, %v4803
        %v4852 = vpack.c.b16 %v4806, %v4805
        %v4853 = vpack.c.b16 %v4808, %v4807
        %v4854 = vpack.c.b16 %v4810, %v4809
        %v4855 = vpack.c.b16 %v4812, %v4811
        %v4856 = vpack.c.b16 %v4814, %v4813
        %v4857 = vpack.c.b16 %v4816, %v4815
        %v4858 = vpack.c.b16 %v4818, %v4817
        %v4859 = vpack.c.b16 %v4820, %v4819
        %v4860 = vpack.c.b16 %v4822, %v4821
        %v4861 = vpack.c.b16 %v4824, %v4823
        %v4862 = vpack.c.b16 %v4826, %v4825
        %v4863 = vpack.c.b16 %v4828, %v4827
        %v4864 = vpack.c.b16 %v4830, %v4829
        %v4865 = vpack.c.b16 %v4832, %v4831
        %v4866 = vpack.c.b16 %v4834, %v4833
        %v4867 = vpack.c.b16 %v4836, %v4835
        %v4868 = vpack.c.b16 %v4838, %v4837
        %v4869 = vpack.c.b16 %v4840, %v4839
        %v4870 = vpack.c.b16 %v4842, %v4841
        %v4871 = vpack.c.b16 %v4844, %v4843
        %v4872 = vpack.c.b16 %v4846, %v4845
        %v4873 = vpack.c.b16 %v4848, %v4847
        %v4874 = vpack.c.b16 %v4850, %v4849
        %4899 = vmatprep.subr.bf16.mxu0 0
        %4900 = vmatpush1.bf16.msra.mxu0 %v4851
        %4901 = vmatprep.subr.bf16.mxu0 0
        %4902 = vmatpush1.bf16.msra.mxu0 %v4852
        %4903 = vmatprep.subr.bf16.mxu0 0
        %4904 = vmatpush1.bf16.msra.mxu0 %v4853
        %4905 = vmatprep.subr.bf16.mxu0 0
        %4906 = vmatpush1.bf16.msra.mxu0 %v4854
        %4907 = vmatprep.subr.bf16.mxu0 0
        %4908 = vmatpush1.bf16.msra.mxu0 %v4855
        %4909 = vmatprep.subr.bf16.mxu0 0
        %4910 = vmatpush1.bf16.msra.mxu0 %v4856
        %4911 = vmatprep.subr.bf16.mxu0 0
        %4912 = vmatpush1.bf16.msra.mxu0 %v4857
        %4913 = vmatprep.subr.bf16.mxu0 0
        %4914 = vmatpush1.bf16.msra.mxu0 %v4858
        %4915 = vmatprep.subr.bf16.mxu0 0
        %4916 = vmatpush1.bf16.msra.mxu0 %v4859
        %4917 = vmatprep.subr.bf16.mxu0 0
        %4918 = vmatpush1.bf16.msra.mxu0 %v4860
        %4919 = vmatprep.subr.bf16.mxu0 0
        %4920 = vmatpush1.bf16.msra.mxu0 %v4861
        %4921 = vmatprep.subr.bf16.mxu0 0
        %4922 = vmatpush1.bf16.msra.mxu0 %v4862
        %4923 = vmatprep.subr.bf16.mxu0 0
        %4924 = vmatpush1.bf16.msra.mxu0 %v4863
        %4925 = vmatprep.subr.bf16.mxu0 0
        %4926 = vmatpush1.bf16.msra.mxu0 %v4864
        %4927 = vmatprep.subr.bf16.mxu0 0
        %4928 = vmatpush1.bf16.msra.mxu0 %v4865
        %4929 = vmatprep.subr.bf16.mxu0 0
        %4930 = vmatpush1.bf16.msra.mxu0 %v4866
        %4931 = vmatprep.mubr.bf16.mxu0 %v4747
        %4932 = vmatmul.mubr.bf16.gmra.mrb[0].mxu0 %v4746
        %v4933 = vpop.f32.mrb[0].mxu0
        %v4934 = vadd.f32 %v4753, %v4933
        %v4935 = vpop.f32.mrb[0].mxu0
        %v4936 = vpop.f32.mrb[0].mxu0
        %v4937 = vadd.f32 %v4753, %v4936
        %v4938 = vpop.f32.mrb[0].mxu0
        %4939 = vdwg.mxu0
        %4940 = vmatprep.subr.bf16.mxu0 0
        %4941 = vmatpush1.bf16.msra.mxu0 %v4867
        %4942 = vmatprep.subr.bf16.mxu0 0
        %4943 = vmatpush1.bf16.msra.mxu0 %v4868
        %4944 = vmatprep.subr.bf16.mxu0 0
        %4945 = vmatpush1.bf16.msra.mxu0 %v4869
        %4946 = vmatprep.subr.bf16.mxu0 0
        %4947 = vmatpush1.bf16.msra.mxu0 %v4870
        %4948 = vmatprep.subr.bf16.mxu0 0
        %4949 = vmatpush1.bf16.msra.mxu0 %v4871
        %4950 = vmatprep.subr.bf16.mxu0 0
        %4951 = vmatpush1.bf16.msra.mxu0 %v4872
        %4952 = vmatprep.subr.bf16.mxu0 0
        %4953 = vmatpush1.bf16.msra.mxu0 %v4873
        %4954 = vmatprep.subr.bf16.mxu0 0
        %4955 = vmatpush1.bf16.msra.mxu0 %v4874
        %4956 = vmatprep.subr.bf16.mxu0 0
        %4957 = vmatpush1.bf16.msra.mxu0 0
        %4958 = vmatprep.subr.bf16.mxu0 0
        %4959 = vmatpush1.bf16.msra.mxu0 0
        %4960 = vmatprep.subr.bf16.mxu0 0
        %4961 = vmatpush1.bf16.msra.mxu0 0
        %4962 = vmatprep.subr.bf16.mxu0 0
        %4963 = vmatpush1.bf16.msra.mxu0 0
        %4964 = vmatprep.subr.bf16.mxu0 0
        %4965 = vmatpush1.bf16.msra.mxu0 0
        %4966 = vmatprep.subr.bf16.mxu0 0
        %4967 = vmatpush1.bf16.msra.mxu0 0
        %4968 = vmatprep.subr.bf16.mxu0 0
        %4969 = vmatpush1.bf16.msra.mxu0 0
        %4970 = vmatprep.subr.bf16.mxu0 0
        %4971 = vmatpush1.bf16.msra.mxu0 0
        %4972 = vmatprep.mubr.bf16.mxu0 0
        %4973 = vmatmul.mubr.bf16.gmra.mrb[0].mxu0 %v4748
        %v4974 = vpop.f32.mrb[0].mxu0
        %v4975 = vadd.f32 %v4934, %v4974
        %v4976 = vpop.f32.mrb[0].mxu0
        %v4977 = vpop.f32.mrb[0].mxu0
        %v4978 = vadd.f32 %v4937, %v4977
        %v4979 = vpop.f32.mrb[0].mxu0
        %4980 = vdwg.mxu0
        %v4981 = vadd.f32 %v4343, %v4975
        %v4982 = vadd.f32 %v4344, %v4978
        %vm4983 = vcmp.eq.f32.partialorder %v1505, 0.0
        %vm4984 = vcmp.eq.f32.partialorder %v1506, 0.0
        %v4985 = vsel %vm4983, %v4981, 0.0
        %v4986 = vsel %vm4984, %v4982, 0.0
        %v4987 = vpack.c.bf16 %v4986, %v4985
        %v4988 = vld [vmem:[%s14] sm:$0xf]
        %v4989 = vld [vmem:[%s14 + $0x4] sm:$0xf]
        %v4990 = vld [vmem:[%s14 + $0x8] sm:$0xf]
        %v4991 = vld [vmem:[%s14 + $0xc] sm:$0xf]
        %v4992 = vld [vmem:[%s14 + $0x10] sm:$0x3]
        %vm4993 = vcmp.eq.f32.partialorder %v1505, 1.0
        %vm4994 = vcmp.eq.f32.partialorder %v1506, 1.0
        %v4995 = vsel %vm4993, %v4981, 0.0
        %v4996 = vsel %vm4994, %v4982, 0.0
        %v4997 = vpack.c.bf16 %v4996, %v4995
        %s4998 = scalar_lea.vmem %s14, 20
        %v4999 = vld [vmem:[%s4998] sm:$0xf]
        %v5000 = vld [vmem:[%s4998 + $0x4] sm:$0xf]
        %v5001 = vld [vmem:[%s4998 + $0x8] sm:$0xf]
        %v5002 = vld [vmem:[%s4998 + $0xc] sm:$0xf]
        %v5003 = vld [vmem:[%s4998 + $0x10] sm:$0x3]
        %v5009 = vunpack.c.l.b16 %v4999
        %v5010 = vunpack.c.l.b16 %v5000
        %v5011 = vunpack.c.l.b16 %v5001
        %v5012 = vunpack.c.l.b16 %v5002
        %v5013 = vunpack.c.l.b16 %v5003
        %v5014 = vpack.c.b16 %v5010, %v5009
        %v5015 = vpack.c.b16 %v5012, %v5011
        %v5016 = vpack.c.b16 %v5013, %v5013
        %v5018 = vsel %vm2785, %v5014, 0
        %v5021 = vsel %vm2785, %v5015, 0
        %v5024 = vsel %vm2785, %v5016, 0
        %v5027 = vsel %vm2789, %v4997, 0
        %5029 = vmatprep.subr.bf16.mxu0 0
        %5030 = vmatpush1.bf16.msra.mxu0 %v5027
        %5031 = vmatprep.subr.bf16.mxu0 0
        %5032 = vmatpush1.bf16.msra.mxu0 0
        %5033 = vmatprep.subr.bf16.mxu0 0
        %5034 = vmatpush1.bf16.msra.mxu0 0
        %5035 = vmatprep.subr.bf16.mxu0 0
        %5036 = vmatpush1.bf16.msra.mxu0 0
        %5037 = vmatprep.subr.bf16.mxu0 0
        %5038 = vmatpush1.bf16.msra.mxu0 0
        %5039 = vmatprep.subr.bf16.mxu0 0
        %5040 = vmatpush1.bf16.msra.mxu0 0
        %5041 = vmatprep.subr.bf16.mxu0 0
        %5042 = vmatpush1.bf16.msra.mxu0 0
        %5043 = vmatprep.subr.bf16.mxu0 0
        %5044 = vmatpush1.bf16.msra.mxu0 0
        %5045 = vmatprep.subr.bf16.mxu0 0
        %5046 = vmatpush1.bf16.msra.mxu0 0
        %5047 = vmatprep.subr.bf16.mxu0 0
        %5048 = vmatpush1.bf16.msra.mxu0 0
        %5049 = vmatprep.subr.bf16.mxu0 0
        %5050 = vmatpush1.bf16.msra.mxu0 0
        %5051 = vmatprep.subr.bf16.mxu0 0
        %5052 = vmatpush1.bf16.msra.mxu0 0
        %5053 = vmatprep.subr.bf16.mxu0 0
        %5054 = vmatpush1.bf16.msra.mxu0 0
        %5055 = vmatprep.subr.bf16.mxu0 0
        %5056 = vmatpush1.bf16.msra.mxu0 0
        %5057 = vmatprep.subr.bf16.mxu0 0
        %5058 = vmatpush1.bf16.msra.mxu0 0
        %5059 = vmatprep.subr.bf16.mxu0 0
        %5060 = vmatpush1.bf16.msra.mxu0 0
        %5061 = vmatprep.mubr.bf16.mxu0 0
        %5062 = vmatmul.mubr.bf16.gmra.mrb[0].mxu0 %v5018
        %v5063 = vpop.f32.mrb[0].mxu0
        %v5064 = vadd.f32 0.0, %v5063
        %v5065 = vpop.f32.mrb[0].mxu0
        %v5066 = vpop.f32.mrb[0].mxu0
        %v5067 = vadd.f32 0.0, %v5066
        %v5068 = vpop.f32.mrb[0].mxu0
        %5069 = vmatprep.mubr.bf16.mxu0 0
        %5070 = vmatmul.mubr.bf16.gmra.mrb[0].mxu0 %v5021
        %v5071 = vpop.f32.mrb[0].mxu0
        %v5072 = vadd.f32 0.0, %v5071
        %v5073 = vpop.f32.mrb[0].mxu0
        %v5074 = vpop.f32.mrb[0].mxu0
        %v5075 = vadd.f32 0.0, %v5074
        %v5076 = vpop.f32.mrb[0].mxu0
        %5077 = vmatprep.mubr.bf16.mxu0 0
        %5078 = vmatmul.mubr.bf16.gmra.mrb[0].mxu0 %v5024
        %v5079 = vpop.f32.mrb[0].mxu0
        %v5080 = vadd.f32 0.0, %v5079
        %v5081 = vpop.f32.mrb[0].mxu0
        %v5082 = vpop.f32.mrb[0].mxu0
        %v5083 = vpop.f32.mrb[0].mxu0
        %5084 = vdwg.mxu0
        %v5090 = vunpack.c.l.b16 %v4988
        %v5091 = vunpack.c.l.b16 %v4989
        %v5092 = vunpack.c.l.b16 %v4990
        %v5093 = vunpack.c.l.b16 %v4991
        %v5094 = vunpack.c.l.b16 %v4992
        %v5095 = vpack.c.b16 %v5091, %v5090
        %v5096 = vpack.c.b16 %v5093, %v5092
        %v5097 = vpack.c.b16 %v5094, %v5094
        %v5099 = vsel %vm2785, %v5095, 0
        %v5102 = vsel %vm2785, %v5096, 0
        %v5105 = vsel %vm2785, %v5097, 0
        %v5108 = vsel %vm2789, %v4987, 0
        %5110 = vmatprep.subr.bf16.mxu0 0
        %5111 = vmatpush1.bf16.msra.mxu0 %v5108
        %5112 = vmatprep.subr.bf16.mxu0 0
        %5113 = vmatpush1.bf16.msra.mxu0 0
        %5114 = vmatprep.subr.bf16.mxu0 0
        %5115 = vmatpush1.bf16.msra.mxu0 0
        %5116 = vmatprep.subr.bf16.mxu0 0
        %5117 = vmatpush1.bf16.msra.mxu0 0
        %5118 = vmatprep.subr.bf16.mxu0 0
        %5119 = vmatpush1.bf16.msra.mxu0 0
        %5120 = vmatprep.subr.bf16.mxu0 0
        %5121 = vmatpush1.bf16.msra.mxu0 0
        %5122 = vmatprep.subr.bf16.mxu0 0
        %5123 = vmatpush1.bf16.msra.mxu0 0
        %5124 = vmatprep.subr.bf16.mxu0 0
        %5125 = vmatpush1.bf16.msra.mxu0 0
        %5126 = vmatprep.subr.bf16.mxu0 0
        %5127 = vmatpush1.bf16.msra.mxu0 0
        %5128 = vmatprep.subr.bf16.mxu0 0
        %5129 = vmatpush1.bf16.msra.mxu0 0
        %5130 = vmatprep.subr.bf16.mxu0 0
        %5131 = vmatpush1.bf16.msra.mxu0 0
        %5132 = vmatprep.subr.bf16.mxu0 0
        %5133 = vmatpush1.bf16.msra.mxu0 0
        %5134 = vmatprep.subr.bf16.mxu0 0
        %5135 = vmatpush1.bf16.msra.mxu0 0
        %5136 = vmatprep.subr.bf16.mxu0 0
        %5137 = vmatpush1.bf16.msra.mxu0 0
        %5138 = vmatprep.subr.bf16.mxu0 0
        %5139 = vmatpush1.bf16.msra.mxu0 0
        %5140 = vmatprep.subr.bf16.mxu0 0
        %5141 = vmatpush1.bf16.msra.mxu0 0
        %5142 = vmatprep.mubr.bf16.mxu0 0
        %5143 = vmatmul.mubr.bf16.gmra.mrb[0].mxu0 %v5099
        %v5144 = vpop.f32.mrb[0].mxu0
        %v5145 = vadd.f32 %v5064, %v5144
        %v5146 = vpop.f32.mrb[0].mxu0
        %v5147 = vpop.f32.mrb[0].mxu0
        %v5148 = vadd.f32 %v5067, %v5147
        %v5149 = vpop.f32.mrb[0].mxu0
        %5150 = vmatprep.mubr.bf16.mxu0 0
        %5151 = vmatmul.mubr.bf16.gmra.mrb[0].mxu0 %v5102
        %v5152 = vpop.f32.mrb[0].mxu0
        %v5153 = vadd.f32 %v5072, %v5152
        %v5154 = vpop.f32.mrb[0].mxu0
        %v5155 = vpop.f32.mrb[0].mxu0
        %v5156 = vadd.f32 %v5075, %v5155
        %v5157 = vpop.f32.mrb[0].mxu0
        %5158 = vmatprep.mubr.bf16.mxu0 0
        %5159 = vmatmul.mubr.bf16.gmra.mrb[0].mxu0 %v5105
        %v5160 = vpop.f32.mrb[0].mxu0
        %v5161 = vadd.f32 %v5080, %v5160
        %v5162 = vpop.f32.mrb[0].mxu0
        %v5163 = vpop.f32.mrb[0].mxu0
        %v5164 = vpop.f32.mrb[0].mxu0
        %5165 = vdwg.mxu0
        %vm5166 = vcmp.eq.f32.partialorder %v1505, 2.0
        %vm5167 = vcmp.eq.f32.partialorder %v1506, 2.0
        %v5168 = vsel %vm5166, %v4981, 0.0
        %v5169 = vsel %vm5167, %v4982, 0.0
        %v5170 = vpack.c.bf16 %v5169, %v5168
        %s5171 = scalar_lea.vmem %s14, 40
        %v5172 = vld [vmem:[%s5171] sm:$0xf]
        %v5173 = vld [vmem:[%s5171 + $0x4] sm:$0xf]
        %v5174 = vld [vmem:[%s5171 + $0x8] sm:$0xf]
        %v5175 = vld [vmem:[%s5171 + $0xc] sm:$0xf]
        %v5176 = vld [vmem:[%s5171 + $0x10] sm:$0x3]
        %v5182 = vunpack.c.l.b16 %v5172
        %v5183 = vunpack.c.l.b16 %v5173
        %v5184 = vunpack.c.l.b16 %v5174
        %v5185 = vunpack.c.l.b16 %v5175
        %v5186 = vunpack.c.l.b16 %v5176
        %v5187 = vpack.c.b16 %v5183, %v5182
        %v5188 = vpack.c.b16 %v5185, %v5184
        %v5189 = vpack.c.b16 %v5186, %v5186
        %v5191 = vsel %vm2785, %v5187, 0
        %v5194 = vsel %vm2785, %v5188, 0
        %v5197 = vsel %vm2785, %v5189, 0
        %v5200 = vsel %vm2789, %v5170, 0
        %5202 = vmatprep.subr.bf16.mxu0 0
        %5203 = vmatpush1.bf16.msra.mxu0 %v5200
        %5204 = vmatprep.subr.bf16.mxu0 0
        %5205 = vmatpush1.bf16.msra.mxu0 0
        %5206 = vmatprep.subr.bf16.mxu0 0
        %5207 = vmatpush1.bf16.msra.mxu0 0
        %5208 = vmatprep.subr.bf16.mxu0 0
        %5209 = vmatpush1.bf16.msra.mxu0 0
        %5210 = vmatprep.subr.bf16.mxu0 0
        %5211 = vmatpush1.bf16.msra.mxu0 0
        %5212 = vmatprep.subr.bf16.mxu0 0
        %5213 = vmatpush1.bf16.msra.mxu0 0
        %5214 = vmatprep.subr.bf16.mxu0 0
        %5215 = vmatpush1.bf16.msra.mxu0 0
        %5216 = vmatprep.subr.bf16.mxu0 0
        %5217 = vmatpush1.bf16.msra.mxu0 0
        %5218 = vmatprep.subr.bf16.mxu0 0
        %5219 = vmatpush1.bf16.msra.mxu0 0
        %5220 = vmatprep.subr.bf16.mxu0 0
        %5221 = vmatpush1.bf16.msra.mxu0 0
        %5222 = vmatprep.subr.bf16.mxu0 0
        %5223 = vmatpush1.bf16.msra.mxu0 0
        %5224 = vmatprep.subr.bf16.mxu0 0
        %5225 = vmatpush1.bf16.msra.mxu0 0
        %5226 = vmatprep.subr.bf16.mxu0 0
        %5227 = vmatpush1.bf16.msra.mxu0 0
        %5228 = vmatprep.subr.bf16.mxu0 0
        %5229 = vmatpush1.bf16.msra.mxu0 0
        %5230 = vmatprep.subr.bf16.mxu0 0
        %5231 = vmatpush1.bf16.msra.mxu0 0
        %5232 = vmatprep.subr.bf16.mxu0 0
        %5233 = vmatpush1.bf16.msra.mxu0 0
        %5234 = vmatprep.mubr.bf16.mxu0 0
        %5235 = vmatmul.mubr.bf16.gmra.mrb[0].mxu0 %v5191
        %v5236 = vpop.f32.mrb[0].mxu0
        %v5237 = vadd.f32 0.0, %v5236
        %v5238 = vpop.f32.mrb[0].mxu0
        %v5239 = vpop.f32.mrb[0].mxu0
        %v5240 = vadd.f32 0.0, %v5239
        %v5241 = vpop.f32.mrb[0].mxu0
        %5242 = vmatprep.mubr.bf16.mxu0 0
        %5243 = vmatmul.mubr.bf16.gmra.mrb[0].mxu0 %v5194
        %v5244 = vpop.f32.mrb[0].mxu0
        %v5245 = vadd.f32 0.0, %v5244
        %v5246 = vpop.f32.mrb[0].mxu0
        %v5247 = vpop.f32.mrb[0].mxu0
        %v5248 = vadd.f32 0.0, %v5247
        %v5249 = vpop.f32.mrb[0].mxu0
        %5250 = vmatprep.mubr.bf16.mxu0 0
        %5251 = vmatmul.mubr.bf16.gmra.mrb[0].mxu0 %v5197
        %v5252 = vpop.f32.mrb[0].mxu0
        %v5253 = vadd.f32 0.0, %v5252
        %v5254 = vpop.f32.mrb[0].mxu0
        %v5255 = vpop.f32.mrb[0].mxu0
        %v5256 = vpop.f32.mrb[0].mxu0
        %5257 = vdwg.mxu0
        %v5258 = vadd.f32 %v5145, %v5237
        %v5259 = vadd.f32 %v5148, %v5240
        %v5260 = vadd.f32 %v5153, %v5245
        %v5261 = vadd.f32 %v5156, %v5248
        %v5262 = vadd.f32 %v5161, %v5253
        %v5263 = vadd.f32 %v580, %v5258
        %v5264 = vadd.f32 %v581, %v5259
        %v5265 = vadd.f32 %v582, %v5260
        %v5266 = vadd.f32 %v583, %v5261
        %v5267 = vadd.f32 %v584, %v5262
        %v5268 = vld [vmem:[%s9] sm:$0xf]
        %v5269 = vld [vmem:[%s9 + $0x4] sm:$0xf]
        %v5270 = vld [vmem:[%s9 + $0x8] sm:$0xf]
        %v5271 = vld [vmem:[%s9 + $0xc] sm:$0xf]
        %v5272 = vld [vmem:[%s9 + $0x10] sm:$0xf]
        %v5273 = vld [vmem:[%s9 + $0x14] sm:$0xf]
        %v5274 = vld [vmem:[%s9 + $0x18] sm:$0xf]
        %v5275 = vld [vmem:[%s9 + $0x1c] sm:$0xf]
        %v5276 = vld [vmem:[%s9 + $0x20] sm:$0xf]
        %v5277 = vld [vmem:[%s9 + $0x24] sm:$0xf]
        %v5278 = vld [vmem:[%s9 + $0x28] sm:$0xf]
        %v5279 = vld [vmem:[%s9 + $0x2c] sm:$0xf]
        %v5280 = vld [vmem:[%s9 + $0x30] sm:$0xf]
        %v5281 = vld [vmem:[%s9 + $0x34] sm:$0xf]
        %v5282 = vld [vmem:[%s9 + $0x38] sm:$0xf]
        %v5283 = vld [vmem:[%s9 + $0x3c] sm:$0xf]
        %v5284 = vld [vmem:[%s10] sm:$0x1]
        %v5285 = vpack.c.bf16 %v5264, %v5263
        %v5286 = vpack.c.bf16 %v5266, %v5265
        %v5287 = vpack.c.bf16 %v5267, %v5267
        %v5289 = vlaneseq
        %v5290 = vshrl.u32 %v5289, 7
        %v5291 = vsub.s32 0, %v5290
        %v5292 = vrot.slane %v5284, %v5291
        %v5310 = vunpack.c.l.b16 %v5268
        %v5311 = vunpack.c.l.b16 %v5269
        %v5312 = vunpack.c.l.b16 %v5270
        %v5313 = vunpack.c.l.b16 %v5271
        %v5314 = vunpack.c.l.b16 %v5272
        %v5315 = vunpack.c.l.b16 %v5273
        %v5316 = vunpack.c.l.b16 %v5274
        %v5317 = vunpack.c.l.b16 %v5275
        %v5318 = vunpack.c.l.b16 %v5276
        %v5319 = vunpack.c.l.b16 %v5277
        %v5320 = vunpack.c.l.b16 %v5278
        %v5321 = vunpack.c.l.b16 %v5279
        %v5322 = vunpack.c.l.b16 %v5280
        %v5323 = vunpack.c.l.b16 %v5281
        %v5324 = vunpack.c.l.b16 %v5282
        %v5325 = vunpack.c.l.b16 %v5283
        %v5326 = vpack.c.b16 %v5311, %v5310
        %v5327 = vpack.c.b16 %v5313, %v5312
        %v5328 = vpack.c.b16 %v5315, %v5314
        %v5329 = vpack.c.b16 %v5317, %v5316
        %v5330 = vpack.c.b16 %v5319, %v5318
        %v5331 = vpack.c.b16 %v5321, %v5320
        %v5332 = vpack.c.b16 %v5323, %v5322
        %v5333 = vpack.c.b16 %v5325, %v5324
        %5342 = vmatprep.subr.bf16.mxu0 0
        %5343 = vmatpush1.bf16.msra.mxu0 %v5326
        %5344 = vmatprep.subr.bf16.mxu0 0
        %5345 = vmatpush1.bf16.msra.mxu0 %v5327
        %5346 = vmatprep.subr.bf16.mxu0 0
        %5347 = vmatpush1.bf16.msra.mxu0 %v5328
        %5348 = vmatprep.subr.bf16.mxu0 0
        %5349 = vmatpush1.bf16.msra.mxu0 %v5329
        %5350 = vmatprep.subr.bf16.mxu0 0
        %5351 = vmatpush1.bf16.msra.mxu0 %v5330
        %5352 = vmatprep.subr.bf16.mxu0 0
        %5353 = vmatpush1.bf16.msra.mxu0 %v5331
        %5354 = vmatprep.subr.bf16.mxu0 0
        %5355 = vmatpush1.bf16.msra.mxu0 %v5332
        %5356 = vmatprep.subr.bf16.mxu0 0
        %5357 = vmatpush1.bf16.msra.mxu0 %v5333
        %5358 = vmatprep.subr.bf16.mxu0 0
        %5359 = vmatpush1.bf16.msra.mxu0 0
        %5360 = vmatprep.subr.bf16.mxu0 0
        %5361 = vmatpush1.bf16.msra.mxu0 0
        %5362 = vmatprep.subr.bf16.mxu0 0
        %5363 = vmatpush1.bf16.msra.mxu0 0
        %5364 = vmatprep.subr.bf16.mxu0 0
        %5365 = vmatpush1.bf16.msra.mxu0 0
        %5366 = vmatprep.subr.bf16.mxu0 0
        %5367 = vmatpush1.bf16.msra.mxu0 0
        %5368 = vmatprep.subr.bf16.mxu0 0
        %5369 = vmatpush1.bf16.msra.mxu0 0
        %5370 = vmatprep.subr.bf16.mxu0 0
        %5371 = vmatpush1.bf16.msra.mxu0 0
        %5372 = vmatprep.subr.bf16.mxu0 0
        %5373 = vmatpush1.bf16.msra.mxu0 0
        %5374 = vmatprep.mubr.bf16.mxu0 0
        %5375 = vmatmul.mubr.bf16.gmra.mrb[0].mxu0 %v5285
        %v5376 = vpop.f32.mrb[0].mxu0
        %v5377 = vadd.f32 %v5292, %v5376
        %v5378 = vpop.f32.mrb[0].mxu0
        %v5379 = vpop.f32.mrb[0].mxu0
        %v5380 = vadd.f32 %v5292, %v5379
        %v5381 = vpop.f32.mrb[0].mxu0
        %5382 = vmatprep.mubr.bf16.mxu0 0
        %5383 = vmatmul.mubr.bf16.gmra.mrb[0].mxu0 %v5286
        %v5384 = vpop.f32.mrb[0].mxu0
        %v5385 = vadd.f32 %v5292, %v5384
        %v5386 = vpop.f32.mrb[0].mxu0
        %v5387 = vpop.f32.mrb[0].mxu0
        %v5388 = vadd.f32 %v5292, %v5387
        %v5389 = vpop.f32.mrb[0].mxu0
        %5390 = vmatprep.mubr.bf16.mxu0 0
        %5391 = vmatmul.mubr.bf16.gmra.mrb[0].mxu0 %v5287
        %v5392 = vpop.f32.mrb[0].mxu0
        %v5393 = vadd.f32 %v5292, %v5392
        %v5394 = vpop.f32.mrb[0].mxu0
        %v5395 = vpop.f32.mrb[0].mxu0
        %v5396 = vpop.f32.mrb[0].mxu0
        %5397 = vdwg.mxu0
        %v5398 = vld [vmem:[%s11] sm:$0xf]
        %v5399 = vld [vmem:[%s11 + $0x4] sm:$0xf]
        %v5400 = vld [vmem:[%s11 + $0x8] sm:$0xf]
        %v5401 = vld [vmem:[%s11 + $0xc] sm:$0xf]
        %v5402 = vld [vmem:[%s11 + $0x10] sm:$0xf]
        %v5403 = vld [vmem:[%s11 + $0x14] sm:$0xf]
        %v5404 = vld [vmem:[%s11 + $0x18] sm:$0xf]
        %v5405 = vld [vmem:[%s11 + $0x1c] sm:$0xf]
        %v5406 = vld [vmem:[%s11 + $0x20] sm:$0xf]
        %v5407 = vld [vmem:[%s11 + $0x24] sm:$0xf]
        %v5408 = vld [vmem:[%s11 + $0x28] sm:$0xf]
        %v5409 = vld [vmem:[%s11 + $0x2c] sm:$0xf]
        %v5410 = vld [vmem:[%s11 + $0x30] sm:$0xf]
        %v5411 = vld [vmem:[%s11 + $0x34] sm:$0xf]
        %v5412 = vld [vmem:[%s11 + $0x38] sm:$0xf]
        %v5413 = vld [vmem:[%s11 + $0x3c] sm:$0xf]
        %v5414 = vld [vmem:[%s12] sm:$0x1]
        %v5415 = vpack.c.bf16 %v5380, %v5377
        %v5416 = vpack.c.bf16 %v5388, %v5385
        %v5417 = vpack.c.bf16 %v5393, %v5393
        %v5419 = vlaneseq
        %v5420 = vshrl.u32 %v5419, 7
        %v5421 = vsub.s32 0, %v5420
        %v5422 = vrot.slane %v5414, %v5421
        %v5440 = vunpack.c.l.b16 %v5398
        %v5441 = vunpack.c.l.b16 %v5399
        %v5442 = vunpack.c.l.b16 %v5400
        %v5443 = vunpack.c.l.b16 %v5401
        %v5444 = vunpack.c.l.b16 %v5402
        %v5445 = vunpack.c.l.b16 %v5403
        %v5446 = vunpack.c.l.b16 %v5404
        %v5447 = vunpack.c.l.b16 %v5405
        %v5448 = vunpack.c.l.b16 %v5406
        %v5449 = vunpack.c.l.b16 %v5407
        %v5450 = vunpack.c.l.b16 %v5408
        %v5451 = vunpack.c.l.b16 %v5409
        %v5452 = vunpack.c.l.b16 %v5410
        %v5453 = vunpack.c.l.b16 %v5411
        %v5454 = vunpack.c.l.b16 %v5412
        %v5455 = vunpack.c.l.b16 %v5413
        %v5456 = vpack.c.b16 %v5441, %v5440
        %v5457 = vpack.c.b16 %v5443, %v5442
        %v5458 = vpack.c.b16 %v5445, %v5444
        %v5459 = vpack.c.b16 %v5447, %v5446
        %v5460 = vpack.c.b16 %v5449, %v5448
        %v5461 = vpack.c.b16 %v5451, %v5450
        %v5462 = vpack.c.b16 %v5453, %v5452
        %v5463 = vpack.c.b16 %v5455, %v5454
        %5472 = vmatprep.subr.bf16.mxu0 0
        %5473 = vmatpush1.bf16.msra.mxu0 %v5456
        %5474 = vmatprep.subr.bf16.mxu0 0
        %5475 = vmatpush1.bf16.msra.mxu0 %v5457
        %5476 = vmatprep.subr.bf16.mxu0 0
        %5477 = vmatpush1.bf16.msra.mxu0 %v5458
        %5478 = vmatprep.subr.bf16.mxu0 0
        %5479 = vmatpush1.bf16.msra.mxu0 %v5459
        %5480 = vmatprep.subr.bf16.mxu0 0
        %5481 = vmatpush1.bf16.msra.mxu0 %v5460
        %5482 = vmatprep.subr.bf16.mxu0 0
        %5483 = vmatpush1.bf16.msra.mxu0 %v5461
        %5484 = vmatprep.subr.bf16.mxu0 0
        %5485 = vmatpush1.bf16.msra.mxu0 %v5462
        %5486 = vmatprep.subr.bf16.mxu0 0
        %5487 = vmatpush1.bf16.msra.mxu0 %v5463
        %5488 = vmatprep.subr.bf16.mxu0 0
        %5489 = vmatpush1.bf16.msra.mxu0 0
        %5490 = vmatprep.subr.bf16.mxu0 0
        %5491 = vmatpush1.bf16.msra.mxu0 0
        %5492 = vmatprep.subr.bf16.mxu0 0
        %5493 = vmatpush1.bf16.msra.mxu0 0
        %5494 = vmatprep.subr.bf16.mxu0 0
        %5495 = vmatpush1.bf16.msra.mxu0 0
        %5496 = vmatprep.subr.bf16.mxu0 0
        %5497 = vmatpush1.bf16.msra.mxu0 0
        %5498 = vmatprep.subr.bf16.mxu0 0
        %5499 = vmatpush1.bf16.msra.mxu0 0
        %5500 = vmatprep.subr.bf16.mxu0 0
        %5501 = vmatpush1.bf16.msra.mxu0 0
        %5502 = vmatprep.subr.bf16.mxu0 0
        %5503 = vmatpush1.bf16.msra.mxu0 0
        %5504 = vmatprep.mubr.bf16.mxu0 0
        %5505 = vmatmul.mubr.bf16.gmra.mrb[0].mxu0 %v5415
        %v5506 = vpop.f32.mrb[0].mxu0
        %v5507 = vadd.f32 %v5422, %v5506
        %v5508 = vpop.f32.mrb[0].mxu0
        %v5509 = vpop.f32.mrb[0].mxu0
        %v5510 = vadd.f32 %v5422, %v5509
        %v5511 = vpop.f32.mrb[0].mxu0
        %5512 = vmatprep.mubr.bf16.mxu0 0
        %5513 = vmatmul.mubr.bf16.gmra.mrb[0].mxu0 %v5416
        %v5514 = vpop.f32.mrb[0].mxu0
        %v5515 = vadd.f32 %v5422, %v5514
        %v5516 = vpop.f32.mrb[0].mxu0
        %v5517 = vpop.f32.mrb[0].mxu0
        %v5518 = vadd.f32 %v5422, %v5517
        %v5519 = vpop.f32.mrb[0].mxu0
        %5520 = vmatprep.mubr.bf16.mxu0 0
        %5521 = vmatmul.mubr.bf16.gmra.mrb[0].mxu0 %v5417
        %v5522 = vpop.f32.mrb[0].mxu0
        %v5523 = vadd.f32 %v5422, %v5522
        %v5524 = vpop.f32.mrb[0].mxu0
        %v5525 = vpop.f32.mrb[0].mxu0
        %v5526 = vpop.f32.mrb[0].mxu0
        %5527 = vdwg.mxu0
        %v5528 = vxor.u32 %v5507, 2147483648
        %v5529 = vxor.u32 %v5510, 2147483648
        %v5530 = vxor.u32 %v5515, 2147483648
        %v5531 = vxor.u32 %v5518, 2147483648
        %v5532 = vxor.u32 %v5523, 2147483648
        %v5533 = vmul.f32 %v5528, 1.442695
        %v5534 = vpow.pop %v5533
        %v5535 = vmul.f32 %v5529, 1.442695
        %v5536 = vpow.pop %v5535
        %v5537 = vmul.f32 %v5530, 1.442695
        %v5538 = vpow.pop %v5537
        %v5539 = vmul.f32 %v5531, 1.442695
        %v5540 = vpow.pop %v5539
        %v5541 = vmul.f32 %v5532, 1.442695
        %v5542 = vpow.pop %v5541
        %v5543 = vadd.f32 %v5534, 1.0
        %v5544 = vadd.f32 %v5536, 1.0
        %v5545 = vadd.f32 %v5538, 1.0
        %v5546 = vadd.f32 %v5540, 1.0
        %v5547 = vadd.f32 %v5542, 1.0
        %v5548 = vrcp.pop %v5543
        %v5549 = vmul.f32 1.0, %v5548
        %v5550 = vrcp.pop %v5544
        %v5551 = vmul.f32 1.0, %v5550
        %v5552 = vrcp.pop %v5545
        %v5553 = vmul.f32 1.0, %v5552
        %v5554 = vrcp.pop %v5546
        %v5555 = vmul.f32 1.0, %v5554
        %v5556 = vrcp.pop %v5547
        %v5557 = vmul.f32 1.0, %v5556
        %5558 = vst [vmem:[%s578] sm:$0xff] %v5549
        %5559 = vst [vmem:[%s578 + $0x8] sm:$0xff] %v5551
        %5560 = vst [vmem:[%s578 + $0x10] sm:$0xff] %v5553
        %5561 = vst [vmem:[%s578 + $0x18] sm:$0xff] %v5555
        %5562 = vst [vmem:[%s578 + $0x20] sm:$0xf] %v5557
        %p5563 = scmp.lt.s32.totalorder %s30, 1
        %s5564 = scalar_select %p5563, %s30, 1
        %s5565 = smul.addr %s5564, 5
        %s5566 = smul.addr %s5565, 8
        %s5567 = scalar_lea.vmem %s17, %s5566
        // Predicated region
        $region97: #{attention_branch_forward.1} parent=87 // pred_check
          %p5568 = pneg %p410
        $region98: #{attention_branch_forward.1} parent=87 // pred_check_branch
          %5570 = sbr.rel (%p5568) target = $region100
        $region99: #{attention_branch_forward.1} parent=87 // pred_region
          _
        $region100: #{attention_branch_forward.1} parent=87 // pred_fallthru
          _
      $region88: #{attention_branch_forward.1} parent=5 // pred_fallthru
        _
      %p5571 = scmp.le.s32.totalorder 2, %s25
      // Predicated region
      $region101: #{attention_branch_forward.1} parent=5 // pred_check
        %p5572 = pneg %p5571
      $region102: #{attention_branch_forward.1} parent=5 // pred_check_branch
        %5574 = sbr.rel (%p5572) target = $region104
      $region103: #{attention_branch_forward.1} parent=5 // pred_region
        %s5575 = ssub.s32 %s25, 2
        // Predicated region
        $region105: #{attention_branch_forward.1} parent=103 // pred_check
          %p5576 = pneg %p416
        $region106: #{attention_branch_forward.1} parent=103 // pred_check_branch
          %5578 = sbr.rel (%p5576) target = $region108
        $region107: #{attention_branch_forward.1} parent=103 // pred_region
          %p5579 = scmp.lt.s32.totalorder %s31, 1
          %s5580 = scalar_select %p5579, %s31, 1
          %s5581 = smul.addr %s5580, 5
          %s5582 = smul.addr %s5581, 8
          %s5583 = scalar_lea.vmem %s17, %s5582
        $region108: #{attention_branch_forward.1} parent=103 // pred_fallthru
          _
      $region104: #{attention_branch_forward.1} parent=5 // pred_fallthru
        _
    $region6: #{attention_branch_forward.1} parent=1 // loop_footer
      %s29 = sadd.s32 1, %s25
    $region7: #{attention_branch_forward.1} parent=1 // loop_footer_branch
      %24 = sbr.rel target = $region3
    $region8: #{attention_branch_forward.1} parent=1 // loop_exit
      _
    %5584 = vsyncpa [#allocation4], 1
    %s5585 = scalar_lea.sflag [#allocation4], 1
    %5586 = vsyncpa %s5585, 1
    %5587 = vsyncpa [#allocation6], 1

</llo_original>
